<compile_context>
chip_gen: v5e
topology: v5e:2x2
jax: 0.10.0
libtpu: 0.0.40
codegen_flags: <defaults>
</compile_context>

<pallas_src>
import numpy as np
import jax
import jax.numpy as jnp
from jax.experimental import pallas as pl
from jax.experimental.pallas import tpu as pltpu

POOL_R = 4  # SCnet.pooling_r

_MOSAIC = dict(vmem_limit_bytes=32 * 1024 * 1024)


# ----------------------------------------------------------------------------
# small helpers
# ----------------------------------------------------------------------------
def _pick_divisor(n, target):
    """Largest divisor of n that is <= target (>= 1)."""
    t = int(min(n, max(1, target)))
    while n % t:
        t -= 1
    return t


def _pick_gemm_tile(m, target=256):
    """Row tile for the GEMM: divisor of m, multiple of 8 (sublane), <= target."""
    if m <= target:
        return m
    for t in range(min(target, m), 7, -1):
        if m % t == 0 and t % 8 == 0:
            return t
    return m  # single full block is always layout-legal


def _avg_pool(x, r=POOL_R):
    """AvgPool2d(kernel=r, stride=r) on NHWC (spatial dims must be divisible by r)."""
    n, h, w, c = x.shape
    return x.reshape(n, h // r, r, w // r, r, c).mean(axis=(2, 4))


def _upsample_nearest(x, r=POOL_R):
    """F.interpolate(mode='nearest') back to r*H x r*W on NHWC."""
    return jnp.repeat(jnp.repeat(x, r, axis=1), r, axis=2)


def _build_row_halo(x, th):
    """Per-row-tile halo side-car: (N*nh, 2, W, C) holding the row just above / just
    below each TH-row tile (zeros at the image border).  Only 2 rows per tile are
    duplicated instead of writing a full padded copy of x to HBM."""
    n, h, w, c = x.shape
    nh = h // th
    zero = jnp.zeros((n, 1, w, c), x.dtype)
    if nh == 1:
        tops, bots = zero, zero
    else:
        tops = jnp.concatenate([zero, x[:, th - 1::th, :, :][:, : nh - 1]], axis=1)
        bots = jnp.concatenate([x[:, th::th, :, :][:, : nh - 1], zero], axis=1)
    return jnp.stack([tops, bots], axis=2).reshape(n * nh, 2, w, c)


# ----------------------------------------------------------------------------
# Kernel 1: fused dual 1x1 conv (branch a + branch b) + folded BN + ReLU
#   x: (TM, Cin), wa/wb: (Cin, P), scales/biases: (1, P)  ->  oa, ob: (TM, P)
#   One kernel reads x once for both stems (instead of two separate 1x1 convs).
# ----------------------------------------------------------------------------
def _dual_pointwise_kernel(x_ref, wa_ref, sa_ref, ba_ref, wb_ref, sb_ref, bb_ref,
                           oa_ref, ob_ref):
    x = x_ref[...]
    ya = jnp.dot(x, wa_ref[...], preferred_element_type=jnp.float32)
    oa_ref[...] = jnp.maximum(ya * sa_ref[...] + ba_ref[...], 0.0).astype(oa_ref.dtype)
    yb = jnp.dot(x, wb_ref[...], preferred_element_type=jnp.float32)
    ob_ref[...] = jnp.maximum(yb * sb_ref[...] + bb_ref[...], 0.0).astype(ob_ref.dtype)


def dual_pointwise_conv_bn_relu(x_flat, wa, sa, ba, wb, sb, bb, *, tm_target=256):
    m, cin = x_flat.shape
    p = wa.shape[1]
    tm = _pick_gemm_tile(m, tm_target)
    vec = lambda v: v.reshape(1, -1)

    flops = 4 * m * cin * p
    bytes_accessed = 4 * (m * cin + 2 * m * p + 2 * cin * p + 4 * p)

    return pl.pallas_call(
        _dual_pointwise_kernel,
        out_shape=(jax.ShapeDtypeStruct((m, p), jnp.float32),
                   jax.ShapeDtypeStruct((m, p), jnp.float32)),
        grid=(m // tm,),
        in_specs=[
            pl.BlockSpec((tm, cin), lambda i: (i, 0)),
            pl.BlockSpec((cin, p), lambda i: (0, 0)),
            pl.BlockSpec((1, p), lambda i: (0, 0)),
            pl.BlockSpec((1, p), lambda i: (0, 0)),
            pl.BlockSpec((cin, p), lambda i: (0, 0)),
            pl.BlockSpec((1, p), lambda i: (0, 0)),
            pl.BlockSpec((1, p), lambda i: (0, 0)),
        ],
        out_specs=[
            pl.BlockSpec((tm, p), lambda i: (i, 0)),
            pl.BlockSpec((tm, p), lambda i: (i, 0)),
        ],
        compiler_params=pltpu.CompilerParams(
            dimension_semantics=("parallel",), **_MOSAIC),
        cost_estimate=pl.CostEstimate(flops=flops, transcendentals=0,
                                      bytes_accessed=bytes_accessed),
    )(x_flat, wa, vec(sa), vec(ba), wb, vec(sb), vec(bb))


# ----------------------------------------------------------------------------
# Kernel 2: row-tiled 3x3 conv (stride 1, pad 1, no conv bias) + folded BN, with
# optional fused ReLU, sigmoid gating (SCConv) and a second affine+ReLU (bn3).
# The 1-pixel halo is assembled in a VMEM scratch from the unpadded input block
# plus the 2-row side-car -> no wrapper-side jnp.pad / padded HBM copy.
# ----------------------------------------------------------------------------
def _make_conv3x3_kernel(relu1, has_affine2, has_gate):
    def kernel(*refs):
        x_ref, halo_ref, w_ref, s1_ref, b1_ref = refs[:5]
        pos = 5
        s2_ref = b2_ref = id_ref = up_ref = None
        if has_affine2:
            s2_ref, b2_ref = refs[pos], refs[pos + 1]
            pos += 2
        if has_gate:
            id_ref, up_ref = refs[pos], refs[pos + 1]
            pos += 2
        o_ref, xpad_ref = refs[pos], refs[pos + 1]

        th, w_sz, cout = o_ref.shape[1], o_ref.shape[2], o_ref.shape[3]
        cin = x_ref.shape[3]

        # Assemble zero-padded (TH+2, W+2, Cin) tile in VMEM (halo handled in-kernel).
        zcol = jnp.zeros((th + 2, 1, cin), jnp.float32)
        xpad_ref[:, 0:1, :] = zcol
        xpad_ref[:, w_sz + 1:w_sz + 2, :] = zcol
        xpad_ref[0:1, 1:w_sz + 1, :] = halo_ref[0, 0:1]
        xpad_ref[th + 1:th + 2, 1:w_sz + 1, :] = halo_ref[0, 1:2]
        xpad_ref[1:th + 1, 1:w_sz + 1, :] = x_ref[0]

        w = w_ref[...]
        acc = jnp.zeros((th, w_sz, cout), jnp.float32)
        # TODO(synk): combine the kw taps via pltpu.roll on the matmul result (or an
        # im2col K=9*Cin GEMM) to avoid sublane-offset input slices; perf-only.
        for kh in range(3):
            for kw in range(3):
                patch = xpad_ref[kh:kh + th, kw:kw + w_sz, :]
                acc = acc + jax.lax.dot_general(
                    patch, w[kh, kw],
                    dimension_numbers=(((2,), (0,)), ((), ())),
                    preferred_element_type=jnp.float32)

        acc = acc * s1_ref[...] + b1_ref[...]          # folded BatchNorm
        if relu1:
            acc = jnp.maximum(acc, 0.0)
        if has_gate:                                    # SCConv: sigmoid(id + up) * .
            z = id_ref[0] + up_ref[0]
            acc = acc * (1.0 / (1.0 + jnp.exp(-z)))
        if has_affine2:                                 # fused bn3 half + ReLU
            acc = jnp.maximum(acc * s2_ref[...] + b2_ref[...], 0.0)
        o_ref[0] = acc.astype(o_ref.dtype)

    return kernel


def conv3x3_bn_fused(x, w, s1, b1, *, relu1=False, affine2=None, gate=None,
                     row_tile=64):
    n, h, w_sz, cin = x.shape
    cout = w.shape[-1]
    th = _pick_divisor(h, row_tile)
    nh = h // th
    halo = _build_row_halo(x, th)
    vec = lambda v: v.reshape(1, -1)

    def _halo_index(i, j):
        return (i * nh + j, 0, 0, 0)

    in_specs = [
        pl.BlockSpec((1, th, w_sz, cin), lambda i, j: (i, j, 0, 0)),
        pl.BlockSpec((1, 2, w_sz, cin), _halo_index),
        pl.BlockSpec((3, 3, cin, cout), lambda i, j: (0, 0, 0, 0)),
        pl.BlockSpec((1, cout), lambda i, j: (0, 0)),
        pl.BlockSpec((1, cout), lambda i, j: (0, 0)),
    ]
    args = [x, halo, w, vec(s1), vec(b1)]
    if affine2 is not None:
        s2, b2 = affine2
        in_specs.append(pl.BlockSpec((1, cout), lambda i, j: (0, 0)))
        in_specs.append(pl.BlockSpec((1, cout), lambda i, j: (0, 0)))
        args += [vec(s2), vec(b2)]
    if gate is not None:
        identity, up = gate
        in_specs.append(pl.BlockSpec((1, th, w_sz, cout), lambda i, j: (i, j, 0, 0)))
        in_specs.append(pl.BlockSpec((1, th, w_sz, cout), lambda i, j: (i, j, 0, 0)))
        args += [identity, up]

    flops = 2 * 9 * n * h * w_sz * cin * cout
    transcend = n * h * w_sz * cout if gate is not None else 0
    bytes_accessed = 4 * (n * h * w_sz * cin + n * h * w_sz * cout + 9 * cin * cout
                          + (2 * n * h * w_sz * cout if gate is not None else 0))

    return pl.pallas_call(
        _make_conv3x3_kernel(relu1, affine2 is not None, gate is not None),
        out_shape=jax.ShapeDtypeStruct((n, h, w_sz, cout), jnp.float32),
        grid=(n, nh),
        in_specs=in_specs,
        out_specs=pl.BlockSpec((1, th, w_sz, cout), lambda i, j: (i, j, 0, 0)),
        scratch_shapes=[pltpu.VMEM((th + 2, w_sz + 2, cin), jnp.float32)],
        compiler_params=pltpu.CompilerParams(
            dimension_semantics=("parallel", "parallel"), **_MOSAIC),
        cost_estimate=pl.CostEstimate(flops=flops, transcendentals=transcend,
                                      bytes_accessed=bytes_accessed),
    )(*args)


# ----------------------------------------------------------------------------
# SCnet forward (stride=1; BatchNorm folded to inference-mode scale/bias)
# ----------------------------------------------------------------------------
def scnet_forward(params, x_nchw, *, row_tile=64):
    # TODO(synk): stride != 1 (strided conv3x3 in k1/k4) is not implemented; the
    # module's default stride=1 path is covered.
    p = params
    x = jnp.transpose(x_nchw, (0, 2, 3, 1)).astype(jnp.float32)      # NCHW -> NHWC
    n, h, w, cin = x.shape
    planes = p["w1a"].shape[1]

    # stems: conv1x1_a / conv1x1_b fused into one GEMM kernel (reads x once)
    a0, b0 = dual_pointwise_conv_bn_relu(
        x.reshape(n * h * w, cin),
        p["w1a"], p["s1a"], p["b1a"],
        p["w1b"], p["s1b"], p["b1b"])
    a0 = a0.reshape(n, h, w, planes)
    b0 = b0.reshape(n, h, w, planes)

    # branch a: k1 conv+BN+ReLU, then fused bn3[:planes]+ReLU (its half of the concat)
    out_a = conv3x3_bn_fused(a0, p["wk1"], p["sk1"], p["bk1"],
                             relu1=True, affine2=(p["s3a"], p["b3a"]),
                             row_tile=row_tile)

    # branch b: SCConv
    # k2 path on the 4x-pooled map (tiny); pool / nearest-upsample are thin jnp glue.
    # TODO(synk): fold AvgPool2d / nearest interpolate into the adjacent conv kernels.
    pooled = _avg_pool(b0)
    k2o = conv3x3_bn_fused(pooled, p["wk2"], p["sk2"], p["bk2"],
                           relu1=False, row_tile=row_tile)
    up = _upsample_nearest(k2o)
    # k3 conv+BN with the sigmoid(identity + up) gating fused into the epilogue
    gated = conv3x3_bn_fused(b0, p["wk3"], p["sk3"], p["bk3"],
                             relu1=False, gate=(b0, up), row_tile=row_tile)
    # k4 conv+BN+ReLU, then fused bn3[planes:]+ReLU
    out_b = conv3x3_bn_fused(gated, p["wk4"], p["sk4"], p["bk4"],
                             relu1=True, affine2=(p["s3b"], p["b3b"]),
                             row_tile=row_tile)

    out = jnp.concatenate([out_a, out_b], axis=-1)                   # channel concat
    return jnp.transpose(out, (0, 3, 1, 2))                          # back to NCHW


# ----------------------------------------------------------------------------
# Deterministic synthetic parameters (kaiming-style conv weights, BN folded)
# ----------------------------------------------------------------------------
def _fold_bn(gamma, beta, mean, var, eps=1e-5):
    scale = gamma / jnp.sqrt(var + eps)
    return scale, beta - mean * scale


def init_params(key, inplanes, planes):
    p = planes // 2                       # SCnet halves `planes` internally
    keys = iter(jax.random.split(key, 40))

    def conv_w(shape, fan_in):
        return np.sqrt(2.0 / fan_in) * jax.random.normal(next(keys), shape, jnp.float32)

    def bn(c):
        gamma = 1.0 + 0.02 * jax.random.normal(next(keys), (c,), jnp.float32)
        beta = 0.05 * jax.random.normal(next(keys), (c,), jnp.float32)
        mean = 0.1 * jax.random.normal(next(keys), (c,), jnp.float32)
        var = 0.9 + 0.2 * jax.random.uniform(next(keys), (c,), jnp.float32)
        return _fold_bn(gamma, beta, mean, var)

    params = {}
    params["w1a"] = conv_w((inplanes, p), inplanes)                 # conv1x1 as (Cin, Cout)
    params["s1a"], params["b1a"] = bn(p)
    params["w1b"] = conv_w((inplanes, p), inplanes)
    params["s1b"], params["b1b"] = bn(p)
    params["wk1"] = conv_w((3, 3, p, p), 9 * p)                     # conv3x3 as HWIO
    params["sk1"], params["bk1"] = bn(p)
    params["wk2"] = conv_w((3, 3, p, p), 9 * p)
    params["sk2"], params["bk2"] = bn(p)
    params["wk3"] = conv_w((3, 3, p, p), 9 * p)
    params["sk3"], params["bk3"] = bn(p)
    params["wk4"] = conv_w((3, 3, p, p), 9 * p)
    params["sk4"], params["bk4"] = bn(p)
    s3, b3 = bn(2 * p)                                              # bn3 over the concat
    params["s3a"], params["b3a"] = s3[:p], b3[:p]
    params["s3b"], params["b3b"] = s3[p:], b3[p:]
    return params


# ----------------------------------------------------------------------------
# Pure-JAX reference (same folded-BN semantics) for a correctness assertion
# ----------------------------------------------------------------------------
def _ref_forward(params, x_nchw):
    p = params
    x = jnp.transpose(x_nchw, (0, 2, 3, 1)).astype(jnp.float32)
    relu = lambda t: jnp.maximum(t, 0.0)

    def c1(t, w, s, b):
        return relu(jnp.einsum("nhwc,cd->nhwd", t, w) * s + b)

    def c3(t, w, s, b):
        y = jax.lax.conv_general_dilated(
            t, w, window_strides=(1, 1), padding=((1, 1), (1, 1)),
            dimension_numbers=("NHWC", "HWIO", "NHWC"))
        return y * s + b

    a = c1(x, p["w1a"], p["s1a"], p["b1a"])
    b = c1(x, p["w1b"], p["s1b"], p["b1b"])

    a = relu(c3(a, p["wk1"], p["sk1"], p["bk1"]))
    a = relu(a * p["s3a"] + p["b3a"])

    k2 = c3(_avg_pool(b), p["wk2"], p["sk2"], p["bk2"])
    gate = jax.nn.sigmoid(b + _upsample_nearest(k2))
    g = c3(b, p["wk3"], p["sk3"], p["bk3"]) * gate
    bo = relu(c3(g, p["wk4"], p["sk4"], p["bk4"]))
    bo = relu(bo * p["s3b"] + p["b3b"])

    out = jnp.concatenate([a, bo], axis=-1)
    return jnp.transpose(out, (0, 3, 1, 2))


if __name__ == "__main__":
    # SCnet(inplanes=16, planes=16, stride=1): internal planes -> 8, output channels 16
    N, inplanes, planes = 2, 16, 16
    H = W = 16

    key = jax.random.PRNGKey(0)
    k_param, k_x = jax.random.split(key)
    params = init_params(k_param, inplanes, planes)
    x = jax.random.normal(k_x, (N, inplanes, H, W), jnp.float32)      # NCHW

    fwd_tiled = jax.jit(lambda pr, xx: scnet_forward(pr, xx, row_tile=8))  # 2 row tiles -> exercises the halo path
    fwd_full = jax.jit(scnet_forward)                                      # single-tile path

    out_tiled = jax.block_until_ready(fwd_tiled(params, x))
    out_full = jax.block_until_ready(fwd_full(params, x))
    ref = jax.block_until_ready(_ref_forward(params, x))

    assert out_tiled.shape == (N, planes, H, W), out_tiled.shape
    np.testing.assert_allclose(np.asarray(out_tiled), np.asarray(ref), rtol=1e-3, atol=1e-3)
    np.testing.assert_allclose(np.asarray(out_full), np.asarray(ref), rtol=1e-3, atol=1e-3)
    print("KERNEL_OK")
</pallas_src>

<mosaic_0001>
module attributes {stable_mosaic.version = 11 : i64} {
  func.func @_dual_pointwise_kernel(%arg0: i32, %arg1: memref<256x16xf32, #tpu.memory_space<vmem>>, %arg2: memref<16x8xf32, #tpu.memory_space<vmem>>, %arg3: memref<1x8xf32, #tpu.memory_space<vmem>>, %arg4: memref<1x8xf32, #tpu.memory_space<vmem>>, %arg5: memref<16x8xf32, #tpu.memory_space<vmem>>, %arg6: memref<1x8xf32, #tpu.memory_space<vmem>>, %arg7: memref<1x8xf32, #tpu.memory_space<vmem>>, %arg8: memref<256x8xf32, #tpu.memory_space<vmem>>, %arg9: memref<256x8xf32, #tpu.memory_space<vmem>>) attributes {dimension_semantics = [#tpu.dimension_semantics<parallel>], iteration_bounds = array<i64: 2>, scalar_prefetch = 0 : i64, scratch_operands = 0 : i64, tpu.core_type = #tpu.core_type<tc>, window_params = [{transform_indices = @transform_0, window_bounds = array<i64: 256, 16>}, {pipeline_mode = #tpu.pipeline_mode<synchronous>, transform_indices = @transform_1, window_bounds = array<i64: 16, 8>}, {pipeline_mode = #tpu.pipeline_mode<synchronous>, transform_indices = @transform_2, window_bounds = array<i64: 1, 8>}, {pipeline_mode = #tpu.pipeline_mode<synchronous>, transform_indices = @transform_3, window_bounds = array<i64: 1, 8>}, {pipeline_mode = #tpu.pipeline_mode<synchronous>, transform_indices = @transform_4, window_bounds = array<i64: 16, 8>}, {pipeline_mode = #tpu.pipeline_mode<synchronous>, transform_indices = @transform_5, window_bounds = array<i64: 1, 8>}, {pipeline_mode = #tpu.pipeline_mode<synchronous>, transform_indices = @transform_6, window_bounds = array<i64: 1, 8>}, {transform_indices = @transform_7, window_bounds = array<i64: 256, 8>}, {transform_indices = @transform_8, window_bounds = array<i64: 256, 8>}]} {
    %c0 = arith.constant 0 : index
    %c0_0 = arith.constant 0 : index
    %0 = vector.load %arg1[%c0, %c0_0] : memref<256x16xf32, #tpu.memory_space<vmem>>, vector<256x16xf32>
    %c0_1 = arith.constant 0 : index
    %c0_2 = arith.constant 0 : index
    %1 = vector.load %arg2[%c0_1, %c0_2] : memref<16x8xf32, #tpu.memory_space<vmem>>, vector<16x8xf32>
    %cst = arith.constant dense<0.000000e+00> : vector<256x8xf32>
    %2 = tpu.matmul %0, %1, %cst {dimension_numbers = #tpu.dot_dimension_numbers<[1], [0], [0], [1], [0, 0, 1, 1], [], []>} : vector<256x16xf32>, vector<16x8xf32>, vector<256x8xf32> -> vector<256x8xf32>
    %c0_3 = arith.constant 0 : index
    %c0_4 = arith.constant 0 : index
    %3 = vector.load %arg3[%c0_3, %c0_4] : memref<1x8xf32, #tpu.memory_space<vmem>>, vector<1x8xf32>
    %4 = vector.broadcast %3 : vector<1x8xf32> to vector<256x8xf32>
    %5 = arith.mulf %2, %4 : vector<256x8xf32>
    %c0_5 = arith.constant 0 : index
    %c0_6 = arith.constant 0 : index
    %6 = vector.load %arg4[%c0_5, %c0_6] : memref<1x8xf32, #tpu.memory_space<vmem>>, vector<1x8xf32>
    %7 = vector.broadcast %6 : vector<1x8xf32> to vector<256x8xf32>
    %8 = arith.addf %5, %7 : vector<256x8xf32>
    %cst_7 = arith.constant 0.000000e+00 : f32
    %9 = vector.broadcast %cst_7 : f32 to vector<256x8xf32>
    %10 = arith.maximumf %8, %9 : vector<256x8xf32>
    %c0_8 = arith.constant 0 : index
    %c0_9 = arith.constant 0 : index
    %11 = vector.load %arg8[%c0_8, %c0_9] : memref<256x8xf32, #tpu.memory_space<vmem>>, vector<256x8xf32>
    tpu.vector_store %arg8[%c0_8, %c0_9], %10 {strides = array<i32>} : memref<256x8xf32, #tpu.memory_space<vmem>>, vector<256x8xf32>,
    %c0_10 = arith.constant 0 : index
    %c0_11 = arith.constant 0 : index
    %12 = vector.load %arg5[%c0_10, %c0_11] : memref<16x8xf32, #tpu.memory_space<vmem>>, vector<16x8xf32>
    %cst_12 = arith.constant dense<0.000000e+00> : vector<256x8xf32>
    %13 = tpu.matmul %0, %12, %cst_12 {dimension_numbers = #tpu.dot_dimension_numbers<[1], [0], [0], [1], [0, 0, 1, 1], [], []>} : vector<256x16xf32>, vector<16x8xf32>, vector<256x8xf32> -> vector<256x8xf32>
    %c0_13 = arith.constant 0 : index
    %c0_14 = arith.constant 0 : index
    %14 = vector.load %arg6[%c0_13, %c0_14] : memref<1x8xf32, #tpu.memory_space<vmem>>, vector<1x8xf32>
    %15 = vector.broadcast %14 : vector<1x8xf32> to vector<256x8xf32>
    %16 = arith.mulf %13, %15 : vector<256x8xf32>
    %c0_15 = arith.constant 0 : index
    %c0_16 = arith.constant 0 : index
    %17 = vector.load %arg7[%c0_15, %c0_16] : memref<1x8xf32, #tpu.memory_space<vmem>>, vector<1x8xf32>
    %18 = vector.broadcast %17 : vector<1x8xf32> to vector<256x8xf32>
    %19 = arith.addf %16, %18 : vector<256x8xf32>
    %cst_17 = arith.constant 0.000000e+00 : f32
    %20 = vector.broadcast %cst_17 : f32 to vector<256x8xf32>
    %21 = arith.maximumf %19, %20 : vector<256x8xf32>
    %c0_18 = arith.constant 0 : index
    %c0_19 = arith.constant 0 : index
    %22 = vector.load %arg9[%c0_18, %c0_19] : memref<256x8xf32, #tpu.memory_space<vmem>>, vector<256x8xf32>
    tpu.vector_store %arg9[%c0_18, %c0_19], %21 {strides = array<i32>} : memref<256x8xf32, #tpu.memory_space<vmem>>, vector<256x8xf32>,
    return
  }
  func.func @transform_0(%arg0: i32) -> (i32, i32) {
    %c0_i32 = arith.constant 0 : i32
    %c0_i32_0 = arith.constant 0 : i32
    return %arg0, %c0_i32 : i32, i32
  }
  func.func @transform_1(%arg0: i32) -> (i32, i32) {
    %c0_i32 = arith.constant 0 : i32
    %c0_i32_0 = arith.constant 0 : i32
    %c0_i32_1 = arith.constant 0 : i32
    return %c0_i32, %c0_i32_0 : i32, i32
  }
  func.func @transform_2(%arg0: i32) -> (i32, i32) {
    %c0_i32 = arith.constant 0 : i32
    %c0_i32_0 = arith.constant 0 : i32
    %c0_i32_1 = arith.constant 0 : i32
    return %c0_i32, %c0_i32_0 : i32, i32
  }
  func.func @transform_3(%arg0: i32) -> (i32, i32) {
    %c0_i32 = arith.constant 0 : i32
    %c0_i32_0 = arith.constant 0 : i32
    %c0_i32_1 = arith.constant 0 : i32
    return %c0_i32, %c0_i32_0 : i32, i32
  }
  func.func @transform_4(%arg0: i32) -> (i32, i32) {
    %c0_i32 = arith.constant 0 : i32
    %c0_i32_0 = arith.constant 0 : i32
    %c0_i32_1 = arith.constant 0 : i32
    return %c0_i32, %c0_i32_0 : i32, i32
  }
  func.func @transform_5(%arg0: i32) -> (i32, i32) {
    %c0_i32 = arith.constant 0 : i32
    %c0_i32_0 = arith.constant 0 : i32
    %c0_i32_1 = arith.constant 0 : i32
    return %c0_i32, %c0_i32_0 : i32, i32
  }
  func.func @transform_6(%arg0: i32) -> (i32, i32) {
    %c0_i32 = arith.constant 0 : i32
    %c0_i32_0 = arith.constant 0 : i32
    %c0_i32_1 = arith.constant 0 : i32
    return %c0_i32, %c0_i32_0 : i32, i32
  }
  func.func @transform_7(%arg0: i32) -> (i32, i32) {
    %c0_i32 = arith.constant 0 : i32
    %c0_i32_0 = arith.constant 0 : i32
    return %arg0, %c0_i32 : i32, i32
  }
  func.func @transform_8(%arg0: i32) -> (i32, i32) {
    %c0_i32 = arith.constant 0 : i32
    %c0_i32_0 = arith.constant 0 : i32
    return %arg0, %c0_i32 : i32, i32
  }
}

module attributes {stable_mosaic.version = 11 : i64} {
  func.func @kernel(%arg0: i32, %arg1: i32, %arg2: memref<1x4x4x8xf32, #tpu.memory_space<vmem>>, %arg3: memref<1x2x4x8xf32, #tpu.memory_space<vmem>>, %arg4: memref<3x3x8x8xf32, #tpu.memory_space<vmem>>, %arg5: memref<1x8xf32, #tpu.memory_space<vmem>>, %arg6: memref<1x8xf32, #tpu.memory_space<vmem>>, %arg7: memref<1x4x4x8xf32, #tpu.memory_space<vmem>>, %arg8: memref<6x6x8xf32, #tpu.memory_space<vmem>>) attributes {dimension_semantics = [#tpu.dimension_semantics<parallel>, #tpu.dimension_semantics<parallel>], iteration_bounds = array<i64: 2, 1>, scalar_prefetch = 0 : i64, scratch_operands = 1 : i64, tpu.core_type = #tpu.core_type<tc>, window_params = [{transform_indices = @transform_0, window_bounds = array<i64: 1, 4, 4, 8>}, {transform_indices = @transform_1, window_bounds = array<i64: 1, 2, 4, 8>}, {pipeline_mode = #tpu.pipeline_mode<synchronous>, transform_indices = @transform_2, window_bounds = array<i64: 3, 3, 8, 8>}, {pipeline_mode = #tpu.pipeline_mode<synchronous>, transform_indices = @transform_3, window_bounds = array<i64: 1, 8>}, {pipeline_mode = #tpu.pipeline_mode<synchronous>, transform_indices = @transform_4, window_bounds = array<i64: 1, 8>}, {transform_indices = @transform_5, window_bounds = array<i64: 1, 4, 4, 8>}]} {
    %cst = arith.constant 0.000000e+00 : f32
    %0 = vector.broadcast %cst : f32 to vector<6x1x8xf32>
    %c0 = arith.constant 0 : index
    %c0_0 = arith.constant 0 : index
    %c0_1 = arith.constant 0 : index
    %1 = vector.load %arg8[%c0, %c0_0, %c0_1] : memref<6x6x8xf32, #tpu.memory_space<vmem>>, vector<6x1x8xf32>
    tpu.vector_store %arg8[%c0, %c0_0, %c0_1], %0 {strides = array<i32>} : memref<6x6x8xf32, #tpu.memory_space<vmem>>, vector<6x1x8xf32>,
    %c0_2 = arith.constant 0 : index
    %c5 = arith.constant 5 : index
    %c0_3 = arith.constant 0 : index
    %2 = vector.load %arg8[%c0_2, %c5, %c0_3] : memref<6x6x8xf32, #tpu.memory_space<vmem>>, vector<6x1x8xf32>
    tpu.vector_store %arg8[%c0_2, %c5, %c0_3], %0 {strides = array<i32>} : memref<6x6x8xf32, #tpu.memory_space<vmem>>, vector<6x1x8xf32>,
    %c0_4 = arith.constant 0 : index
    %c0_5 = arith.constant 0 : index
    %c0_6 = arith.constant 0 : index
    %c0_7 = arith.constant 0 : index
    %3 = vector.load %arg3[%c0_4, %c0_5, %c0_6, %c0_7] : memref<1x2x4x8xf32, #tpu.memory_space<vmem>>, vector<1x1x4x8xf32>
    %4 = vector.shape_cast %3 : vector<1x1x4x8xf32> to vector<1x4x8xf32>
    %c0_8 = arith.constant 0 : index
    %c1 = arith.constant 1 : index
    %c0_9 = arith.constant 0 : index
    %5 = vector.load %arg8[%c0_8, %c1, %c0_9] : memref<6x6x8xf32, #tpu.memory_space<vmem>>, vector<1x4x8xf32>
    tpu.vector_store %arg8[%c0_8, %c1, %c0_9], %4 {strides = array<i32>} : memref<6x6x8xf32, #tpu.memory_space<vmem>>, vector<1x4x8xf32>,
    %c0_10 = arith.constant 0 : index
    %c1_11 = arith.constant 1 : index
    %c0_12 = arith.constant 0 : index
    %c0_13 = arith.constant 0 : index
    %6 = vector.load %arg3[%c0_10, %c1_11, %c0_12, %c0_13] : memref<1x2x4x8xf32, #tpu.memory_space<vmem>>, vector<1x1x4x8xf32>
    %7 = vector.shape_cast %6 : vector<1x1x4x8xf32> to vector<1x4x8xf32>
    %c5_14 = arith.constant 5 : index
    %c1_15 = arith.constant 1 : index
    %c0_16 = arith.constant 0 : index
    %8 = vector.load %arg8[%c5_14, %c1_15, %c0_16] : memref<6x6x8xf32, #tpu.memory_space<vmem>>, vector<1x4x8xf32>
    tpu.vector_store %arg8[%c5_14, %c1_15, %c0_16], %7 {strides = array<i32>} : memref<6x6x8xf32, #tpu.memory_space<vmem>>, vector<1x4x8xf32>,
    %c0_17 = arith.constant 0 : index
    %c0_18 = arith.constant 0 : index
    %c0_19 = arith.constant 0 : index
    %c0_20 = arith.constant 0 : index
    %9 = vector.load %arg2[%c0_17, %c0_18, %c0_19, %c0_20] : memref<1x4x4x8xf32, #tpu.memory_space<vmem>>, vector<1x4x4x8xf32>
    %10 = vector.shape_cast %9 : vector<1x4x4x8xf32> to vector<4x4x8xf32>
    %c1_21 = arith.constant 1 : index
    %c1_22 = arith.constant 1 : index
    %c0_23 = arith.constant 0 : index
    %11 = vector.load %arg8[%c1_21, %c1_22, %c0_23] : memref<6x6x8xf32, #tpu.memory_space<vmem>>, vector<4x4x8xf32>
    tpu.vector_store %arg8[%c1_21, %c1_22, %c0_23], %10 {strides = array<i32>} : memref<6x6x8xf32, #tpu.memory_space<vmem>>, vector<4x4x8xf32>,
    %c0_24 = arith.constant 0 : index
    %c0_25 = arith.constant 0 : index
    %c0_26 = arith.constant 0 : index
    %c0_27 = arith.constant 0 : index
    %12 = vector.load %arg4[%c0_24, %c0_25, %c0_26, %c0_27] : memref<3x3x8x8xf32, #tpu.memory_space<vmem>>, vector<3x3x8x8xf32>
    %cst_28 = arith.constant 0.000000e+00 : f32
    %13 = vector.broadcast %cst_28 : f32 to vector<4x4x8xf32>
    %c0_29 = arith.constant 0 : index
    %c0_30 = arith.constant 0 : index
    %c0_31 = arith.constant 0 : index
    %14 = vector.load %arg8[%c0_29, %c0_30, %c0_31] : memref<6x6x8xf32, #tpu.memory_space<vmem>>, vector<4x4x8xf32>
    %15 = vector.extract_strided_slice %12 {offsets = [0, 0, 0, 0], sizes = [1, 1, 8, 8], strides = [1, 1, 1, 1]} : vector<3x3x8x8xf32> to vector<1x1x8x8xf32>
    %16 = vector.shape_cast %15 : vector<1x1x8x8xf32> to vector<8x8xf32>
    %cst_32 = arith.constant dense<0.000000e+00> : vector<4x4x8xf32>
    %17 = tpu.matmul %14, %16, %cst_32 {dimension_numbers = #tpu.dot_dimension_numbers<[2], [0], [0, 1], [1], [0, 0, 0, 1, 1, 1], [], []>} : vector<4x4x8xf32>, vector<8x8xf32>, vector<4x4x8xf32> -> vector<4x4x8xf32>
    %18 = arith.addf %13, %17 : vector<4x4x8xf32>
    %c0_33 = arith.constant 0 : index
    %c1_34 = arith.constant 1 : index
    %c0_35 = arith.constant 0 : index
    %19 = vector.load %arg8[%c0_33, %c1_34, %c0_35] : memref<6x6x8xf32, #tpu.memory_space<vmem>>, vector<4x4x8xf32>
    %20 = vector.extract_strided_slice %12 {offsets = [0, 1, 0, 0], sizes = [1, 1, 8, 8], strides = [1, 1, 1, 1]} : vector<3x3x8x8xf32> to vector<1x1x8x8xf32>
    %21 = vector.shape_cast %20 : vector<1x1x8x8xf32> to vector<8x8xf32>
    %cst_36 = arith.constant dense<0.000000e+00> : vector<4x4x8xf32>
    %22 = tpu.matmul %19, %21, %cst_36 {dimension_numbers = #tpu.dot_dimension_numbers<[2], [0], [0, 1], [1], [0, 0, 0, 1, 1, 1], [], []>} : vector<4x4x8xf32>, vector<8x8xf32>, vector<4x4x8xf32> -> vector<4x4x8xf32>
    %23 = arith.addf %18, %22 : vector<4x4x8xf32>
    %c0_37 = arith.constant 0 : index
    %c2 = arith.constant 2 : index
    %c0_38 = arith.constant 0 : index
    %24 = vector.load %arg8[%c0_37, %c2, %c0_38] : memref<6x6x8xf32, #tpu.memory_space<vmem>>, vector<4x4x8xf32>
    %25 = vector.extract_strided_slice %12 {offsets = [0, 2, 0, 0], sizes = [1, 1, 8, 8], strides = [1, 1, 1, 1]} : vector<3x3x8x8xf32> to vector<1x1x8x8xf32>
    %26 = vector.shape_cast %25 : vector<1x1x8x8xf32> to vector<8x8xf32>
    %cst_39 = arith.constant dense<0.000000e+00> : vector<4x4x8xf32>
    %27 = tpu.matmul %24, %26, %cst_39 {dimension_numbers = #tpu.dot_dimension_numbers<[2], [0], [0, 1], [1], [0, 0, 0, 1, 1, 1], [], []>} : vector<4x4x8xf32>, vector<8x8xf32>, vector<4x4x8xf32> -> vector<4x4x8xf32>
    %28 = arith.addf %23, %27 : vector<4x4x8xf32>
    %c1_40 = arith.constant 1 : index
    %c0_41 = arith.constant 0 : index
    %c0_42 = arith.constant 0 : index
    %29 = vector.load %arg8[%c1_40, %c0_41, %c0_42] : memref<6x6x8xf32, #tpu.memory_space<vmem>>, vector<4x4x8xf32>
    %30 = vector.extract_strided_slice %12 {offsets = [1, 0, 0, 0], sizes = [1, 1, 8, 8], strides = [1, 1, 1, 1]} : vector<3x3x8x8xf32> to vector<1x1x8x8xf32>
    %31 = vector.shape_cast %30 : vector<1x1x8x8xf32> to vector<8x8xf32>
    %cst_43 = arith.constant dense<0.000000e+00> : vector<4x4x8xf32>
    %32 = tpu.matmul %29, %31, %cst_43 {dimension_numbers = #tpu.dot_dimension_numbers<[2], [0], [0, 1], [1], [0, 0, 0, 1, 1, 1], [], []>} : vector<4x4x8xf32>, vector<8x8xf32>, vector<4x4x8xf32> -> vector<4x4x8xf32>
    %33 = arith.addf %28, %32 : vector<4x4x8xf32>
    %c1_44 = arith.constant 1 : index
    %c1_45 = arith.constant 1 : index
    %c0_46 = arith.constant 0 : index
    %34 = vector.load %arg8[%c1_44, %c1_45, %c0_46] : memref<6x6x8xf32, #tpu.memory_space<vmem>>, vector<4x4x8xf32>
    %35 = vector.extract_strided_slice %12 {offsets = [1, 1, 0, 0], sizes = [1, 1, 8, 8], strides = [1, 1, 1, 1]} : vector<3x3x8x8xf32> to vector<1x1x8x8xf32>
    %36 = vector.shape_cast %35 : vector<1x1x8x8xf32> to vector<8x8xf32>
    %cst_47 = arith.constant dense<0.000000e+00> : vector<4x4x8xf32>
    %37 = tpu.matmul %34, %36, %cst_47 {dimension_numbers = #tpu.dot_dimension_numbers<[2], [0], [0, 1], [1], [0, 0, 0, 1, 1, 1], [], []>} : vector<4x4x8xf32>, vector<8x8xf32>, vector<4x4x8xf32> -> vector<4x4x8xf32>
    %38 = arith.addf %33, %37 : vector<4x4x8xf32>
    %c1_48 = arith.constant 1 : index
    %c2_49 = arith.constant 2 : index
    %c0_50 = arith.constant 0 : index
    %39 = vector.load %arg8[%c1_48, %c2_49, %c0_50] : memref<6x6x8xf32, #tpu.memory_space<vmem>>, vector<4x4x8xf32>
    %40 = vector.extract_strided_slice %12 {offsets = [1, 2, 0, 0], sizes = [1, 1, 8, 8], strides = [1, 1, 1, 1]} : vector<3x3x8x8xf32> to vector<1x1x8x8xf32>
    %41 = vector.shape_cast %40 : vector<1x1x8x8xf32> to vector<8x8xf32>
    %cst_51 = arith.constant dense<0.000000e+00> : vector<4x4x8xf32>
    %42 = tpu.matmul %39, %41, %cst_51 {dimension_numbers = #tpu.dot_dimension_numbers<[2], [0], [0, 1], [1], [0, 0, 0, 1, 1, 1], [], []>} : vector<4x4x8xf32>, vector<8x8xf32>, vector<4x4x8xf32> -> vector<4x4x8xf32>
    %43 = arith.addf %38, %42 : vector<4x4x8xf32>
    %c2_52 = arith.constant 2 : index
    %c0_53 = arith.constant 0 : index
    %c0_54 = arith.constant 0 : index
    %44 = vector.load %arg8[%c2_52, %c0_53, %c0_54] : memref<6x6x8xf32, #tpu.memory_space<vmem>>, vector<4x4x8xf32>
    %45 = vector.extract_strided_slice %12 {offsets = [2, 0, 0, 0], sizes = [1, 1, 8, 8], strides = [1, 1, 1, 1]} : vector<3x3x8x8xf32> to vector<1x1x8x8xf32>
    %46 = vector.shape_cast %45 : vector<1x1x8x8xf32> to vector<8x8xf32>
    %cst_55 = arith.constant dense<0.000000e+00> : vector<4x4x8xf32>
    %47 = tpu.matmul %44, %46, %cst_55 {dimension_numbers = #tpu.dot_dimension_numbers<[2], [0], [0, 1], [1], [0, 0, 0, 1, 1, 1], [], []>} : vector<4x4x8xf32>, vector<8x8xf32>, vector<4x4x8xf32> -> vector<4x4x8xf32>
    %48 = arith.addf %43, %47 : vector<4x4x8xf32>
    %c2_56 = arith.constant 2 : index
    %c1_57 = arith.constant 1 : index
    %c0_58 = arith.constant 0 : index
    %49 = vector.load %arg8[%c2_56, %c1_57, %c0_58] : memref<6x6x8xf32, #tpu.memory_space<vmem>>, vector<4x4x8xf32>
    %50 = vector.extract_strided_slice %12 {offsets = [2, 1, 0, 0], sizes = [1, 1, 8, 8], strides = [1, 1, 1, 1]} : vector<3x3x8x8xf32> to vector<1x1x8x8xf32>
    %51 = vector.shape_cast %50 : vector<1x1x8x8xf32> to vector<8x8xf32>
    %cst_59 = arith.constant dense<0.000000e+00> : vector<4x4x8xf32>
    %52 = tpu.matmul %49, %51, %cst_59 {dimension_numbers = #tpu.dot_dimension_numbers<[2], [0], [0, 1], [1], [0, 0, 0, 1, 1, 1], [], []>} : vector<4x4x8xf32>, vector<8x8xf32>, vector<4x4x8xf32> -> vector<4x4x8xf32>
    %53 = arith.addf %48, %52 : vector<4x4x8xf32>
    %c2_60 = arith.constant 2 : index
    %c2_61 = arith.constant 2 : index
    %c0_62 = arith.constant 0 : index
    %54 = vector.load %arg8[%c2_60, %c2_61, %c0_62] : memref<6x6x8xf32, #tpu.memory_space<vmem>>, vector<4x4x8xf32>
    %55 = vector.extract_strided_slice %12 {offsets = [2, 2, 0, 0], sizes = [1, 1, 8, 8], strides = [1, 1, 1, 1]} : vector<3x3x8x8xf32> to vector<1x1x8x8xf32>
    %56 = vector.shape_cast %55 : vector<1x1x8x8xf32> to vector<8x8xf32>
    %cst_63 = arith.constant dense<0.000000e+00> : vector<4x4x8xf32>
    %57 = tpu.matmul %54, %56, %cst_63 {dimension_numbers = #tpu.dot_dimension_numbers<[2], [0], [0, 1], [1], [0, 0, 0, 1, 1, 1], [], []>} : vector<4x4x8xf32>, vector<8x8xf32>, vector<4x4x8xf32> -> vector<4x4x8xf32>
    %58 = arith.addf %53, %57 : vector<4x4x8xf32>
    %c0_64 = arith.constant 0 : index
    %c0_65 = arith.constant 0 : index
    %59 = vector.load %arg5[%c0_64, %c0_65] : memref<1x8xf32, #tpu.memory_space<vmem>>, vector<1x8xf32>
    %60 = vector.shape_cast %59 : vector<1x8xf32> to vector<1x1x8xf32>
    %61 = vector.broadcast %60 : vector<1x1x8xf32> to vector<4x4x8xf32>
    %62 = arith.mulf %58, %61 : vector<4x4x8xf32>
    %c0_66 = arith.constant 0 : index
    %c0_67 = arith.constant 0 : index
    %63 = vector.load %arg6[%c0_66, %c0_67] : memref<1x8xf32, #tpu.memory_space<vmem>>, vector<1x8xf32>
    %64 = vector.shape_cast %63 : vector<1x8xf32> to vector<1x1x8xf32>
    %65 = vector.broadcast %64 : vector<1x1x8xf32> to vector<4x4x8xf32>
    %66 = arith.addf %62, %65 : vector<4x4x8xf32>
    %c0_68 = arith.constant 0 : index
    %c0_69 = arith.constant 0 : index
    %c0_70 = arith.constant 0 : index
    %c0_71 = arith.constant 0 : index
    %67 = vector.load %arg7[%c0_68, %c0_69, %c0_70, %c0_71] : memref<1x4x4x8xf32, #tpu.memory_space<vmem>>, vector<1x4x4x8xf32>
    %68 = vector.shape_cast %67 : vector<1x4x4x8xf32> to vector<4x4x8xf32>
    %69 = vector.shape_cast %66 : vector<4x4x8xf32> to vector<1x4x4x8xf32>
    tpu.vector_store %arg7[%c0_68, %c0_69, %c0_70, %c0_71], %69 {strides = array<i32>} : memref<1x4x4x8xf32, #tpu.memory_space<vmem>>, vector<1x4x4x8xf32>,
    return
  }
  func.func @transform_0(%arg0: i32, %arg1: i32) -> (i32, i32, i32, i32) {
    %c0_i32 = arith.constant 0 : i32
    %c0_i32_0 = arith.constant 0 : i32
    %c0_i32_1 = arith.constant 0 : i32
    return %arg0, %arg1, %c0_i32, %c0_i32_0 : i32, i32, i32, i32
  }
  func.func @transform_1(%arg0: i32, %arg1: i32) -> (i32, i32, i32, i32) {
    %c1_i32 = arith.constant 1 : i32
    %0 = arith.muli %arg0, %c1_i32 : i32
    %1 = arith.addi %0, %arg1 : i32
    %c0_i32 = arith.constant 0 : i32
    %c0_i32_0 = arith.constant 0 : i32
    %c0_i32_1 = arith.constant 0 : i32
    %c0_i32_2 = arith.constant 0 : i32
    return %1, %c0_i32, %c0_i32_0, %c0_i32_1 : i32, i32, i32, i32
  }
  func.func @transform_2(%arg0: i32, %arg1: i32) -> (i32, i32, i32, i32) {
    %c0_i32 = arith.constant 0 : i32
    %c0_i32_0 = arith.constant 0 : i32
    %c0_i32_1 = arith.constant 0 : i32
    %c0_i32_2 = arith.constant 0 : i32
    %c0_i32_3 = arith.constant 0 : i32
    return %c0_i32, %c0_i32_0, %c0_i32_1, %c0_i32_2 : i32, i32, i32, i32
  }
  func.func @transform_3(%arg0: i32, %arg1: i32) -> (i32, i32) {
    %c0_i32 = arith.constant 0 : i32
    %c0_i32_0 = arith.constant 0 : i32
    %c0_i32_1 = arith.constant 0 : i32
    return %c0_i32, %c0_i32_0 : i32, i32
  }
  func.func @transform_4(%arg0: i32, %arg1: i32) -> (i32, i32) {
    %c0_i32 = arith.constant 0 : i32
    %c0_i32_0 = arith.constant 0 : i32
    %c0_i32_1 = arith.constant 0 : i32
    return %c0_i32, %c0_i32_0 : i32, i32
  }
  func.func @transform_5(%arg0: i32, %arg1: i32) -> (i32, i32, i32, i32) {
    %c0_i32 = arith.constant 0 : i32
    %c0_i32_0 = arith.constant 0 : i32
    %c0_i32_1 = arith.constant 0 : i32
    return %arg0, %arg1, %c0_i32, %c0_i32_0 : i32, i32, i32, i32
  }
}

module attributes {stable_mosaic.version = 11 : i64} {
  func.func @kernel(%arg0: i32, %arg1: i32, %arg2: memref<1x8x16x8xf32, #tpu.memory_space<vmem>>, %arg3: memref<1x2x16x8xf32, #tpu.memory_space<vmem>>, %arg4: memref<3x3x8x8xf32, #tpu.memory_space<vmem>>, %arg5: memref<1x8xf32, #tpu.memory_space<vmem>>, %arg6: memref<1x8xf32, #tpu.memory_space<vmem>>, %arg7: memref<1x8xf32, #tpu.memory_space<vmem>>, %arg8: memref<1x8xf32, #tpu.memory_space<vmem>>, %arg9: memref<1x8x16x8xf32, #tpu.memory_space<vmem>>, %arg10: memref<10x18x8xf32, #tpu.memory_space<vmem>>) attributes {dimension_semantics = [#tpu.dimension_semantics<parallel>, #tpu.dimension_semantics<parallel>], iteration_bounds = array<i64: 2, 2>, scalar_prefetch = 0 : i64, scratch_operands = 1 : i64, tpu.core_type = #tpu.core_type<tc>, window_params = [{transform_indices = @transform_0, window_bounds = array<i64: 1, 8, 16, 8>}, {transform_indices = @transform_1, window_bounds = array<i64: 1, 2, 16, 8>}, {pipeline_mode = #tpu.pipeline_mode<synchronous>, transform_indices = @transform_2, window_bounds = array<i64: 3, 3, 8, 8>}, {pipeline_mode = #tpu.pipeline_mode<synchronous>, transform_indices = @transform_3, window_bounds = array<i64: 1, 8>}, {pipeline_mode = #tpu.pipeline_mode<synchronous>, transform_indices = @transform_4, window_bounds = array<i64: 1, 8>}, {pipeline_mode = #tpu.pipeline_mode<synchronous>, transform_indices = @transform_5, window_bounds = array<i64: 1, 8>}, {pipeline_mode = #tpu.pipeline_mode<synchronous>, transform_indices = @transform_6, window_bounds = array<i64: 1, 8>}, {transform_indices = @transform_7, window_bounds = array<i64: 1, 8, 16, 8>}]} {
    %cst = arith.constant 0.000000e+00 : f32
    %0 = vector.broadcast %cst : f32 to vector<10x1x8xf32>
    %c0 = arith.constant 0 : index
    %c0_0 = arith.constant 0 : index
    %c0_1 = arith.constant 0 : index
    %1 = vector.load %arg10[%c0, %c0_0, %c0_1] : memref<10x18x8xf32, #tpu.memory_space<vmem>>, vector<10x1x8xf32>
    tpu.vector_store %arg10[%c0, %c0_0, %c0_1], %0 {strides = array<i32>} : memref<10x18x8xf32, #tpu.memory_space<vmem>>, vector<10x1x8xf32>,
    %c0_2 = arith.constant 0 : index
    %c17 = arith.constant 17 : index
    %c0_3 = arith.constant 0 : index
    %2 = vector.load %arg10[%c0_2, %c17, %c0_3] : memref<10x18x8xf32, #tpu.memory_space<vmem>>, vector<10x1x8xf32>
    tpu.vector_store %arg10[%c0_2, %c17, %c0_3], %0 {strides = array<i32>} : memref<10x18x8xf32, #tpu.memory_space<vmem>>, vector<10x1x8xf32>,
    %c0_4 = arith.constant 0 : index
    %c0_5 = arith.constant 0 : index
    %c0_6 = arith.constant 0 : index
    %c0_7 = arith.constant 0 : index
    %3 = vector.load %arg3[%c0_4, %c0_5, %c0_6, %c0_7] : memref<1x2x16x8xf32, #tpu.memory_space<vmem>>, vector<1x1x16x8xf32>
    %4 = vector.shape_cast %3 : vector<1x1x16x8xf32> to vector<1x16x8xf32>
    %c0_8 = arith.constant 0 : index
    %c1 = arith.constant 1 : index
    %c0_9 = arith.constant 0 : index
    %5 = vector.load %arg10[%c0_8, %c1, %c0_9] : memref<10x18x8xf32, #tpu.memory_space<vmem>>, vector<1x16x8xf32>
    tpu.vector_store %arg10[%c0_8, %c1, %c0_9], %4 {strides = array<i32>} : memref<10x18x8xf32, #tpu.memory_space<vmem>>, vector<1x16x8xf32>,
    %c0_10 = arith.constant 0 : index
    %c1_11 = arith.constant 1 : index
    %c0_12 = arith.constant 0 : index
    %c0_13 = arith.constant 0 : index
    %6 = vector.load %arg3[%c0_10, %c1_11, %c0_12, %c0_13] : memref<1x2x16x8xf32, #tpu.memory_space<vmem>>, vector<1x1x16x8xf32>
    %7 = vector.shape_cast %6 : vector<1x1x16x8xf32> to vector<1x16x8xf32>
    %c9 = arith.constant 9 : index
    %c1_14 = arith.constant 1 : index
    %c0_15 = arith.constant 0 : index
    %8 = vector.load %arg10[%c9, %c1_14, %c0_15] : memref<10x18x8xf32, #tpu.memory_space<vmem>>, vector<1x16x8xf32>
    tpu.vector_store %arg10[%c9, %c1_14, %c0_15], %7 {strides = array<i32>} : memref<10x18x8xf32, #tpu.memory_space<vmem>>, vector<1x16x8xf32>,
    %c0_16 = arith.constant 0 : index
    %c0_17 = arith.constant 0 : index
    %c0_18 = arith.constant 0 : index
    %c0_19 = arith.constant 0 : index
    %9 = vector.load %arg2[%c0_16, %c0_17, %c0_18, %c0_19] : memref<1x8x16x8xf32, #tpu.memory_space<vmem>>, vector<1x8x16x8xf32>
    %10 = vector.shape_cast %9 : vector<1x8x16x8xf32> to vector<8x16x8xf32>
    %c1_20 = arith.constant 1 : index
    %c1_21 = arith.constant 1 : index
    %c0_22 = arith.constant 0 : index
    %11 = vector.load %arg10[%c1_20, %c1_21, %c0_22] : memref<10x18x8xf32, #tpu.memory_space<vmem>>, vector<8x16x8xf32>
    tpu.vector_store %arg10[%c1_20, %c1_21, %c0_22], %10 {strides = array<i32>} : memref<10x18x8xf32, #tpu.memory_space<vmem>>, vector<8x16x8xf32>,
    %c0_23 = arith.constant 0 : index
    %c0_24 = arith.constant 0 : index
    %c0_25 = arith.constant 0 : index
    %c0_26 = arith.constant 0 : index
    %12 = vector.load %arg4[%c0_23, %c0_24, %c0_25, %c0_26] : memref<3x3x8x8xf32, #tpu.memory_space<vmem>>, vector<3x3x8x8xf32>
    %cst_27 = arith.constant 0.000000e+00 : f32
    %13 = vector.broadcast %cst_27 : f32 to vector<8x16x8xf32>
    %c0_28 = arith.constant 0 : index
    %c0_29 = arith.constant 0 : index
    %c0_30 = arith.constant 0 : index
    %14 = vector.load %arg10[%c0_28, %c0_29, %c0_30] : memref<10x18x8xf32, #tpu.memory_space<vmem>>, vector<8x16x8xf32>
    %15 = vector.extract_strided_slice %12 {offsets = [0, 0, 0, 0], sizes = [1, 1, 8, 8], strides = [1, 1, 1, 1]} : vector<3x3x8x8xf32> to vector<1x1x8x8xf32>
    %16 = vector.shape_cast %15 : vector<1x1x8x8xf32> to vector<8x8xf32>
    %cst_31 = arith.constant dense<0.000000e+00> : vector<8x16x8xf32>
    %17 = tpu.matmul %14, %16, %cst_31 {dimension_numbers = #tpu.dot_dimension_numbers<[2], [0], [0, 1], [1], [0, 0, 0, 1, 1, 1], [], []>} : vector<8x16x8xf32>, vector<8x8xf32>, vector<8x16x8xf32> -> vector<8x16x8xf32>
    %18 = arith.addf %13, %17 : vector<8x16x8xf32>
    %c0_32 = arith.constant 0 : index
    %c1_33 = arith.constant 1 : index
    %c0_34 = arith.constant 0 : index
    %19 = vector.load %arg10[%c0_32, %c1_33, %c0_34] : memref<10x18x8xf32, #tpu.memory_space<vmem>>, vector<8x16x8xf32>
    %20 = vector.extract_strided_slice %12 {offsets = [0, 1, 0, 0], sizes = [1, 1, 8, 8], strides = [1, 1, 1, 1]} : vector<3x3x8x8xf32> to vector<1x1x8x8xf32>
    %21 = vector.shape_cast %20 : vector<1x1x8x8xf32> to vector<8x8xf32>
    %cst_35 = arith.constant dense<0.000000e+00> : vector<8x16x8xf32>
    %22 = tpu.matmul %19, %21, %cst_35 {dimension_numbers = #tpu.dot_dimension_numbers<[2], [0], [0, 1], [1], [0, 0, 0, 1, 1, 1], [], []>} : vector<8x16x8xf32>, vector<8x8xf32>, vector<8x16x8xf32> -> vector<8x16x8xf32>
    %23 = arith.addf %18, %22 : vector<8x16x8xf32>
    %c0_36 = arith.constant 0 : index
    %c2 = arith.constant 2 : index
    %c0_37 = arith.constant 0 : index
    %24 = vector.load %arg10[%c0_36, %c2, %c0_37] : memref<10x18x8xf32, #tpu.memory_space<vmem>>, vector<8x16x8xf32>
    %25 = vector.extract_strided_slice %12 {offsets = [0, 2, 0, 0], sizes = [1, 1, 8, 8], strides = [1, 1, 1, 1]} : vector<3x3x8x8xf32> to vector<1x1x8x8xf32>
    %26 = vector.shape_cast %25 : vector<1x1x8x8xf32> to vector<8x8xf32>
    %cst_38 = arith.constant dense<0.000000e+00> : vector<8x16x8xf32>
    %27 = tpu.matmul %24, %26, %cst_38 {dimension_numbers = #tpu.dot_dimension_numbers<[2], [0], [0, 1], [1], [0, 0, 0, 1, 1, 1], [], []>} : vector<8x16x8xf32>, vector<8x8xf32>, vector<8x16x8xf32> -> vector<8x16x8xf32>
    %28 = arith.addf %23, %27 : vector<8x16x8xf32>
    %c1_39 = arith.constant 1 : index
    %c0_40 = arith.constant 0 : index
    %c0_41 = arith.constant 0 : index
    %29 = vector.load %arg10[%c1_39, %c0_40, %c0_41] : memref<10x18x8xf32, #tpu.memory_space<vmem>>, vector<8x16x8xf32>
    %30 = vector.extract_strided_slice %12 {offsets = [1, 0, 0, 0], sizes = [1, 1, 8, 8], strides = [1, 1, 1, 1]} : vector<3x3x8x8xf32> to vector<1x1x8x8xf32>
    %31 = vector.shape_cast %30 : vector<1x1x8x8xf32> to vector<8x8xf32>
    %cst_42 = arith.constant dense<0.000000e+00> : vector<8x16x8xf32>
    %32 = tpu.matmul %29, %31, %cst_42 {dimension_numbers = #tpu.dot_dimension_numbers<[2], [0], [0, 1], [1], [0, 0, 0, 1, 1, 1], [], []>} : vector<8x16x8xf32>, vector<8x8xf32>, vector<8x16x8xf32> -> vector<8x16x8xf32>
    %33 = arith.addf %28, %32 : vector<8x16x8xf32>
    %c1_43 = arith.constant 1 : index
    %c1_44 = arith.constant 1 : index
    %c0_45 = arith.constant 0 : index
    %34 = vector.load %arg10[%c1_43, %c1_44, %c0_45] : memref<10x18x8xf32, #tpu.memory_space<vmem>>, vector<8x16x8xf32>
    %35 = vector.extract_strided_slice %12 {offsets = [1, 1, 0, 0], sizes = [1, 1, 8, 8], strides = [1, 1, 1, 1]} : vector<3x3x8x8xf32> to vector<1x1x8x8xf32>
    %36 = vector.shape_cast %35 : vector<1x1x8x8xf32> to vector<8x8xf32>
    %cst_46 = arith.constant dense<0.000000e+00> : vector<8x16x8xf32>
    %37 = tpu.matmul %34, %36, %cst_46 {dimension_numbers = #tpu.dot_dimension_numbers<[2], [0], [0, 1], [1], [0, 0, 0, 1, 1, 1], [], []>} : vector<8x16x8xf32>, vector<8x8xf32>, vector<8x16x8xf32> -> vector<8x16x8xf32>
    %38 = arith.addf %33, %37 : vector<8x16x8xf32>
    %c1_47 = arith.constant 1 : index
    %c2_48 = arith.constant 2 : index
    %c0_49 = arith.constant 0 : index
    %39 = vector.load %arg10[%c1_47, %c2_48, %c0_49] : memref<10x18x8xf32, #tpu.memory_space<vmem>>, vector<8x16x8xf32>
    %40 = vector.extract_strided_slice %12 {offsets = [1, 2, 0, 0], sizes = [1, 1, 8, 8], strides = [1, 1, 1, 1]} : vector<3x3x8x8xf32> to vector<1x1x8x8xf32>
    %41 = vector.shape_cast %40 : vector<1x1x8x8xf32> to vector<8x8xf32>
    %cst_50 = arith.constant dense<0.000000e+00> : vector<8x16x8xf32>
    %42 = tpu.matmul %39, %41, %cst_50 {dimension_numbers = #tpu.dot_dimension_numbers<[2], [0], [0, 1], [1], [0, 0, 0, 1, 1, 1], [], []>} : vector<8x16x8xf32>, vector<8x8xf32>, vector<8x16x8xf32> -> vector<8x16x8xf32>
    %43 = arith.addf %38, %42 : vector<8x16x8xf32>
    %c2_51 = arith.constant 2 : index
    %c0_52 = arith.constant 0 : index
    %c0_53 = arith.constant 0 : index
    %44 = vector.load %arg10[%c2_51, %c0_52, %c0_53] : memref<10x18x8xf32, #tpu.memory_space<vmem>>, vector<8x16x8xf32>
    %45 = vector.extract_strided_slice %12 {offsets = [2, 0, 0, 0], sizes = [1, 1, 8, 8], strides = [1, 1, 1, 1]} : vector<3x3x8x8xf32> to vector<1x1x8x8xf32>
    %46 = vector.shape_cast %45 : vector<1x1x8x8xf32> to vector<8x8xf32>
    %cst_54 = arith.constant dense<0.000000e+00> : vector<8x16x8xf32>
    %47 = tpu.matmul %44, %46, %cst_54 {dimension_numbers = #tpu.dot_dimension_numbers<[2], [0], [0, 1], [1], [0, 0, 0, 1, 1, 1], [], []>} : vector<8x16x8xf32>, vector<8x8xf32>, vector<8x16x8xf32> -> vector<8x16x8xf32>
    %48 = arith.addf %43, %47 : vector<8x16x8xf32>
    %c2_55 = arith.constant 2 : index
    %c1_56 = arith.constant 1 : index
    %c0_57 = arith.constant 0 : index
    %49 = vector.load %arg10[%c2_55, %c1_56, %c0_57] : memref<10x18x8xf32, #tpu.memory_space<vmem>>, vector<8x16x8xf32>
    %50 = vector.extract_strided_slice %12 {offsets = [2, 1, 0, 0], sizes = [1, 1, 8, 8], strides = [1, 1, 1, 1]} : vector<3x3x8x8xf32> to vector<1x1x8x8xf32>
    %51 = vector.shape_cast %50 : vector<1x1x8x8xf32> to vector<8x8xf32>
    %cst_58 = arith.constant dense<0.000000e+00> : vector<8x16x8xf32>
    %52 = tpu.matmul %49, %51, %cst_58 {dimension_numbers = #tpu.dot_dimension_numbers<[2], [0], [0, 1], [1], [0, 0, 0, 1, 1, 1], [], []>} : vector<8x16x8xf32>, vector<8x8xf32>, vector<8x16x8xf32> -> vector<8x16x8xf32>
    %53 = arith.addf %48, %52 : vector<8x16x8xf32>
    %c2_59 = arith.constant 2 : index
    %c2_60 = arith.constant 2 : index
    %c0_61 = arith.constant 0 : index
    %54 = vector.load %arg10[%c2_59, %c2_60, %c0_61] : memref<10x18x8xf32, #tpu.memory_space<vmem>>, vector<8x16x8xf32>
    %55 = vector.extract_strided_slice %12 {offsets = [2, 2, 0, 0], sizes = [1, 1, 8, 8], strides = [1, 1, 1, 1]} : vector<3x3x8x8xf32> to vector<1x1x8x8xf32>
    %56 = vector.shape_cast %55 : vector<1x1x8x8xf32> to vector<8x8xf32>
    %cst_62 = arith.constant dense<0.000000e+00> : vector<8x16x8xf32>
    %57 = tpu.matmul %54, %56, %cst_62 {dimension_numbers = #tpu.dot_dimension_numbers<[2], [0], [0, 1], [1], [0, 0, 0, 1, 1, 1], [], []>} : vector<8x16x8xf32>, vector<8x8xf32>, vector<8x16x8xf32> -> vector<8x16x8xf32>
    %58 = arith.addf %53, %57 : vector<8x16x8xf32>
    %c0_63 = arith.constant 0 : index
    %c0_64 = arith.constant 0 : index
    %59 = vector.load %arg5[%c0_63, %c0_64] : memref<1x8xf32, #tpu.memory_space<vmem>>, vector<1x8xf32>
    %60 = vector.shape_cast %59 : vector<1x8xf32> to vector<1x1x8xf32>
    %61 = vector.broadcast %60 : vector<1x1x8xf32> to vector<8x16x8xf32>
    %62 = arith.mulf %58, %61 : vector<8x16x8xf32>
    %c0_65 = arith.constant 0 : index
    %c0_66 = arith.constant 0 : index
    %63 = vector.load %arg6[%c0_65, %c0_66] : memref<1x8xf32, #tpu.memory_space<vmem>>, vector<1x8xf32>
    %64 = vector.shape_cast %63 : vector<1x8xf32> to vector<1x1x8xf32>
    %65 = vector.broadcast %64 : vector<1x1x8xf32> to vector<8x16x8xf32>
    %66 = arith.addf %62, %65 : vector<8x16x8xf32>
    %cst_67 = arith.constant 0.000000e+00 : f32
    %67 = vector.broadcast %cst_67 : f32 to vector<8x16x8xf32>
    %68 = arith.maximumf %66, %67 : vector<8x16x8xf32>
    %c0_68 = arith.constant 0 : index
    %c0_69 = arith.constant 0 : index
    %69 = vector.load %arg7[%c0_68, %c0_69] : memref<1x8xf32, #tpu.memory_space<vmem>>, vector<1x8xf32>
    %70 = vector.shape_cast %69 : vector<1x8xf32> to vector<1x1x8xf32>
    %71 = vector.broadcast %70 : vector<1x1x8xf32> to vector<8x16x8xf32>
    %72 = arith.mulf %68, %71 : vector<8x16x8xf32>
    %c0_70 = arith.constant 0 : index
    %c0_71 = arith.constant 0 : index
    %73 = vector.load %arg8[%c0_70, %c0_71] : memref<1x8xf32, #tpu.memory_space<vmem>>, vector<1x8xf32>
    %74 = vector.shape_cast %73 : vector<1x8xf32> to vector<1x1x8xf32>
    %75 = vector.broadcast %74 : vector<1x1x8xf32> to vector<8x16x8xf32>
    %76 = arith.addf %72, %75 : vector<8x16x8xf32>
    %cst_72 = arith.constant 0.000000e+00 : f32
    %77 = vector.broadcast %cst_72 : f32 to vector<8x16x8xf32>
    %78 = arith.maximumf %76, %77 : vector<8x16x8xf32>
    %c0_73 = arith.constant 0 : index
    %c0_74 = arith.constant 0 : index
    %c0_75 = arith.constant 0 : index
    %c0_76 = arith.constant 0 : index
    %79 = vector.load %arg9[%c0_73, %c0_74, %c0_75, %c0_76] : memref<1x8x16x8xf32, #tpu.memory_space<vmem>>, vector<1x8x16x8xf32>
    %80 = vector.shape_cast %79 : vector<1x8x16x8xf32> to vector<8x16x8xf32>
    %81 = vector.shape_cast %78 : vector<8x16x8xf32> to vector<1x8x16x8xf32>
    tpu.vector_store %arg9[%c0_73, %c0_74, %c0_75, %c0_76], %81 {strides = array<i32>} : memref<1x8x16x8xf32, #tpu.memory_space<vmem>>, vector<1x8x16x8xf32>,
    return
  }
  func.func @transform_0(%arg0: i32, %arg1: i32) -> (i32, i32, i32, i32) {
    %c0_i32 = arith.constant 0 : i32
    %c0_i32_0 = arith.constant 0 : i32
    %c0_i32_1 = arith.constant 0 : i32
    return %arg0, %arg1, %c0_i32, %c0_i32_0 : i32, i32, i32, i32
  }
  func.func @transform_1(%arg0: i32, %arg1: i32) -> (i32, i32, i32, i32) {
    %c2_i32 = arith.constant 2 : i32
    %0 = arith.muli %arg0, %c2_i32 : i32
    %1 = arith.addi %0, %arg1 : i32
    %c0_i32 = arith.constant 0 : i32
    %c0_i32_0 = arith.constant 0 : i32
    %c0_i32_1 = arith.constant 0 : i32
    %c0_i32_2 = arith.constant 0 : i32
    return %1, %c0_i32, %c0_i32_0, %c0_i32_1 : i32, i32, i32, i32
  }
  func.func @transform_2(%arg0: i32, %arg1: i32) -> (i32, i32, i32, i32) {
    %c0_i32 = arith.constant 0 : i32
    %c0_i32_0 = arith.constant 0 : i32
    %c0_i32_1 = arith.constant 0 : i32
    %c0_i32_2 = arith.constant 0 : i32
    %c0_i32_3 = arith.constant 0 : i32
    return %c0_i32, %c0_i32_0, %c0_i32_1, %c0_i32_2 : i32, i32, i32, i32
  }
  func.func @transform_3(%arg0: i32, %arg1: i32) -> (i32, i32) {
    %c0_i32 = arith.constant 0 : i32
    %c0_i32_0 = arith.constant 0 : i32
    %c0_i32_1 = arith.constant 0 : i32
    return %c0_i32, %c0_i32_0 : i32, i32
  }
  func.func @transform_4(%arg0: i32, %arg1: i32) -> (i32, i32) {
    %c0_i32 = arith.constant 0 : i32
    %c0_i32_0 = arith.constant 0 : i32
    %c0_i32_1 = arith.constant 0 : i32
    return %c0_i32, %c0_i32_0 : i32, i32
  }
  func.func @transform_5(%arg0: i32, %arg1: i32) -> (i32, i32) {
    %c0_i32 = arith.constant 0 : i32
    %c0_i32_0 = arith.constant 0 : i32
    %c0_i32_1 = arith.constant 0 : i32
    return %c0_i32, %c0_i32_0 : i32, i32
  }
  func.func @transform_6(%arg0: i32, %arg1: i32) -> (i32, i32) {
    %c0_i32 = arith.constant 0 : i32
    %c0_i32_0 = arith.constant 0 : i32
    %c0_i32_1 = arith.constant 0 : i32
    return %c0_i32, %c0_i32_0 : i32, i32
  }
  func.func @transform_7(%arg0: i32, %arg1: i32) -> (i32, i32, i32, i32) {
    %c0_i32 = arith.constant 0 : i32
    %c0_i32_0 = arith.constant 0 : i32
    %c0_i32_1 = arith.constant 0 : i32
    return %arg0, %arg1, %c0_i32, %c0_i32_0 : i32, i32, i32, i32
  }
}

module attributes {stable_mosaic.version = 11 : i64} {
  func.func @kernel(%arg0: i32, %arg1: i32, %arg2: memref<1x8x16x8xf32, #tpu.memory_space<vmem>>, %arg3: memref<1x2x16x8xf32, #tpu.memory_space<vmem>>, %arg4: memref<3x3x8x8xf32, #tpu.memory_space<vmem>>, %arg5: memref<1x8xf32, #tpu.memory_space<vmem>>, %arg6: memref<1x8xf32, #tpu.memory_space<vmem>>, %arg7: memref<1x8x16x8xf32, #tpu.memory_space<vmem>>, %arg8: memref<1x8x16x8xf32, #tpu.memory_space<vmem>>, %arg9: memref<1x8x16x8xf32, #tpu.memory_space<vmem>>, %arg10: memref<10x18x8xf32, #tpu.memory_space<vmem>>) attributes {dimension_semantics = [#tpu.dimension_semantics<parallel>, #tpu.dimension_semantics<parallel>], iteration_bounds = array<i64: 2, 2>, scalar_prefetch = 0 : i64, scratch_operands = 1 : i64, tpu.core_type = #tpu.core_type<tc>, window_params = [{transform_indices = @transform_0, window_bounds = array<i64: 1, 8, 16, 8>}, {transform_indices = @transform_1, window_bounds = array<i64: 1, 2, 16, 8>}, {pipeline_mode = #tpu.pipeline_mode<synchronous>, transform_indices = @transform_2, window_bounds = array<i64: 3, 3, 8, 8>}, {pipeline_mode = #tpu.pipeline_mode<synchronous>, transform_indices = @transform_3, window_bounds = array<i64: 1, 8>}, {pipeline_mode = #tpu.pipeline_mode<synchronous>, transform_indices = @transform_4, window_bounds = array<i64: 1, 8>}, {transform_indices = @transform_5, window_bounds = array<i64: 1, 8, 16, 8>}, {transform_indices = @transform_6, window_bounds = array<i64: 1, 8, 16, 8>}, {transform_indices = @transform_7, window_bounds = array<i64: 1, 8, 16, 8>}]} {
    %cst = arith.constant 0.000000e+00 : f32
    %0 = vector.broadcast %cst : f32 to vector<10x1x8xf32>
    %c0 = arith.constant 0 : index
    %c0_0 = arith.constant 0 : index
    %c0_1 = arith.constant 0 : index
    %1 = vector.load %arg10[%c0, %c0_0, %c0_1] : memref<10x18x8xf32, #tpu.memory_space<vmem>>, vector<10x1x8xf32>
    tpu.vector_store %arg10[%c0, %c0_0, %c0_1], %0 {strides = array<i32>} : memref<10x18x8xf32, #tpu.memory_space<vmem>>, vector<10x1x8xf32>,
    %c0_2 = arith.constant 0 : index
    %c17 = arith.constant 17 : index
    %c0_3 = arith.constant 0 : index
    %2 = vector.load %arg10[%c0_2, %c17, %c0_3] : memref<10x18x8xf32, #tpu.memory_space<vmem>>, vector<10x1x8xf32>
    tpu.vector_store %arg10[%c0_2, %c17, %c0_3], %0 {strides = array<i32>} : memref<10x18x8xf32, #tpu.memory_space<vmem>>, vector<10x1x8xf32>,
    %c0_4 = arith.constant 0 : index
    %c0_5 = arith.constant 0 : index
    %c0_6 = arith.constant 0 : index
    %c0_7 = arith.constant 0 : index
    %3 = vector.load %arg3[%c0_4, %c0_5, %c0_6, %c0_7] : memref<1x2x16x8xf32, #tpu.memory_space<vmem>>, vector<1x1x16x8xf32>
    %4 = vector.shape_cast %3 : vector<1x1x16x8xf32> to vector<1x16x8xf32>
    %c0_8 = arith.constant 0 : index
    %c1 = arith.constant 1 : index
    %c0_9 = arith.constant 0 : index
    %5 = vector.load %arg10[%c0_8, %c1, %c0_9] : memref<10x18x8xf32, #tpu.memory_space<vmem>>, vector<1x16x8xf32>
    tpu.vector_store %arg10[%c0_8, %c1, %c0_9], %4 {strides = array<i32>} : memref<10x18x8xf32, #tpu.memory_space<vmem>>, vector<1x16x8xf32>,
    %c0_10 = arith.constant 0 : index
    %c1_11 = arith.constant 1 : index
    %c0_12 = arith.constant 0 : index
    %c0_13 = arith.constant 0 : index
    %6 = vector.load %arg3[%c0_10, %c1_11, %c0_12, %c0_13] : memref<1x2x16x8xf32, #tpu.memory_space<vmem>>, vector<1x1x16x8xf32>
    %7 = vector.shape_cast %6 : vector<1x1x16x8xf32> to vector<1x16x8xf32>
    %c9 = arith.constant 9 : index
    %c1_14 = arith.constant 1 : index
    %c0_15 = arith.constant 0 : index
    %8 = vector.load %arg10[%c9, %c1_14, %c0_15] : memref<10x18x8xf32, #tpu.memory_space<vmem>>, vector<1x16x8xf32>
    tpu.vector_store %arg10[%c9, %c1_14, %c0_15], %7 {strides = array<i32>} : memref<10x18x8xf32, #tpu.memory_space<vmem>>, vector<1x16x8xf32>,
    %c0_16 = arith.constant 0 : index
    %c0_17 = arith.constant 0 : index
    %c0_18 = arith.constant 0 : index
    %c0_19 = arith.constant 0 : index
    %9 = vector.load %arg2[%c0_16, %c0_17, %c0_18, %c0_19] : memref<1x8x16x8xf32, #tpu.memory_space<vmem>>, vector<1x8x16x8xf32>
    %10 = vector.shape_cast %9 : vector<1x8x16x8xf32> to vector<8x16x8xf32>
    %c1_20 = arith.constant 1 : index
    %c1_21 = arith.constant 1 : index
    %c0_22 = arith.constant 0 : index
    %11 = vector.load %arg10[%c1_20, %c1_21, %c0_22] : memref<10x18x8xf32, #tpu.memory_space<vmem>>, vector<8x16x8xf32>
    tpu.vector_store %arg10[%c1_20, %c1_21, %c0_22], %10 {strides = array<i32>} : memref<10x18x8xf32, #tpu.memory_space<vmem>>, vector<8x16x8xf32>,
    %c0_23 = arith.constant 0 : index
    %c0_24 = arith.constant 0 : index
    %c0_25 = arith.constant 0 : index
    %c0_26 = arith.constant 0 : index
    %12 = vector.load %arg4[%c0_23, %c0_24, %c0_25, %c0_26] : memref<3x3x8x8xf32, #tpu.memory_space<vmem>>, vector<3x3x8x8xf32>
    %cst_27 = arith.constant 0.000000e+00 : f32
    %13 = vector.broadcast %cst_27 : f32 to vector<8x16x8xf32>
    %c0_28 = arith.constant 0 : index
    %c0_29 = arith.constant 0 : index
    %c0_30 = arith.constant 0 : index
    %14 = vector.load %arg10[%c0_28, %c0_29, %c0_30] : memref<10x18x8xf32, #tpu.memory_space<vmem>>, vector<8x16x8xf32>
    %15 = vector.extract_strided_slice %12 {offsets = [0, 0, 0, 0], sizes = [1, 1, 8, 8], strides = [1, 1, 1, 1]} : vector<3x3x8x8xf32> to vector<1x1x8x8xf32>
    %16 = vector.shape_cast %15 : vector<1x1x8x8xf32> to vector<8x8xf32>
    %cst_31 = arith.constant dense<0.000000e+00> : vector<8x16x8xf32>
    %17 = tpu.matmul %14, %16, %cst_31 {dimension_numbers = #tpu.dot_dimension_numbers<[2], [0], [0, 1], [1], [0, 0, 0, 1, 1, 1], [], []>} : vector<8x16x8xf32>, vector<8x8xf32>, vector<8x16x8xf32> -> vector<8x16x8xf32>
    %18 = arith.addf %13, %17 : vector<8x16x8xf32>
    %c0_32 = arith.constant 0 : index
    %c1_33 = arith.constant 1 : index
    %c0_34 = arith.constant 0 : index
    %19 = vector.load %arg10[%c0_32, %c1_33, %c0_34] : memref<10x18x8xf32, #tpu.memory_space<vmem>>, vector<8x16x8xf32>
    %20 = vector.extract_strided_slice %12 {offsets = [0, 1, 0, 0], sizes = [1, 1, 8, 8], strides = [1, 1, 1, 1]} : vector<3x3x8x8xf32> to vector<1x1x8x8xf32>
    %21 = vector.shape_cast %20 : vector<1x1x8x8xf32> to vector<8x8xf32>
    %cst_35 = arith.constant dense<0.000000e+00> : vector<8x16x8xf32>
    %22 = tpu.matmul %19, %21, %cst_35 {dimension_numbers = #tpu.dot_dimension_numbers<[2], [0], [0, 1], [1], [0, 0, 0, 1, 1, 1], [], []>} : vector<8x16x8xf32>, vector<8x8xf32>, vector<8x16x8xf32> -> vector<8x16x8xf32>
    %23 = arith.addf %18, %22 : vector<8x16x8xf32>
    %c0_36 = arith.constant 0 : index
    %c2 = arith.constant 2 : index
    %c0_37 = arith.constant 0 : index
    %24 = vector.load %arg10[%c0_36, %c2, %c0_37] : memref<10x18x8xf32, #tpu.memory_space<vmem>>, vector<8x16x8xf32>
    %25 = vector.extract_strided_slice %12 {offsets = [0, 2, 0, 0], sizes = [1, 1, 8, 8], strides = [1, 1, 1, 1]} : vector<3x3x8x8xf32> to vector<1x1x8x8xf32>
    %26 = vector.shape_cast %25 : vector<1x1x8x8xf32> to vector<8x8xf32>
    %cst_38 = arith.constant dense<0.000000e+00> : vector<8x16x8xf32>
    %27 = tpu.matmul %24, %26, %cst_38 {dimension_numbers = #tpu.dot_dimension_numbers<[2], [0], [0, 1], [1], [0, 0, 0, 1, 1, 1], [], []>} : vector<8x16x8xf32>, vector<8x8xf32>, vector<8x16x8xf32> -> vector<8x16x8xf32>
    %28 = arith.addf %23, %27 : vector<8x16x8xf32>
    %c1_39 = arith.constant 1 : index
    %c0_40 = arith.constant 0 : index
    %c0_41 = arith.constant 0 : index
    %29 = vector.load %arg10[%c1_39, %c0_40, %c0_41] : memref<10x18x8xf32, #tpu.memory_space<vmem>>, vector<8x16x8xf32>
    %30 = vector.extract_strided_slice %12 {offsets = [1, 0, 0, 0], sizes = [1, 1, 8, 8], strides = [1, 1, 1, 1]} : vector<3x3x8x8xf32> to vector<1x1x8x8xf32>
    %31 = vector.shape_cast %30 : vector<1x1x8x8xf32> to vector<8x8xf32>
    %cst_42 = arith.constant dense<0.000000e+00> : vector<8x16x8xf32>
    %32 = tpu.matmul %29, %31, %cst_42 {dimension_numbers = #tpu.dot_dimension_numbers<[2], [0], [0, 1], [1], [0, 0, 0, 1, 1, 1], [], []>} : vector<8x16x8xf32>, vector<8x8xf32>, vector<8x16x8xf32> -> vector<8x16x8xf32>
    %33 = arith.addf %28, %32 : vector<8x16x8xf32>
    %c1_43 = arith.constant 1 : index
    %c1_44 = arith.constant 1 : index
    %c0_45 = arith.constant 0 : index
    %34 = vector.load %arg10[%c1_43, %c1_44, %c0_45] : memref<10x18x8xf32, #tpu.memory_space<vmem>>, vector<8x16x8xf32>
    %35 = vector.extract_strided_slice %12 {offsets = [1, 1, 0, 0], sizes = [1, 1, 8, 8], strides = [1, 1, 1, 1]} : vector<3x3x8x8xf32> to vector<1x1x8x8xf32>
    %36 = vector.shape_cast %35 : vector<1x1x8x8xf32> to vector<8x8xf32>
    %cst_46 = arith.constant dense<0.000000e+00> : vector<8x16x8xf32>
    %37 = tpu.matmul %34, %36, %cst_46 {dimension_numbers = #tpu.dot_dimension_numbers<[2], [0], [0, 1], [1], [0, 0, 0, 1, 1, 1], [], []>} : vector<8x16x8xf32>, vector<8x8xf32>, vector<8x16x8xf32> -> vector<8x16x8xf32>
    %38 = arith.addf %33, %37 : vector<8x16x8xf32>
    %c1_47 = arith.constant 1 : index
    %c2_48 = arith.constant 2 : index
    %c0_49 = arith.constant 0 : index
    %39 = vector.load %arg10[%c1_47, %c2_48, %c0_49] : memref<10x18x8xf32, #tpu.memory_space<vmem>>, vector<8x16x8xf32>
    %40 = vector.extract_strided_slice %12 {offsets = [1, 2, 0, 0], sizes = [1, 1, 8, 8], strides = [1, 1, 1, 1]} : vector<3x3x8x8xf32> to vector<1x1x8x8xf32>
    %41 = vector.shape_cast %40 : vector<1x1x8x8xf32> to vector<8x8xf32>
    %cst_50 = arith.constant dense<0.000000e+00> : vector<8x16x8xf32>
    %42 = tpu.matmul %39, %41, %cst_50 {dimension_numbers = #tpu.dot_dimension_numbers<[2], [0], [0, 1], [1], [0, 0, 0, 1, 1, 1], [], []>} : vector<8x16x8xf32>, vector<8x8xf32>, vector<8x16x8xf32> -> vector<8x16x8xf32>
    %43 = arith.addf %38, %42 : vector<8x16x8xf32>
    %c2_51 = arith.constant 2 : index
    %c0_52 = arith.constant 0 : index
    %c0_53 = arith.constant 0 : index
    %44 = vector.load %arg10[%c2_51, %c0_52, %c0_53] : memref<10x18x8xf32, #tpu.memory_space<vmem>>, vector<8x16x8xf32>
    %45 = vector.extract_strided_slice %12 {offsets = [2, 0, 0, 0], sizes = [1, 1, 8, 8], strides = [1, 1, 1, 1]} : vector<3x3x8x8xf32> to vector<1x1x8x8xf32>
    %46 = vector.shape_cast %45 : vector<1x1x8x8xf32> to vector<8x8xf32>
    %cst_54 = arith.constant dense<0.000000e+00> : vector<8x16x8xf32>
    %47 = tpu.matmul %44, %46, %cst_54 {dimension_numbers = #tpu.dot_dimension_numbers<[2], [0], [0, 1], [1], [0, 0, 0, 1, 1, 1], [], []>} : vector<8x16x8xf32>, vector<8x8xf32>, vector<8x16x8xf32> -> vector<8x16x8xf32>
    %48 = arith.addf %43, %47 : vector<8x16x8xf32>
    %c2_55 = arith.constant 2 : index
    %c1_56 = arith.constant 1 : index
    %c0_57 = arith.constant 0 : index
    %49 = vector.load %arg10[%c2_55, %c1_56, %c0_57] : memref<10x18x8xf32, #tpu.memory_space<vmem>>, vector<8x16x8xf32>
    %50 = vector.extract_strided_slice %12 {offsets = [2, 1, 0, 0], sizes = [1, 1, 8, 8], strides = [1, 1, 1, 1]} : vector<3x3x8x8xf32> to vector<1x1x8x8xf32>
    %51 = vector.shape_cast %50 : vector<1x1x8x8xf32> to vector<8x8xf32>
    %cst_58 = arith.constant dense<0.000000e+00> : vector<8x16x8xf32>
    %52 = tpu.matmul %49, %51, %cst_58 {dimension_numbers = #tpu.dot_dimension_numbers<[2], [0], [0, 1], [1], [0, 0, 0, 1, 1, 1], [], []>} : vector<8x16x8xf32>, vector<8x8xf32>, vector<8x16x8xf32> -> vector<8x16x8xf32>
    %53 = arith.addf %48, %52 : vector<8x16x8xf32>
    %c2_59 = arith.constant 2 : index
    %c2_60 = arith.constant 2 : index
    %c0_61 = arith.constant 0 : index
    %54 = vector.load %arg10[%c2_59, %c2_60, %c0_61] : memref<10x18x8xf32, #tpu.memory_space<vmem>>, vector<8x16x8xf32>
    %55 = vector.extract_strided_slice %12 {offsets = [2, 2, 0, 0], sizes = [1, 1, 8, 8], strides = [1, 1, 1, 1]} : vector<3x3x8x8xf32> to vector<1x1x8x8xf32>
    %56 = vector.shape_cast %55 : vector<1x1x8x8xf32> to vector<8x8xf32>
    %cst_62 = arith.constant dense<0.000000e+00> : vector<8x16x8xf32>
    %57 = tpu.matmul %54, %56, %cst_62 {dimension_numbers = #tpu.dot_dimension_numbers<[2], [0], [0, 1], [1], [0, 0, 0, 1, 1, 1], [], []>} : vector<8x16x8xf32>, vector<8x8xf32>, vector<8x16x8xf32> -> vector<8x16x8xf32>
    %58 = arith.addf %53, %57 : vector<8x16x8xf32>
    %c0_63 = arith.constant 0 : index
    %c0_64 = arith.constant 0 : index
    %59 = vector.load %arg5[%c0_63, %c0_64] : memref<1x8xf32, #tpu.memory_space<vmem>>, vector<1x8xf32>
    %60 = vector.shape_cast %59 : vector<1x8xf32> to vector<1x1x8xf32>
    %61 = vector.broadcast %60 : vector<1x1x8xf32> to vector<8x16x8xf32>
    %62 = arith.mulf %58, %61 : vector<8x16x8xf32>
    %c0_65 = arith.constant 0 : index
    %c0_66 = arith.constant 0 : index
    %63 = vector.load %arg6[%c0_65, %c0_66] : memref<1x8xf32, #tpu.memory_space<vmem>>, vector<1x8xf32>
    %64 = vector.shape_cast %63 : vector<1x8xf32> to vector<1x1x8xf32>
    %65 = vector.broadcast %64 : vector<1x1x8xf32> to vector<8x16x8xf32>
    %66 = arith.addf %62, %65 : vector<8x16x8xf32>
    %c0_67 = arith.constant 0 : index
    %c0_68 = arith.constant 0 : index
    %c0_69 = arith.constant 0 : index
    %c0_70 = arith.constant 0 : index
    %67 = vector.load %arg7[%c0_67, %c0_68, %c0_69, %c0_70] : memref<1x8x16x8xf32, #tpu.memory_space<vmem>>, vector<1x8x16x8xf32>
    %68 = vector.shape_cast %67 : vector<1x8x16x8xf32> to vector<8x16x8xf32>
    %c0_71 = arith.constant 0 : index
    %c0_72 = arith.constant 0 : index
    %c0_73 = arith.constant 0 : index
    %c0_74 = arith.constant 0 : index
    %69 = vector.load %arg8[%c0_71, %c0_72, %c0_73, %c0_74] : memref<1x8x16x8xf32, #tpu.memory_space<vmem>>, vector<1x8x16x8xf32>
    %70 = vector.shape_cast %69 : vector<1x8x16x8xf32> to vector<8x16x8xf32>
    %71 = arith.addf %68, %70 : vector<8x16x8xf32>
    %cst_75 = arith.constant 0.000000e+00 : f32
    %72 = vector.broadcast %cst_75 : f32 to vector<8x16x8xf32>
    %73 = arith.subf %72, %71 : vector<8x16x8xf32>
    %74 = math.exp %73 : vector<8x16x8xf32>
    %cst_76 = arith.constant 1.000000e+00 : f32
    %75 = vector.broadcast %cst_76 : f32 to vector<8x16x8xf32>
    %76 = arith.addf %75, %74 : vector<8x16x8xf32>
    %cst_77 = arith.constant 1.000000e+00 : f32
    %77 = vector.broadcast %cst_77 : f32 to vector<8x16x8xf32>
    %78 = arith.divf %77, %76 : vector<8x16x8xf32>
    %79 = arith.mulf %66, %78 : vector<8x16x8xf32>
    %c0_78 = arith.constant 0 : index
    %c0_79 = arith.constant 0 : index
    %c0_80 = arith.constant 0 : index
    %c0_81 = arith.constant 0 : index
    %80 = vector.load %arg9[%c0_78, %c0_79, %c0_80, %c0_81] : memref<1x8x16x8xf32, #tpu.memory_space<vmem>>, vector<1x8x16x8xf32>
    %81 = vector.shape_cast %80 : vector<1x8x16x8xf32> to vector<8x16x8xf32>
    %82 = vector.shape_cast %79 : vector<8x16x8xf32> to vector<1x8x16x8xf32>
    tpu.vector_store %arg9[%c0_78, %c0_79, %c0_80, %c0_81], %82 {strides = array<i32>} : memref<1x8x16x8xf32, #tpu.memory_space<vmem>>, vector<1x8x16x8xf32>,
    return
  }
  func.func @transform_0(%arg0: i32, %arg1: i32) -> (i32, i32, i32, i32) {
    %c0_i32 = arith.constant 0 : i32
    %c0_i32_0 = arith.constant 0 : i32
    %c0_i32_1 = arith.constant 0 : i32
    return %arg0, %arg1, %c0_i32, %c0_i32_0 : i32, i32, i32, i32
  }
  func.func @transform_1(%arg0: i32, %arg1: i32) -> (i32, i32, i32, i32) {
    %c2_i32 = arith.constant 2 : i32
    %0 = arith.muli %arg0, %c2_i32 : i32
    %1 = arith.addi %0, %arg1 : i32
    %c0_i32 = arith.constant 0 : i32
    %c0_i32_0 = arith.constant 0 : i32
    %c0_i32_1 = arith.constant 0 : i32
    %c0_i32_2 = arith.constant 0 : i32
    return %1, %c0_i32, %c0_i32_0, %c0_i32_1 : i32, i32, i32, i32
  }
  func.func @transform_2(%arg0: i32, %arg1: i32) -> (i32, i32, i32, i32) {
    %c0_i32 = arith.constant 0 : i32
    %c0_i32_0 = arith.constant 0 : i32
    %c0_i32_1 = arith.constant 0 : i32
    %c0_i32_2 = arith.constant 0 : i32
    %c0_i32_3 = arith.constant 0 : i32
    return %c0_i32, %c0_i32_0, %c0_i32_1, %c0_i32_2 : i32, i32, i32, i32
  }
  func.func @transform_3(%arg0: i32, %arg1: i32) -> (i32, i32) {
    %c0_i32 = arith.constant 0 : i32
    %c0_i32_0 = arith.constant 0 : i32
    %c0_i32_1 = arith.constant 0 : i32
    return %c0_i32, %c0_i32_0 : i32, i32
  }
  func.func @transform_4(%arg0: i32, %arg1: i32) -> (i32, i32) {
    %c0_i32 = arith.constant 0 : i32
    %c0_i32_0 = arith.constant 0 : i32
    %c0_i32_1 = arith.constant 0 : i32
    return %c0_i32, %c0_i32_0 : i32, i32
  }
  func.func @transform_5(%arg0: i32, %arg1: i32) -> (i32, i32, i32, i32) {
    %c0_i32 = arith.constant 0 : i32
    %c0_i32_0 = arith.constant 0 : i32
    %c0_i32_1 = arith.constant 0 : i32
    return %arg0, %arg1, %c0_i32, %c0_i32_0 : i32, i32, i32, i32
  }
  func.func @transform_6(%arg0: i32, %arg1: i32) -> (i32, i32, i32, i32) {
    %c0_i32 = arith.constant 0 : i32
    %c0_i32_0 = arith.constant 0 : i32
    %c0_i32_1 = arith.constant 0 : i32
    return %arg0, %arg1, %c0_i32, %c0_i32_0 : i32, i32, i32, i32
  }
  func.func @transform_7(%arg0: i32, %arg1: i32) -> (i32, i32, i32, i32) {
    %c0_i32 = arith.constant 0 : i32
    %c0_i32_0 = arith.constant 0 : i32
    %c0_i32_1 = arith.constant 0 : i32
    return %arg0, %arg1, %c0_i32, %c0_i32_0 : i32, i32, i32, i32
  }
}

</mosaic_0001>

<llo_original>
// kernel: _lambda_.5
$region0: #{_lambda_.5}
  #allocation0 [shape = 'u32[]', space=smem, size = 0x4, offset = 0x4, fixed_abs, tag = 'smem constant byte address 0x4 - core index']
  #allocation1 [shape = 'u32[72,128]{1,0:T(1,128)}', space=vmem, size = 0x9000, scoped, tag = 'internal scratch']
  %s0 = inlined_call_operand.vmem [shape: f32[512,16], index: 0, kind: input, shape index: {}]
  %s1 = inlined_call_operand.vmem [shape: f32[16,8], index: 1, kind: input, shape index: {}]
  %s2 = inlined_call_operand.vmem [shape: f32[1,8], index: 2, kind: input, shape index: {}]
  %s3 = inlined_call_operand.vmem [shape: f32[1,8], index: 3, kind: input, shape index: {}]
  %s4 = inlined_call_operand.vmem [shape: f32[16,8], index: 4, kind: input, shape index: {}]
  %s5 = inlined_call_operand.vmem [shape: f32[1,8], index: 5, kind: input, shape index: {}]
  %s6 = inlined_call_operand.vmem [shape: f32[1,8], index: 6, kind: input, shape index: {}]
  %s7 = inlined_call_operand.vmem [shape: f32[512,8], index: 7, kind: output, shape index: {0}]
  %s8 = inlined_call_operand.vmem [shape: f32[512,8], index: 8, kind: output, shape index: {1}]
  %9 = xla_tuple %s7, %s8
  %s10 = sld [smem:[#allocation0]]
  $region69: #{_lambda_.5} parent=0
    _
  %s12 = ssub.s32 1, %s10
  %s13 = scalar_select 0, %s12, %s10
  loop: start=0, step=1, limit=4
  $region2: #{_lambda_.5} parent=0 // loop_pre_header
    _
  $region3: #{_lambda_.5} parent=0 // loop_header
    %s15 = sphi 0, %s19
    %p16 = scmp.ge.s32.totalorder %s15, 4
    %s25 = sphi 0, %s27
    %s28 = sphi 0, %s25
    %s29 = sphi 0, %s28
    %s45 = sphi 0, %s29
    %s49 = sphi 0, %s49
    %s51 = sphi 0, %s49
    %s52 = sphi 0, %s51
    %s66 = sphi 0, %s52
    %s70 = sphi 0, %s70
    %s72 = sphi 0, %s70
    %s73 = sphi 0, %s72
    %s87 = sphi 0, %s73
    %s91 = sphi 0, %s91
    %s93 = sphi 0, %s91
    %s94 = sphi 0, %s93
    %s108 = sphi 0, %s94
    %s112 = sphi 0, %s112
    %s114 = sphi 0, %s112
    %s115 = sphi 0, %s114
    %s129 = sphi 0, %s115
    %s133 = sphi 0, %s133
    %s135 = sphi 0, %s133
    %s136 = sphi 0, %s135
    %s150 = sphi 0, %s136
    %s154 = sphi 0, %s154
    %s156 = sphi 0, %s154
    %s157 = sphi 0, %s156
    %s171 = sphi 0, %s157
    %s177 = sphi 0, %s179
    %s180 = sphi 0, %s177
    %s181 = sphi 0, %s180
    %s197 = sphi 0, %s181
    %s203 = sphi 0, %s205
    %s206 = sphi 0, %s203
    %s207 = sphi 0, %s206
    %s223 = sphi 0, %s207
  $region4: #{_lambda_.5} parent=0 // loop_header_branch
    %18 = sbr.rel (%p16) target = $region8
  $region5: #{_lambda_.5} parent=0 // loop_body
    %s20 = ssub.s32 %s15, 1
    %s21 = ssub.s32 %s15, 2
    %s22 = sadd.s32 %s15, 1
    %s23 = ssub.s32 %s15, %s22
    %p24 = scmp.eq.s32.totalorder %s23, 0
    %s26 = sadd.s32 %s25, 1
    %s27 = scalar_select %p24, %s25, %s26
    %p30 = pneg %p24
    %p31 = scmp.eq.s32.totalorder %s15, 1
    %p32 = por %p30, %p31
    %p33 = scmp.ne.s32.totalorder %s25, %s28
    %p34 = scmp.eq.s32.totalorder %s15, 0
    %p35 = por %p33, %p34
    %p36 = scmp.ne.s32.totalorder %s25, %s28
    %p37 = scmp.eq.s32.totalorder %s20, 1
    %p38 = por %p36, %p37
    %p39 = scmp.ne.s32.totalorder %s28, %s29
    %p40 = scmp.eq.s32.totalorder %s20, 0
    %p41 = por %p39, %p40
    %p42 = scmp.ne.s32.totalorder %s28, %s29
    %p43 = scmp.eq.s32.totalorder %s21, 1
    %p44 = por %p42, %p43
    %p46 = scmp.ne.s32.totalorder %s29, %s45
    %p47 = scmp.eq.s32.totalorder %s21, 0
    %p48 = por %p46, %p47
    %s50 = sadd.s32 %s49, 1
    %p53 = scmp.eq.s32.totalorder %s15, 1
    %p54 = scmp.ne.s32.totalorder %s49, %s51
    %p55 = scmp.eq.s32.totalorder %s15, 0
    %p56 = por %p54, %p55
    %p57 = scmp.ne.s32.totalorder %s49, %s51
    %p58 = scmp.eq.s32.totalorder %s20, 1
    %p59 = por %p57, %p58
    %p60 = scmp.ne.s32.totalorder %s51, %s52
    %p61 = scmp.eq.s32.totalorder %s20, 0
    %p62 = por %p60, %p61
    %p63 = scmp.ne.s32.totalorder %s51, %s52
    %p64 = scmp.eq.s32.totalorder %s21, 1
    %p65 = por %p63, %p64
    %p67 = scmp.ne.s32.totalorder %s52, %s66
    %p68 = scmp.eq.s32.totalorder %s21, 0
    %p69 = por %p67, %p68
    %s71 = sadd.s32 %s70, 1
    %p74 = scmp.eq.s32.totalorder %s15, 1
    %p75 = scmp.ne.s32.totalorder %s70, %s72
    %p76 = scmp.eq.s32.totalorder %s15, 0
    %p77 = por %p75, %p76
    %p78 = scmp.ne.s32.totalorder %s70, %s72
    %p79 = scmp.eq.s32.totalorder %s20, 1
    %p80 = por %p78, %p79
    %p81 = scmp.ne.s32.totalorder %s72, %s73
    %p82 = scmp.eq.s32.totalorder %s20, 0
    %p83 = por %p81, %p82
    %p84 = scmp.ne.s32.totalorder %s72, %s73
    %p85 = scmp.eq.s32.totalorder %s21, 1
    %p86 = por %p84, %p85
    %p88 = scmp.ne.s32.totalorder %s73, %s87
    %p89 = scmp.eq.s32.totalorder %s21, 0
    %p90 = por %p88, %p89
    %s92 = sadd.s32 %s91, 1
    %p95 = scmp.eq.s32.totalorder %s15, 1
    %p96 = scmp.ne.s32.totalorder %s91, %s93
    %p97 = scmp.eq.s32.totalorder %s15, 0
    %p98 = por %p96, %p97
    %p99 = scmp.ne.s32.totalorder %s91, %s93
    %p100 = scmp.eq.s32.totalorder %s20, 1
    %p101 = por %p99, %p100
    %p102 = scmp.ne.s32.totalorder %s93, %s94
    %p103 = scmp.eq.s32.totalorder %s20, 0
    %p104 = por %p102, %p103
    %p105 = scmp.ne.s32.totalorder %s93, %s94
    %p106 = scmp.eq.s32.totalorder %s21, 1
    %p107 = por %p105, %p106
    %p109 = scmp.ne.s32.totalorder %s94, %s108
    %p110 = scmp.eq.s32.totalorder %s21, 0
    %p111 = por %p109, %p110
    %s113 = sadd.s32 %s112, 1
    %p116 = scmp.eq.s32.totalorder %s15, 1
    %p117 = scmp.ne.s32.totalorder %s112, %s114
    %p118 = scmp.eq.s32.totalorder %s15, 0
    %p119 = por %p117, %p118
    %p120 = scmp.ne.s32.totalorder %s112, %s114
    %p121 = scmp.eq.s32.totalorder %s20, 1
    %p122 = por %p120, %p121
    %p123 = scmp.ne.s32.totalorder %s114, %s115
    %p124 = scmp.eq.s32.totalorder %s20, 0
    %p125 = por %p123, %p124
    %p126 = scmp.ne.s32.totalorder %s114, %s115
    %p127 = scmp.eq.s32.totalorder %s21, 1
    %p128 = por %p126, %p127
    %p130 = scmp.ne.s32.totalorder %s115, %s129
    %p131 = scmp.eq.s32.totalorder %s21, 0
    %p132 = por %p130, %p131
    %s134 = sadd.s32 %s133, 1
    %p137 = scmp.eq.s32.totalorder %s15, 1
    %p138 = scmp.ne.s32.totalorder %s133, %s135
    %p139 = scmp.eq.s32.totalorder %s15, 0
    %p140 = por %p138, %p139
    %p141 = scmp.ne.s32.totalorder %s133, %s135
    %p142 = scmp.eq.s32.totalorder %s20, 1
    %p143 = por %p141, %p142
    %p144 = scmp.ne.s32.totalorder %s135, %s136
    %p145 = scmp.eq.s32.totalorder %s20, 0
    %p146 = por %p144, %p145
    %p147 = scmp.ne.s32.totalorder %s135, %s136
    %p148 = scmp.eq.s32.totalorder %s21, 1
    %p149 = por %p147, %p148
    %p151 = scmp.ne.s32.totalorder %s136, %s150
    %p152 = scmp.eq.s32.totalorder %s21, 0
    %p153 = por %p151, %p152
    %s155 = sadd.s32 %s154, 1
    %p158 = scmp.eq.s32.totalorder %s15, 1
    %p159 = scmp.ne.s32.totalorder %s154, %s156
    %p160 = scmp.eq.s32.totalorder %s15, 0
    %p161 = por %p159, %p160
    %p162 = scmp.ne.s32.totalorder %s154, %s156
    %p163 = scmp.eq.s32.totalorder %s20, 1
    %p164 = por %p162, %p163
    %p165 = scmp.ne.s32.totalorder %s156, %s157
    %p166 = scmp.eq.s32.totalorder %s20, 0
    %p167 = por %p165, %p166
    %p168 = scmp.ne.s32.totalorder %s156, %s157
    %p169 = scmp.eq.s32.totalorder %s21, 1
    %p170 = por %p168, %p169
    %p172 = scmp.ne.s32.totalorder %s157, %s171
    %p173 = scmp.eq.s32.totalorder %s21, 0
    %p174 = por %p172, %p173
    %s175 = ssub.s32 %s15, %s22
    %p176 = scmp.eq.s32.totalorder %s175, 0
    %s178 = sadd.s32 %s177, 1
    %s179 = scalar_select %p176, %s177, %s178
    %p182 = pneg %p176
    %p183 = scmp.eq.s32.totalorder %s15, 1
    %p184 = por %p182, %p183
    %p185 = scmp.ne.s32.totalorder %s177, %s180
    %p186 = scmp.eq.s32.totalorder %s15, 0
    %p187 = por %p185, %p186
    %p188 = scmp.ne.s32.totalorder %s177, %s180
    %p189 = scmp.eq.s32.totalorder %s20, 1
    %p190 = por %p188, %p189
    %p191 = scmp.ne.s32.totalorder %s180, %s181
    %p192 = scmp.eq.s32.totalorder %s20, 0
    %p193 = por %p191, %p192
    %p194 = scmp.ne.s32.totalorder %s180, %s181
    %p195 = scmp.eq.s32.totalorder %s21, 1
    %p196 = por %p194, %p195
    %p198 = scmp.ne.s32.totalorder %s181, %s197
    %p199 = scmp.eq.s32.totalorder %s21, 0
    %p200 = por %p198, %p199
    %s201 = ssub.s32 %s15, %s22
    %p202 = scmp.eq.s32.totalorder %s201, 0
    %s204 = sadd.s32 %s203, 1
    %s205 = scalar_select %p202, %s203, %s204
    %p208 = pneg %p202
    %p209 = scmp.eq.s32.totalorder %s15, 1
    %p210 = por %p208, %p209
    %p211 = scmp.ne.s32.totalorder %s203, %s206
    %p212 = scmp.eq.s32.totalorder %s15, 0
    %p213 = por %p211, %p212
    %p214 = scmp.ne.s32.totalorder %s203, %s206
    %p215 = scmp.eq.s32.totalorder %s20, 1
    %p216 = por %p214, %p215
    %p217 = scmp.ne.s32.totalorder %s206, %s207
    %p218 = scmp.eq.s32.totalorder %s20, 0
    %p219 = por %p217, %p218
    %p220 = scmp.ne.s32.totalorder %s206, %s207
    %p221 = scmp.eq.s32.totalorder %s21, 1
    %p222 = por %p220, %p221
    %p224 = scmp.ne.s32.totalorder %s207, %s223
    %p225 = scmp.eq.s32.totalorder %s21, 0
    %p226 = por %p224, %p225
    %p227 = scmp.le.s32.totalorder 1, %s15
    %p228 = scmp.lt.s32.totalorder %s15, 3
    %p229 = pnand %p227, %p228
    %p230 = pneg %p229
    // Predicated region
    $region9: #{_lambda_.5} parent=5 // pred_check
      _
    $region10: #{_lambda_.5} parent=5 // pred_check_branch
      %232 = sbr.rel (%p229) target = $region12
    $region11: #{_lambda_.5} parent=5 // pred_region
      %s233 = ssub.s32 %s15, 1
      // Predicated region
      $region13: #{_lambda_.5} parent=11 // pred_check
        %p234 = pneg %p62
      $region14: #{_lambda_.5} parent=11 // pred_check_branch
        %236 = sbr.rel (%p234) target = $region16
      $region15: #{_lambda_.5} parent=11 // pred_region
        _
      $region16: #{_lambda_.5} parent=11 // pred_fallthru
        _
      // Predicated region
      $region17: #{_lambda_.5} parent=11 // pred_check
        %p237 = pneg %p83
      $region18: #{_lambda_.5} parent=11 // pred_check_branch
        %239 = sbr.rel (%p237) target = $region20
      $region19: #{_lambda_.5} parent=11 // pred_region
        _
      $region20: #{_lambda_.5} parent=11 // pred_fallthru
        _
      // Predicated region
      $region21: #{_lambda_.5} parent=11 // pred_check
        %p240 = pneg %p104
      $region22: #{_lambda_.5} parent=11 // pred_check_branch
        %242 = sbr.rel (%p240) target = $region24
      $region23: #{_lambda_.5} parent=11 // pred_region
        _
      $region24: #{_lambda_.5} parent=11 // pred_fallthru
        _
      // Predicated region
      $region25: #{_lambda_.5} parent=11 // pred_check
        %p243 = pneg %p125
      $region26: #{_lambda_.5} parent=11 // pred_check_branch
        %245 = sbr.rel (%p243) target = $region28
      $region27: #{_lambda_.5} parent=11 // pred_region
        _
      $region28: #{_lambda_.5} parent=11 // pred_fallthru
        _
      // Predicated region
      $region29: #{_lambda_.5} parent=11 // pred_check
        %p246 = pneg %p146
      $region30: #{_lambda_.5} parent=11 // pred_check_branch
        %248 = sbr.rel (%p246) target = $region32
      $region31: #{_lambda_.5} parent=11 // pred_region
        _
      $region32: #{_lambda_.5} parent=11 // pred_fallthru
        _
      // Predicated region
      $region33: #{_lambda_.5} parent=11 // pred_check
        %p249 = pneg %p167
      $region34: #{_lambda_.5} parent=11 // pred_check_branch
        %251 = sbr.rel (%p249) target = $region36
      $region35: #{_lambda_.5} parent=11 // pred_region
        _
      $region36: #{_lambda_.5} parent=11 // pred_fallthru
        _
    $region12: #{_lambda_.5} parent=5 // pred_fallthru
      _
    %p252 = scmp.lt.s32.totalorder %s15, 2
    // Predicated region
    $region37: #{_lambda_.5} parent=5 // pred_check
      %p253 = pneg %p252
    $region38: #{_lambda_.5} parent=5 // pred_check_branch
      %255 = sbr.rel (%p253) target = $region40
    $region39: #{_lambda_.5} parent=5 // pred_region
      // Predicated region
      $region41: #{_lambda_.5} parent=39 // pred_check
        %p256 = pneg %p35
      $region42: #{_lambda_.5} parent=39 // pred_check_branch
        %258 = sbr.rel (%p256) target = $region44
      $region43: #{_lambda_.5} parent=39 // pred_region
        %s259 = smul.u32 32, %s15
        %p260 = scmp.lt.s32.totalorder %s259, 63
        %s261 = scalar_select %p260, %s259, 63
        %s262 = smul.addr %s261, 8
        %s263 = scalar_lea.vmem %s0, %s262
        %s264 = smul.u32 32, %s15
      $region44: #{_lambda_.5} parent=39 // pred_fallthru
        _
    $region40: #{_lambda_.5} parent=5 // pred_fallthru
      _
    %p265 = scmp.le.s32.totalorder 1, %s15
    %p266 = scmp.lt.s32.totalorder %s15, 3
    %p267 = pnand %p265, %p266
    %p268 = pneg %p267
    // Predicated region
    $region45: #{_lambda_.5} parent=5 // pred_check
      _
    $region46: #{_lambda_.5} parent=5 // pred_check_branch
      %270 = sbr.rel (%p267) target = $region48
    $region47: #{_lambda_.5} parent=5 // pred_region
      %s271 = ssub.s32 %s15, 1
      %s272 = smul.u32 32, %s20
      %p273 = scmp.lt.s32.totalorder %s272, 63
      %s274 = scalar_select %p273, %s272, 63
      %s275 = smul.addr %s274, 8
      %s276 = scalar_lea.vmem %s0, %s275
      %p277 = pneg %p41
      %p278 = pneg %p38
      %p279 = pneg %p62
      %p280 = pneg %p59
      %p281 = pneg %p83
      %p282 = pneg %p80
      %p283 = pneg %p104
      %p284 = pneg %p101
      %p285 = pneg %p125
      %p286 = pneg %p122
      %p287 = pneg %p146
      %p288 = pneg %p143
      %p289 = pneg %p167
      %p290 = pneg %p164
      %p291 = pneg %p193
      %p292 = pneg %p190
      %s293 = smul.u32 32, %s20
      %p294 = scmp.lt.s32.totalorder %s293, 63
      %s295 = scalar_select %p294, %s293, 63
      %s296 = smul.addr %s295, 8
      %s297 = scalar_lea.vmem %s7, %s296
      %p298 = pneg %p219
      %p299 = pneg %p216
      %s300 = smul.u32 32, %s20
      %p301 = scmp.lt.s32.totalorder %s300, 63
      %s302 = scalar_select %p301, %s300, 63
      %s303 = smul.addr %s302, 8
      %s304 = scalar_lea.vmem %s8, %s303
      %s305 = smul.u32 32, %s20
      %p306 = scmp.lt.s32.totalorder %s305, 63
      %s307 = scalar_select %p306, %s305, 63
      %s308 = smul.addr %s307, 8
      %s309 = scalar_lea.vmem %s0, %s308
      %s310 = smul.u32 32, %s20
      %s311 = smul.u32 32, %s20
      %p312 = scmp.lt.s32.totalorder %s311, 63
      %s313 = scalar_select %p312, %s311, 63
      %s314 = smul.addr %s313, 8
      %s315 = scalar_lea.vmem %s7, %s314
      %s316 = smul.u32 32, %s20
      %s317 = smul.u32 32, %s20
      %p318 = scmp.lt.s32.totalorder %s317, 63
      %s319 = scalar_select %p318, %s317, 63
      %s320 = smul.addr %s319, 8
      %s321 = scalar_lea.vmem %s8, %s320
      %s322 = smul.u32 32, %s20
      %v323 = vld [vmem:[%s309] sm:$0xff]
      %v324 = vld [vmem:[%s309 + $0x8] sm:$0xff]
      %v325 = vld [vmem:[%s309 + $0x10] sm:$0xff]
      %v326 = vld [vmem:[%s309 + $0x18] sm:$0xff]
      %v327 = vld [vmem:[%s309 + $0x20] sm:$0xff]
      %v328 = vld [vmem:[%s309 + $0x28] sm:$0xff]
      %v329 = vld [vmem:[%s309 + $0x30] sm:$0xff]
      %v330 = vld [vmem:[%s309 + $0x38] sm:$0xff]
      %v331 = vld [vmem:[%s309 + $0x40] sm:$0xff]
      %v332 = vld [vmem:[%s309 + $0x48] sm:$0xff]
      %v333 = vld [vmem:[%s309 + $0x50] sm:$0xff]
      %v334 = vld [vmem:[%s309 + $0x58] sm:$0xff]
      %v335 = vld [vmem:[%s309 + $0x60] sm:$0xff]
      %v336 = vld [vmem:[%s309 + $0x68] sm:$0xff]
      %v337 = vld [vmem:[%s309 + $0x70] sm:$0xff]
      %v338 = vld [vmem:[%s309 + $0x78] sm:$0xff]
      %v339 = vld [vmem:[%s309 + $0x80] sm:$0xff]
      %v340 = vld [vmem:[%s309 + $0x88] sm:$0xff]
      %v341 = vld [vmem:[%s309 + $0x90] sm:$0xff]
      %v342 = vld [vmem:[%s309 + $0x98] sm:$0xff]
      %v343 = vld [vmem:[%s309 + $0xa0] sm:$0xff]
      %v344 = vld [vmem:[%s309 + $0xa8] sm:$0xff]
      %v345 = vld [vmem:[%s309 + $0xb0] sm:$0xff]
      %v346 = vld [vmem:[%s309 + $0xb8] sm:$0xff]
      %v347 = vld [vmem:[%s309 + $0xc0] sm:$0xff]
      %v348 = vld [vmem:[%s309 + $0xc8] sm:$0xff]
      %v349 = vld [vmem:[%s309 + $0xd0] sm:$0xff]
      %v350 = vld [vmem:[%s309 + $0xd8] sm:$0xff]
      %v351 = vld [vmem:[%s309 + $0xe0] sm:$0xff]
      %v352 = vld [vmem:[%s309 + $0xe8] sm:$0xff]
      %v353 = vld [vmem:[%s309 + $0xf0] sm:$0xff]
      %v354 = vld [vmem:[%s309 + $0xf8] sm:$0xff]
      %v355 = vld [vmem:[%s1] sm:$0xff]
      %v356 = vld [vmem:[%s1 + $0x8] sm:$0xff]
      %vm357 = vcmask 130048
      %v359 = vsel %vm357, %v323, 0
      %v362 = vsel %vm357, %v324, 0
      %v365 = vsel %vm357, %v325, 0
      %v368 = vsel %vm357, %v326, 0
      %v371 = vsel %vm357, %v327, 0
      %v374 = vsel %vm357, %v328, 0
      %v377 = vsel %vm357, %v329, 0
      %v380 = vsel %vm357, %v330, 0
      %v383 = vsel %vm357, %v331, 0
      %v386 = vsel %vm357, %v332, 0
      %v389 = vsel %vm357, %v333, 0
      %v392 = vsel %vm357, %v334, 0
      %v395 = vsel %vm357, %v335, 0
      %v398 = vsel %vm357, %v336, 0
      %v401 = vsel %vm357, %v337, 0
      %v404 = vsel %vm357, %v338, 0
      %v407 = vsel %vm357, %v339, 0
      %v410 = vsel %vm357, %v340, 0
      %v413 = vsel %vm357, %v341, 0
      %v416 = vsel %vm357, %v342, 0
      %v419 = vsel %vm357, %v343, 0
      %v422 = vsel %vm357, %v344, 0
      %v425 = vsel %vm357, %v345, 0
      %v428 = vsel %vm357, %v346, 0
      %v431 = vsel %vm357, %v347, 0
      %v434 = vsel %vm357, %v348, 0
      %v437 = vsel %vm357, %v349, 0
      %v440 = vsel %vm357, %v350, 0
      %v443 = vsel %vm357, %v351, 0
      %v446 = vsel %vm357, %v352, 0
      %v449 = vsel %vm357, %v353, 0
      %v452 = vsel %vm357, %v354, 0
      %454 = vmatpush.msra.mxu0 0.0
      %455 = vmatpush.msra.mxu0 0.0
      %456 = vmatpush.msra.mxu0 0.0
      %457 = vmatpush.msra.mxu0 0.0
      %458 = vmatpush.msra.mxu0 0.0
      %459 = vmatpush.msra.mxu0 0.0
      %460 = vmatpush.msra.mxu0 0.0
      %461 = vmatpush.msra.mxu0 0.0
      %462 = vmatpush.msra.mxu0 0.0
      %463 = vmatpush.msra.mxu0 0.0
      %464 = vmatpush.msra.mxu0 0.0
      %465 = vmatpush.msra.mxu0 0.0
      %466 = vmatpush.msra.mxu0 0.0
      %467 = vmatpush.msra.mxu0 0.0
      %468 = vmatpush.msra.mxu0 %v356
      %469 = vmatpush.msra.mxu0 %v355
      %470 = vmatmul.f32.gmra.mxu0 %v359
      %v471 = vpop.f32.mrf.mxu0
      %v472 = vadd.f32 0.0, %v471
      %473 = vmatmul.f32.gmra.mxu0 %v362
      %v474 = vpop.f32.mrf.mxu0
      %v475 = vadd.f32 0.0, %v474
      %476 = vmatmul.f32.gmra.mxu0 %v365
      %v477 = vpop.f32.mrf.mxu0
      %v478 = vadd.f32 0.0, %v477
      %479 = vmatmul.f32.gmra.mxu0 %v368
      %v480 = vpop.f32.mrf.mxu0
      %v481 = vadd.f32 0.0, %v480
      %482 = vmatmul.f32.gmra.mxu0 %v371
      %v483 = vpop.f32.mrf.mxu0
      %v484 = vadd.f32 0.0, %v483
      %485 = vmatmul.f32.gmra.mxu0 %v374
      %v486 = vpop.f32.mrf.mxu0
      %v487 = vadd.f32 0.0, %v486
      %488 = vmatmul.f32.gmra.mxu0 %v377
      %v489 = vpop.f32.mrf.mxu0
      %v490 = vadd.f32 0.0, %v489
      %491 = vmatmul.f32.gmra.mxu0 %v380
      %v492 = vpop.f32.mrf.mxu0
      %v493 = vadd.f32 0.0, %v492
      %494 = vmatmul.f32.gmra.mxu0 %v383
      %v495 = vpop.f32.mrf.mxu0
      %v496 = vadd.f32 0.0, %v495
      %497 = vmatmul.f32.gmra.mxu0 %v386
      %v498 = vpop.f32.mrf.mxu0
      %v499 = vadd.f32 0.0, %v498
      %500 = vmatmul.f32.gmra.mxu0 %v389
      %v501 = vpop.f32.mrf.mxu0
      %v502 = vadd.f32 0.0, %v501
      %503 = vmatmul.f32.gmra.mxu0 %v392
      %v504 = vpop.f32.mrf.mxu0
      %v505 = vadd.f32 0.0, %v504
      %506 = vmatmul.f32.gmra.mxu0 %v395
      %v507 = vpop.f32.mrf.mxu0
      %v508 = vadd.f32 0.0, %v507
      %509 = vmatmul.f32.gmra.mxu0 %v398
      %v510 = vpop.f32.mrf.mxu0
      %v511 = vadd.f32 0.0, %v510
      %512 = vmatmul.f32.gmra.mxu0 %v401
      %v513 = vpop.f32.mrf.mxu0
      %v514 = vadd.f32 0.0, %v513
      %515 = vmatmul.f32.gmra.mxu0 %v404
      %v516 = vpop.f32.mrf.mxu0
      %v517 = vadd.f32 0.0, %v516
      %518 = vmatmul.f32.gmra.mxu0 %v407
      %v519 = vpop.f32.mrf.mxu0
      %v520 = vadd.f32 0.0, %v519
      %521 = vmatmul.f32.gmra.mxu0 %v410
      %v522 = vpop.f32.mrf.mxu0
      %v523 = vadd.f32 0.0, %v522
      %524 = vmatmul.f32.gmra.mxu0 %v413
      %v525 = vpop.f32.mrf.mxu0
      %v526 = vadd.f32 0.0, %v525
      %527 = vmatmul.f32.gmra.mxu0 %v416
      %v528 = vpop.f32.mrf.mxu0
      %v529 = vadd.f32 0.0, %v528
      %530 = vmatmul.f32.gmra.mxu0 %v419
      %v531 = vpop.f32.mrf.mxu0
      %v532 = vadd.f32 0.0, %v531
      %533 = vmatmul.f32.gmra.mxu0 %v422
      %v534 = vpop.f32.mrf.mxu0
      %v535 = vadd.f32 0.0, %v534
      %536 = vmatmul.f32.gmra.mxu0 %v425
      %v537 = vpop.f32.mrf.mxu0
      %v538 = vadd.f32 0.0, %v537
      %539 = vmatmul.f32.gmra.mxu0 %v428
      %v540 = vpop.f32.mrf.mxu0
      %v541 = vadd.f32 0.0, %v540
      %542 = vmatmul.f32.gmra.mxu0 %v431
      %v543 = vpop.f32.mrf.mxu0
      %v544 = vadd.f32 0.0, %v543
      %545 = vmatmul.f32.gmra.mxu0 %v434
      %v546 = vpop.f32.mrf.mxu0
      %v547 = vadd.f32 0.0, %v546
      %548 = vmatmul.f32.gmra.mxu0 %v437
      %v549 = vpop.f32.mrf.mxu0
      %v550 = vadd.f32 0.0, %v549
      %551 = vmatmul.f32.gmra.mxu0 %v440
      %v552 = vpop.f32.mrf.mxu0
      %v553 = vadd.f32 0.0, %v552
      %554 = vmatmul.f32.gmra.mxu0 %v443
      %v555 = vpop.f32.mrf.mxu0
      %v556 = vadd.f32 0.0, %v555
      %557 = vmatmul.f32.gmra.mxu0 %v446
      %v558 = vpop.f32.mrf.mxu0
      %v559 = vadd.f32 0.0, %v558
      %560 = vmatmul.f32.gmra.mxu0 %v449
      %v561 = vpop.f32.mrf.mxu0
      %v562 = vadd.f32 0.0, %v561
      %563 = vmatmul.f32.gmra.mxu0 %v452
      %v564 = vpop.f32.mrf.mxu0
      %v565 = vadd.f32 0.0, %v564
      %566 = vdwg.mxu0
      %v567 = vld [vmem:[%s2] sm:$0x1]
      %v569 = vperm.slane %v567, 0
      %v571 = vmul.f32 %v472, %v569
      %v572 = vmul.f32 %v475, %v569
      %v573 = vmul.f32 %v478, %v569
      %v574 = vmul.f32 %v481, %v569
      %v575 = vmul.f32 %v484, %v569
      %v576 = vmul.f32 %v487, %v569
      %v577 = vmul.f32 %v490, %v569
      %v578 = vmul.f32 %v493, %v569
      %v579 = vmul.f32 %v496, %v569
      %v580 = vmul.f32 %v499, %v569
      %v581 = vmul.f32 %v502, %v569
      %v582 = vmul.f32 %v505, %v569
      %v583 = vmul.f32 %v508, %v569
      %v584 = vmul.f32 %v511, %v569
      %v585 = vmul.f32 %v514, %v569
      %v586 = vmul.f32 %v517, %v569
      %v587 = vmul.f32 %v520, %v569
      %v588 = vmul.f32 %v523, %v569
      %v589 = vmul.f32 %v526, %v569
      %v590 = vmul.f32 %v529, %v569
      %v591 = vmul.f32 %v532, %v569
      %v592 = vmul.f32 %v535, %v569
      %v593 = vmul.f32 %v538, %v569
      %v594 = vmul.f32 %v541, %v569
      %v595 = vmul.f32 %v544, %v569
      %v596 = vmul.f32 %v547, %v569
      %v597 = vmul.f32 %v550, %v569
      %v598 = vmul.f32 %v553, %v569
      %v599 = vmul.f32 %v556, %v569
      %v600 = vmul.f32 %v559, %v569
      %v601 = vmul.f32 %v562, %v569
      %v602 = vmul.f32 %v565, %v569
      %v603 = vld [vmem:[%s3] sm:$0x1]
      %v605 = vperm.slane %v603, 0
      %v607 = vadd.f32 %v571, %v605
      %v608 = vadd.f32 %v572, %v605
      %v609 = vadd.f32 %v573, %v605
      %v610 = vadd.f32 %v574, %v605
      %v611 = vadd.f32 %v575, %v605
      %v612 = vadd.f32 %v576, %v605
      %v613 = vadd.f32 %v577, %v605
      %v614 = vadd.f32 %v578, %v605
      %v615 = vadd.f32 %v579, %v605
      %v616 = vadd.f32 %v580, %v605
      %v617 = vadd.f32 %v581, %v605
      %v618 = vadd.f32 %v582, %v605
      %v619 = vadd.f32 %v583, %v605
      %v620 = vadd.f32 %v584, %v605
      %v621 = vadd.f32 %v585, %v605
      %v622 = vadd.f32 %v586, %v605
      %v623 = vadd.f32 %v587, %v605
      %v624 = vadd.f32 %v588, %v605
      %v625 = vadd.f32 %v589, %v605
      %v626 = vadd.f32 %v590, %v605
      %v627 = vadd.f32 %v591, %v605
      %v628 = vadd.f32 %v592, %v605
      %v629 = vadd.f32 %v593, %v605
      %v630 = vadd.f32 %v594, %v605
      %v631 = vadd.f32 %v595, %v605
      %v632 = vadd.f32 %v596, %v605
      %v633 = vadd.f32 %v597, %v605
      %v634 = vadd.f32 %v598, %v605
      %v635 = vadd.f32 %v599, %v605
      %v636 = vadd.f32 %v600, %v605
      %v637 = vadd.f32 %v601, %v605
      %v638 = vadd.f32 %v602, %v605
      %v639 = vmax.f32 %v607, 0.0
      %v640 = vmax.f32 %v608, 0.0
      %v641 = vmax.f32 %v609, 0.0
      %v642 = vmax.f32 %v610, 0.0
      %v643 = vmax.f32 %v611, 0.0
      %v644 = vmax.f32 %v612, 0.0
      %v645 = vmax.f32 %v613, 0.0
      %v646 = vmax.f32 %v614, 0.0
      %v647 = vmax.f32 %v615, 0.0
      %v648 = vmax.f32 %v616, 0.0
      %v649 = vmax.f32 %v617, 0.0
      %v650 = vmax.f32 %v618, 0.0
      %v651 = vmax.f32 %v619, 0.0
      %v652 = vmax.f32 %v620, 0.0
      %v653 = vmax.f32 %v621, 0.0
      %v654 = vmax.f32 %v622, 0.0
      %v655 = vmax.f32 %v623, 0.0
      %v656 = vmax.f32 %v624, 0.0
      %v657 = vmax.f32 %v625, 0.0
      %v658 = vmax.f32 %v626, 0.0
      %v659 = vmax.f32 %v627, 0.0
      %v660 = vmax.f32 %v628, 0.0
      %v661 = vmax.f32 %v629, 0.0
      %v662 = vmax.f32 %v630, 0.0
      %v663 = vmax.f32 %v631, 0.0
      %v664 = vmax.f32 %v632, 0.0
      %v665 = vmax.f32 %v633, 0.0
      %v666 = vmax.f32 %v634, 0.0
      %v667 = vmax.f32 %v635, 0.0
      %v668 = vmax.f32 %v636, 0.0
      %v669 = vmax.f32 %v637, 0.0
      %v670 = vmax.f32 %v638, 0.0
      %vm671 = vcmask 64512
      %672 = vst.msk [vmem:[%s315] sm:$0xff] %vm671, %v639
      %673 = vst.msk [vmem:[%s315 + $0x8] sm:$0xff] %vm671, %v640
      %674 = vst.msk [vmem:[%s315 + $0x10] sm:$0xff] %vm671, %v641
      %675 = vst.msk [vmem:[%s315 + $0x18] sm:$0xff] %vm671, %v642
      %676 = vst.msk [vmem:[%s315 + $0x20] sm:$0xff] %vm671, %v643
      %677 = vst.msk [vmem:[%s315 + $0x28] sm:$0xff] %vm671, %v644
      %678 = vst.msk [vmem:[%s315 + $0x30] sm:$0xff] %vm671, %v645
      %679 = vst.msk [vmem:[%s315 + $0x38] sm:$0xff] %vm671, %v646
      %680 = vst.msk [vmem:[%s315 + $0x40] sm:$0xff] %vm671, %v647
      %681 = vst.msk [vmem:[%s315 + $0x48] sm:$0xff] %vm671, %v648
      %682 = vst.msk [vmem:[%s315 + $0x50] sm:$0xff] %vm671, %v649
      %683 = vst.msk [vmem:[%s315 + $0x58] sm:$0xff] %vm671, %v650
      %684 = vst.msk [vmem:[%s315 + $0x60] sm:$0xff] %vm671, %v651
      %685 = vst.msk [vmem:[%s315 + $0x68] sm:$0xff] %vm671, %v652
      %686 = vst.msk [vmem:[%s315 + $0x70] sm:$0xff] %vm671, %v653
      %687 = vst.msk [vmem:[%s315 + $0x78] sm:$0xff] %vm671, %v654
      %688 = vst.msk [vmem:[%s315 + $0x80] sm:$0xff] %vm671, %v655
      %689 = vst.msk [vmem:[%s315 + $0x88] sm:$0xff] %vm671, %v656
      %690 = vst.msk [vmem:[%s315 + $0x90] sm:$0xff] %vm671, %v657
      %691 = vst.msk [vmem:[%s315 + $0x98] sm:$0xff] %vm671, %v658
      %692 = vst.msk [vmem:[%s315 + $0xa0] sm:$0xff] %vm671, %v659
      %693 = vst.msk [vmem:[%s315 + $0xa8] sm:$0xff] %vm671, %v660
      %694 = vst.msk [vmem:[%s315 + $0xb0] sm:$0xff] %vm671, %v661
      %695 = vst.msk [vmem:[%s315 + $0xb8] sm:$0xff] %vm671, %v662
      %696 = vst.msk [vmem:[%s315 + $0xc0] sm:$0xff] %vm671, %v663
      %697 = vst.msk [vmem:[%s315 + $0xc8] sm:$0xff] %vm671, %v664
      %698 = vst.msk [vmem:[%s315 + $0xd0] sm:$0xff] %vm671, %v665
      %699 = vst.msk [vmem:[%s315 + $0xd8] sm:$0xff] %vm671, %v666
      %700 = vst.msk [vmem:[%s315 + $0xe0] sm:$0xff] %vm671, %v667
      %701 = vst.msk [vmem:[%s315 + $0xe8] sm:$0xff] %vm671, %v668
      %702 = vst.msk [vmem:[%s315 + $0xf0] sm:$0xff] %vm671, %v669
      %703 = vst.msk [vmem:[%s315 + $0xf8] sm:$0xff] %vm671, %v670
      %v704 = vld [vmem:[%s4] sm:$0xff]
      %v705 = vld [vmem:[%s4 + $0x8] sm:$0xff]
      %706 = vmatpush.msra.mxu0 0.0
      %707 = vmatpush.msra.mxu0 0.0
      %708 = vmatpush.msra.mxu0 0.0
      %709 = vmatpush.msra.mxu0 0.0
      %710 = vmatpush.msra.mxu0 0.0
      %711 = vmatpush.msra.mxu0 0.0
      %712 = vmatpush.msra.mxu0 0.0
      %713 = vmatpush.msra.mxu0 0.0
      %714 = vmatpush.msra.mxu0 0.0
      %715 = vmatpush.msra.mxu0 0.0
      %716 = vmatpush.msra.mxu0 0.0
      %717 = vmatpush.msra.mxu0 0.0
      %718 = vmatpush.msra.mxu0 0.0
      %719 = vmatpush.msra.mxu0 0.0
      %720 = vmatpush.msra.mxu0 %v705
      %721 = vmatpush.msra.mxu0 %v704
      %722 = vmatmul.f32.gmra.mxu0 %v359
      %v723 = vpop.f32.mrf.mxu0
      %v724 = vadd.f32 0.0, %v723
      %725 = vmatmul.f32.gmra.mxu0 %v362
      %v726 = vpop.f32.mrf.mxu0
      %v727 = vadd.f32 0.0, %v726
      %728 = vmatmul.f32.gmra.mxu0 %v365
      %v729 = vpop.f32.mrf.mxu0
      %v730 = vadd.f32 0.0, %v729
      %731 = vmatmul.f32.gmra.mxu0 %v368
      %v732 = vpop.f32.mrf.mxu0
      %v733 = vadd.f32 0.0, %v732
      %734 = vmatmul.f32.gmra.mxu0 %v371
      %v735 = vpop.f32.mrf.mxu0
      %v736 = vadd.f32 0.0, %v735
      %737 = vmatmul.f32.gmra.mxu0 %v374
      %v738 = vpop.f32.mrf.mxu0
      %v739 = vadd.f32 0.0, %v738
      %740 = vmatmul.f32.gmra.mxu0 %v377
      %v741 = vpop.f32.mrf.mxu0
      %v742 = vadd.f32 0.0, %v741
      %743 = vmatmul.f32.gmra.mxu0 %v380
      %v744 = vpop.f32.mrf.mxu0
      %v745 = vadd.f32 0.0, %v744
      %746 = vmatmul.f32.gmra.mxu0 %v383
      %v747 = vpop.f32.mrf.mxu0
      %v748 = vadd.f32 0.0, %v747
      %749 = vmatmul.f32.gmra.mxu0 %v386
      %v750 = vpop.f32.mrf.mxu0
      %v751 = vadd.f32 0.0, %v750
      %752 = vmatmul.f32.gmra.mxu0 %v389
      %v753 = vpop.f32.mrf.mxu0
      %v754 = vadd.f32 0.0, %v753
      %755 = vmatmul.f32.gmra.mxu0 %v392
      %v756 = vpop.f32.mrf.mxu0
      %v757 = vadd.f32 0.0, %v756
      %758 = vmatmul.f32.gmra.mxu0 %v395
      %v759 = vpop.f32.mrf.mxu0
      %v760 = vadd.f32 0.0, %v759
      %761 = vmatmul.f32.gmra.mxu0 %v398
      %v762 = vpop.f32.mrf.mxu0
      %v763 = vadd.f32 0.0, %v762
      %764 = vmatmul.f32.gmra.mxu0 %v401
      %v765 = vpop.f32.mrf.mxu0
      %v766 = vadd.f32 0.0, %v765
      %767 = vmatmul.f32.gmra.mxu0 %v404
      %v768 = vpop.f32.mrf.mxu0
      %v769 = vadd.f32 0.0, %v768
      %770 = vmatmul.f32.gmra.mxu0 %v407
      %v771 = vpop.f32.mrf.mxu0
      %v772 = vadd.f32 0.0, %v771
      %773 = vmatmul.f32.gmra.mxu0 %v410
      %v774 = vpop.f32.mrf.mxu0
      %v775 = vadd.f32 0.0, %v774
      %776 = vmatmul.f32.gmra.mxu0 %v413
      %v777 = vpop.f32.mrf.mxu0
      %v778 = vadd.f32 0.0, %v777
      %779 = vmatmul.f32.gmra.mxu0 %v416
      %v780 = vpop.f32.mrf.mxu0
      %v781 = vadd.f32 0.0, %v780
      %782 = vmatmul.f32.gmra.mxu0 %v419
      %v783 = vpop.f32.mrf.mxu0
      %v784 = vadd.f32 0.0, %v783
      %785 = vmatmul.f32.gmra.mxu0 %v422
      %v786 = vpop.f32.mrf.mxu0
      %v787 = vadd.f32 0.0, %v786
      %788 = vmatmul.f32.gmra.mxu0 %v425
      %v789 = vpop.f32.mrf.mxu0
      %v790 = vadd.f32 0.0, %v789
      %791 = vmatmul.f32.gmra.mxu0 %v428
      %v792 = vpop.f32.mrf.mxu0
      %v793 = vadd.f32 0.0, %v792
      %794 = vmatmul.f32.gmra.mxu0 %v431
      %v795 = vpop.f32.mrf.mxu0
      %v796 = vadd.f32 0.0, %v795
      %797 = vmatmul.f32.gmra.mxu0 %v434
      %v798 = vpop.f32.mrf.mxu0
      %v799 = vadd.f32 0.0, %v798
      %800 = vmatmul.f32.gmra.mxu0 %v437
      %v801 = vpop.f32.mrf.mxu0
      %v802 = vadd.f32 0.0, %v801
      %803 = vmatmul.f32.gmra.mxu0 %v440
      %v804 = vpop.f32.mrf.mxu0
      %v805 = vadd.f32 0.0, %v804
      %806 = vmatmul.f32.gmra.mxu0 %v443
      %v807 = vpop.f32.mrf.mxu0
      %v808 = vadd.f32 0.0, %v807
      %809 = vmatmul.f32.gmra.mxu0 %v446
      %v810 = vpop.f32.mrf.mxu0
      %v811 = vadd.f32 0.0, %v810
      %812 = vmatmul.f32.gmra.mxu0 %v449
      %v813 = vpop.f32.mrf.mxu0
      %v814 = vadd.f32 0.0, %v813
      %815 = vmatmul.f32.gmra.mxu0 %v452
      %v816 = vpop.f32.mrf.mxu0
      %v817 = vadd.f32 0.0, %v816
      %818 = vdwg.mxu0
      %v819 = vld [vmem:[%s5] sm:$0x1]
      %v821 = vperm.slane %v819, 0
      %v823 = vmul.f32 %v724, %v821
      %v824 = vmul.f32 %v727, %v821
      %v825 = vmul.f32 %v730, %v821
      %v826 = vmul.f32 %v733, %v821
      %v827 = vmul.f32 %v736, %v821
      %v828 = vmul.f32 %v739, %v821
      %v829 = vmul.f32 %v742, %v821
      %v830 = vmul.f32 %v745, %v821
      %v831 = vmul.f32 %v748, %v821
      %v832 = vmul.f32 %v751, %v821
      %v833 = vmul.f32 %v754, %v821
      %v834 = vmul.f32 %v757, %v821
      %v835 = vmul.f32 %v760, %v821
      %v836 = vmul.f32 %v763, %v821
      %v837 = vmul.f32 %v766, %v821
      %v838 = vmul.f32 %v769, %v821
      %v839 = vmul.f32 %v772, %v821
      %v840 = vmul.f32 %v775, %v821
      %v841 = vmul.f32 %v778, %v821
      %v842 = vmul.f32 %v781, %v821
      %v843 = vmul.f32 %v784, %v821
      %v844 = vmul.f32 %v787, %v821
      %v845 = vmul.f32 %v790, %v821
      %v846 = vmul.f32 %v793, %v821
      %v847 = vmul.f32 %v796, %v821
      %v848 = vmul.f32 %v799, %v821
      %v849 = vmul.f32 %v802, %v821
      %v850 = vmul.f32 %v805, %v821
      %v851 = vmul.f32 %v808, %v821
      %v852 = vmul.f32 %v811, %v821
      %v853 = vmul.f32 %v814, %v821
      %v854 = vmul.f32 %v817, %v821
      %v855 = vld [vmem:[%s6] sm:$0x1]
      %v857 = vperm.slane %v855, 0
      %v859 = vadd.f32 %v823, %v857
      %v860 = vadd.f32 %v824, %v857
      %v861 = vadd.f32 %v825, %v857
      %v862 = vadd.f32 %v826, %v857
      %v863 = vadd.f32 %v827, %v857
      %v864 = vadd.f32 %v828, %v857
      %v865 = vadd.f32 %v829, %v857
      %v866 = vadd.f32 %v830, %v857
      %v867 = vadd.f32 %v831, %v857
      %v868 = vadd.f32 %v832, %v857
      %v869 = vadd.f32 %v833, %v857
      %v870 = vadd.f32 %v834, %v857
      %v871 = vadd.f32 %v835, %v857
      %v872 = vadd.f32 %v836, %v857
      %v873 = vadd.f32 %v837, %v857
      %v874 = vadd.f32 %v838, %v857
      %v875 = vadd.f32 %v839, %v857
      %v876 = vadd.f32 %v840, %v857
      %v877 = vadd.f32 %v841, %v857
      %v878 = vadd.f32 %v842, %v857
      %v879 = vadd.f32 %v843, %v857
      %v880 = vadd.f32 %v844, %v857
      %v881 = vadd.f32 %v845, %v857
      %v882 = vadd.f32 %v846, %v857
      %v883 = vadd.f32 %v847, %v857
      %v884 = vadd.f32 %v848, %v857
      %v885 = vadd.f32 %v849, %v857
      %v886 = vadd.f32 %v850, %v857
      %v887 = vadd.f32 %v851, %v857
      %v888 = vadd.f32 %v852, %v857
      %v889 = vadd.f32 %v853, %v857
      %v890 = vadd.f32 %v854, %v857
      %v891 = vmax.f32 %v859, 0.0
      %v892 = vmax.f32 %v860, 0.0
      %v893 = vmax.f32 %v861, 0.0
      %v894 = vmax.f32 %v862, 0.0
      %v895 = vmax.f32 %v863, 0.0
      %v896 = vmax.f32 %v864, 0.0
      %v897 = vmax.f32 %v865, 0.0
      %v898 = vmax.f32 %v866, 0.0
      %v899 = vmax.f32 %v867, 0.0
      %v900 = vmax.f32 %v868, 0.0
      %v901 = vmax.f32 %v869, 0.0
      %v902 = vmax.f32 %v870, 0.0
      %v903 = vmax.f32 %v871, 0.0
      %v904 = vmax.f32 %v872, 0.0
      %v905 = vmax.f32 %v873, 0.0
      %v906 = vmax.f32 %v874, 0.0
      %v907 = vmax.f32 %v875, 0.0
      %v908 = vmax.f32 %v876, 0.0
      %v909 = vmax.f32 %v877, 0.0
      %v910 = vmax.f32 %v878, 0.0
      %v911 = vmax.f32 %v879, 0.0
      %v912 = vmax.f32 %v880, 0.0
      %v913 = vmax.f32 %v881, 0.0
      %v914 = vmax.f32 %v882, 0.0
      %v915 = vmax.f32 %v883, 0.0
      %v916 = vmax.f32 %v884, 0.0
      %v917 = vmax.f32 %v885, 0.0
      %v918 = vmax.f32 %v886, 0.0
      %v919 = vmax.f32 %v887, 0.0
      %v920 = vmax.f32 %v888, 0.0
      %v921 = vmax.f32 %v889, 0.0
      %v922 = vmax.f32 %v890, 0.0
      %923 = vst.msk [vmem:[%s321] sm:$0xff] %vm671, %v891
      %924 = vst.msk [vmem:[%s321 + $0x8] sm:$0xff] %vm671, %v892
      %925 = vst.msk [vmem:[%s321 + $0x10] sm:$0xff] %vm671, %v893
      %926 = vst.msk [vmem:[%s321 + $0x18] sm:$0xff] %vm671, %v894
      %927 = vst.msk [vmem:[%s321 + $0x20] sm:$0xff] %vm671, %v895
      %928 = vst.msk [vmem:[%s321 + $0x28] sm:$0xff] %vm671, %v896
      %929 = vst.msk [vmem:[%s321 + $0x30] sm:$0xff] %vm671, %v897
      %930 = vst.msk [vmem:[%s321 + $0x38] sm:$0xff] %vm671, %v898
      %931 = vst.msk [vmem:[%s321 + $0x40] sm:$0xff] %vm671, %v899
      %932 = vst.msk [vmem:[%s321 + $0x48] sm:$0xff] %vm671, %v900
      %933 = vst.msk [vmem:[%s321 + $0x50] sm:$0xff] %vm671, %v901
      %934 = vst.msk [vmem:[%s321 + $0x58] sm:$0xff] %vm671, %v902
      %935 = vst.msk [vmem:[%s321 + $0x60] sm:$0xff] %vm671, %v903
      %936 = vst.msk [vmem:[%s321 + $0x68] sm:$0xff] %vm671, %v904
      %937 = vst.msk [vmem:[%s321 + $0x70] sm:$0xff] %vm671, %v905
      %938 = vst.msk [vmem:[%s321 + $0x78] sm:$0xff] %vm671, %v906
      %939 = vst.msk [vmem:[%s321 + $0x80] sm:$0xff] %vm671, %v907
      %940 = vst.msk [vmem:[%s321 + $0x88] sm:$0xff] %vm671, %v908
      %941 = vst.msk [vmem:[%s321 + $0x90] sm:$0xff] %vm671, %v909
      %942 = vst.msk [vmem:[%s321 + $0x98] sm:$0xff] %vm671, %v910
      %943 = vst.msk [vmem:[%s321 + $0xa0] sm:$0xff] %vm671, %v911
      %944 = vst.msk [vmem:[%s321 + $0xa8] sm:$0xff] %vm671, %v912
      %945 = vst.msk [vmem:[%s321 + $0xb0] sm:$0xff] %vm671, %v913
      %946 = vst.msk [vmem:[%s321 + $0xb8] sm:$0xff] %vm671, %v914
      %947 = vst.msk [vmem:[%s321 + $0xc0] sm:$0xff] %vm671, %v915
      %948 = vst.msk [vmem:[%s321 + $0xc8] sm:$0xff] %vm671, %v916
      %949 = vst.msk [vmem:[%s321 + $0xd0] sm:$0xff] %vm671, %v917
      %950 = vst.msk [vmem:[%s321 + $0xd8] sm:$0xff] %vm671, %v918
      %951 = vst.msk [vmem:[%s321 + $0xe0] sm:$0xff] %vm671, %v919
      %952 = vst.msk [vmem:[%s321 + $0xe8] sm:$0xff] %vm671, %v920
      %953 = vst.msk [vmem:[%s321 + $0xf0] sm:$0xff] %vm671, %v921
      %954 = vst.msk [vmem:[%s321 + $0xf8] sm:$0xff] %vm671, %v922
      %s955 = smul.u32 32, %s20
      %p956 = scmp.lt.s32.totalorder %s955, 63
      %s957 = scalar_select %p956, %s955, 63
      %s958 = smul.addr %s957, 8
      %s959 = scalar_lea.vmem %s7, %s958
      %s960 = smul.u32 32, %s20
      %p961 = scmp.lt.s32.totalorder %s960, 63
      %s962 = scalar_select %p961, %s960, 63
      %s963 = smul.addr %s962, 8
      %s964 = scalar_lea.vmem %s8, %s963
      // Predicated region
      $region49: #{_lambda_.5} parent=47 // pred_check
        %p965 = pneg %p190
      $region50: #{_lambda_.5} parent=47 // pred_check_branch
        %967 = sbr.rel (%p965) target = $region52
      $region51: #{_lambda_.5} parent=47 // pred_region
        %s968 = smul.u32 32, %s20
      $region52: #{_lambda_.5} parent=47 // pred_fallthru
        _
      // Predicated region
      $region53: #{_lambda_.5} parent=47 // pred_check
        %p969 = pneg %p216
      $region54: #{_lambda_.5} parent=47 // pred_check_branch
        %971 = sbr.rel (%p969) target = $region56
      $region55: #{_lambda_.5} parent=47 // pred_region
        %s972 = smul.u32 32, %s20
      $region56: #{_lambda_.5} parent=47 // pred_fallthru
        _
    $region48: #{_lambda_.5} parent=5 // pred_fallthru
      _
    %p973 = scmp.le.s32.totalorder 2, %s15
    // Predicated region
    $region57: #{_lambda_.5} parent=5 // pred_check
      %p974 = pneg %p973
    $region58: #{_lambda_.5} parent=5 // pred_check_branch
      %976 = sbr.rel (%p974) target = $region60
    $region59: #{_lambda_.5} parent=5 // pred_region
      %s977 = ssub.s32 %s15, 2
      // Predicated region
      $region61: #{_lambda_.5} parent=59 // pred_check
        %p978 = pneg %p196
      $region62: #{_lambda_.5} parent=59 // pred_check_branch
        %980 = sbr.rel (%p978) target = $region64
      $region63: #{_lambda_.5} parent=59 // pred_region
        %s981 = smul.u32 32, %s21
        %p982 = scmp.lt.s32.totalorder %s981, 63
        %s983 = scalar_select %p982, %s981, 63
        %s984 = smul.addr %s983, 8
        %s985 = scalar_lea.vmem %s7, %s984
      $region64: #{_lambda_.5} parent=59 // pred_fallthru
        _
      // Predicated region
      $region65: #{_lambda_.5} parent=59 // pred_check
        %p986 = pneg %p222
      $region66: #{_lambda_.5} parent=59 // pred_check_branch
        %988 = sbr.rel (%p986) target = $region68
      $region67: #{_lambda_.5} parent=59 // pred_region
        %s989 = smul.u32 32, %s21
        %p990 = scmp.lt.s32.totalorder %s989, 63
        %s991 = scalar_select %p990, %s989, 63
        %s992 = smul.addr %s991, 8
        %s993 = scalar_lea.vmem %s8, %s992
      $region68: #{_lambda_.5} parent=59 // pred_fallthru
        _
    $region60: #{_lambda_.5} parent=5 // pred_fallthru
      _
  $region6: #{_lambda_.5} parent=0 // loop_footer
    %s19 = sadd.s32 1, %s15
  $region7: #{_lambda_.5} parent=0 // loop_footer_branch
    %14 = sbr.rel target = $region3
  $region8: #{_lambda_.5} parent=0 // loop_exit
    _

// kernel: _lambda_.7
$region0: #{_lambda_.7}
  #allocation0 [shape = 'u32[]', space=smem, size = 0x4, offset = 0x4, fixed_abs, tag = 'smem constant byte address 0x4 - core index']
  #allocation1 [shape = 'u32[72,128]{1,0:T(1,128)}', space=vmem, size = 0x9000, scoped, tag = 'internal scratch']
  #allocation2 [shape = 'f32[6,6,8]{2,1,0:T(8,128)}', space=vmem, size = 0x6000, scoped, tag = 'scratch operand']
  %s0 = inlined_call_operand.vmem [shape: f32[2,4,4,8], index: 0, kind: input, shape index: {}]
  %s1 = inlined_call_operand.vmem [shape: f32[2,2,4,8], index: 1, kind: input, shape index: {}]
  %s2 = inlined_call_operand.vmem [shape: f32[3,3,8,8], index: 2, kind: input, shape index: {}]
  %s3 = inlined_call_operand.vmem [shape: f32[1,8], index: 3, kind: input, shape index: {}]
  %s4 = inlined_call_operand.vmem [shape: f32[1,8], index: 4, kind: input, shape index: {}]
  %s5 = inlined_call_operand.vmem [shape: f32[2,4,4,8], index: 5, kind: output, shape index: {}]
  %s6 = sld [smem:[#allocation0]]
  $region53: #{_lambda_.7} parent=0
    _
  %s8 = ssub.s32 1, %s6
  %s9 = scalar_select 0, %s8, %s6
  loop: start=0, step=1, limit=4
  $region2: #{_lambda_.7} parent=0 // loop_pre_header
    _
  $region3: #{_lambda_.7} parent=0 // loop_header
    %s11 = sphi 0, %s15
    %p12 = scmp.ge.s32.totalorder %s11, 4
    %s18 = sphi 0, %s30
    %s19 = sphi 0, %s26
    %s20 = sphi 0, %s18
    %s21 = sphi 0, %s19
    %s22 = sphi 0, %s20
    %s23 = sphi 0, %s21
    %s35 = sphi 0, %s37
    %s38 = sphi 0, %s35
    %s39 = sphi 0, %s38
    %s55 = sphi 0, %s39
    %s63 = sphi 0, %s65
    %s66 = sphi 0, %s63
    %s67 = sphi 0, %s66
    %s83 = sphi 0, %s67
    %s87 = sphi 0, %s87
    %s89 = sphi 0, %s87
    %s90 = sphi 0, %s89
    %s104 = sphi 0, %s90
    %s108 = sphi 0, %s108
    %s110 = sphi 0, %s108
    %s111 = sphi 0, %s110
    %s125 = sphi 0, %s111
    %s129 = sphi 0, %s129
    %s131 = sphi 0, %s129
    %s132 = sphi 0, %s131
    %s146 = sphi 0, %s132
    %s154 = sphi 0, %s156
    %s157 = sphi 0, %s154
    %s158 = sphi 0, %s157
    %s174 = sphi 0, %s158
  $region4: #{_lambda_.7} parent=0 // loop_header_branch
    %14 = sbr.rel (%p12) target = $region8
  $region5: #{_lambda_.7} parent=0 // loop_body
    %s16 = ssub.s32 %s11, 1
    %s17 = ssub.s32 %s11, 2
    %s24 = sadd.s32 1, %s19
    %p25 = scmp.ge.s32.totalorder %s24, 1
    %s26 = scalar_select %p25, 0, %s24
    %s27 = sadd.s32 1, %s18
    %s28 = scalar_select %p25, %s27, %s18
    %p29 = scmp.ge.s32.totalorder %s28, 2
    %s30 = scalar_select %p29, 0, %s28
    %s31 = ssub.s32 %s18, %s30
    %s32 = ssub.s32 %s19, %s26
    %s33 = sor.u32 %s31, %s32
    %p34 = scmp.eq.s32.totalorder %s33, 0
    %s36 = sadd.s32 %s35, 1
    %s37 = scalar_select %p34, %s35, %s36
    %p40 = pneg %p34
    %p41 = scmp.eq.s32.totalorder %s11, 1
    %p42 = por %p40, %p41
    %p43 = scmp.ne.s32.totalorder %s35, %s38
    %p44 = scmp.eq.s32.totalorder %s11, 0
    %p45 = por %p43, %p44
    %p46 = scmp.ne.s32.totalorder %s35, %s38
    %p47 = scmp.eq.s32.totalorder %s16, 1
    %p48 = por %p46, %p47
    %p49 = scmp.ne.s32.totalorder %s38, %s39
    %p50 = scmp.eq.s32.totalorder %s16, 0
    %p51 = por %p49, %p50
    %p52 = scmp.ne.s32.totalorder %s38, %s39
    %p53 = scmp.eq.s32.totalorder %s17, 1
    %p54 = por %p52, %p53
    %p56 = scmp.ne.s32.totalorder %s39, %s55
    %p57 = scmp.eq.s32.totalorder %s17, 0
    %p58 = por %p56, %p57
    %s59 = sadd.s32 %s18, %s19
    %s60 = sadd.s32 %s30, %s26
    %s61 = ssub.s32 %s59, %s60
    %p62 = scmp.eq.s32.totalorder %s61, 0
    %s64 = sadd.s32 %s63, 1
    %s65 = scalar_select %p62, %s63, %s64
    %p68 = pneg %p62
    %p69 = scmp.eq.s32.totalorder %s11, 1
    %p70 = por %p68, %p69
    %p71 = scmp.ne.s32.totalorder %s63, %s66
    %p72 = scmp.eq.s32.totalorder %s11, 0
    %p73 = por %p71, %p72
    %p74 = scmp.ne.s32.totalorder %s63, %s66
    %p75 = scmp.eq.s32.totalorder %s16, 1
    %p76 = por %p74, %p75
    %p77 = scmp.ne.s32.totalorder %s66, %s67
    %p78 = scmp.eq.s32.totalorder %s16, 0
    %p79 = por %p77, %p78
    %p80 = scmp.ne.s32.totalorder %s66, %s67
    %p81 = scmp.eq.s32.totalorder %s17, 1
    %p82 = por %p80, %p81
    %p84 = scmp.ne.s32.totalorder %s67, %s83
    %p85 = scmp.eq.s32.totalorder %s17, 0
    %p86 = por %p84, %p85
    %s88 = sadd.s32 %s87, 1
    %p91 = scmp.eq.s32.totalorder %s11, 1
    %p92 = scmp.ne.s32.totalorder %s87, %s89
    %p93 = scmp.eq.s32.totalorder %s11, 0
    %p94 = por %p92, %p93
    %p95 = scmp.ne.s32.totalorder %s87, %s89
    %p96 = scmp.eq.s32.totalorder %s16, 1
    %p97 = por %p95, %p96
    %p98 = scmp.ne.s32.totalorder %s89, %s90
    %p99 = scmp.eq.s32.totalorder %s16, 0
    %p100 = por %p98, %p99
    %p101 = scmp.ne.s32.totalorder %s89, %s90
    %p102 = scmp.eq.s32.totalorder %s17, 1
    %p103 = por %p101, %p102
    %p105 = scmp.ne.s32.totalorder %s90, %s104
    %p106 = scmp.eq.s32.totalorder %s17, 0
    %p107 = por %p105, %p106
    %s109 = sadd.s32 %s108, 1
    %p112 = scmp.eq.s32.totalorder %s11, 1
    %p113 = scmp.ne.s32.totalorder %s108, %s110
    %p114 = scmp.eq.s32.totalorder %s11, 0
    %p115 = por %p113, %p114
    %p116 = scmp.ne.s32.totalorder %s108, %s110
    %p117 = scmp.eq.s32.totalorder %s16, 1
    %p118 = por %p116, %p117
    %p119 = scmp.ne.s32.totalorder %s110, %s111
    %p120 = scmp.eq.s32.totalorder %s16, 0
    %p121 = por %p119, %p120
    %p122 = scmp.ne.s32.totalorder %s110, %s111
    %p123 = scmp.eq.s32.totalorder %s17, 1
    %p124 = por %p122, %p123
    %p126 = scmp.ne.s32.totalorder %s111, %s125
    %p127 = scmp.eq.s32.totalorder %s17, 0
    %p128 = por %p126, %p127
    %s130 = sadd.s32 %s129, 1
    %p133 = scmp.eq.s32.totalorder %s11, 1
    %p134 = scmp.ne.s32.totalorder %s129, %s131
    %p135 = scmp.eq.s32.totalorder %s11, 0
    %p136 = por %p134, %p135
    %p137 = scmp.ne.s32.totalorder %s129, %s131
    %p138 = scmp.eq.s32.totalorder %s16, 1
    %p139 = por %p137, %p138
    %p140 = scmp.ne.s32.totalorder %s131, %s132
    %p141 = scmp.eq.s32.totalorder %s16, 0
    %p142 = por %p140, %p141
    %p143 = scmp.ne.s32.totalorder %s131, %s132
    %p144 = scmp.eq.s32.totalorder %s17, 1
    %p145 = por %p143, %p144
    %p147 = scmp.ne.s32.totalorder %s132, %s146
    %p148 = scmp.eq.s32.totalorder %s17, 0
    %p149 = por %p147, %p148
    %s150 = ssub.s32 %s18, %s30
    %s151 = ssub.s32 %s19, %s26
    %s152 = sor.u32 %s150, %s151
    %p153 = scmp.eq.s32.totalorder %s152, 0
    %s155 = sadd.s32 %s154, 1
    %s156 = scalar_select %p153, %s154, %s155
    %p159 = pneg %p153
    %p160 = scmp.eq.s32.totalorder %s11, 1
    %p161 = por %p159, %p160
    %p162 = scmp.ne.s32.totalorder %s154, %s157
    %p163 = scmp.eq.s32.totalorder %s11, 0
    %p164 = por %p162, %p163
    %p165 = scmp.ne.s32.totalorder %s154, %s157
    %p166 = scmp.eq.s32.totalorder %s16, 1
    %p167 = por %p165, %p166
    %p168 = scmp.ne.s32.totalorder %s157, %s158
    %p169 = scmp.eq.s32.totalorder %s16, 0
    %p170 = por %p168, %p169
    %p171 = scmp.ne.s32.totalorder %s157, %s158
    %p172 = scmp.eq.s32.totalorder %s17, 1
    %p173 = por %p171, %p172
    %p175 = scmp.ne.s32.totalorder %s158, %s174
    %p176 = scmp.eq.s32.totalorder %s17, 0
    %p177 = por %p175, %p176
    %p178 = scmp.le.s32.totalorder 1, %s11
    %p179 = scmp.lt.s32.totalorder %s11, 3
    %p180 = pnand %p178, %p179
    %p181 = pneg %p180
    // Predicated region
    $region9: #{_lambda_.7} parent=5 // pred_check
      _
    $region10: #{_lambda_.7} parent=5 // pred_check_branch
      %183 = sbr.rel (%p180) target = $region12
    $region11: #{_lambda_.7} parent=5 // pred_region
      %s184 = ssub.s32 %s11, 1
      // Predicated region
      $region13: #{_lambda_.7} parent=11 // pred_check
        %p185 = pneg %p100
      $region14: #{_lambda_.7} parent=11 // pred_check_branch
        %187 = sbr.rel (%p185) target = $region16
      $region15: #{_lambda_.7} parent=11 // pred_region
        _
      $region16: #{_lambda_.7} parent=11 // pred_fallthru
        _
      // Predicated region
      $region17: #{_lambda_.7} parent=11 // pred_check
        %p188 = pneg %p121
      $region18: #{_lambda_.7} parent=11 // pred_check_branch
        %190 = sbr.rel (%p188) target = $region20
      $region19: #{_lambda_.7} parent=11 // pred_region
        _
      $region20: #{_lambda_.7} parent=11 // pred_fallthru
        _
      // Predicated region
      $region21: #{_lambda_.7} parent=11 // pred_check
        %p191 = pneg %p142
      $region22: #{_lambda_.7} parent=11 // pred_check_branch
        %193 = sbr.rel (%p191) target = $region24
      $region23: #{_lambda_.7} parent=11 // pred_region
        _
      $region24: #{_lambda_.7} parent=11 // pred_fallthru
        _
    $region12: #{_lambda_.7} parent=5 // pred_fallthru
      _
    %p194 = scmp.lt.s32.totalorder %s11, 2
    // Predicated region
    $region25: #{_lambda_.7} parent=5 // pred_check
      %p195 = pneg %p194
    $region26: #{_lambda_.7} parent=5 // pred_check_branch
      %197 = sbr.rel (%p195) target = $region28
    $region27: #{_lambda_.7} parent=5 // pred_region
      // Predicated region
      $region29: #{_lambda_.7} parent=27 // pred_check
        %p198 = pneg %p45
      $region30: #{_lambda_.7} parent=27 // pred_check_branch
        %200 = sbr.rel (%p198) target = $region32
      $region31: #{_lambda_.7} parent=27 // pred_region
        %s201 = smul.u32 4, %s19
        %p202 = scmp.lt.s32.totalorder %s18, 1
        %s203 = scalar_select %p202, %s18, 1
        %p204 = scmp.lt.s32.totalorder %s201, 3
        %s205 = scalar_select %p204, %s201, 3
        %s206 = smul.addr %s203, 4
        %s207 = sadd.s32 %s205, %s206
        %s208 = smul.addr %s207, 4
        %s209 = scalar_lea.vmem %s0, %s208
        %s210 = smul.u32 4, %s19
      $region32: #{_lambda_.7} parent=27 // pred_fallthru
        _
      // Predicated region
      $region33: #{_lambda_.7} parent=27 // pred_check
        %p211 = pneg %p73
      $region34: #{_lambda_.7} parent=27 // pred_check_branch
        %213 = sbr.rel (%p211) target = $region36
      $region35: #{_lambda_.7} parent=27 // pred_region
        %s214 = sadd.s32 %s18, %s19
        %p215 = scmp.lt.s32.totalorder %s214, 1
        %s216 = scalar_select %p215, %s214, 1
        %s217 = smul.addr %s216, 2
        %s218 = smul.addr %s217, 4
        %s219 = scalar_lea.vmem %s1, %s218
        %s220 = sadd.s32 %s18, %s19
      $region36: #{_lambda_.7} parent=27 // pred_fallthru
        _
    $region28: #{_lambda_.7} parent=5 // pred_fallthru
      _
    %p221 = scmp.le.s32.totalorder 1, %s11
    %p222 = scmp.lt.s32.totalorder %s11, 3
    %p223 = pnand %p221, %p222
    %p224 = pneg %p223
    // Predicated region
    $region37: #{_lambda_.7} parent=5 // pred_check
      _
    $region38: #{_lambda_.7} parent=5 // pred_check_branch
      %226 = sbr.rel (%p223) target = $region40
    $region39: #{_lambda_.7} parent=5 // pred_region
      %s227 = ssub.s32 %s11, 1
      %s228 = smul.u32 4, %s21
      %p229 = scmp.lt.s32.totalorder %s20, 1
      %s230 = scalar_select %p229, %s20, 1
      %p231 = scmp.lt.s32.totalorder %s228, 3
      %s232 = scalar_select %p231, %s228, 3
      %s233 = smul.addr %s230, 4
      %s234 = sadd.s32 %s232, %s233
      %s235 = smul.addr %s234, 4
      %s236 = scalar_lea.vmem %s0, %s235
      %p237 = pneg %p51
      %p238 = pneg %p48
      %s239 = sadd.s32 %s20, %s21
      %p240 = scmp.lt.s32.totalorder %s239, 1
      %s241 = scalar_select %p240, %s239, 1
      %s242 = smul.addr %s241, 2
      %s243 = smul.addr %s242, 4
      %s244 = scalar_lea.vmem %s1, %s243
      %p245 = pneg %p79
      %p246 = pneg %p76
      %p247 = pneg %p100
      %p248 = pneg %p97
      %p249 = pneg %p121
      %p250 = pneg %p118
      %p251 = pneg %p142
      %p252 = pneg %p139
      %p253 = pneg %p170
      %p254 = pneg %p167
      %s255 = smul.u32 4, %s21
      %p256 = scmp.lt.s32.totalorder %s20, 1
      %s257 = scalar_select %p256, %s20, 1
      %p258 = scmp.lt.s32.totalorder %s255, 3
      %s259 = scalar_select %p258, %s255, 3
      %s260 = smul.addr %s257, 4
      %s261 = sadd.s32 %s259, %s260
      %s262 = smul.addr %s261, 4
      %s263 = scalar_lea.vmem %s5, %s262
      %s264 = smul.u32 4, %s21
      %p265 = scmp.lt.s32.totalorder %s20, 1
      %s266 = scalar_select %p265, %s20, 1
      %p267 = scmp.lt.s32.totalorder %s264, 3
      %s268 = scalar_select %p267, %s264, 3
      %s269 = smul.addr %s266, 4
      %s270 = sadd.s32 %s268, %s269
      %s271 = smul.addr %s270, 4
      %s272 = scalar_lea.vmem %s0, %s271
      %s273 = smul.u32 4, %s21
      %s274 = sadd.s32 %s20, %s21
      %p275 = scmp.lt.s32.totalorder %s274, 1
      %s276 = scalar_select %p275, %s274, 1
      %s277 = smul.addr %s276, 2
      %s278 = smul.addr %s277, 4
      %s279 = scalar_lea.vmem %s1, %s278
      %s280 = sadd.s32 %s20, %s21
      %s281 = smul.u32 4, %s21
      %p282 = scmp.lt.s32.totalorder %s20, 1
      %s283 = scalar_select %p282, %s20, 1
      %p284 = scmp.lt.s32.totalorder %s281, 3
      %s285 = scalar_select %p284, %s281, 3
      %s286 = smul.addr %s283, 4
      %s287 = sadd.s32 %s285, %s286
      %s288 = smul.addr %s287, 4
      %s289 = scalar_lea.vmem %s5, %s288
      %s290 = smul.u32 4, %s21
      %vm291 = vcmask 57344
      %292 = vst.msk [vmem:[#allocation2] sm:$0x1] %vm291, 0.0
      %293 = vst.msk [vmem:[#allocation2 + $0x8] sm:$0x1] %vm291, 0.0
      %294 = vst.msk [vmem:[#allocation2 + $0x10] sm:$0x1] %vm291, 0.0
      %295 = vst.msk [vmem:[#allocation2 + $0x18] sm:$0x1] %vm291, 0.0
      %296 = vst.msk [vmem:[#allocation2 + $0x20] sm:$0x1] %vm291, 0.0
      %297 = vst.msk [vmem:[#allocation2 + $0x28] sm:$0x1] %vm291, 0.0
      %298 = vst.msk [vmem:[#allocation2 + $0x5] sm:$0x1] %vm291, 0.0
      %299 = vst.msk [vmem:[#allocation2 + $0xd] sm:$0x1] %vm291, 0.0
      %300 = vst.msk [vmem:[#allocation2 + $0x15] sm:$0x1] %vm291, 0.0
      %301 = vst.msk [vmem:[#allocation2 + $0x1d] sm:$0x1] %vm291, 0.0
      %302 = vst.msk [vmem:[#allocation2 + $0x25] sm:$0x1] %vm291, 0.0
      %303 = vst.msk [vmem:[#allocation2 + $0x2d] sm:$0x1] %vm291, 0.0
      %v304 = vld [vmem:[%s279] sm:$0xf]
      %vm305 = vcmask 60416
      %306 = vst.msk [vmem:[#allocation2 + $0x1] sm:$0xf] %vm305, %v304
      %s307 = scalar_lea.vmem %s279, 4
      %v308 = vld [vmem:[%s307] sm:$0xf]
      %s309 = scalar_lea.vmem [#allocation2], 40
      %310 = vst.msk [vmem:[%s309 + $0x1] sm:$0xf] %vm305, %v308
      %v311 = vld [vmem:[%s272] sm:$0xf]
      %v312 = vld [vmem:[%s272 + $0x4] sm:$0xf]
      %v313 = vld [vmem:[%s272 + $0x8] sm:$0xf]
      %v314 = vld [vmem:[%s272 + $0xc] sm:$0xf]
      %s315 = scalar_lea.vmem [#allocation2], 8
      %316 = vst.msk [vmem:[%s315 + $0x1] sm:$0xf] %vm305, %v311
      %317 = vst.msk [vmem:[%s315 + $0x9] sm:$0xf] %vm305, %v312
      %318 = vst.msk [vmem:[%s315 + $0x11] sm:$0xf] %vm305, %v313
      %319 = vst.msk [vmem:[%s315 + $0x19] sm:$0xf] %vm305, %v314
      %v320 = vld [vmem:[%s2] sm:$0xff]
      %v321 = vld [vmem:[%s2 + $0x8] sm:$0xff]
      %v322 = vld [vmem:[%s2 + $0x10] sm:$0xff]
      %v323 = vld [vmem:[%s2 + $0x18] sm:$0xff]
      %v324 = vld [vmem:[%s2 + $0x20] sm:$0xff]
      %v325 = vld [vmem:[%s2 + $0x28] sm:$0xff]
      %v326 = vld [vmem:[%s2 + $0x30] sm:$0xff]
      %v327 = vld [vmem:[%s2 + $0x38] sm:$0xff]
      %v328 = vld [vmem:[%s2 + $0x40] sm:$0xff]
      %v329 = vld [vmem:[#allocation2] sm:$0xf]
      %v330 = vld [vmem:[#allocation2 + $0x8] sm:$0xf]
      %v331 = vld [vmem:[#allocation2 + $0x10] sm:$0xf]
      %v332 = vld [vmem:[#allocation2 + $0x18] sm:$0xf]
      %v333 = vld [vmem:[#allocation2 + $0x1] sm:$0xf]
      %v334 = vld [vmem:[#allocation2 + $0x9] sm:$0xf]
      %v335 = vld [vmem:[#allocation2 + $0x11] sm:$0xf]
      %v336 = vld [vmem:[#allocation2 + $0x19] sm:$0xf]
      %341 = vst [vmem:[#allocation1] ss:$2 sm:$0xff] %v333
      %s342 = scalar_lea.vmem [#allocation1], 1
      %343 = vst [vmem:[%s342] ss:$2 sm:$0xff] %v334
      %s344 = scalar_lea.vmem [#allocation1], 16
      %345 = vst [vmem:[%s344] ss:$2 sm:$0xff] %v335
      %s346 = scalar_lea.vmem [#allocation1], 17
      %347 = vst [vmem:[%s346] ss:$2 sm:$0xff] %v336
      %v348 = vld.sshfl [vmem:[#allocation1] sm:$0xff pattern:$0x75316420]
      %v349 = vld.sshfl [vmem:[#allocation1 + $0x10] sm:$0xff pattern:$0x75316420]
      %vm350 = vcmask 64512
      %v351 = vsel %vm350, %v348, 0
      %v353 = vsel %vm350, %v349, 0
      %355 = vmatpush.msra.mxu0 0.0
      %356 = vmatpush.msra.mxu0 0.0
      %357 = vmatpush.msra.mxu0 0.0
      %358 = vmatpush.msra.mxu0 0.0
      %359 = vmatpush.msra.mxu0 0.0
      %360 = vmatpush.msra.mxu0 0.0
      %361 = vmatpush.msra.mxu0 0.0
      %362 = vmatpush.msra.mxu0 0.0
      %363 = vmatpush.msra.mxu0 0.0
      %364 = vmatpush.msra.mxu0 0.0
      %365 = vmatpush.msra.mxu0 0.0
      %366 = vmatpush.msra.mxu0 0.0
      %367 = vmatpush.msra.mxu0 0.0
      %368 = vmatpush.msra.mxu0 0.0
      %369 = vmatpush.msra.mxu0 0.0
      %370 = vmatpush.msra.mxu0 %v321
      %371 = vmatmul.f32.gmra.mxu0 %v351
      %v372 = vpop.f32.mrf.mxu0
      %v373 = vadd.f32 0.0, %v372
      %374 = vmatmul.f32.gmra.mxu0 %v353
      %v375 = vpop.f32.mrf.mxu0
      %v376 = vadd.f32 0.0, %v375
      %377 = vdwg.mxu0
      %382 = vst [vmem:[#allocation1] ss:$2 sm:$0xff] %v329
      %s383 = scalar_lea.vmem [#allocation1], 1
      %384 = vst [vmem:[%s383] ss:$2 sm:$0xff] %v330
      %s385 = scalar_lea.vmem [#allocation1], 16
      %386 = vst [vmem:[%s385] ss:$2 sm:$0xff] %v331
      %s387 = scalar_lea.vmem [#allocation1], 17
      %388 = vst [vmem:[%s387] ss:$2 sm:$0xff] %v332
      %v389 = vld.sshfl [vmem:[#allocation1] sm:$0xff pattern:$0x75316420]
      %v390 = vld.sshfl [vmem:[#allocation1 + $0x10] sm:$0xff pattern:$0x75316420]
      %v391 = vsel %vm350, %v389, 0
      %v393 = vsel %vm350, %v390, 0
      %395 = vmatpush.msra.mxu0 0.0
      %396 = vmatpush.msra.mxu0 0.0
      %397 = vmatpush.msra.mxu0 0.0
      %398 = vmatpush.msra.mxu0 0.0
      %399 = vmatpush.msra.mxu0 0.0
      %400 = vmatpush.msra.mxu0 0.0
      %401 = vmatpush.msra.mxu0 0.0
      %402 = vmatpush.msra.mxu0 0.0
      %403 = vmatpush.msra.mxu0 0.0
      %404 = vmatpush.msra.mxu0 0.0
      %405 = vmatpush.msra.mxu0 0.0
      %406 = vmatpush.msra.mxu0 0.0
      %407 = vmatpush.msra.mxu0 0.0
      %408 = vmatpush.msra.mxu0 0.0
      %409 = vmatpush.msra.mxu0 0.0
      %410 = vmatpush.msra.mxu0 %v320
      %411 = vmatmul.f32.gmra.mxu0 %v391
      %v412 = vpop.f32.mrf.mxu0
      %v413 = vadd.f32 %v373, %v412
      %414 = vmatmul.f32.gmra.mxu0 %v393
      %v415 = vpop.f32.mrf.mxu0
      %v416 = vadd.f32 %v376, %v415
      %417 = vdwg.mxu0
      %v420 = vrot.slane %v413, 4
      %v421 = vrot.slane %v416, 4
      %v424 = vld [vmem:[#allocation2 + $0x2] sm:$0xf]
      %v425 = vld [vmem:[#allocation2 + $0xa] sm:$0xf]
      %v426 = vld [vmem:[#allocation2 + $0x12] sm:$0xf]
      %v427 = vld [vmem:[#allocation2 + $0x1a] sm:$0xf]
      %432 = vst [vmem:[#allocation1] ss:$2 sm:$0xff] %v424
      %s433 = scalar_lea.vmem [#allocation1], 1
      %434 = vst [vmem:[%s433] ss:$2 sm:$0xff] %v425
      %s435 = scalar_lea.vmem [#allocation1], 16
      %436 = vst [vmem:[%s435] ss:$2 sm:$0xff] %v426
      %s437 = scalar_lea.vmem [#allocation1], 17
      %438 = vst [vmem:[%s437] ss:$2 sm:$0xff] %v427
      %v439 = vld.sshfl [vmem:[#allocation1] sm:$0xff pattern:$0x75316420]
      %v440 = vld.sshfl [vmem:[#allocation1 + $0x10] sm:$0xff pattern:$0x75316420]
      %v441 = vsel %vm350, %v439, 0
      %v443 = vsel %vm350, %v440, 0
      %445 = vmatpush.msra.mxu0 0.0
      %446 = vmatpush.msra.mxu0 0.0
      %447 = vmatpush.msra.mxu0 0.0
      %448 = vmatpush.msra.mxu0 0.0
      %449 = vmatpush.msra.mxu0 0.0
      %450 = vmatpush.msra.mxu0 0.0
      %451 = vmatpush.msra.mxu0 0.0
      %452 = vmatpush.msra.mxu0 0.0
      %453 = vmatpush.msra.mxu0 0.0
      %454 = vmatpush.msra.mxu0 0.0
      %455 = vmatpush.msra.mxu0 0.0
      %456 = vmatpush.msra.mxu0 0.0
      %457 = vmatpush.msra.mxu0 0.0
      %458 = vmatpush.msra.mxu0 0.0
      %459 = vmatpush.msra.mxu0 0.0
      %460 = vmatpush.msra.mxu0 %v322
      %461 = vmatmul.f32.gmra.mxu0 %v441
      %v462 = vpop.f32.mrf.mxu0
      %v463 = vadd.f32 0.0, %v462
      %464 = vmatmul.f32.gmra.mxu0 %v443
      %v465 = vpop.f32.mrf.mxu0
      %v466 = vadd.f32 0.0, %v465
      %467 = vdwg.mxu0
      %v470 = vrot.slane %v463, 4
      %v471 = vrot.slane %v466, 4
      %v474 = vadd.f32 %v413, %v463
      %v475 = vadd.f32 %v420, %v470
      %v476 = vadd.f32 %v416, %v466
      %v477 = vadd.f32 %v421, %v471
      %v478 = vld [vmem:[%s315] sm:$0xf]
      %v479 = vld [vmem:[%s315 + $0x8] sm:$0xf]
      %v480 = vld [vmem:[%s315 + $0x10] sm:$0xf]
      %v481 = vld [vmem:[%s315 + $0x18] sm:$0xf]
      %486 = vst [vmem:[#allocation1] ss:$2 sm:$0xff] %v478
      %s487 = scalar_lea.vmem [#allocation1], 1
      %488 = vst [vmem:[%s487] ss:$2 sm:$0xff] %v479
      %s489 = scalar_lea.vmem [#allocation1], 16
      %490 = vst [vmem:[%s489] ss:$2 sm:$0xff] %v480
      %s491 = scalar_lea.vmem [#allocation1], 17
      %492 = vst [vmem:[%s491] ss:$2 sm:$0xff] %v481
      %v493 = vld.sshfl [vmem:[#allocation1] sm:$0xff pattern:$0x75316420]
      %v494 = vld.sshfl [vmem:[#allocation1 + $0x10] sm:$0xff pattern:$0x75316420]
      %v495 = vsel %vm350, %v493, 0
      %v497 = vsel %vm350, %v494, 0
      %499 = vmatpush.msra.mxu0 0.0
      %500 = vmatpush.msra.mxu0 0.0
      %501 = vmatpush.msra.mxu0 0.0
      %502 = vmatpush.msra.mxu0 0.0
      %503 = vmatpush.msra.mxu0 0.0
      %504 = vmatpush.msra.mxu0 0.0
      %505 = vmatpush.msra.mxu0 0.0
      %506 = vmatpush.msra.mxu0 0.0
      %507 = vmatpush.msra.mxu0 0.0
      %508 = vmatpush.msra.mxu0 0.0
      %509 = vmatpush.msra.mxu0 0.0
      %510 = vmatpush.msra.mxu0 0.0
      %511 = vmatpush.msra.mxu0 0.0
      %512 = vmatpush.msra.mxu0 0.0
      %513 = vmatpush.msra.mxu0 0.0
      %514 = vmatpush.msra.mxu0 %v323
      %515 = vmatmul.f32.gmra.mxu0 %v495
      %v516 = vpop.f32.mrf.mxu0
      %v517 = vadd.f32 0.0, %v516
      %518 = vmatmul.f32.gmra.mxu0 %v497
      %v519 = vpop.f32.mrf.mxu0
      %v520 = vadd.f32 0.0, %v519
      %521 = vdwg.mxu0
      %v524 = vrot.slane %v517, 4
      %v525 = vrot.slane %v520, 4
      %v528 = vadd.f32 %v474, %v517
      %v529 = vadd.f32 %v475, %v524
      %v530 = vadd.f32 %v476, %v520
      %v531 = vadd.f32 %v477, %v525
      %v532 = vld [vmem:[%s315 + $0x1] sm:$0xf]
      %v533 = vld [vmem:[%s315 + $0x9] sm:$0xf]
      %v534 = vld [vmem:[%s315 + $0x11] sm:$0xf]
      %v535 = vld [vmem:[%s315 + $0x19] sm:$0xf]
      %540 = vst [vmem:[#allocation1] ss:$2 sm:$0xff] %v532
      %s541 = scalar_lea.vmem [#allocation1], 1
      %542 = vst [vmem:[%s541] ss:$2 sm:$0xff] %v533
      %s543 = scalar_lea.vmem [#allocation1], 16
      %544 = vst [vmem:[%s543] ss:$2 sm:$0xff] %v534
      %s545 = scalar_lea.vmem [#allocation1], 17
      %546 = vst [vmem:[%s545] ss:$2 sm:$0xff] %v535
      %v547 = vld.sshfl [vmem:[#allocation1] sm:$0xff pattern:$0x75316420]
      %v548 = vld.sshfl [vmem:[#allocation1 + $0x10] sm:$0xff pattern:$0x75316420]
      %v549 = vsel %vm350, %v547, 0
      %v551 = vsel %vm350, %v548, 0
      %553 = vmatpush.msra.mxu0 0.0
      %554 = vmatpush.msra.mxu0 0.0
      %555 = vmatpush.msra.mxu0 0.0
      %556 = vmatpush.msra.mxu0 0.0
      %557 = vmatpush.msra.mxu0 0.0
      %558 = vmatpush.msra.mxu0 0.0
      %559 = vmatpush.msra.mxu0 0.0
      %560 = vmatpush.msra.mxu0 0.0
      %561 = vmatpush.msra.mxu0 0.0
      %562 = vmatpush.msra.mxu0 0.0
      %563 = vmatpush.msra.mxu0 0.0
      %564 = vmatpush.msra.mxu0 0.0
      %565 = vmatpush.msra.mxu0 0.0
      %566 = vmatpush.msra.mxu0 0.0
      %567 = vmatpush.msra.mxu0 0.0
      %568 = vmatpush.msra.mxu0 %v324
      %569 = vmatmul.f32.gmra.mxu0 %v549
      %v570 = vpop.f32.mrf.mxu0
      %v571 = vadd.f32 0.0, %v570
      %572 = vmatmul.f32.gmra.mxu0 %v551
      %v573 = vpop.f32.mrf.mxu0
      %v574 = vadd.f32 0.0, %v573
      %575 = vdwg.mxu0
      %v578 = vrot.slane %v571, 4
      %v579 = vrot.slane %v574, 4
      %v582 = vadd.f32 %v528, %v571
      %v583 = vadd.f32 %v529, %v578
      %v584 = vadd.f32 %v530, %v574
      %v585 = vadd.f32 %v531, %v579
      %v586 = vld [vmem:[%s315 + $0x2] sm:$0xf]
      %v587 = vld [vmem:[%s315 + $0xa] sm:$0xf]
      %v588 = vld [vmem:[%s315 + $0x12] sm:$0xf]
      %v589 = vld [vmem:[%s315 + $0x1a] sm:$0xf]
      %594 = vst [vmem:[#allocation1] ss:$2 sm:$0xff] %v586
      %s595 = scalar_lea.vmem [#allocation1], 1
      %596 = vst [vmem:[%s595] ss:$2 sm:$0xff] %v587
      %s597 = scalar_lea.vmem [#allocation1], 16
      %598 = vst [vmem:[%s597] ss:$2 sm:$0xff] %v588
      %s599 = scalar_lea.vmem [#allocation1], 17
      %600 = vst [vmem:[%s599] ss:$2 sm:$0xff] %v589
      %v601 = vld.sshfl [vmem:[#allocation1] sm:$0xff pattern:$0x75316420]
      %v602 = vld.sshfl [vmem:[#allocation1 + $0x10] sm:$0xff pattern:$0x75316420]
      %v603 = vsel %vm350, %v601, 0
      %v605 = vsel %vm350, %v602, 0
      %607 = vmatpush.msra.mxu0 0.0
      %608 = vmatpush.msra.mxu0 0.0
      %609 = vmatpush.msra.mxu0 0.0
      %610 = vmatpush.msra.mxu0 0.0
      %611 = vmatpush.msra.mxu0 0.0
      %612 = vmatpush.msra.mxu0 0.0
      %613 = vmatpush.msra.mxu0 0.0
      %614 = vmatpush.msra.mxu0 0.0
      %615 = vmatpush.msra.mxu0 0.0
      %616 = vmatpush.msra.mxu0 0.0
      %617 = vmatpush.msra.mxu0 0.0
      %618 = vmatpush.msra.mxu0 0.0
      %619 = vmatpush.msra.mxu0 0.0
      %620 = vmatpush.msra.mxu0 0.0
      %621 = vmatpush.msra.mxu0 0.0
      %622 = vmatpush.msra.mxu0 %v325
      %623 = vmatmul.f32.gmra.mxu0 %v603
      %v624 = vpop.f32.mrf.mxu0
      %v625 = vadd.f32 0.0, %v624
      %626 = vmatmul.f32.gmra.mxu0 %v605
      %v627 = vpop.f32.mrf.mxu0
      %v628 = vadd.f32 0.0, %v627
      %629 = vdwg.mxu0
      %v632 = vrot.slane %v625, 4
      %v633 = vrot.slane %v628, 4
      %v636 = vadd.f32 %v582, %v625
      %v637 = vadd.f32 %v583, %v632
      %v638 = vadd.f32 %v584, %v628
      %v639 = vadd.f32 %v585, %v633
      %s640 = scalar_lea.vmem [#allocation2], 16
      %v641 = vld [vmem:[%s640] sm:$0xf]
      %v642 = vld [vmem:[%s640 + $0x8] sm:$0xf]
      %v643 = vld [vmem:[%s640 + $0x10] sm:$0xf]
      %v644 = vld [vmem:[%s640 + $0x18] sm:$0xf]
      %649 = vst [vmem:[#allocation1] ss:$2 sm:$0xff] %v641
      %s650 = scalar_lea.vmem [#allocation1], 1
      %651 = vst [vmem:[%s650] ss:$2 sm:$0xff] %v642
      %s652 = scalar_lea.vmem [#allocation1], 16
      %653 = vst [vmem:[%s652] ss:$2 sm:$0xff] %v643
      %s654 = scalar_lea.vmem [#allocation1], 17
      %655 = vst [vmem:[%s654] ss:$2 sm:$0xff] %v644
      %v656 = vld.sshfl [vmem:[#allocation1] sm:$0xff pattern:$0x75316420]
      %v657 = vld.sshfl [vmem:[#allocation1 + $0x10] sm:$0xff pattern:$0x75316420]
      %v658 = vsel %vm350, %v656, 0
      %v660 = vsel %vm350, %v657, 0
      %662 = vmatpush.msra.mxu0 0.0
      %663 = vmatpush.msra.mxu0 0.0
      %664 = vmatpush.msra.mxu0 0.0
      %665 = vmatpush.msra.mxu0 0.0
      %666 = vmatpush.msra.mxu0 0.0
      %667 = vmatpush.msra.mxu0 0.0
      %668 = vmatpush.msra.mxu0 0.0
      %669 = vmatpush.msra.mxu0 0.0
      %670 = vmatpush.msra.mxu0 0.0
      %671 = vmatpush.msra.mxu0 0.0
      %672 = vmatpush.msra.mxu0 0.0
      %673 = vmatpush.msra.mxu0 0.0
      %674 = vmatpush.msra.mxu0 0.0
      %675 = vmatpush.msra.mxu0 0.0
      %676 = vmatpush.msra.mxu0 0.0
      %677 = vmatpush.msra.mxu0 %v326
      %678 = vmatmul.f32.gmra.mxu0 %v658
      %v679 = vpop.f32.mrf.mxu0
      %v680 = vadd.f32 0.0, %v679
      %681 = vmatmul.f32.gmra.mxu0 %v660
      %v682 = vpop.f32.mrf.mxu0
      %v683 = vadd.f32 0.0, %v682
      %684 = vdwg.mxu0
      %v687 = vrot.slane %v680, 4
      %v688 = vrot.slane %v683, 4
      %v691 = vadd.f32 %v636, %v680
      %v692 = vadd.f32 %v637, %v687
      %v693 = vadd.f32 %v638, %v683
      %v694 = vadd.f32 %v639, %v688
      %v695 = vld [vmem:[%s640 + $0x1] sm:$0xf]
      %v696 = vld [vmem:[%s640 + $0x9] sm:$0xf]
      %v697 = vld [vmem:[%s640 + $0x11] sm:$0xf]
      %v698 = vld [vmem:[%s640 + $0x19] sm:$0xf]
      %703 = vst [vmem:[#allocation1] ss:$2 sm:$0xff] %v695
      %s704 = scalar_lea.vmem [#allocation1], 1
      %705 = vst [vmem:[%s704] ss:$2 sm:$0xff] %v696
      %s706 = scalar_lea.vmem [#allocation1], 16
      %707 = vst [vmem:[%s706] ss:$2 sm:$0xff] %v697
      %s708 = scalar_lea.vmem [#allocation1], 17
      %709 = vst [vmem:[%s708] ss:$2 sm:$0xff] %v698
      %v710 = vld.sshfl [vmem:[#allocation1] sm:$0xff pattern:$0x75316420]
      %v711 = vld.sshfl [vmem:[#allocation1 + $0x10] sm:$0xff pattern:$0x75316420]
      %v712 = vsel %vm350, %v710, 0
      %v714 = vsel %vm350, %v711, 0
      %716 = vmatpush.msra.mxu0 0.0
      %717 = vmatpush.msra.mxu0 0.0
      %718 = vmatpush.msra.mxu0 0.0
      %719 = vmatpush.msra.mxu0 0.0
      %720 = vmatpush.msra.mxu0 0.0
      %721 = vmatpush.msra.mxu0 0.0
      %722 = vmatpush.msra.mxu0 0.0
      %723 = vmatpush.msra.mxu0 0.0
      %724 = vmatpush.msra.mxu0 0.0
      %725 = vmatpush.msra.mxu0 0.0
      %726 = vmatpush.msra.mxu0 0.0
      %727 = vmatpush.msra.mxu0 0.0
      %728 = vmatpush.msra.mxu0 0.0
      %729 = vmatpush.msra.mxu0 0.0
      %730 = vmatpush.msra.mxu0 0.0
      %731 = vmatpush.msra.mxu0 %v327
      %732 = vmatmul.f32.gmra.mxu0 %v712
      %v733 = vpop.f32.mrf.mxu0
      %v734 = vadd.f32 0.0, %v733
      %735 = vmatmul.f32.gmra.mxu0 %v714
      %v736 = vpop.f32.mrf.mxu0
      %v737 = vadd.f32 0.0, %v736
      %738 = vdwg.mxu0
      %v741 = vrot.slane %v734, 4
      %v742 = vrot.slane %v737, 4
      %v745 = vadd.f32 %v691, %v734
      %v746 = vadd.f32 %v692, %v741
      %v747 = vadd.f32 %v693, %v737
      %v748 = vadd.f32 %v694, %v742
      %v749 = vld [vmem:[%s640 + $0x2] sm:$0xf]
      %v750 = vld [vmem:[%s640 + $0xa] sm:$0xf]
      %v751 = vld [vmem:[%s640 + $0x12] sm:$0xf]
      %v752 = vld [vmem:[%s640 + $0x1a] sm:$0xf]
      %757 = vst [vmem:[#allocation1] ss:$2 sm:$0xff] %v749
      %s758 = scalar_lea.vmem [#allocation1], 1
      %759 = vst [vmem:[%s758] ss:$2 sm:$0xff] %v750
      %s760 = scalar_lea.vmem [#allocation1], 16
      %761 = vst [vmem:[%s760] ss:$2 sm:$0xff] %v751
      %s762 = scalar_lea.vmem [#allocation1], 17
      %763 = vst [vmem:[%s762] ss:$2 sm:$0xff] %v752
      %v764 = vld.sshfl [vmem:[#allocation1] sm:$0xff pattern:$0x75316420]
      %v765 = vld.sshfl [vmem:[#allocation1 + $0x10] sm:$0xff pattern:$0x75316420]
      %v766 = vsel %vm350, %v764, 0
      %v768 = vsel %vm350, %v765, 0
      %770 = vmatpush.msra.mxu0 0.0
      %771 = vmatpush.msra.mxu0 0.0
      %772 = vmatpush.msra.mxu0 0.0
      %773 = vmatpush.msra.mxu0 0.0
      %774 = vmatpush.msra.mxu0 0.0
      %775 = vmatpush.msra.mxu0 0.0
      %776 = vmatpush.msra.mxu0 0.0
      %777 = vmatpush.msra.mxu0 0.0
      %778 = vmatpush.msra.mxu0 0.0
      %779 = vmatpush.msra.mxu0 0.0
      %780 = vmatpush.msra.mxu0 0.0
      %781 = vmatpush.msra.mxu0 0.0
      %782 = vmatpush.msra.mxu0 0.0
      %783 = vmatpush.msra.mxu0 0.0
      %784 = vmatpush.msra.mxu0 0.0
      %785 = vmatpush.msra.mxu0 %v328
      %786 = vmatmul.f32.gmra.mxu0 %v766
      %v787 = vpop.f32.mrf.mxu0
      %v788 = vadd.f32 0.0, %v787
      %789 = vmatmul.f32.gmra.mxu0 %v768
      %v790 = vpop.f32.mrf.mxu0
      %v791 = vadd.f32 0.0, %v790
      %792 = vdwg.mxu0
      %v795 = vrot.slane %v788, 4
      %v796 = vrot.slane %v791, 4
      %v799 = vadd.f32 %v745, %v788
      %v800 = vadd.f32 %v746, %v795
      %v801 = vadd.f32 %v747, %v791
      %v802 = vadd.f32 %v748, %v796
      %v803 = vld [vmem:[%s3] sm:$0x1]
      %v805 = vperm.slane %v803, 0
      %v807 = vmul.f32 %v799, %v805
      %v808 = vmul.f32 %v800, %v805
      %v809 = vmul.f32 %v801, %v805
      %v810 = vmul.f32 %v802, %v805
      %v811 = vld [vmem:[%s4] sm:$0x1]
      %v813 = vperm.slane %v811, 0
      %v815 = vadd.f32 %v807, %v813
      %v816 = vadd.f32 %v808, %v813
      %v817 = vadd.f32 %v809, %v813
      %v818 = vadd.f32 %v810, %v813
      %819 = vst.msk [vmem:[%s289] sm:$0xf] %vm305, %v815
      %820 = vst.msk [vmem:[%s289 + $0x4] sm:$0xf] %vm305, %v816
      %821 = vst.msk [vmem:[%s289 + $0x8] sm:$0xf] %vm305, %v817
      %822 = vst.msk [vmem:[%s289 + $0xc] sm:$0xf] %vm305, %v818
      %s823 = smul.u32 4, %s21
      %p824 = scmp.lt.s32.totalorder %s20, 1
      %s825 = scalar_select %p824, %s20, 1
      %p826 = scmp.lt.s32.totalorder %s823, 3
      %s827 = scalar_select %p826, %s823, 3
      %s828 = smul.addr %s825, 4
      %s829 = sadd.s32 %s827, %s828
      %s830 = smul.addr %s829, 4
      %s831 = scalar_lea.vmem %s5, %s830
      // Predicated region
      $region41: #{_lambda_.7} parent=39 // pred_check
        %p832 = pneg %p167
      $region42: #{_lambda_.7} parent=39 // pred_check_branch
        %834 = sbr.rel (%p832) target = $region44
      $region43: #{_lambda_.7} parent=39 // pred_region
        %s835 = smul.u32 4, %s21
      $region44: #{_lambda_.7} parent=39 // pred_fallthru
        _
    $region40: #{_lambda_.7} parent=5 // pred_fallthru
      _
    %p836 = scmp.le.s32.totalorder 2, %s11
    // Predicated region
    $region45: #{_lambda_.7} parent=5 // pred_check
      %p837 = pneg %p836
    $region46: #{_lambda_.7} parent=5 // pred_check_branch
      %839 = sbr.rel (%p837) target = $region48
    $region47: #{_lambda_.7} parent=5 // pred_region
      %s840 = ssub.s32 %s11, 2
      // Predicated region
      $region49: #{_lambda_.7} parent=47 // pred_check
        %p841 = pneg %p173
      $region50: #{_lambda_.7} parent=47 // pred_check_branch
        %843 = sbr.rel (%p841) target = $region52
      $region51: #{_lambda_.7} parent=47 // pred_region
        %s844 = smul.u32 4, %s23
        %p845 = scmp.lt.s32.totalorder %s22, 1
        %s846 = scalar_select %p845, %s22, 1
        %p847 = scmp.lt.s32.totalorder %s844, 3
        %s848 = scalar_select %p847, %s844, 3
        %s849 = smul.addr %s846, 4
        %s850 = sadd.s32 %s848, %s849
        %s851 = smul.addr %s850, 4
        %s852 = scalar_lea.vmem %s5, %s851
      $region52: #{_lambda_.7} parent=47 // pred_fallthru
        _
    $region48: #{_lambda_.7} parent=5 // pred_fallthru
      _
  $region6: #{_lambda_.7} parent=0 // loop_footer
    %s15 = sadd.s32 1, %s11
  $region7: #{_lambda_.7} parent=0 // loop_footer_branch
    %10 = sbr.rel target = $region3
  $region8: #{_lambda_.7} parent=0 // loop_exit
    _

// kernel: _lambda_.6
$region0: #{_lambda_.6}
  #allocation0 [shape = 'u32[]', space=smem, size = 0x4, offset = 0x4, fixed_abs, tag = 'smem constant byte address 0x4 - core index']
  #allocation1 [shape = 'u32[72,128]{1,0:T(1,128)}', space=vmem, size = 0x9000, scoped, tag = 'internal scratch']
  #allocation2 [shape = 'f32[10,18,8]{2,1,0:T(8,128)}', space=vmem, size = 0x1e000, scoped, tag = 'scratch operand']
  %s0 = inlined_call_operand.vmem [shape: f32[2,16,16,8], index: 0, kind: input, shape index: {}]
  %s1 = inlined_call_operand.vmem [shape: f32[4,2,16,8], index: 1, kind: input, shape index: {}]
  %s2 = inlined_call_operand.vmem [shape: f32[3,3,8,8], index: 2, kind: input, shape index: {}]
  %s3 = inlined_call_operand.vmem [shape: f32[1,8], index: 3, kind: input, shape index: {}]
  %s4 = inlined_call_operand.vmem [shape: f32[1,8], index: 4, kind: input, shape index: {}]
  %s5 = inlined_call_operand.vmem [shape: f32[1,8], index: 5, kind: input, shape index: {}]
  %s6 = inlined_call_operand.vmem [shape: f32[1,8], index: 6, kind: input, shape index: {}]
  %s7 = inlined_call_operand.vmem [shape: f32[2,16,16,8], index: 7, kind: output, shape index: {}]
  %s8 = sld [smem:[#allocation0]]
  $region61: #{_lambda_.6} parent=0
    _
  %s10 = ssub.s32 1, %s8
  %s11 = scalar_select 0, %s10, %s8
  loop: start=0, step=1, limit=6
  $region2: #{_lambda_.6} parent=0 // loop_pre_header
    _
  $region3: #{_lambda_.6} parent=0 // loop_header
    %s13 = sphi 0, %s17
    %p14 = scmp.ge.s32.totalorder %s13, 6
    %s20 = sphi 0, %s32
    %s21 = sphi 0, %s28
    %s22 = sphi 0, %s20
    %s23 = sphi 0, %s21
    %s24 = sphi 0, %s22
    %s25 = sphi 0, %s23
    %s37 = sphi 0, %s39
    %s40 = sphi 0, %s37
    %s41 = sphi 0, %s40
    %s57 = sphi 0, %s41
    %s67 = sphi 0, %s69
    %s70 = sphi 0, %s67
    %s71 = sphi 0, %s70
    %s87 = sphi 0, %s71
    %s91 = sphi 0, %s91
    %s93 = sphi 0, %s91
    %s94 = sphi 0, %s93
    %s108 = sphi 0, %s94
    %s112 = sphi 0, %s112
    %s114 = sphi 0, %s112
    %s115 = sphi 0, %s114
    %s129 = sphi 0, %s115
    %s133 = sphi 0, %s133
    %s135 = sphi 0, %s133
    %s136 = sphi 0, %s135
    %s150 = sphi 0, %s136
    %s154 = sphi 0, %s154
    %s156 = sphi 0, %s154
    %s157 = sphi 0, %s156
    %s171 = sphi 0, %s157
    %s175 = sphi 0, %s175
    %s177 = sphi 0, %s175
    %s178 = sphi 0, %s177
    %s192 = sphi 0, %s178
    %s200 = sphi 0, %s202
    %s203 = sphi 0, %s200
    %s204 = sphi 0, %s203
    %s220 = sphi 0, %s204
  $region4: #{_lambda_.6} parent=0 // loop_header_branch
    %16 = sbr.rel (%p14) target = $region8
  $region5: #{_lambda_.6} parent=0 // loop_body
    %s18 = ssub.s32 %s13, 1
    %s19 = ssub.s32 %s13, 2
    %s26 = sadd.s32 1, %s21
    %p27 = scmp.ge.s32.totalorder %s26, 2
    %s28 = scalar_select %p27, 0, %s26
    %s29 = sadd.s32 1, %s20
    %s30 = scalar_select %p27, %s29, %s20
    %p31 = scmp.ge.s32.totalorder %s30, 2
    %s32 = scalar_select %p31, 0, %s30
    %s33 = ssub.s32 %s20, %s32
    %s34 = ssub.s32 %s21, %s28
    %s35 = sor.u32 %s33, %s34
    %p36 = scmp.eq.s32.totalorder %s35, 0
    %s38 = sadd.s32 %s37, 1
    %s39 = scalar_select %p36, %s37, %s38
    %p42 = pneg %p36
    %p43 = scmp.eq.s32.totalorder %s13, 3
    %p44 = por %p42, %p43
    %p45 = scmp.ne.s32.totalorder %s37, %s40
    %p46 = scmp.eq.s32.totalorder %s13, 0
    %p47 = por %p45, %p46
    %p48 = scmp.ne.s32.totalorder %s37, %s40
    %p49 = scmp.eq.s32.totalorder %s18, 3
    %p50 = por %p48, %p49
    %p51 = scmp.ne.s32.totalorder %s40, %s41
    %p52 = scmp.eq.s32.totalorder %s18, 0
    %p53 = por %p51, %p52
    %p54 = scmp.ne.s32.totalorder %s40, %s41
    %p55 = scmp.eq.s32.totalorder %s19, 3
    %p56 = por %p54, %p55
    %p58 = scmp.ne.s32.totalorder %s41, %s57
    %p59 = scmp.eq.s32.totalorder %s19, 0
    %p60 = por %p58, %p59
    %s61 = smul.u32 %s20, 2
    %s62 = sadd.s32 %s61, %s21
    %s63 = smul.u32 %s32, 2
    %s64 = sadd.s32 %s63, %s28
    %s65 = ssub.s32 %s62, %s64
    %p66 = scmp.eq.s32.totalorder %s65, 0
    %s68 = sadd.s32 %s67, 1
    %s69 = scalar_select %p66, %s67, %s68
    %p72 = pneg %p66
    %p73 = scmp.eq.s32.totalorder %s13, 3
    %p74 = por %p72, %p73
    %p75 = scmp.ne.s32.totalorder %s67, %s70
    %p76 = scmp.eq.s32.totalorder %s13, 0
    %p77 = por %p75, %p76
    %p78 = scmp.ne.s32.totalorder %s67, %s70
    %p79 = scmp.eq.s32.totalorder %s18, 3
    %p80 = por %p78, %p79
    %p81 = scmp.ne.s32.totalorder %s70, %s71
    %p82 = scmp.eq.s32.totalorder %s18, 0
    %p83 = por %p81, %p82
    %p84 = scmp.ne.s32.totalorder %s70, %s71
    %p85 = scmp.eq.s32.totalorder %s19, 3
    %p86 = por %p84, %p85
    %p88 = scmp.ne.s32.totalorder %s71, %s87
    %p89 = scmp.eq.s32.totalorder %s19, 0
    %p90 = por %p88, %p89
    %s92 = sadd.s32 %s91, 1
    %p95 = scmp.eq.s32.totalorder %s13, 3
    %p96 = scmp.ne.s32.totalorder %s91, %s93
    %p97 = scmp.eq.s32.totalorder %s13, 0
    %p98 = por %p96, %p97
    %p99 = scmp.ne.s32.totalorder %s91, %s93
    %p100 = scmp.eq.s32.totalorder %s18, 3
    %p101 = por %p99, %p100
    %p102 = scmp.ne.s32.totalorder %s93, %s94
    %p103 = scmp.eq.s32.totalorder %s18, 0
    %p104 = por %p102, %p103
    %p105 = scmp.ne.s32.totalorder %s93, %s94
    %p106 = scmp.eq.s32.totalorder %s19, 3
    %p107 = por %p105, %p106
    %p109 = scmp.ne.s32.totalorder %s94, %s108
    %p110 = scmp.eq.s32.totalorder %s19, 0
    %p111 = por %p109, %p110
    %s113 = sadd.s32 %s112, 1
    %p116 = scmp.eq.s32.totalorder %s13, 3
    %p117 = scmp.ne.s32.totalorder %s112, %s114
    %p118 = scmp.eq.s32.totalorder %s13, 0
    %p119 = por %p117, %p118
    %p120 = scmp.ne.s32.totalorder %s112, %s114
    %p121 = scmp.eq.s32.totalorder %s18, 3
    %p122 = por %p120, %p121
    %p123 = scmp.ne.s32.totalorder %s114, %s115
    %p124 = scmp.eq.s32.totalorder %s18, 0
    %p125 = por %p123, %p124
    %p126 = scmp.ne.s32.totalorder %s114, %s115
    %p127 = scmp.eq.s32.totalorder %s19, 3
    %p128 = por %p126, %p127
    %p130 = scmp.ne.s32.totalorder %s115, %s129
    %p131 = scmp.eq.s32.totalorder %s19, 0
    %p132 = por %p130, %p131
    %s134 = sadd.s32 %s133, 1
    %p137 = scmp.eq.s32.totalorder %s13, 3
    %p138 = scmp.ne.s32.totalorder %s133, %s135
    %p139 = scmp.eq.s32.totalorder %s13, 0
    %p140 = por %p138, %p139
    %p141 = scmp.ne.s32.totalorder %s133, %s135
    %p142 = scmp.eq.s32.totalorder %s18, 3
    %p143 = por %p141, %p142
    %p144 = scmp.ne.s32.totalorder %s135, %s136
    %p145 = scmp.eq.s32.totalorder %s18, 0
    %p146 = por %p144, %p145
    %p147 = scmp.ne.s32.totalorder %s135, %s136
    %p148 = scmp.eq.s32.totalorder %s19, 3
    %p149 = por %p147, %p148
    %p151 = scmp.ne.s32.totalorder %s136, %s150
    %p152 = scmp.eq.s32.totalorder %s19, 0
    %p153 = por %p151, %p152
    %s155 = sadd.s32 %s154, 1
    %p158 = scmp.eq.s32.totalorder %s13, 3
    %p159 = scmp.ne.s32.totalorder %s154, %s156
    %p160 = scmp.eq.s32.totalorder %s13, 0
    %p161 = por %p159, %p160
    %p162 = scmp.ne.s32.totalorder %s154, %s156
    %p163 = scmp.eq.s32.totalorder %s18, 3
    %p164 = por %p162, %p163
    %p165 = scmp.ne.s32.totalorder %s156, %s157
    %p166 = scmp.eq.s32.totalorder %s18, 0
    %p167 = por %p165, %p166
    %p168 = scmp.ne.s32.totalorder %s156, %s157
    %p169 = scmp.eq.s32.totalorder %s19, 3
    %p170 = por %p168, %p169
    %p172 = scmp.ne.s32.totalorder %s157, %s171
    %p173 = scmp.eq.s32.totalorder %s19, 0
    %p174 = por %p172, %p173
    %s176 = sadd.s32 %s175, 1
    %p179 = scmp.eq.s32.totalorder %s13, 3
    %p180 = scmp.ne.s32.totalorder %s175, %s177
    %p181 = scmp.eq.s32.totalorder %s13, 0
    %p182 = por %p180, %p181
    %p183 = scmp.ne.s32.totalorder %s175, %s177
    %p184 = scmp.eq.s32.totalorder %s18, 3
    %p185 = por %p183, %p184
    %p186 = scmp.ne.s32.totalorder %s177, %s178
    %p187 = scmp.eq.s32.totalorder %s18, 0
    %p188 = por %p186, %p187
    %p189 = scmp.ne.s32.totalorder %s177, %s178
    %p190 = scmp.eq.s32.totalorder %s19, 3
    %p191 = por %p189, %p190
    %p193 = scmp.ne.s32.totalorder %s178, %s192
    %p194 = scmp.eq.s32.totalorder %s19, 0
    %p195 = por %p193, %p194
    %s196 = ssub.s32 %s20, %s32
    %s197 = ssub.s32 %s21, %s28
    %s198 = sor.u32 %s196, %s197
    %p199 = scmp.eq.s32.totalorder %s198, 0
    %s201 = sadd.s32 %s200, 1
    %s202 = scalar_select %p199, %s200, %s201
    %p205 = pneg %p199
    %p206 = scmp.eq.s32.totalorder %s13, 3
    %p207 = por %p205, %p206
    %p208 = scmp.ne.s32.totalorder %s200, %s203
    %p209 = scmp.eq.s32.totalorder %s13, 0
    %p210 = por %p208, %p209
    %p211 = scmp.ne.s32.totalorder %s200, %s203
    %p212 = scmp.eq.s32.totalorder %s18, 3
    %p213 = por %p211, %p212
    %p214 = scmp.ne.s32.totalorder %s203, %s204
    %p215 = scmp.eq.s32.totalorder %s18, 0
    %p216 = por %p214, %p215
    %p217 = scmp.ne.s32.totalorder %s203, %s204
    %p218 = scmp.eq.s32.totalorder %s19, 3
    %p219 = por %p217, %p218
    %p221 = scmp.ne.s32.totalorder %s204, %s220
    %p222 = scmp.eq.s32.totalorder %s19, 0
    %p223 = por %p221, %p222
    %p224 = scmp.le.s32.totalorder 1, %s13
    %p225 = scmp.lt.s32.totalorder %s13, 5
    %p226 = pnand %p224, %p225
    %p227 = pneg %p226
    // Predicated region
    $region9: #{_lambda_.6} parent=5 // pred_check
      _
    $region10: #{_lambda_.6} parent=5 // pred_check_branch
      %229 = sbr.rel (%p226) target = $region12
    $region11: #{_lambda_.6} parent=5 // pred_region
      %s230 = ssub.s32 %s13, 1
      // Predicated region
      $region13: #{_lambda_.6} parent=11 // pred_check
        %p231 = pneg %p104
      $region14: #{_lambda_.6} parent=11 // pred_check_branch
        %233 = sbr.rel (%p231) target = $region16
      $region15: #{_lambda_.6} parent=11 // pred_region
        _
      $region16: #{_lambda_.6} parent=11 // pred_fallthru
        _
      // Predicated region
      $region17: #{_lambda_.6} parent=11 // pred_check
        %p234 = pneg %p125
      $region18: #{_lambda_.6} parent=11 // pred_check_branch
        %236 = sbr.rel (%p234) target = $region20
      $region19: #{_lambda_.6} parent=11 // pred_region
        _
      $region20: #{_lambda_.6} parent=11 // pred_fallthru
        _
      // Predicated region
      $region21: #{_lambda_.6} parent=11 // pred_check
        %p237 = pneg %p146
      $region22: #{_lambda_.6} parent=11 // pred_check_branch
        %239 = sbr.rel (%p237) target = $region24
      $region23: #{_lambda_.6} parent=11 // pred_region
        _
      $region24: #{_lambda_.6} parent=11 // pred_fallthru
        _
      // Predicated region
      $region25: #{_lambda_.6} parent=11 // pred_check
        %p240 = pneg %p167
      $region26: #{_lambda_.6} parent=11 // pred_check_branch
        %242 = sbr.rel (%p240) target = $region28
      $region27: #{_lambda_.6} parent=11 // pred_region
        _
      $region28: #{_lambda_.6} parent=11 // pred_fallthru
        _
      // Predicated region
      $region29: #{_lambda_.6} parent=11 // pred_check
        %p243 = pneg %p188
      $region30: #{_lambda_.6} parent=11 // pred_check_branch
        %245 = sbr.rel (%p243) target = $region32
      $region31: #{_lambda_.6} parent=11 // pred_region
        _
      $region32: #{_lambda_.6} parent=11 // pred_fallthru
        _
    $region12: #{_lambda_.6} parent=5 // pred_fallthru
      _
    %p246 = scmp.lt.s32.totalorder %s13, 4
    // Predicated region
    $region33: #{_lambda_.6} parent=5 // pred_check
      %p247 = pneg %p246
    $region34: #{_lambda_.6} parent=5 // pred_check_branch
      %249 = sbr.rel (%p247) target = $region36
    $region35: #{_lambda_.6} parent=5 // pred_region
      // Predicated region
      $region37: #{_lambda_.6} parent=35 // pred_check
        %p250 = pneg %p47
      $region38: #{_lambda_.6} parent=35 // pred_check_branch
        %252 = sbr.rel (%p250) target = $region40
      $region39: #{_lambda_.6} parent=35 // pred_region
        %s253 = smul.u32 8, %s21
        %p254 = scmp.lt.s32.totalorder %s20, 1
        %s255 = scalar_select %p254, %s20, 1
        %p256 = scmp.lt.s32.totalorder %s253, 15
        %s257 = scalar_select %p256, %s253, 15
        %s258 = smul.addr %s257, 2
        %s259 = smul.addr %s255, 32
        %s260 = sadd.s32 %s258, %s259
        %s261 = smul.addr %s260, 8
        %s262 = scalar_lea.vmem %s0, %s261
        %s263 = smul.u32 8, %s21
      $region40: #{_lambda_.6} parent=35 // pred_fallthru
        _
      // Predicated region
      $region41: #{_lambda_.6} parent=35 // pred_check
        %p264 = pneg %p77
      $region42: #{_lambda_.6} parent=35 // pred_check_branch
        %266 = sbr.rel (%p264) target = $region44
      $region43: #{_lambda_.6} parent=35 // pred_region
        %s267 = smul.u32 %s20, 2
        %s268 = sadd.s32 %s267, %s21
        %p269 = scmp.lt.s32.totalorder %s268, 3
        %s270 = scalar_select %p269, %s268, 3
        %s271 = smul.addr %s270, 4
        %s272 = smul.addr %s271, 8
        %s273 = scalar_lea.vmem %s1, %s272
        %s274 = smul.u32 %s20, 2
        %s275 = sadd.s32 %s274, %s21
      $region44: #{_lambda_.6} parent=35 // pred_fallthru
        _
    $region36: #{_lambda_.6} parent=5 // pred_fallthru
      _
    %p276 = scmp.le.s32.totalorder 1, %s13
    %p277 = scmp.lt.s32.totalorder %s13, 5
    %p278 = pnand %p276, %p277
    %p279 = pneg %p278
    // Predicated region
    $region45: #{_lambda_.6} parent=5 // pred_check
      _
    $region46: #{_lambda_.6} parent=5 // pred_check_branch
      %281 = sbr.rel (%p278) target = $region48
    $region47: #{_lambda_.6} parent=5 // pred_region
      %s282 = ssub.s32 %s13, 1
      %s283 = smul.u32 8, %s23
      %p284 = scmp.lt.s32.totalorder %s22, 1
      %s285 = scalar_select %p284, %s22, 1
      %p286 = scmp.lt.s32.totalorder %s283, 15
      %s287 = scalar_select %p286, %s283, 15
      %s288 = smul.addr %s287, 2
      %s289 = smul.addr %s285, 32
      %s290 = sadd.s32 %s288, %s289
      %s291 = smul.addr %s290, 8
      %s292 = scalar_lea.vmem %s0, %s291
      %p293 = pneg %p53
      %p294 = pneg %p50
      %s295 = smul.u32 %s22, 2
      %s296 = sadd.s32 %s295, %s23
      %p297 = scmp.lt.s32.totalorder %s296, 3
      %s298 = scalar_select %p297, %s296, 3
      %s299 = smul.addr %s298, 4
      %s300 = smul.addr %s299, 8
      %s301 = scalar_lea.vmem %s1, %s300
      %p302 = pneg %p83
      %p303 = pneg %p80
      %p304 = pneg %p104
      %p305 = pneg %p101
      %p306 = pneg %p125
      %p307 = pneg %p122
      %p308 = pneg %p146
      %p309 = pneg %p143
      %p310 = pneg %p167
      %p311 = pneg %p164
      %p312 = pneg %p188
      %p313 = pneg %p185
      %p314 = pneg %p216
      %p315 = pneg %p213
      %s316 = smul.u32 8, %s23
      %p317 = scmp.lt.s32.totalorder %s22, 1
      %s318 = scalar_select %p317, %s22, 1
      %p319 = scmp.lt.s32.totalorder %s316, 15
      %s320 = scalar_select %p319, %s316, 15
      %s321 = smul.addr %s320, 2
      %s322 = smul.addr %s318, 32
      %s323 = sadd.s32 %s321, %s322
      %s324 = smul.addr %s323, 8
      %s325 = scalar_lea.vmem %s7, %s324
      %s326 = smul.u32 8, %s23
      %p327 = scmp.lt.s32.totalorder %s22, 1
      %s328 = scalar_select %p327, %s22, 1
      %p329 = scmp.lt.s32.totalorder %s326, 15
      %s330 = scalar_select %p329, %s326, 15
      %s331 = smul.addr %s330, 2
      %s332 = smul.addr %s328, 32
      %s333 = sadd.s32 %s331, %s332
      %s334 = smul.addr %s333, 8
      %s335 = scalar_lea.vmem %s0, %s334
      %s336 = smul.u32 8, %s23
      %s337 = smul.u32 %s22, 2
      %s338 = sadd.s32 %s337, %s23
      %p339 = scmp.lt.s32.totalorder %s338, 3
      %s340 = scalar_select %p339, %s338, 3
      %s341 = smul.addr %s340, 4
      %s342 = smul.addr %s341, 8
      %s343 = scalar_lea.vmem %s1, %s342
      %s344 = smul.u32 %s22, 2
      %s345 = sadd.s32 %s344, %s23
      %s346 = smul.u32 8, %s23
      %p347 = scmp.lt.s32.totalorder %s22, 1
      %s348 = scalar_select %p347, %s22, 1
      %p349 = scmp.lt.s32.totalorder %s346, 15
      %s350 = scalar_select %p349, %s346, 15
      %s351 = smul.addr %s350, 2
      %s352 = smul.addr %s348, 32
      %s353 = sadd.s32 %s351, %s352
      %s354 = smul.addr %s353, 8
      %s355 = scalar_lea.vmem %s7, %s354
      %s356 = smul.u32 8, %s23
      %vm357 = vcmask 57344
      %358 = vst.msk [vmem:[#allocation2] sm:$0x1] %vm357, 0.0
      %359 = vst.msk [vmem:[#allocation2 + $0x18] sm:$0x1] %vm357, 0.0
      %360 = vst.msk [vmem:[#allocation2 + $0x30] sm:$0x1] %vm357, 0.0
      %361 = vst.msk [vmem:[#allocation2 + $0x48] sm:$0x1] %vm357, 0.0
      %362 = vst.msk [vmem:[#allocation2 + $0x60] sm:$0x1] %vm357, 0.0
      %363 = vst.msk [vmem:[#allocation2 + $0x78] sm:$0x1] %vm357, 0.0
      %364 = vst.msk [vmem:[#allocation2 + $0x90] sm:$0x1] %vm357, 0.0
      %365 = vst.msk [vmem:[#allocation2 + $0xa8] sm:$0x1] %vm357, 0.0
      %366 = vst.msk [vmem:[#allocation2 + $0xc0] sm:$0x1] %vm357, 0.0
      %367 = vst.msk [vmem:[#allocation2 + $0xd8] sm:$0x1] %vm357, 0.0
      %368 = vst.msk [vmem:[#allocation2 + $0x11] sm:$0x1] %vm357, 0.0
      %369 = vst.msk [vmem:[#allocation2 + $0x29] sm:$0x1] %vm357, 0.0
      %370 = vst.msk [vmem:[#allocation2 + $0x41] sm:$0x1] %vm357, 0.0
      %371 = vst.msk [vmem:[#allocation2 + $0x59] sm:$0x1] %vm357, 0.0
      %372 = vst.msk [vmem:[#allocation2 + $0x71] sm:$0x1] %vm357, 0.0
      %373 = vst.msk [vmem:[#allocation2 + $0x89] sm:$0x1] %vm357, 0.0
      %374 = vst.msk [vmem:[#allocation2 + $0xa1] sm:$0x1] %vm357, 0.0
      %375 = vst.msk [vmem:[#allocation2 + $0xb9] sm:$0x1] %vm357, 0.0
      %376 = vst.msk [vmem:[#allocation2 + $0xd1] sm:$0x1] %vm357, 0.0
      %377 = vst.msk [vmem:[#allocation2 + $0xe9] sm:$0x1] %vm357, 0.0
      %v378 = vld [vmem:[%s343] sm:$0xff]
      %v379 = vld [vmem:[%s343 + $0x8] sm:$0xff]
      %vm380 = vcmask 64512
      %381 = vst.msk [vmem:[#allocation2 + $0x1] sm:$0xff] %vm380, %v378
      %382 = vst.msk [vmem:[#allocation2 + $0x9] sm:$0xff] %vm380, %v379
      %s383 = scalar_lea.vmem %s343, 16
      %v384 = vld [vmem:[%s383] sm:$0xff]
      %v385 = vld [vmem:[%s383 + $0x8] sm:$0xff]
      %s386 = scalar_lea.vmem [#allocation2], 216
      %387 = vst.msk [vmem:[%s386 + $0x1] sm:$0xff] %vm380, %v384
      %388 = vst.msk [vmem:[%s386 + $0x9] sm:$0xff] %vm380, %v385
      %v389 = vld [vmem:[%s335] sm:$0xff]
      %v390 = vld [vmem:[%s335 + $0x8] sm:$0xff]
      %v391 = vld [vmem:[%s335 + $0x10] sm:$0xff]
      %v392 = vld [vmem:[%s335 + $0x18] sm:$0xff]
      %v393 = vld [vmem:[%s335 + $0x20] sm:$0xff]
      %v394 = vld [vmem:[%s335 + $0x28] sm:$0xff]
      %v395 = vld [vmem:[%s335 + $0x30] sm:$0xff]
      %v396 = vld [vmem:[%s335 + $0x38] sm:$0xff]
      %v397 = vld [vmem:[%s335 + $0x40] sm:$0xff]
      %v398 = vld [vmem:[%s335 + $0x48] sm:$0xff]
      %v399 = vld [vmem:[%s335 + $0x50] sm:$0xff]
      %v400 = vld [vmem:[%s335 + $0x58] sm:$0xff]
      %v401 = vld [vmem:[%s335 + $0x60] sm:$0xff]
      %v402 = vld [vmem:[%s335 + $0x68] sm:$0xff]
      %v403 = vld [vmem:[%s335 + $0x70] sm:$0xff]
      %v404 = vld [vmem:[%s335 + $0x78] sm:$0xff]
      %s405 = scalar_lea.vmem [#allocation2], 24
      %406 = vst.msk [vmem:[%s405 + $0x1] sm:$0xff] %vm380, %v389
      %407 = vst.msk [vmem:[%s405 + $0x9] sm:$0xff] %vm380, %v390
      %408 = vst.msk [vmem:[%s405 + $0x19] sm:$0xff] %vm380, %v391
      %409 = vst.msk [vmem:[%s405 + $0x21] sm:$0xff] %vm380, %v392
      %410 = vst.msk [vmem:[%s405 + $0x31] sm:$0xff] %vm380, %v393
      %411 = vst.msk [vmem:[%s405 + $0x39] sm:$0xff] %vm380, %v394
      %412 = vst.msk [vmem:[%s405 + $0x49] sm:$0xff] %vm380, %v395
      %413 = vst.msk [vmem:[%s405 + $0x51] sm:$0xff] %vm380, %v396
      %414 = vst.msk [vmem:[%s405 + $0x61] sm:$0xff] %vm380, %v397
      %415 = vst.msk [vmem:[%s405 + $0x69] sm:$0xff] %vm380, %v398
      %416 = vst.msk [vmem:[%s405 + $0x79] sm:$0xff] %vm380, %v399
      %417 = vst.msk [vmem:[%s405 + $0x81] sm:$0xff] %vm380, %v400
      %418 = vst.msk [vmem:[%s405 + $0x91] sm:$0xff] %vm380, %v401
      %419 = vst.msk [vmem:[%s405 + $0x99] sm:$0xff] %vm380, %v402
      %420 = vst.msk [vmem:[%s405 + $0xa9] sm:$0xff] %vm380, %v403
      %421 = vst.msk [vmem:[%s405 + $0xb1] sm:$0xff] %vm380, %v404
      %v422 = vld [vmem:[%s2] sm:$0xff]
      %v423 = vld [vmem:[%s2 + $0x8] sm:$0xff]
      %v424 = vld [vmem:[%s2 + $0x10] sm:$0xff]
      %v425 = vld [vmem:[%s2 + $0x18] sm:$0xff]
      %v426 = vld [vmem:[%s2 + $0x20] sm:$0xff]
      %v427 = vld [vmem:[%s2 + $0x28] sm:$0xff]
      %v428 = vld [vmem:[%s2 + $0x30] sm:$0xff]
      %v429 = vld [vmem:[%s2 + $0x38] sm:$0xff]
      %v430 = vld [vmem:[%s2 + $0x40] sm:$0xff]
      %v431 = vld [vmem:[#allocation2] sm:$0xff]
      %v432 = vld [vmem:[#allocation2 + $0x8] sm:$0xff]
      %v433 = vld [vmem:[#allocation2 + $0x18] sm:$0xff]
      %v434 = vld [vmem:[#allocation2 + $0x20] sm:$0xff]
      %v435 = vld [vmem:[#allocation2 + $0x30] sm:$0xff]
      %v436 = vld [vmem:[#allocation2 + $0x38] sm:$0xff]
      %v437 = vld [vmem:[#allocation2 + $0x48] sm:$0xff]
      %v438 = vld [vmem:[#allocation2 + $0x50] sm:$0xff]
      %v439 = vld [vmem:[#allocation2 + $0x60] sm:$0xff]
      %v440 = vld [vmem:[#allocation2 + $0x68] sm:$0xff]
      %v441 = vld [vmem:[#allocation2 + $0x78] sm:$0xff]
      %v442 = vld [vmem:[#allocation2 + $0x80] sm:$0xff]
      %v443 = vld [vmem:[#allocation2 + $0x90] sm:$0xff]
      %v444 = vld [vmem:[#allocation2 + $0x98] sm:$0xff]
      %v445 = vld [vmem:[#allocation2 + $0xa8] sm:$0xff]
      %v446 = vld [vmem:[#allocation2 + $0xb0] sm:$0xff]
      %v447 = vld [vmem:[#allocation2 + $0x1] sm:$0xff]
      %v448 = vld [vmem:[#allocation2 + $0x9] sm:$0xff]
      %v449 = vld [vmem:[#allocation2 + $0x19] sm:$0xff]
      %v450 = vld [vmem:[#allocation2 + $0x21] sm:$0xff]
      %v451 = vld [vmem:[#allocation2 + $0x31] sm:$0xff]
      %v452 = vld [vmem:[#allocation2 + $0x39] sm:$0xff]
      %v453 = vld [vmem:[#allocation2 + $0x49] sm:$0xff]
      %v454 = vld [vmem:[#allocation2 + $0x51] sm:$0xff]
      %v455 = vld [vmem:[#allocation2 + $0x61] sm:$0xff]
      %v456 = vld [vmem:[#allocation2 + $0x69] sm:$0xff]
      %v457 = vld [vmem:[#allocation2 + $0x79] sm:$0xff]
      %v458 = vld [vmem:[#allocation2 + $0x81] sm:$0xff]
      %v459 = vld [vmem:[#allocation2 + $0x91] sm:$0xff]
      %v460 = vld [vmem:[#allocation2 + $0x99] sm:$0xff]
      %v461 = vld [vmem:[#allocation2 + $0xa9] sm:$0xff]
      %v462 = vld [vmem:[#allocation2 + $0xb1] sm:$0xff]
      %v464 = vsel %vm380, %v447, 0
      %v467 = vsel %vm380, %v448, 0
      %v470 = vsel %vm380, %v449, 0
      %v473 = vsel %vm380, %v450, 0
      %v476 = vsel %vm380, %v451, 0
      %v479 = vsel %vm380, %v452, 0
      %v482 = vsel %vm380, %v453, 0
      %v485 = vsel %vm380, %v454, 0
      %v488 = vsel %vm380, %v455, 0
      %v491 = vsel %vm380, %v456, 0
      %v494 = vsel %vm380, %v457, 0
      %v497 = vsel %vm380, %v458, 0
      %v500 = vsel %vm380, %v459, 0
      %v503 = vsel %vm380, %v460, 0
      %v506 = vsel %vm380, %v461, 0
      %v509 = vsel %vm380, %v462, 0
      %511 = vmatpush.msra.mxu0 0.0
      %512 = vmatpush.msra.mxu0 0.0
      %513 = vmatpush.msra.mxu0 0.0
      %514 = vmatpush.msra.mxu0 0.0
      %515 = vmatpush.msra.mxu0 0.0
      %516 = vmatpush.msra.mxu0 0.0
      %517 = vmatpush.msra.mxu0 0.0
      %518 = vmatpush.msra.mxu0 0.0
      %519 = vmatpush.msra.mxu0 0.0
      %520 = vmatpush.msra.mxu0 0.0
      %521 = vmatpush.msra.mxu0 0.0
      %522 = vmatpush.msra.mxu0 0.0
      %523 = vmatpush.msra.mxu0 0.0
      %524 = vmatpush.msra.mxu0 0.0
      %525 = vmatpush.msra.mxu0 0.0
      %526 = vmatpush.msra.mxu0 %v423
      %527 = vmatmul.f32.gmra.mxu0 %v464
      %v528 = vpop.f32.mrf.mxu0
      %v529 = vadd.f32 0.0, %v528
      %530 = vmatmul.f32.gmra.mxu0 %v467
      %v531 = vpop.f32.mrf.mxu0
      %v532 = vadd.f32 0.0, %v531
      %533 = vmatmul.f32.gmra.mxu0 %v470
      %v534 = vpop.f32.mrf.mxu0
      %v535 = vadd.f32 0.0, %v534
      %536 = vmatmul.f32.gmra.mxu0 %v473
      %v537 = vpop.f32.mrf.mxu0
      %v538 = vadd.f32 0.0, %v537
      %539 = vmatmul.f32.gmra.mxu0 %v476
      %v540 = vpop.f32.mrf.mxu0
      %v541 = vadd.f32 0.0, %v540
      %542 = vmatmul.f32.gmra.mxu0 %v479
      %v543 = vpop.f32.mrf.mxu0
      %v544 = vadd.f32 0.0, %v543
      %545 = vmatmul.f32.gmra.mxu0 %v482
      %v546 = vpop.f32.mrf.mxu0
      %v547 = vadd.f32 0.0, %v546
      %548 = vmatmul.f32.gmra.mxu0 %v485
      %v549 = vpop.f32.mrf.mxu0
      %v550 = vadd.f32 0.0, %v549
      %551 = vmatmul.f32.gmra.mxu0 %v488
      %v552 = vpop.f32.mrf.mxu0
      %v553 = vadd.f32 0.0, %v552
      %554 = vmatmul.f32.gmra.mxu0 %v491
      %v555 = vpop.f32.mrf.mxu0
      %v556 = vadd.f32 0.0, %v555
      %557 = vmatmul.f32.gmra.mxu0 %v494
      %v558 = vpop.f32.mrf.mxu0
      %v559 = vadd.f32 0.0, %v558
      %560 = vmatmul.f32.gmra.mxu0 %v497
      %v561 = vpop.f32.mrf.mxu0
      %v562 = vadd.f32 0.0, %v561
      %563 = vmatmul.f32.gmra.mxu0 %v500
      %v564 = vpop.f32.mrf.mxu0
      %v565 = vadd.f32 0.0, %v564
      %566 = vmatmul.f32.gmra.mxu0 %v503
      %v567 = vpop.f32.mrf.mxu0
      %v568 = vadd.f32 0.0, %v567
      %569 = vmatmul.f32.gmra.mxu0 %v506
      %v570 = vpop.f32.mrf.mxu0
      %v571 = vadd.f32 0.0, %v570
      %572 = vmatmul.f32.gmra.mxu0 %v509
      %v573 = vpop.f32.mrf.mxu0
      %v574 = vadd.f32 0.0, %v573
      %575 = vdwg.mxu0
      %v577 = vsel %vm380, %v431, 0
      %v580 = vsel %vm380, %v432, 0
      %v583 = vsel %vm380, %v433, 0
      %v586 = vsel %vm380, %v434, 0
      %v589 = vsel %vm380, %v435, 0
      %v592 = vsel %vm380, %v436, 0
      %v595 = vsel %vm380, %v437, 0
      %v598 = vsel %vm380, %v438, 0
      %v601 = vsel %vm380, %v439, 0
      %v604 = vsel %vm380, %v440, 0
      %v607 = vsel %vm380, %v441, 0
      %v610 = vsel %vm380, %v442, 0
      %v613 = vsel %vm380, %v443, 0
      %v616 = vsel %vm380, %v444, 0
      %v619 = vsel %vm380, %v445, 0
      %v622 = vsel %vm380, %v446, 0
      %624 = vmatpush.msra.mxu0 0.0
      %625 = vmatpush.msra.mxu0 0.0
      %626 = vmatpush.msra.mxu0 0.0
      %627 = vmatpush.msra.mxu0 0.0
      %628 = vmatpush.msra.mxu0 0.0
      %629 = vmatpush.msra.mxu0 0.0
      %630 = vmatpush.msra.mxu0 0.0
      %631 = vmatpush.msra.mxu0 0.0
      %632 = vmatpush.msra.mxu0 0.0
      %633 = vmatpush.msra.mxu0 0.0
      %634 = vmatpush.msra.mxu0 0.0
      %635 = vmatpush.msra.mxu0 0.0
      %636 = vmatpush.msra.mxu0 0.0
      %637 = vmatpush.msra.mxu0 0.0
      %638 = vmatpush.msra.mxu0 0.0
      %639 = vmatpush.msra.mxu0 %v422
      %640 = vmatmul.f32.gmra.mxu0 %v577
      %v641 = vpop.f32.mrf.mxu0
      %v642 = vadd.f32 %v529, %v641
      %643 = vmatmul.f32.gmra.mxu0 %v580
      %v644 = vpop.f32.mrf.mxu0
      %v645 = vadd.f32 %v532, %v644
      %646 = vmatmul.f32.gmra.mxu0 %v583
      %v647 = vpop.f32.mrf.mxu0
      %v648 = vadd.f32 %v535, %v647
      %649 = vmatmul.f32.gmra.mxu0 %v586
      %v650 = vpop.f32.mrf.mxu0
      %v651 = vadd.f32 %v538, %v650
      %652 = vmatmul.f32.gmra.mxu0 %v589
      %v653 = vpop.f32.mrf.mxu0
      %v654 = vadd.f32 %v541, %v653
      %655 = vmatmul.f32.gmra.mxu0 %v592
      %v656 = vpop.f32.mrf.mxu0
      %v657 = vadd.f32 %v544, %v656
      %658 = vmatmul.f32.gmra.mxu0 %v595
      %v659 = vpop.f32.mrf.mxu0
      %v660 = vadd.f32 %v547, %v659
      %661 = vmatmul.f32.gmra.mxu0 %v598
      %v662 = vpop.f32.mrf.mxu0
      %v663 = vadd.f32 %v550, %v662
      %664 = vmatmul.f32.gmra.mxu0 %v601
      %v665 = vpop.f32.mrf.mxu0
      %v666 = vadd.f32 %v553, %v665
      %667 = vmatmul.f32.gmra.mxu0 %v604
      %v668 = vpop.f32.mrf.mxu0
      %v669 = vadd.f32 %v556, %v668
      %670 = vmatmul.f32.gmra.mxu0 %v607
      %v671 = vpop.f32.mrf.mxu0
      %v672 = vadd.f32 %v559, %v671
      %673 = vmatmul.f32.gmra.mxu0 %v610
      %v674 = vpop.f32.mrf.mxu0
      %v675 = vadd.f32 %v562, %v674
      %676 = vmatmul.f32.gmra.mxu0 %v613
      %v677 = vpop.f32.mrf.mxu0
      %v678 = vadd.f32 %v565, %v677
      %679 = vmatmul.f32.gmra.mxu0 %v616
      %v680 = vpop.f32.mrf.mxu0
      %v681 = vadd.f32 %v568, %v680
      %682 = vmatmul.f32.gmra.mxu0 %v619
      %v683 = vpop.f32.mrf.mxu0
      %v684 = vadd.f32 %v571, %v683
      %685 = vmatmul.f32.gmra.mxu0 %v622
      %v686 = vpop.f32.mrf.mxu0
      %v687 = vadd.f32 %v574, %v686
      %688 = vdwg.mxu0
      %v689 = vld [vmem:[#allocation2 + $0x2] sm:$0xff]
      %v690 = vld [vmem:[#allocation2 + $0xa] sm:$0xff]
      %v691 = vld [vmem:[#allocation2 + $0x1a] sm:$0xff]
      %v692 = vld [vmem:[#allocation2 + $0x22] sm:$0xff]
      %v693 = vld [vmem:[#allocation2 + $0x32] sm:$0xff]
      %v694 = vld [vmem:[#allocation2 + $0x3a] sm:$0xff]
      %v695 = vld [vmem:[#allocation2 + $0x4a] sm:$0xff]
      %v696 = vld [vmem:[#allocation2 + $0x52] sm:$0xff]
      %v697 = vld [vmem:[#allocation2 + $0x62] sm:$0xff]
      %v698 = vld [vmem:[#allocation2 + $0x6a] sm:$0xff]
      %v699 = vld [vmem:[#allocation2 + $0x7a] sm:$0xff]
      %v700 = vld [vmem:[#allocation2 + $0x82] sm:$0xff]
      %v701 = vld [vmem:[#allocation2 + $0x92] sm:$0xff]
      %v702 = vld [vmem:[#allocation2 + $0x9a] sm:$0xff]
      %v703 = vld [vmem:[#allocation2 + $0xaa] sm:$0xff]
      %v704 = vld [vmem:[#allocation2 + $0xb2] sm:$0xff]
      %v706 = vsel %vm380, %v689, 0
      %v709 = vsel %vm380, %v690, 0
      %v712 = vsel %vm380, %v691, 0
      %v715 = vsel %vm380, %v692, 0
      %v718 = vsel %vm380, %v693, 0
      %v721 = vsel %vm380, %v694, 0
      %v724 = vsel %vm380, %v695, 0
      %v727 = vsel %vm380, %v696, 0
      %v730 = vsel %vm380, %v697, 0
      %v733 = vsel %vm380, %v698, 0
      %v736 = vsel %vm380, %v699, 0
      %v739 = vsel %vm380, %v700, 0
      %v742 = vsel %vm380, %v701, 0
      %v745 = vsel %vm380, %v702, 0
      %v748 = vsel %vm380, %v703, 0
      %v751 = vsel %vm380, %v704, 0
      %753 = vmatpush.msra.mxu0 0.0
      %754 = vmatpush.msra.mxu0 0.0
      %755 = vmatpush.msra.mxu0 0.0
      %756 = vmatpush.msra.mxu0 0.0
      %757 = vmatpush.msra.mxu0 0.0
      %758 = vmatpush.msra.mxu0 0.0
      %759 = vmatpush.msra.mxu0 0.0
      %760 = vmatpush.msra.mxu0 0.0
      %761 = vmatpush.msra.mxu0 0.0
      %762 = vmatpush.msra.mxu0 0.0
      %763 = vmatpush.msra.mxu0 0.0
      %764 = vmatpush.msra.mxu0 0.0
      %765 = vmatpush.msra.mxu0 0.0
      %766 = vmatpush.msra.mxu0 0.0
      %767 = vmatpush.msra.mxu0 0.0
      %768 = vmatpush.msra.mxu0 %v424
      %769 = vmatmul.f32.gmra.mxu0 %v706
      %v770 = vpop.f32.mrf.mxu0
      %v771 = vadd.f32 0.0, %v770
      %772 = vmatmul.f32.gmra.mxu0 %v709
      %v773 = vpop.f32.mrf.mxu0
      %v774 = vadd.f32 0.0, %v773
      %775 = vmatmul.f32.gmra.mxu0 %v712
      %v776 = vpop.f32.mrf.mxu0
      %v777 = vadd.f32 0.0, %v776
      %778 = vmatmul.f32.gmra.mxu0 %v715
      %v779 = vpop.f32.mrf.mxu0
      %v780 = vadd.f32 0.0, %v779
      %781 = vmatmul.f32.gmra.mxu0 %v718
      %v782 = vpop.f32.mrf.mxu0
      %v783 = vadd.f32 0.0, %v782
      %784 = vmatmul.f32.gmra.mxu0 %v721
      %v785 = vpop.f32.mrf.mxu0
      %v786 = vadd.f32 0.0, %v785
      %787 = vmatmul.f32.gmra.mxu0 %v724
      %v788 = vpop.f32.mrf.mxu0
      %v789 = vadd.f32 0.0, %v788
      %790 = vmatmul.f32.gmra.mxu0 %v727
      %v791 = vpop.f32.mrf.mxu0
      %v792 = vadd.f32 0.0, %v791
      %793 = vmatmul.f32.gmra.mxu0 %v730
      %v794 = vpop.f32.mrf.mxu0
      %v795 = vadd.f32 0.0, %v794
      %796 = vmatmul.f32.gmra.mxu0 %v733
      %v797 = vpop.f32.mrf.mxu0
      %v798 = vadd.f32 0.0, %v797
      %799 = vmatmul.f32.gmra.mxu0 %v736
      %v800 = vpop.f32.mrf.mxu0
      %v801 = vadd.f32 0.0, %v800
      %802 = vmatmul.f32.gmra.mxu0 %v739
      %v803 = vpop.f32.mrf.mxu0
      %v804 = vadd.f32 0.0, %v803
      %805 = vmatmul.f32.gmra.mxu0 %v742
      %v806 = vpop.f32.mrf.mxu0
      %v807 = vadd.f32 0.0, %v806
      %808 = vmatmul.f32.gmra.mxu0 %v745
      %v809 = vpop.f32.mrf.mxu0
      %v810 = vadd.f32 0.0, %v809
      %811 = vmatmul.f32.gmra.mxu0 %v748
      %v812 = vpop.f32.mrf.mxu0
      %v813 = vadd.f32 0.0, %v812
      %814 = vmatmul.f32.gmra.mxu0 %v751
      %v815 = vpop.f32.mrf.mxu0
      %v816 = vadd.f32 0.0, %v815
      %817 = vdwg.mxu0
      %v818 = vadd.f32 %v642, %v771
      %v819 = vadd.f32 %v645, %v774
      %v820 = vadd.f32 %v648, %v777
      %v821 = vadd.f32 %v651, %v780
      %v822 = vadd.f32 %v654, %v783
      %v823 = vadd.f32 %v657, %v786
      %v824 = vadd.f32 %v660, %v789
      %v825 = vadd.f32 %v663, %v792
      %v826 = vadd.f32 %v666, %v795
      %v827 = vadd.f32 %v669, %v798
      %v828 = vadd.f32 %v672, %v801
      %v829 = vadd.f32 %v675, %v804
      %v830 = vadd.f32 %v678, %v807
      %v831 = vadd.f32 %v681, %v810
      %v832 = vadd.f32 %v684, %v813
      %v833 = vadd.f32 %v687, %v816
      %v834 = vld [vmem:[%s405] sm:$0xff]
      %v835 = vld [vmem:[%s405 + $0x8] sm:$0xff]
      %v836 = vld [vmem:[%s405 + $0x18] sm:$0xff]
      %v837 = vld [vmem:[%s405 + $0x20] sm:$0xff]
      %v838 = vld [vmem:[%s405 + $0x30] sm:$0xff]
      %v839 = vld [vmem:[%s405 + $0x38] sm:$0xff]
      %v840 = vld [vmem:[%s405 + $0x48] sm:$0xff]
      %v841 = vld [vmem:[%s405 + $0x50] sm:$0xff]
      %v842 = vld [vmem:[%s405 + $0x60] sm:$0xff]
      %v843 = vld [vmem:[%s405 + $0x68] sm:$0xff]
      %v844 = vld [vmem:[%s405 + $0x78] sm:$0xff]
      %v845 = vld [vmem:[%s405 + $0x80] sm:$0xff]
      %v846 = vld [vmem:[%s405 + $0x90] sm:$0xff]
      %v847 = vld [vmem:[%s405 + $0x98] sm:$0xff]
      %v848 = vld [vmem:[%s405 + $0xa8] sm:$0xff]
      %v849 = vld [vmem:[%s405 + $0xb0] sm:$0xff]
      %v851 = vsel %vm380, %v834, 0
      %v854 = vsel %vm380, %v835, 0
      %v857 = vsel %vm380, %v836, 0
      %v860 = vsel %vm380, %v837, 0
      %v863 = vsel %vm380, %v838, 0
      %v866 = vsel %vm380, %v839, 0
      %v869 = vsel %vm380, %v840, 0
      %v872 = vsel %vm380, %v841, 0
      %v875 = vsel %vm380, %v842, 0
      %v878 = vsel %vm380, %v843, 0
      %v881 = vsel %vm380, %v844, 0
      %v884 = vsel %vm380, %v845, 0
      %v887 = vsel %vm380, %v846, 0
      %v890 = vsel %vm380, %v847, 0
      %v893 = vsel %vm380, %v848, 0
      %v896 = vsel %vm380, %v849, 0
      %898 = vmatpush.msra.mxu0 0.0
      %899 = vmatpush.msra.mxu0 0.0
      %900 = vmatpush.msra.mxu0 0.0
      %901 = vmatpush.msra.mxu0 0.0
      %902 = vmatpush.msra.mxu0 0.0
      %903 = vmatpush.msra.mxu0 0.0
      %904 = vmatpush.msra.mxu0 0.0
      %905 = vmatpush.msra.mxu0 0.0
      %906 = vmatpush.msra.mxu0 0.0
      %907 = vmatpush.msra.mxu0 0.0
      %908 = vmatpush.msra.mxu0 0.0
      %909 = vmatpush.msra.mxu0 0.0
      %910 = vmatpush.msra.mxu0 0.0
      %911 = vmatpush.msra.mxu0 0.0
      %912 = vmatpush.msra.mxu0 0.0
      %913 = vmatpush.msra.mxu0 %v425
      %914 = vmatmul.f32.gmra.mxu0 %v851
      %v915 = vpop.f32.mrf.mxu0
      %v916 = vadd.f32 0.0, %v915
      %917 = vmatmul.f32.gmra.mxu0 %v854
      %v918 = vpop.f32.mrf.mxu0
      %v919 = vadd.f32 0.0, %v918
      %920 = vmatmul.f32.gmra.mxu0 %v857
      %v921 = vpop.f32.mrf.mxu0
      %v922 = vadd.f32 0.0, %v921
      %923 = vmatmul.f32.gmra.mxu0 %v860
      %v924 = vpop.f32.mrf.mxu0
      %v925 = vadd.f32 0.0, %v924
      %926 = vmatmul.f32.gmra.mxu0 %v863
      %v927 = vpop.f32.mrf.mxu0
      %v928 = vadd.f32 0.0, %v927
      %929 = vmatmul.f32.gmra.mxu0 %v866
      %v930 = vpop.f32.mrf.mxu0
      %v931 = vadd.f32 0.0, %v930
      %932 = vmatmul.f32.gmra.mxu0 %v869
      %v933 = vpop.f32.mrf.mxu0
      %v934 = vadd.f32 0.0, %v933
      %935 = vmatmul.f32.gmra.mxu0 %v872
      %v936 = vpop.f32.mrf.mxu0
      %v937 = vadd.f32 0.0, %v936
      %938 = vmatmul.f32.gmra.mxu0 %v875
      %v939 = vpop.f32.mrf.mxu0
      %v940 = vadd.f32 0.0, %v939
      %941 = vmatmul.f32.gmra.mxu0 %v878
      %v942 = vpop.f32.mrf.mxu0
      %v943 = vadd.f32 0.0, %v942
      %944 = vmatmul.f32.gmra.mxu0 %v881
      %v945 = vpop.f32.mrf.mxu0
      %v946 = vadd.f32 0.0, %v945
      %947 = vmatmul.f32.gmra.mxu0 %v884
      %v948 = vpop.f32.mrf.mxu0
      %v949 = vadd.f32 0.0, %v948
      %950 = vmatmul.f32.gmra.mxu0 %v887
      %v951 = vpop.f32.mrf.mxu0
      %v952 = vadd.f32 0.0, %v951
      %953 = vmatmul.f32.gmra.mxu0 %v890
      %v954 = vpop.f32.mrf.mxu0
      %v955 = vadd.f32 0.0, %v954
      %956 = vmatmul.f32.gmra.mxu0 %v893
      %v957 = vpop.f32.mrf.mxu0
      %v958 = vadd.f32 0.0, %v957
      %959 = vmatmul.f32.gmra.mxu0 %v896
      %v960 = vpop.f32.mrf.mxu0
      %v961 = vadd.f32 0.0, %v960
      %962 = vdwg.mxu0
      %v963 = vadd.f32 %v818, %v916
      %v964 = vadd.f32 %v819, %v919
      %v965 = vadd.f32 %v820, %v922
      %v966 = vadd.f32 %v821, %v925
      %v967 = vadd.f32 %v822, %v928
      %v968 = vadd.f32 %v823, %v931
      %v969 = vadd.f32 %v824, %v934
      %v970 = vadd.f32 %v825, %v937
      %v971 = vadd.f32 %v826, %v940
      %v972 = vadd.f32 %v827, %v943
      %v973 = vadd.f32 %v828, %v946
      %v974 = vadd.f32 %v829, %v949
      %v975 = vadd.f32 %v830, %v952
      %v976 = vadd.f32 %v831, %v955
      %v977 = vadd.f32 %v832, %v958
      %v978 = vadd.f32 %v833, %v961
      %v979 = vld [vmem:[%s405 + $0x1] sm:$0xff]
      %v980 = vld [vmem:[%s405 + $0x9] sm:$0xff]
      %v981 = vld [vmem:[%s405 + $0x19] sm:$0xff]
      %v982 = vld [vmem:[%s405 + $0x21] sm:$0xff]
      %v983 = vld [vmem:[%s405 + $0x31] sm:$0xff]
      %v984 = vld [vmem:[%s405 + $0x39] sm:$0xff]
      %v985 = vld [vmem:[%s405 + $0x49] sm:$0xff]
      %v986 = vld [vmem:[%s405 + $0x51] sm:$0xff]
      %v987 = vld [vmem:[%s405 + $0x61] sm:$0xff]
      %v988 = vld [vmem:[%s405 + $0x69] sm:$0xff]
      %v989 = vld [vmem:[%s405 + $0x79] sm:$0xff]
      %v990 = vld [vmem:[%s405 + $0x81] sm:$0xff]
      %v991 = vld [vmem:[%s405 + $0x91] sm:$0xff]
      %v992 = vld [vmem:[%s405 + $0x99] sm:$0xff]
      %v993 = vld [vmem:[%s405 + $0xa9] sm:$0xff]
      %v994 = vld [vmem:[%s405 + $0xb1] sm:$0xff]
      %v996 = vsel %vm380, %v979, 0
      %v999 = vsel %vm380, %v980, 0
      %v1002 = vsel %vm380, %v981, 0
      %v1005 = vsel %vm380, %v982, 0
      %v1008 = vsel %vm380, %v983, 0
      %v1011 = vsel %vm380, %v984, 0
      %v1014 = vsel %vm380, %v985, 0
      %v1017 = vsel %vm380, %v986, 0
      %v1020 = vsel %vm380, %v987, 0
      %v1023 = vsel %vm380, %v988, 0
      %v1026 = vsel %vm380, %v989, 0
      %v1029 = vsel %vm380, %v990, 0
      %v1032 = vsel %vm380, %v991, 0
      %v1035 = vsel %vm380, %v992, 0
      %v1038 = vsel %vm380, %v993, 0
      %v1041 = vsel %vm380, %v994, 0
      %1043 = vmatpush.msra.mxu0 0.0
      %1044 = vmatpush.msra.mxu0 0.0
      %1045 = vmatpush.msra.mxu0 0.0
      %1046 = vmatpush.msra.mxu0 0.0
      %1047 = vmatpush.msra.mxu0 0.0
      %1048 = vmatpush.msra.mxu0 0.0
      %1049 = vmatpush.msra.mxu0 0.0
      %1050 = vmatpush.msra.mxu0 0.0
      %1051 = vmatpush.msra.mxu0 0.0
      %1052 = vmatpush.msra.mxu0 0.0
      %1053 = vmatpush.msra.mxu0 0.0
      %1054 = vmatpush.msra.mxu0 0.0
      %1055 = vmatpush.msra.mxu0 0.0
      %1056 = vmatpush.msra.mxu0 0.0
      %1057 = vmatpush.msra.mxu0 0.0
      %1058 = vmatpush.msra.mxu0 %v426
      %1059 = vmatmul.f32.gmra.mxu0 %v996
      %v1060 = vpop.f32.mrf.mxu0
      %v1061 = vadd.f32 0.0, %v1060
      %1062 = vmatmul.f32.gmra.mxu0 %v999
      %v1063 = vpop.f32.mrf.mxu0
      %v1064 = vadd.f32 0.0, %v1063
      %1065 = vmatmul.f32.gmra.mxu0 %v1002
      %v1066 = vpop.f32.mrf.mxu0
      %v1067 = vadd.f32 0.0, %v1066
      %1068 = vmatmul.f32.gmra.mxu0 %v1005
      %v1069 = vpop.f32.mrf.mxu0
      %v1070 = vadd.f32 0.0, %v1069
      %1071 = vmatmul.f32.gmra.mxu0 %v1008
      %v1072 = vpop.f32.mrf.mxu0
      %v1073 = vadd.f32 0.0, %v1072
      %1074 = vmatmul.f32.gmra.mxu0 %v1011
      %v1075 = vpop.f32.mrf.mxu0
      %v1076 = vadd.f32 0.0, %v1075
      %1077 = vmatmul.f32.gmra.mxu0 %v1014
      %v1078 = vpop.f32.mrf.mxu0
      %v1079 = vadd.f32 0.0, %v1078
      %1080 = vmatmul.f32.gmra.mxu0 %v1017
      %v1081 = vpop.f32.mrf.mxu0
      %v1082 = vadd.f32 0.0, %v1081
      %1083 = vmatmul.f32.gmra.mxu0 %v1020
      %v1084 = vpop.f32.mrf.mxu0
      %v1085 = vadd.f32 0.0, %v1084
      %1086 = vmatmul.f32.gmra.mxu0 %v1023
      %v1087 = vpop.f32.mrf.mxu0
      %v1088 = vadd.f32 0.0, %v1087
      %1089 = vmatmul.f32.gmra.mxu0 %v1026
      %v1090 = vpop.f32.mrf.mxu0
      %v1091 = vadd.f32 0.0, %v1090
      %1092 = vmatmul.f32.gmra.mxu0 %v1029
      %v1093 = vpop.f32.mrf.mxu0
      %v1094 = vadd.f32 0.0, %v1093
      %1095 = vmatmul.f32.gmra.mxu0 %v1032
      %v1096 = vpop.f32.mrf.mxu0
      %v1097 = vadd.f32 0.0, %v1096
      %1098 = vmatmul.f32.gmra.mxu0 %v1035
      %v1099 = vpop.f32.mrf.mxu0
      %v1100 = vadd.f32 0.0, %v1099
      %1101 = vmatmul.f32.gmra.mxu0 %v1038
      %v1102 = vpop.f32.mrf.mxu0
      %v1103 = vadd.f32 0.0, %v1102
      %1104 = vmatmul.f32.gmra.mxu0 %v1041
      %v1105 = vpop.f32.mrf.mxu0
      %v1106 = vadd.f32 0.0, %v1105
      %1107 = vdwg.mxu0
      %v1108 = vadd.f32 %v963, %v1061
      %v1109 = vadd.f32 %v964, %v1064
      %v1110 = vadd.f32 %v965, %v1067
      %v1111 = vadd.f32 %v966, %v1070
      %v1112 = vadd.f32 %v967, %v1073
      %v1113 = vadd.f32 %v968, %v1076
      %v1114 = vadd.f32 %v969, %v1079
      %v1115 = vadd.f32 %v970, %v1082
      %v1116 = vadd.f32 %v971, %v1085
      %v1117 = vadd.f32 %v972, %v1088
      %v1118 = vadd.f32 %v973, %v1091
      %v1119 = vadd.f32 %v974, %v1094
      %v1120 = vadd.f32 %v975, %v1097
      %v1121 = vadd.f32 %v976, %v1100
      %v1122 = vadd.f32 %v977, %v1103
      %v1123 = vadd.f32 %v978, %v1106
      %v1124 = vld [vmem:[%s405 + $0x2] sm:$0xff]
      %v1125 = vld [vmem:[%s405 + $0xa] sm:$0xff]
      %v1126 = vld [vmem:[%s405 + $0x1a] sm:$0xff]
      %v1127 = vld [vmem:[%s405 + $0x22] sm:$0xff]
      %v1128 = vld [vmem:[%s405 + $0x32] sm:$0xff]
      %v1129 = vld [vmem:[%s405 + $0x3a] sm:$0xff]
      %v1130 = vld [vmem:[%s405 + $0x4a] sm:$0xff]
      %v1131 = vld [vmem:[%s405 + $0x52] sm:$0xff]
      %v1132 = vld [vmem:[%s405 + $0x62] sm:$0xff]
      %v1133 = vld [vmem:[%s405 + $0x6a] sm:$0xff]
      %v1134 = vld [vmem:[%s405 + $0x7a] sm:$0xff]
      %v1135 = vld [vmem:[%s405 + $0x82] sm:$0xff]
      %v1136 = vld [vmem:[%s405 + $0x92] sm:$0xff]
      %v1137 = vld [vmem:[%s405 + $0x9a] sm:$0xff]
      %v1138 = vld [vmem:[%s405 + $0xaa] sm:$0xff]
      %v1139 = vld [vmem:[%s405 + $0xb2] sm:$0xff]
      %v1141 = vsel %vm380, %v1124, 0
      %v1144 = vsel %vm380, %v1125, 0
      %v1147 = vsel %vm380, %v1126, 0
      %v1150 = vsel %vm380, %v1127, 0
      %v1153 = vsel %vm380, %v1128, 0
      %v1156 = vsel %vm380, %v1129, 0
      %v1159 = vsel %vm380, %v1130, 0
      %v1162 = vsel %vm380, %v1131, 0
      %v1165 = vsel %vm380, %v1132, 0
      %v1168 = vsel %vm380, %v1133, 0
      %v1171 = vsel %vm380, %v1134, 0
      %v1174 = vsel %vm380, %v1135, 0
      %v1177 = vsel %vm380, %v1136, 0
      %v1180 = vsel %vm380, %v1137, 0
      %v1183 = vsel %vm380, %v1138, 0
      %v1186 = vsel %vm380, %v1139, 0
      %1188 = vmatpush.msra.mxu0 0.0
      %1189 = vmatpush.msra.mxu0 0.0
      %1190 = vmatpush.msra.mxu0 0.0
      %1191 = vmatpush.msra.mxu0 0.0
      %1192 = vmatpush.msra.mxu0 0.0
      %1193 = vmatpush.msra.mxu0 0.0
      %1194 = vmatpush.msra.mxu0 0.0
      %1195 = vmatpush.msra.mxu0 0.0
      %1196 = vmatpush.msra.mxu0 0.0
      %1197 = vmatpush.msra.mxu0 0.0
      %1198 = vmatpush.msra.mxu0 0.0
      %1199 = vmatpush.msra.mxu0 0.0
      %1200 = vmatpush.msra.mxu0 0.0
      %1201 = vmatpush.msra.mxu0 0.0
      %1202 = vmatpush.msra.mxu0 0.0
      %1203 = vmatpush.msra.mxu0 %v427
      %1204 = vmatmul.f32.gmra.mxu0 %v1141
      %v1205 = vpop.f32.mrf.mxu0
      %v1206 = vadd.f32 0.0, %v1205
      %1207 = vmatmul.f32.gmra.mxu0 %v1144
      %v1208 = vpop.f32.mrf.mxu0
      %v1209 = vadd.f32 0.0, %v1208
      %1210 = vmatmul.f32.gmra.mxu0 %v1147
      %v1211 = vpop.f32.mrf.mxu0
      %v1212 = vadd.f32 0.0, %v1211
      %1213 = vmatmul.f32.gmra.mxu0 %v1150
      %v1214 = vpop.f32.mrf.mxu0
      %v1215 = vadd.f32 0.0, %v1214
      %1216 = vmatmul.f32.gmra.mxu0 %v1153
      %v1217 = vpop.f32.mrf.mxu0
      %v1218 = vadd.f32 0.0, %v1217
      %1219 = vmatmul.f32.gmra.mxu0 %v1156
      %v1220 = vpop.f32.mrf.mxu0
      %v1221 = vadd.f32 0.0, %v1220
      %1222 = vmatmul.f32.gmra.mxu0 %v1159
      %v1223 = vpop.f32.mrf.mxu0
      %v1224 = vadd.f32 0.0, %v1223
      %1225 = vmatmul.f32.gmra.mxu0 %v1162
      %v1226 = vpop.f32.mrf.mxu0
      %v1227 = vadd.f32 0.0, %v1226
      %1228 = vmatmul.f32.gmra.mxu0 %v1165
      %v1229 = vpop.f32.mrf.mxu0
      %v1230 = vadd.f32 0.0, %v1229
      %1231 = vmatmul.f32.gmra.mxu0 %v1168
      %v1232 = vpop.f32.mrf.mxu0
      %v1233 = vadd.f32 0.0, %v1232
      %1234 = vmatmul.f32.gmra.mxu0 %v1171
      %v1235 = vpop.f32.mrf.mxu0
      %v1236 = vadd.f32 0.0, %v1235
      %1237 = vmatmul.f32.gmra.mxu0 %v1174
      %v1238 = vpop.f32.mrf.mxu0
      %v1239 = vadd.f32 0.0, %v1238
      %1240 = vmatmul.f32.gmra.mxu0 %v1177
      %v1241 = vpop.f32.mrf.mxu0
      %v1242 = vadd.f32 0.0, %v1241
      %1243 = vmatmul.f32.gmra.mxu0 %v1180
      %v1244 = vpop.f32.mrf.mxu0
      %v1245 = vadd.f32 0.0, %v1244
      %1246 = vmatmul.f32.gmra.mxu0 %v1183
      %v1247 = vpop.f32.mrf.mxu0
      %v1248 = vadd.f32 0.0, %v1247
      %1249 = vmatmul.f32.gmra.mxu0 %v1186
      %v1250 = vpop.f32.mrf.mxu0
      %v1251 = vadd.f32 0.0, %v1250
      %1252 = vdwg.mxu0
      %v1253 = vadd.f32 %v1108, %v1206
      %v1254 = vadd.f32 %v1109, %v1209
      %v1255 = vadd.f32 %v1110, %v1212
      %v1256 = vadd.f32 %v1111, %v1215
      %v1257 = vadd.f32 %v1112, %v1218
      %v1258 = vadd.f32 %v1113, %v1221
      %v1259 = vadd.f32 %v1114, %v1224
      %v1260 = vadd.f32 %v1115, %v1227
      %v1261 = vadd.f32 %v1116, %v1230
      %v1262 = vadd.f32 %v1117, %v1233
      %v1263 = vadd.f32 %v1118, %v1236
      %v1264 = vadd.f32 %v1119, %v1239
      %v1265 = vadd.f32 %v1120, %v1242
      %v1266 = vadd.f32 %v1121, %v1245
      %v1267 = vadd.f32 %v1122, %v1248
      %v1268 = vadd.f32 %v1123, %v1251
      %s1269 = scalar_lea.vmem [#allocation2], 48
      %v1270 = vld [vmem:[%s1269] sm:$0xff]
      %v1271 = vld [vmem:[%s1269 + $0x8] sm:$0xff]
      %v1272 = vld [vmem:[%s1269 + $0x18] sm:$0xff]
      %v1273 = vld [vmem:[%s1269 + $0x20] sm:$0xff]
      %v1274 = vld [vmem:[%s1269 + $0x30] sm:$0xff]
      %v1275 = vld [vmem:[%s1269 + $0x38] sm:$0xff]
      %v1276 = vld [vmem:[%s1269 + $0x48] sm:$0xff]
      %v1277 = vld [vmem:[%s1269 + $0x50] sm:$0xff]
      %v1278 = vld [vmem:[%s1269 + $0x60] sm:$0xff]
      %v1279 = vld [vmem:[%s1269 + $0x68] sm:$0xff]
      %v1280 = vld [vmem:[%s1269 + $0x78] sm:$0xff]
      %v1281 = vld [vmem:[%s1269 + $0x80] sm:$0xff]
      %v1282 = vld [vmem:[%s1269 + $0x90] sm:$0xff]
      %v1283 = vld [vmem:[%s1269 + $0x98] sm:$0xff]
      %v1284 = vld [vmem:[%s1269 + $0xa8] sm:$0xff]
      %v1285 = vld [vmem:[%s1269 + $0xb0] sm:$0xff]
      %v1287 = vsel %vm380, %v1270, 0
      %v1290 = vsel %vm380, %v1271, 0
      %v1293 = vsel %vm380, %v1272, 0
      %v1296 = vsel %vm380, %v1273, 0
      %v1299 = vsel %vm380, %v1274, 0
      %v1302 = vsel %vm380, %v1275, 0
      %v1305 = vsel %vm380, %v1276, 0
      %v1308 = vsel %vm380, %v1277, 0
      %v1311 = vsel %vm380, %v1278, 0
      %v1314 = vsel %vm380, %v1279, 0
      %v1317 = vsel %vm380, %v1280, 0
      %v1320 = vsel %vm380, %v1281, 0
      %v1323 = vsel %vm380, %v1282, 0
      %v1326 = vsel %vm380, %v1283, 0
      %v1329 = vsel %vm380, %v1284, 0
      %v1332 = vsel %vm380, %v1285, 0
      %1334 = vmatpush.msra.mxu0 0.0
      %1335 = vmatpush.msra.mxu0 0.0
      %1336 = vmatpush.msra.mxu0 0.0
      %1337 = vmatpush.msra.mxu0 0.0
      %1338 = vmatpush.msra.mxu0 0.0
      %1339 = vmatpush.msra.mxu0 0.0
      %1340 = vmatpush.msra.mxu0 0.0
      %1341 = vmatpush.msra.mxu0 0.0
      %1342 = vmatpush.msra.mxu0 0.0
      %1343 = vmatpush.msra.mxu0 0.0
      %1344 = vmatpush.msra.mxu0 0.0
      %1345 = vmatpush.msra.mxu0 0.0
      %1346 = vmatpush.msra.mxu0 0.0
      %1347 = vmatpush.msra.mxu0 0.0
      %1348 = vmatpush.msra.mxu0 0.0
      %1349 = vmatpush.msra.mxu0 %v428
      %1350 = vmatmul.f32.gmra.mxu0 %v1287
      %v1351 = vpop.f32.mrf.mxu0
      %v1352 = vadd.f32 0.0, %v1351
      %1353 = vmatmul.f32.gmra.mxu0 %v1290
      %v1354 = vpop.f32.mrf.mxu0
      %v1355 = vadd.f32 0.0, %v1354
      %1356 = vmatmul.f32.gmra.mxu0 %v1293
      %v1357 = vpop.f32.mrf.mxu0
      %v1358 = vadd.f32 0.0, %v1357
      %1359 = vmatmul.f32.gmra.mxu0 %v1296
      %v1360 = vpop.f32.mrf.mxu0
      %v1361 = vadd.f32 0.0, %v1360
      %1362 = vmatmul.f32.gmra.mxu0 %v1299
      %v1363 = vpop.f32.mrf.mxu0
      %v1364 = vadd.f32 0.0, %v1363
      %1365 = vmatmul.f32.gmra.mxu0 %v1302
      %v1366 = vpop.f32.mrf.mxu0
      %v1367 = vadd.f32 0.0, %v1366
      %1368 = vmatmul.f32.gmra.mxu0 %v1305
      %v1369 = vpop.f32.mrf.mxu0
      %v1370 = vadd.f32 0.0, %v1369
      %1371 = vmatmul.f32.gmra.mxu0 %v1308
      %v1372 = vpop.f32.mrf.mxu0
      %v1373 = vadd.f32 0.0, %v1372
      %1374 = vmatmul.f32.gmra.mxu0 %v1311
      %v1375 = vpop.f32.mrf.mxu0
      %v1376 = vadd.f32 0.0, %v1375
      %1377 = vmatmul.f32.gmra.mxu0 %v1314
      %v1378 = vpop.f32.mrf.mxu0
      %v1379 = vadd.f32 0.0, %v1378
      %1380 = vmatmul.f32.gmra.mxu0 %v1317
      %v1381 = vpop.f32.mrf.mxu0
      %v1382 = vadd.f32 0.0, %v1381
      %1383 = vmatmul.f32.gmra.mxu0 %v1320
      %v1384 = vpop.f32.mrf.mxu0
      %v1385 = vadd.f32 0.0, %v1384
      %1386 = vmatmul.f32.gmra.mxu0 %v1323
      %v1387 = vpop.f32.mrf.mxu0
      %v1388 = vadd.f32 0.0, %v1387
      %1389 = vmatmul.f32.gmra.mxu0 %v1326
      %v1390 = vpop.f32.mrf.mxu0
      %v1391 = vadd.f32 0.0, %v1390
      %1392 = vmatmul.f32.gmra.mxu0 %v1329
      %v1393 = vpop.f32.mrf.mxu0
      %v1394 = vadd.f32 0.0, %v1393
      %1395 = vmatmul.f32.gmra.mxu0 %v1332
      %v1396 = vpop.f32.mrf.mxu0
      %v1397 = vadd.f32 0.0, %v1396
      %1398 = vdwg.mxu0
      %v1399 = vadd.f32 %v1253, %v1352
      %v1400 = vadd.f32 %v1254, %v1355
      %v1401 = vadd.f32 %v1255, %v1358
      %v1402 = vadd.f32 %v1256, %v1361
      %v1403 = vadd.f32 %v1257, %v1364
      %v1404 = vadd.f32 %v1258, %v1367
      %v1405 = vadd.f32 %v1259, %v1370
      %v1406 = vadd.f32 %v1260, %v1373
      %v1407 = vadd.f32 %v1261, %v1376
      %v1408 = vadd.f32 %v1262, %v1379
      %v1409 = vadd.f32 %v1263, %v1382
      %v1410 = vadd.f32 %v1264, %v1385
      %v1411 = vadd.f32 %v1265, %v1388
      %v1412 = vadd.f32 %v1266, %v1391
      %v1413 = vadd.f32 %v1267, %v1394
      %v1414 = vadd.f32 %v1268, %v1397
      %v1415 = vld [vmem:[%s1269 + $0x1] sm:$0xff]
      %v1416 = vld [vmem:[%s1269 + $0x9] sm:$0xff]
      %v1417 = vld [vmem:[%s1269 + $0x19] sm:$0xff]
      %v1418 = vld [vmem:[%s1269 + $0x21] sm:$0xff]
      %v1419 = vld [vmem:[%s1269 + $0x31] sm:$0xff]
      %v1420 = vld [vmem:[%s1269 + $0x39] sm:$0xff]
      %v1421 = vld [vmem:[%s1269 + $0x49] sm:$0xff]
      %v1422 = vld [vmem:[%s1269 + $0x51] sm:$0xff]
      %v1423 = vld [vmem:[%s1269 + $0x61] sm:$0xff]
      %v1424 = vld [vmem:[%s1269 + $0x69] sm:$0xff]
      %v1425 = vld [vmem:[%s1269 + $0x79] sm:$0xff]
      %v1426 = vld [vmem:[%s1269 + $0x81] sm:$0xff]
      %v1427 = vld [vmem:[%s1269 + $0x91] sm:$0xff]
      %v1428 = vld [vmem:[%s1269 + $0x99] sm:$0xff]
      %v1429 = vld [vmem:[%s1269 + $0xa9] sm:$0xff]
      %v1430 = vld [vmem:[%s1269 + $0xb1] sm:$0xff]
      %v1432 = vsel %vm380, %v1415, 0
      %v1435 = vsel %vm380, %v1416, 0
      %v1438 = vsel %vm380, %v1417, 0
      %v1441 = vsel %vm380, %v1418, 0
      %v1444 = vsel %vm380, %v1419, 0
      %v1447 = vsel %vm380, %v1420, 0
      %v1450 = vsel %vm380, %v1421, 0
      %v1453 = vsel %vm380, %v1422, 0
      %v1456 = vsel %vm380, %v1423, 0
      %v1459 = vsel %vm380, %v1424, 0
      %v1462 = vsel %vm380, %v1425, 0
      %v1465 = vsel %vm380, %v1426, 0
      %v1468 = vsel %vm380, %v1427, 0
      %v1471 = vsel %vm380, %v1428, 0
      %v1474 = vsel %vm380, %v1429, 0
      %v1477 = vsel %vm380, %v1430, 0
      %1479 = vmatpush.msra.mxu0 0.0
      %1480 = vmatpush.msra.mxu0 0.0
      %1481 = vmatpush.msra.mxu0 0.0
      %1482 = vmatpush.msra.mxu0 0.0
      %1483 = vmatpush.msra.mxu0 0.0
      %1484 = vmatpush.msra.mxu0 0.0
      %1485 = vmatpush.msra.mxu0 0.0
      %1486 = vmatpush.msra.mxu0 0.0
      %1487 = vmatpush.msra.mxu0 0.0
      %1488 = vmatpush.msra.mxu0 0.0
      %1489 = vmatpush.msra.mxu0 0.0
      %1490 = vmatpush.msra.mxu0 0.0
      %1491 = vmatpush.msra.mxu0 0.0
      %1492 = vmatpush.msra.mxu0 0.0
      %1493 = vmatpush.msra.mxu0 0.0
      %1494 = vmatpush.msra.mxu0 %v429
      %1495 = vmatmul.f32.gmra.mxu0 %v1432
      %v1496 = vpop.f32.mrf.mxu0
      %v1497 = vadd.f32 0.0, %v1496
      %1498 = vmatmul.f32.gmra.mxu0 %v1435
      %v1499 = vpop.f32.mrf.mxu0
      %v1500 = vadd.f32 0.0, %v1499
      %1501 = vmatmul.f32.gmra.mxu0 %v1438
      %v1502 = vpop.f32.mrf.mxu0
      %v1503 = vadd.f32 0.0, %v1502
      %1504 = vmatmul.f32.gmra.mxu0 %v1441
      %v1505 = vpop.f32.mrf.mxu0
      %v1506 = vadd.f32 0.0, %v1505
      %1507 = vmatmul.f32.gmra.mxu0 %v1444
      %v1508 = vpop.f32.mrf.mxu0
      %v1509 = vadd.f32 0.0, %v1508
      %1510 = vmatmul.f32.gmra.mxu0 %v1447
      %v1511 = vpop.f32.mrf.mxu0
      %v1512 = vadd.f32 0.0, %v1511
      %1513 = vmatmul.f32.gmra.mxu0 %v1450
      %v1514 = vpop.f32.mrf.mxu0
      %v1515 = vadd.f32 0.0, %v1514
      %1516 = vmatmul.f32.gmra.mxu0 %v1453
      %v1517 = vpop.f32.mrf.mxu0
      %v1518 = vadd.f32 0.0, %v1517
      %1519 = vmatmul.f32.gmra.mxu0 %v1456
      %v1520 = vpop.f32.mrf.mxu0
      %v1521 = vadd.f32 0.0, %v1520
      %1522 = vmatmul.f32.gmra.mxu0 %v1459
      %v1523 = vpop.f32.mrf.mxu0
      %v1524 = vadd.f32 0.0, %v1523
      %1525 = vmatmul.f32.gmra.mxu0 %v1462
      %v1526 = vpop.f32.mrf.mxu0
      %v1527 = vadd.f32 0.0, %v1526
      %1528 = vmatmul.f32.gmra.mxu0 %v1465
      %v1529 = vpop.f32.mrf.mxu0
      %v1530 = vadd.f32 0.0, %v1529
      %1531 = vmatmul.f32.gmra.mxu0 %v1468
      %v1532 = vpop.f32.mrf.mxu0
      %v1533 = vadd.f32 0.0, %v1532
      %1534 = vmatmul.f32.gmra.mxu0 %v1471
      %v1535 = vpop.f32.mrf.mxu0
      %v1536 = vadd.f32 0.0, %v1535
      %1537 = vmatmul.f32.gmra.mxu0 %v1474
      %v1538 = vpop.f32.mrf.mxu0
      %v1539 = vadd.f32 0.0, %v1538
      %1540 = vmatmul.f32.gmra.mxu0 %v1477
      %v1541 = vpop.f32.mrf.mxu0
      %v1542 = vadd.f32 0.0, %v1541
      %1543 = vdwg.mxu0
      %v1544 = vadd.f32 %v1399, %v1497
      %v1545 = vadd.f32 %v1400, %v1500
      %v1546 = vadd.f32 %v1401, %v1503
      %v1547 = vadd.f32 %v1402, %v1506
      %v1548 = vadd.f32 %v1403, %v1509
      %v1549 = vadd.f32 %v1404, %v1512
      %v1550 = vadd.f32 %v1405, %v1515
      %v1551 = vadd.f32 %v1406, %v1518
      %v1552 = vadd.f32 %v1407, %v1521
      %v1553 = vadd.f32 %v1408, %v1524
      %v1554 = vadd.f32 %v1409, %v1527
      %v1555 = vadd.f32 %v1410, %v1530
      %v1556 = vadd.f32 %v1411, %v1533
      %v1557 = vadd.f32 %v1412, %v1536
      %v1558 = vadd.f32 %v1413, %v1539
      %v1559 = vadd.f32 %v1414, %v1542
      %v1560 = vld [vmem:[%s1269 + $0x2] sm:$0xff]
      %v1561 = vld [vmem:[%s1269 + $0xa] sm:$0xff]
      %v1562 = vld [vmem:[%s1269 + $0x1a] sm:$0xff]
      %v1563 = vld [vmem:[%s1269 + $0x22] sm:$0xff]
      %v1564 = vld [vmem:[%s1269 + $0x32] sm:$0xff]
      %v1565 = vld [vmem:[%s1269 + $0x3a] sm:$0xff]
      %v1566 = vld [vmem:[%s1269 + $0x4a] sm:$0xff]
      %v1567 = vld [vmem:[%s1269 + $0x52] sm:$0xff]
      %v1568 = vld [vmem:[%s1269 + $0x62] sm:$0xff]
      %v1569 = vld [vmem:[%s1269 + $0x6a] sm:$0xff]
      %v1570 = vld [vmem:[%s1269 + $0x7a] sm:$0xff]
      %v1571 = vld [vmem:[%s1269 + $0x82] sm:$0xff]
      %v1572 = vld [vmem:[%s1269 + $0x92] sm:$0xff]
      %v1573 = vld [vmem:[%s1269 + $0x9a] sm:$0xff]
      %v1574 = vld [vmem:[%s1269 + $0xaa] sm:$0xff]
      %v1575 = vld [vmem:[%s1269 + $0xb2] sm:$0xff]
      %v1577 = vsel %vm380, %v1560, 0
      %v1580 = vsel %vm380, %v1561, 0
      %v1583 = vsel %vm380, %v1562, 0
      %v1586 = vsel %vm380, %v1563, 0
      %v1589 = vsel %vm380, %v1564, 0
      %v1592 = vsel %vm380, %v1565, 0
      %v1595 = vsel %vm380, %v1566, 0
      %v1598 = vsel %vm380, %v1567, 0
      %v1601 = vsel %vm380, %v1568, 0
      %v1604 = vsel %vm380, %v1569, 0
      %v1607 = vsel %vm380, %v1570, 0
      %v1610 = vsel %vm380, %v1571, 0
      %v1613 = vsel %vm380, %v1572, 0
      %v1616 = vsel %vm380, %v1573, 0
      %v1619 = vsel %vm380, %v1574, 0
      %v1622 = vsel %vm380, %v1575, 0
      %1624 = vmatpush.msra.mxu0 0.0
      %1625 = vmatpush.msra.mxu0 0.0
      %1626 = vmatpush.msra.mxu0 0.0
      %1627 = vmatpush.msra.mxu0 0.0
      %1628 = vmatpush.msra.mxu0 0.0
      %1629 = vmatpush.msra.mxu0 0.0
      %1630 = vmatpush.msra.mxu0 0.0
      %1631 = vmatpush.msra.mxu0 0.0
      %1632 = vmatpush.msra.mxu0 0.0
      %1633 = vmatpush.msra.mxu0 0.0
      %1634 = vmatpush.msra.mxu0 0.0
      %1635 = vmatpush.msra.mxu0 0.0
      %1636 = vmatpush.msra.mxu0 0.0
      %1637 = vmatpush.msra.mxu0 0.0
      %1638 = vmatpush.msra.mxu0 0.0
      %1639 = vmatpush.msra.mxu0 %v430
      %1640 = vmatmul.f32.gmra.mxu0 %v1577
      %v1641 = vpop.f32.mrf.mxu0
      %v1642 = vadd.f32 0.0, %v1641
      %1643 = vmatmul.f32.gmra.mxu0 %v1580
      %v1644 = vpop.f32.mrf.mxu0
      %v1645 = vadd.f32 0.0, %v1644
      %1646 = vmatmul.f32.gmra.mxu0 %v1583
      %v1647 = vpop.f32.mrf.mxu0
      %v1648 = vadd.f32 0.0, %v1647
      %1649 = vmatmul.f32.gmra.mxu0 %v1586
      %v1650 = vpop.f32.mrf.mxu0
      %v1651 = vadd.f32 0.0, %v1650
      %1652 = vmatmul.f32.gmra.mxu0 %v1589
      %v1653 = vpop.f32.mrf.mxu0
      %v1654 = vadd.f32 0.0, %v1653
      %1655 = vmatmul.f32.gmra.mxu0 %v1592
      %v1656 = vpop.f32.mrf.mxu0
      %v1657 = vadd.f32 0.0, %v1656
      %1658 = vmatmul.f32.gmra.mxu0 %v1595
      %v1659 = vpop.f32.mrf.mxu0
      %v1660 = vadd.f32 0.0, %v1659
      %1661 = vmatmul.f32.gmra.mxu0 %v1598
      %v1662 = vpop.f32.mrf.mxu0
      %v1663 = vadd.f32 0.0, %v1662
      %1664 = vmatmul.f32.gmra.mxu0 %v1601
      %v1665 = vpop.f32.mrf.mxu0
      %v1666 = vadd.f32 0.0, %v1665
      %1667 = vmatmul.f32.gmra.mxu0 %v1604
      %v1668 = vpop.f32.mrf.mxu0
      %v1669 = vadd.f32 0.0, %v1668
      %1670 = vmatmul.f32.gmra.mxu0 %v1607
      %v1671 = vpop.f32.mrf.mxu0
      %v1672 = vadd.f32 0.0, %v1671
      %1673 = vmatmul.f32.gmra.mxu0 %v1610
      %v1674 = vpop.f32.mrf.mxu0
      %v1675 = vadd.f32 0.0, %v1674
      %1676 = vmatmul.f32.gmra.mxu0 %v1613
      %v1677 = vpop.f32.mrf.mxu0
      %v1678 = vadd.f32 0.0, %v1677
      %1679 = vmatmul.f32.gmra.mxu0 %v1616
      %v1680 = vpop.f32.mrf.mxu0
      %v1681 = vadd.f32 0.0, %v1680
      %1682 = vmatmul.f32.gmra.mxu0 %v1619
      %v1683 = vpop.f32.mrf.mxu0
      %v1684 = vadd.f32 0.0, %v1683
      %1685 = vmatmul.f32.gmra.mxu0 %v1622
      %v1686 = vpop.f32.mrf.mxu0
      %v1687 = vadd.f32 0.0, %v1686
      %1688 = vdwg.mxu0
      %v1689 = vadd.f32 %v1544, %v1642
      %v1690 = vadd.f32 %v1545, %v1645
      %v1691 = vadd.f32 %v1546, %v1648
      %v1692 = vadd.f32 %v1547, %v1651
      %v1693 = vadd.f32 %v1548, %v1654
      %v1694 = vadd.f32 %v1549, %v1657
      %v1695 = vadd.f32 %v1550, %v1660
      %v1696 = vadd.f32 %v1551, %v1663
      %v1697 = vadd.f32 %v1552, %v1666
      %v1698 = vadd.f32 %v1553, %v1669
      %v1699 = vadd.f32 %v1554, %v1672
      %v1700 = vadd.f32 %v1555, %v1675
      %v1701 = vadd.f32 %v1556, %v1678
      %v1702 = vadd.f32 %v1557, %v1681
      %v1703 = vadd.f32 %v1558, %v1684
      %v1704 = vadd.f32 %v1559, %v1687
      %v1705 = vld [vmem:[%s3] sm:$0x1]
      %v1707 = vperm.slane %v1705, 0
      %v1709 = vmul.f32 %v1689, %v1707
      %v1710 = vmul.f32 %v1690, %v1707
      %v1711 = vmul.f32 %v1691, %v1707
      %v1712 = vmul.f32 %v1692, %v1707
      %v1713 = vmul.f32 %v1693, %v1707
      %v1714 = vmul.f32 %v1694, %v1707
      %v1715 = vmul.f32 %v1695, %v1707
      %v1716 = vmul.f32 %v1696, %v1707
      %v1717 = vmul.f32 %v1697, %v1707
      %v1718 = vmul.f32 %v1698, %v1707
      %v1719 = vmul.f32 %v1699, %v1707
      %v1720 = vmul.f32 %v1700, %v1707
      %v1721 = vmul.f32 %v1701, %v1707
      %v1722 = vmul.f32 %v1702, %v1707
      %v1723 = vmul.f32 %v1703, %v1707
      %v1724 = vmul.f32 %v1704, %v1707
      %v1725 = vld [vmem:[%s4] sm:$0x1]
      %v1727 = vperm.slane %v1725, 0
      %v1729 = vadd.f32 %v1709, %v1727
      %v1730 = vadd.f32 %v1710, %v1727
      %v1731 = vadd.f32 %v1711, %v1727
      %v1732 = vadd.f32 %v1712, %v1727
      %v1733 = vadd.f32 %v1713, %v1727
      %v1734 = vadd.f32 %v1714, %v1727
      %v1735 = vadd.f32 %v1715, %v1727
      %v1736 = vadd.f32 %v1716, %v1727
      %v1737 = vadd.f32 %v1717, %v1727
      %v1738 = vadd.f32 %v1718, %v1727
      %v1739 = vadd.f32 %v1719, %v1727
      %v1740 = vadd.f32 %v1720, %v1727
      %v1741 = vadd.f32 %v1721, %v1727
      %v1742 = vadd.f32 %v1722, %v1727
      %v1743 = vadd.f32 %v1723, %v1727
      %v1744 = vadd.f32 %v1724, %v1727
      %v1745 = vmax.f32 %v1729, 0.0
      %v1746 = vmax.f32 %v1730, 0.0
      %v1747 = vmax.f32 %v1731, 0.0
      %v1748 = vmax.f32 %v1732, 0.0
      %v1749 = vmax.f32 %v1733, 0.0
      %v1750 = vmax.f32 %v1734, 0.0
      %v1751 = vmax.f32 %v1735, 0.0
      %v1752 = vmax.f32 %v1736, 0.0
      %v1753 = vmax.f32 %v1737, 0.0
      %v1754 = vmax.f32 %v1738, 0.0
      %v1755 = vmax.f32 %v1739, 0.0
      %v1756 = vmax.f32 %v1740, 0.0
      %v1757 = vmax.f32 %v1741, 0.0
      %v1758 = vmax.f32 %v1742, 0.0
      %v1759 = vmax.f32 %v1743, 0.0
      %v1760 = vmax.f32 %v1744, 0.0
      %v1761 = vld [vmem:[%s5] sm:$0x1]
      %v1763 = vperm.slane %v1761, 0
      %v1765 = vmul.f32 %v1745, %v1763
      %v1766 = vmul.f32 %v1746, %v1763
      %v1767 = vmul.f32 %v1747, %v1763
      %v1768 = vmul.f32 %v1748, %v1763
      %v1769 = vmul.f32 %v1749, %v1763
      %v1770 = vmul.f32 %v1750, %v1763
      %v1771 = vmul.f32 %v1751, %v1763
      %v1772 = vmul.f32 %v1752, %v1763
      %v1773 = vmul.f32 %v1753, %v1763
      %v1774 = vmul.f32 %v1754, %v1763
      %v1775 = vmul.f32 %v1755, %v1763
      %v1776 = vmul.f32 %v1756, %v1763
      %v1777 = vmul.f32 %v1757, %v1763
      %v1778 = vmul.f32 %v1758, %v1763
      %v1779 = vmul.f32 %v1759, %v1763
      %v1780 = vmul.f32 %v1760, %v1763
      %v1781 = vld [vmem:[%s6] sm:$0x1]
      %v1783 = vperm.slane %v1781, 0
      %v1785 = vadd.f32 %v1765, %v1783
      %v1786 = vadd.f32 %v1766, %v1783
      %v1787 = vadd.f32 %v1767, %v1783
      %v1788 = vadd.f32 %v1768, %v1783
      %v1789 = vadd.f32 %v1769, %v1783
      %v1790 = vadd.f32 %v1770, %v1783
      %v1791 = vadd.f32 %v1771, %v1783
      %v1792 = vadd.f32 %v1772, %v1783
      %v1793 = vadd.f32 %v1773, %v1783
      %v1794 = vadd.f32 %v1774, %v1783
      %v1795 = vadd.f32 %v1775, %v1783
      %v1796 = vadd.f32 %v1776, %v1783
      %v1797 = vadd.f32 %v1777, %v1783
      %v1798 = vadd.f32 %v1778, %v1783
      %v1799 = vadd.f32 %v1779, %v1783
      %v1800 = vadd.f32 %v1780, %v1783
      %v1801 = vmax.f32 %v1785, 0.0
      %v1802 = vmax.f32 %v1786, 0.0
      %v1803 = vmax.f32 %v1787, 0.0
      %v1804 = vmax.f32 %v1788, 0.0
      %v1805 = vmax.f32 %v1789, 0.0
      %v1806 = vmax.f32 %v1790, 0.0
      %v1807 = vmax.f32 %v1791, 0.0
      %v1808 = vmax.f32 %v1792, 0.0
      %v1809 = vmax.f32 %v1793, 0.0
      %v1810 = vmax.f32 %v1794, 0.0
      %v1811 = vmax.f32 %v1795, 0.0
      %v1812 = vmax.f32 %v1796, 0.0
      %v1813 = vmax.f32 %v1797, 0.0
      %v1814 = vmax.f32 %v1798, 0.0
      %v1815 = vmax.f32 %v1799, 0.0
      %v1816 = vmax.f32 %v1800, 0.0
      %1817 = vst.msk [vmem:[%s355] sm:$0xff] %vm380, %v1801
      %1818 = vst.msk [vmem:[%s355 + $0x8] sm:$0xff] %vm380, %v1802
      %1819 = vst.msk [vmem:[%s355 + $0x10] sm:$0xff] %vm380, %v1803
      %1820 = vst.msk [vmem:[%s355 + $0x18] sm:$0xff] %vm380, %v1804
      %1821 = vst.msk [vmem:[%s355 + $0x20] sm:$0xff] %vm380, %v1805
      %1822 = vst.msk [vmem:[%s355 + $0x28] sm:$0xff] %vm380, %v1806
      %1823 = vst.msk [vmem:[%s355 + $0x30] sm:$0xff] %vm380, %v1807
      %1824 = vst.msk [vmem:[%s355 + $0x38] sm:$0xff] %vm380, %v1808
      %1825 = vst.msk [vmem:[%s355 + $0x40] sm:$0xff] %vm380, %v1809
      %1826 = vst.msk [vmem:[%s355 + $0x48] sm:$0xff] %vm380, %v1810
      %1827 = vst.msk [vmem:[%s355 + $0x50] sm:$0xff] %vm380, %v1811
      %1828 = vst.msk [vmem:[%s355 + $0x58] sm:$0xff] %vm380, %v1812
      %1829 = vst.msk [vmem:[%s355 + $0x60] sm:$0xff] %vm380, %v1813
      %1830 = vst.msk [vmem:[%s355 + $0x68] sm:$0xff] %vm380, %v1814
      %1831 = vst.msk [vmem:[%s355 + $0x70] sm:$0xff] %vm380, %v1815
      %1832 = vst.msk [vmem:[%s355 + $0x78] sm:$0xff] %vm380, %v1816
      %s1833 = smul.u32 8, %s23
      %p1834 = scmp.lt.s32.totalorder %s22, 1
      %s1835 = scalar_select %p1834, %s22, 1
      %p1836 = scmp.lt.s32.totalorder %s1833, 15
      %s1837 = scalar_select %p1836, %s1833, 15
      %s1838 = smul.addr %s1837, 2
      %s1839 = smul.addr %s1835, 32
      %s1840 = sadd.s32 %s1838, %s1839
      %s1841 = smul.addr %s1840, 8
      %s1842 = scalar_lea.vmem %s7, %s1841
      // Predicated region
      $region49: #{_lambda_.6} parent=47 // pred_check
        %p1843 = pneg %p213
      $region50: #{_lambda_.6} parent=47 // pred_check_branch
        %1845 = sbr.rel (%p1843) target = $region52
      $region51: #{_lambda_.6} parent=47 // pred_region
        %s1846 = smul.u32 8, %s23
      $region52: #{_lambda_.6} parent=47 // pred_fallthru
        _
    $region48: #{_lambda_.6} parent=5 // pred_fallthru
      _
    %p1847 = scmp.le.s32.totalorder 2, %s13
    // Predicated region
    $region53: #{_lambda_.6} parent=5 // pred_check
      %p1848 = pneg %p1847
    $region54: #{_lambda_.6} parent=5 // pred_check_branch
      %1850 = sbr.rel (%p1848) target = $region56
    $region55: #{_lambda_.6} parent=5 // pred_region
      %s1851 = ssub.s32 %s13, 2
      // Predicated region
      $region57: #{_lambda_.6} parent=55 // pred_check
        %p1852 = pneg %p219
      $region58: #{_lambda_.6} parent=55 // pred_check_branch
        %1854 = sbr.rel (%p1852) target = $region60
      $region59: #{_lambda_.6} parent=55 // pred_region
        %s1855 = smul.u32 8, %s25
        %p1856 = scmp.lt.s32.totalorder %s24, 1
        %s1857 = scalar_select %p1856, %s24, 1
        %p1858 = scmp.lt.s32.totalorder %s1855, 15
        %s1859 = scalar_select %p1858, %s1855, 15
        %s1860 = smul.addr %s1859, 2
        %s1861 = smul.addr %s1857, 32
        %s1862 = sadd.s32 %s1860, %s1861
        %s1863 = smul.addr %s1862, 8
        %s1864 = scalar_lea.vmem %s7, %s1863
      $region60: #{_lambda_.6} parent=55 // pred_fallthru
        _
    $region56: #{_lambda_.6} parent=5 // pred_fallthru
      _
  $region6: #{_lambda_.6} parent=0 // loop_footer
    %s17 = sadd.s32 1, %s13
  $region7: #{_lambda_.6} parent=0 // loop_footer_branch
    %12 = sbr.rel target = $region3
  $region8: #{_lambda_.6} parent=0 // loop_exit
    _

// kernel: _lambda_.8
$region0: #{_lambda_.8}
  #allocation0 [shape = 'u32[]', space=smem, size = 0x4, offset = 0x4, fixed_abs, tag = 'smem constant byte address 0x4 - core index']
  #allocation1 [shape = 'u32[72,128]{1,0:T(1,128)}', space=vmem, size = 0x9000, scoped, tag = 'internal scratch']
  #allocation2 [shape = 'f32[10,18,8]{2,1,0:T(8,128)}', space=vmem, size = 0x1e000, scoped, tag = 'scratch operand']
  %s0 = inlined_call_operand.vmem [shape: f32[2,16,16,8], index: 0, kind: input, shape index: {}, may-alias: {0,5}]
  %s1 = inlined_call_operand.vmem [shape: f32[4,2,16,8], index: 1, kind: input, shape index: {}]
  %s2 = inlined_call_operand.vmem [shape: f32[3,3,8,8], index: 2, kind: input, shape index: {}]
  %s3 = inlined_call_operand.vmem [shape: f32[1,8], index: 3, kind: input, shape index: {}]
  %s4 = inlined_call_operand.vmem [shape: f32[1,8], index: 4, kind: input, shape index: {}]
  %s5 = inlined_call_operand.vmem [shape: f32[2,16,16,8], index: 5, kind: input, shape index: {}, may-alias: {0,5}]
  %s6 = inlined_call_operand.vmem [shape: f32[2,16,16,8], index: 6, kind: input, shape index: {}]
  %s7 = inlined_call_operand.vmem [shape: f32[2,16,16,8], index: 7, kind: output, shape index: {}]
  %s8 = sld [smem:[#allocation0]]
  $region61: #{_lambda_.8} parent=0
    _
  %s10 = ssub.s32 1, %s8
  %s11 = scalar_select 0, %s10, %s8
  loop: start=0, step=1, limit=6
  $region2: #{_lambda_.8} parent=0 // loop_pre_header
    _
  $region3: #{_lambda_.8} parent=0 // loop_header
    %s13 = sphi 0, %s17
    %p14 = scmp.ge.s32.totalorder %s13, 6
    %s20 = sphi 0, %s32
    %s21 = sphi 0, %s28
    %s22 = sphi 0, %s20
    %s23 = sphi 0, %s21
    %s24 = sphi 0, %s22
    %s25 = sphi 0, %s23
    %s37 = sphi 0, %s39
    %s40 = sphi 0, %s37
    %s41 = sphi 0, %s40
    %s57 = sphi 0, %s41
    %s67 = sphi 0, %s69
    %s70 = sphi 0, %s67
    %s71 = sphi 0, %s70
    %s87 = sphi 0, %s71
    %s91 = sphi 0, %s91
    %s93 = sphi 0, %s91
    %s94 = sphi 0, %s93
    %s108 = sphi 0, %s94
    %s112 = sphi 0, %s112
    %s114 = sphi 0, %s112
    %s115 = sphi 0, %s114
    %s129 = sphi 0, %s115
    %s133 = sphi 0, %s133
    %s135 = sphi 0, %s133
    %s136 = sphi 0, %s135
    %s150 = sphi 0, %s136
    %s158 = sphi 0, %s160
    %s161 = sphi 0, %s158
    %s162 = sphi 0, %s161
    %s178 = sphi 0, %s162
    %s186 = sphi 0, %s188
    %s189 = sphi 0, %s186
    %s190 = sphi 0, %s189
    %s206 = sphi 0, %s190
    %s214 = sphi 0, %s216
    %s217 = sphi 0, %s214
    %s218 = sphi 0, %s217
    %s234 = sphi 0, %s218
  $region4: #{_lambda_.8} parent=0 // loop_header_branch
    %16 = sbr.rel (%p14) target = $region8
  $region5: #{_lambda_.8} parent=0 // loop_body
    %s18 = ssub.s32 %s13, 1
    %s19 = ssub.s32 %s13, 2
    %s26 = sadd.s32 1, %s21
    %p27 = scmp.ge.s32.totalorder %s26, 2
    %s28 = scalar_select %p27, 0, %s26
    %s29 = sadd.s32 1, %s20
    %s30 = scalar_select %p27, %s29, %s20
    %p31 = scmp.ge.s32.totalorder %s30, 2
    %s32 = scalar_select %p31, 0, %s30
    %s33 = ssub.s32 %s20, %s32
    %s34 = ssub.s32 %s21, %s28
    %s35 = sor.u32 %s33, %s34
    %p36 = scmp.eq.s32.totalorder %s35, 0
    %s38 = sadd.s32 %s37, 1
    %s39 = scalar_select %p36, %s37, %s38
    %p42 = pneg %p36
    %p43 = scmp.eq.s32.totalorder %s13, 3
    %p44 = por %p42, %p43
    %p45 = scmp.ne.s32.totalorder %s37, %s40
    %p46 = scmp.eq.s32.totalorder %s13, 0
    %p47 = por %p45, %p46
    %p48 = scmp.ne.s32.totalorder %s37, %s40
    %p49 = scmp.eq.s32.totalorder %s18, 3
    %p50 = por %p48, %p49
    %p51 = scmp.ne.s32.totalorder %s40, %s41
    %p52 = scmp.eq.s32.totalorder %s18, 0
    %p53 = por %p51, %p52
    %p54 = scmp.ne.s32.totalorder %s40, %s41
    %p55 = scmp.eq.s32.totalorder %s19, 3
    %p56 = por %p54, %p55
    %p58 = scmp.ne.s32.totalorder %s41, %s57
    %p59 = scmp.eq.s32.totalorder %s19, 0
    %p60 = por %p58, %p59
    %s61 = smul.u32 %s20, 2
    %s62 = sadd.s32 %s61, %s21
    %s63 = smul.u32 %s32, 2
    %s64 = sadd.s32 %s63, %s28
    %s65 = ssub.s32 %s62, %s64
    %p66 = scmp.eq.s32.totalorder %s65, 0
    %s68 = sadd.s32 %s67, 1
    %s69 = scalar_select %p66, %s67, %s68
    %p72 = pneg %p66
    %p73 = scmp.eq.s32.totalorder %s13, 3
    %p74 = por %p72, %p73
    %p75 = scmp.ne.s32.totalorder %s67, %s70
    %p76 = scmp.eq.s32.totalorder %s13, 0
    %p77 = por %p75, %p76
    %p78 = scmp.ne.s32.totalorder %s67, %s70
    %p79 = scmp.eq.s32.totalorder %s18, 3
    %p80 = por %p78, %p79
    %p81 = scmp.ne.s32.totalorder %s70, %s71
    %p82 = scmp.eq.s32.totalorder %s18, 0
    %p83 = por %p81, %p82
    %p84 = scmp.ne.s32.totalorder %s70, %s71
    %p85 = scmp.eq.s32.totalorder %s19, 3
    %p86 = por %p84, %p85
    %p88 = scmp.ne.s32.totalorder %s71, %s87
    %p89 = scmp.eq.s32.totalorder %s19, 0
    %p90 = por %p88, %p89
    %s92 = sadd.s32 %s91, 1
    %p95 = scmp.eq.s32.totalorder %s13, 3
    %p96 = scmp.ne.s32.totalorder %s91, %s93
    %p97 = scmp.eq.s32.totalorder %s13, 0
    %p98 = por %p96, %p97
    %p99 = scmp.ne.s32.totalorder %s91, %s93
    %p100 = scmp.eq.s32.totalorder %s18, 3
    %p101 = por %p99, %p100
    %p102 = scmp.ne.s32.totalorder %s93, %s94
    %p103 = scmp.eq.s32.totalorder %s18, 0
    %p104 = por %p102, %p103
    %p105 = scmp.ne.s32.totalorder %s93, %s94
    %p106 = scmp.eq.s32.totalorder %s19, 3
    %p107 = por %p105, %p106
    %p109 = scmp.ne.s32.totalorder %s94, %s108
    %p110 = scmp.eq.s32.totalorder %s19, 0
    %p111 = por %p109, %p110
    %s113 = sadd.s32 %s112, 1
    %p116 = scmp.eq.s32.totalorder %s13, 3
    %p117 = scmp.ne.s32.totalorder %s112, %s114
    %p118 = scmp.eq.s32.totalorder %s13, 0
    %p119 = por %p117, %p118
    %p120 = scmp.ne.s32.totalorder %s112, %s114
    %p121 = scmp.eq.s32.totalorder %s18, 3
    %p122 = por %p120, %p121
    %p123 = scmp.ne.s32.totalorder %s114, %s115
    %p124 = scmp.eq.s32.totalorder %s18, 0
    %p125 = por %p123, %p124
    %p126 = scmp.ne.s32.totalorder %s114, %s115
    %p127 = scmp.eq.s32.totalorder %s19, 3
    %p128 = por %p126, %p127
    %p130 = scmp.ne.s32.totalorder %s115, %s129
    %p131 = scmp.eq.s32.totalorder %s19, 0
    %p132 = por %p130, %p131
    %s134 = sadd.s32 %s133, 1
    %p137 = scmp.eq.s32.totalorder %s13, 3
    %p138 = scmp.ne.s32.totalorder %s133, %s135
    %p139 = scmp.eq.s32.totalorder %s13, 0
    %p140 = por %p138, %p139
    %p141 = scmp.ne.s32.totalorder %s133, %s135
    %p142 = scmp.eq.s32.totalorder %s18, 3
    %p143 = por %p141, %p142
    %p144 = scmp.ne.s32.totalorder %s135, %s136
    %p145 = scmp.eq.s32.totalorder %s18, 0
    %p146 = por %p144, %p145
    %p147 = scmp.ne.s32.totalorder %s135, %s136
    %p148 = scmp.eq.s32.totalorder %s19, 3
    %p149 = por %p147, %p148
    %p151 = scmp.ne.s32.totalorder %s136, %s150
    %p152 = scmp.eq.s32.totalorder %s19, 0
    %p153 = por %p151, %p152
    %s154 = ssub.s32 %s20, %s32
    %s155 = ssub.s32 %s21, %s28
    %s156 = sor.u32 %s154, %s155
    %p157 = scmp.eq.s32.totalorder %s156, 0
    %s159 = sadd.s32 %s158, 1
    %s160 = scalar_select %p157, %s158, %s159
    %p163 = pneg %p157
    %p164 = scmp.eq.s32.totalorder %s13, 3
    %p165 = por %p163, %p164
    %p166 = scmp.ne.s32.totalorder %s158, %s161
    %p167 = scmp.eq.s32.totalorder %s13, 0
    %p168 = por %p166, %p167
    %p169 = scmp.ne.s32.totalorder %s158, %s161
    %p170 = scmp.eq.s32.totalorder %s18, 3
    %p171 = por %p169, %p170
    %p172 = scmp.ne.s32.totalorder %s161, %s162
    %p173 = scmp.eq.s32.totalorder %s18, 0
    %p174 = por %p172, %p173
    %p175 = scmp.ne.s32.totalorder %s161, %s162
    %p176 = scmp.eq.s32.totalorder %s19, 3
    %p177 = por %p175, %p176
    %p179 = scmp.ne.s32.totalorder %s162, %s178
    %p180 = scmp.eq.s32.totalorder %s19, 0
    %p181 = por %p179, %p180
    %s182 = ssub.s32 %s20, %s32
    %s183 = ssub.s32 %s21, %s28
    %s184 = sor.u32 %s182, %s183
    %p185 = scmp.eq.s32.totalorder %s184, 0
    %s187 = sadd.s32 %s186, 1
    %s188 = scalar_select %p185, %s186, %s187
    %p191 = pneg %p185
    %p192 = scmp.eq.s32.totalorder %s13, 3
    %p193 = por %p191, %p192
    %p194 = scmp.ne.s32.totalorder %s186, %s189
    %p195 = scmp.eq.s32.totalorder %s13, 0
    %p196 = por %p194, %p195
    %p197 = scmp.ne.s32.totalorder %s186, %s189
    %p198 = scmp.eq.s32.totalorder %s18, 3
    %p199 = por %p197, %p198
    %p200 = scmp.ne.s32.totalorder %s189, %s190
    %p201 = scmp.eq.s32.totalorder %s18, 0
    %p202 = por %p200, %p201
    %p203 = scmp.ne.s32.totalorder %s189, %s190
    %p204 = scmp.eq.s32.totalorder %s19, 3
    %p205 = por %p203, %p204
    %p207 = scmp.ne.s32.totalorder %s190, %s206
    %p208 = scmp.eq.s32.totalorder %s19, 0
    %p209 = por %p207, %p208
    %s210 = ssub.s32 %s20, %s32
    %s211 = ssub.s32 %s21, %s28
    %s212 = sor.u32 %s210, %s211
    %p213 = scmp.eq.s32.totalorder %s212, 0
    %s215 = sadd.s32 %s214, 1
    %s216 = scalar_select %p213, %s214, %s215
    %p219 = pneg %p213
    %p220 = scmp.eq.s32.totalorder %s13, 3
    %p221 = por %p219, %p220
    %p222 = scmp.ne.s32.totalorder %s214, %s217
    %p223 = scmp.eq.s32.totalorder %s13, 0
    %p224 = por %p222, %p223
    %p225 = scmp.ne.s32.totalorder %s214, %s217
    %p226 = scmp.eq.s32.totalorder %s18, 3
    %p227 = por %p225, %p226
    %p228 = scmp.ne.s32.totalorder %s217, %s218
    %p229 = scmp.eq.s32.totalorder %s18, 0
    %p230 = por %p228, %p229
    %p231 = scmp.ne.s32.totalorder %s217, %s218
    %p232 = scmp.eq.s32.totalorder %s19, 3
    %p233 = por %p231, %p232
    %p235 = scmp.ne.s32.totalorder %s218, %s234
    %p236 = scmp.eq.s32.totalorder %s19, 0
    %p237 = por %p235, %p236
    %p238 = scmp.le.s32.totalorder 1, %s13
    %p239 = scmp.lt.s32.totalorder %s13, 5
    %p240 = pnand %p238, %p239
    %p241 = pneg %p240
    // Predicated region
    $region9: #{_lambda_.8} parent=5 // pred_check
      _
    $region10: #{_lambda_.8} parent=5 // pred_check_branch
      %243 = sbr.rel (%p240) target = $region12
    $region11: #{_lambda_.8} parent=5 // pred_region
      %s244 = ssub.s32 %s13, 1
      // Predicated region
      $region13: #{_lambda_.8} parent=11 // pred_check
        %p245 = pneg %p104
      $region14: #{_lambda_.8} parent=11 // pred_check_branch
        %247 = sbr.rel (%p245) target = $region16
      $region15: #{_lambda_.8} parent=11 // pred_region
        _
      $region16: #{_lambda_.8} parent=11 // pred_fallthru
        _
      // Predicated region
      $region17: #{_lambda_.8} parent=11 // pred_check
        %p248 = pneg %p125
      $region18: #{_lambda_.8} parent=11 // pred_check_branch
        %250 = sbr.rel (%p248) target = $region20
      $region19: #{_lambda_.8} parent=11 // pred_region
        _
      $region20: #{_lambda_.8} parent=11 // pred_fallthru
        _
      // Predicated region
      $region21: #{_lambda_.8} parent=11 // pred_check
        %p251 = pneg %p146
      $region22: #{_lambda_.8} parent=11 // pred_check_branch
        %253 = sbr.rel (%p251) target = $region24
      $region23: #{_lambda_.8} parent=11 // pred_region
        _
      $region24: #{_lambda_.8} parent=11 // pred_fallthru
        _
    $region12: #{_lambda_.8} parent=5 // pred_fallthru
      _
    %p254 = scmp.lt.s32.totalorder %s13, 4
    // Predicated region
    $region25: #{_lambda_.8} parent=5 // pred_check
      %p255 = pneg %p254
    $region26: #{_lambda_.8} parent=5 // pred_check_branch
      %257 = sbr.rel (%p255) target = $region28
    $region27: #{_lambda_.8} parent=5 // pred_region
      // Predicated region
      $region29: #{_lambda_.8} parent=27 // pred_check
        %p258 = pneg %p47
      $region30: #{_lambda_.8} parent=27 // pred_check_branch
        %260 = sbr.rel (%p258) target = $region32
      $region31: #{_lambda_.8} parent=27 // pred_region
        %s261 = smul.u32 8, %s21
        %p262 = scmp.lt.s32.totalorder %s20, 1
        %s263 = scalar_select %p262, %s20, 1
        %p264 = scmp.lt.s32.totalorder %s261, 15
        %s265 = scalar_select %p264, %s261, 15
        %s266 = smul.addr %s265, 2
        %s267 = smul.addr %s263, 32
        %s268 = sadd.s32 %s266, %s267
        %s269 = smul.addr %s268, 8
        %s270 = scalar_lea.vmem %s0, %s269
        %s271 = smul.u32 8, %s21
      $region32: #{_lambda_.8} parent=27 // pred_fallthru
        _
      // Predicated region
      $region33: #{_lambda_.8} parent=27 // pred_check
        %p272 = pneg %p77
      $region34: #{_lambda_.8} parent=27 // pred_check_branch
        %274 = sbr.rel (%p272) target = $region36
      $region35: #{_lambda_.8} parent=27 // pred_region
        %s275 = smul.u32 %s20, 2
        %s276 = sadd.s32 %s275, %s21
        %p277 = scmp.lt.s32.totalorder %s276, 3
        %s278 = scalar_select %p277, %s276, 3
        %s279 = smul.addr %s278, 4
        %s280 = smul.addr %s279, 8
        %s281 = scalar_lea.vmem %s1, %s280
        %s282 = smul.u32 %s20, 2
        %s283 = sadd.s32 %s282, %s21
      $region36: #{_lambda_.8} parent=27 // pred_fallthru
        _
      // Predicated region
      $region37: #{_lambda_.8} parent=27 // pred_check
        %p284 = pneg %p168
      $region38: #{_lambda_.8} parent=27 // pred_check_branch
        %286 = sbr.rel (%p284) target = $region40
      $region39: #{_lambda_.8} parent=27 // pred_region
        %s287 = smul.u32 8, %s21
        %p288 = scmp.lt.s32.totalorder %s20, 1
        %s289 = scalar_select %p288, %s20, 1
        %p290 = scmp.lt.s32.totalorder %s287, 15
        %s291 = scalar_select %p290, %s287, 15
        %s292 = smul.addr %s291, 2
        %s293 = smul.addr %s289, 32
        %s294 = sadd.s32 %s292, %s293
        %s295 = smul.addr %s294, 8
        %s296 = scalar_lea.vmem %s5, %s295
        %s297 = smul.u32 8, %s21
      $region40: #{_lambda_.8} parent=27 // pred_fallthru
        _
      // Predicated region
      $region41: #{_lambda_.8} parent=27 // pred_check
        %p298 = pneg %p196
      $region42: #{_lambda_.8} parent=27 // pred_check_branch
        %300 = sbr.rel (%p298) target = $region44
      $region43: #{_lambda_.8} parent=27 // pred_region
        %s301 = smul.u32 8, %s21
        %p302 = scmp.lt.s32.totalorder %s20, 1
        %s303 = scalar_select %p302, %s20, 1
        %p304 = scmp.lt.s32.totalorder %s301, 15
        %s305 = scalar_select %p304, %s301, 15
        %s306 = smul.addr %s305, 2
        %s307 = smul.addr %s303, 32
        %s308 = sadd.s32 %s306, %s307
        %s309 = smul.addr %s308, 8
        %s310 = scalar_lea.vmem %s6, %s309
        %s311 = smul.u32 8, %s21
      $region44: #{_lambda_.8} parent=27 // pred_fallthru
        _
    $region28: #{_lambda_.8} parent=5 // pred_fallthru
      _
    %p312 = scmp.le.s32.totalorder 1, %s13
    %p313 = scmp.lt.s32.totalorder %s13, 5
    %p314 = pnand %p312, %p313
    %p315 = pneg %p314
    // Predicated region
    $region45: #{_lambda_.8} parent=5 // pred_check
      _
    $region46: #{_lambda_.8} parent=5 // pred_check_branch
      %317 = sbr.rel (%p314) target = $region48
    $region47: #{_lambda_.8} parent=5 // pred_region
      %s318 = ssub.s32 %s13, 1
      %s319 = smul.u32 8, %s23
      %p320 = scmp.lt.s32.totalorder %s22, 1
      %s321 = scalar_select %p320, %s22, 1
      %p322 = scmp.lt.s32.totalorder %s319, 15
      %s323 = scalar_select %p322, %s319, 15
      %s324 = smul.addr %s323, 2
      %s325 = smul.addr %s321, 32
      %s326 = sadd.s32 %s324, %s325
      %s327 = smul.addr %s326, 8
      %s328 = scalar_lea.vmem %s0, %s327
      %p329 = pneg %p53
      %p330 = pneg %p50
      %s331 = smul.u32 %s22, 2
      %s332 = sadd.s32 %s331, %s23
      %p333 = scmp.lt.s32.totalorder %s332, 3
      %s334 = scalar_select %p333, %s332, 3
      %s335 = smul.addr %s334, 4
      %s336 = smul.addr %s335, 8
      %s337 = scalar_lea.vmem %s1, %s336
      %p338 = pneg %p83
      %p339 = pneg %p80
      %p340 = pneg %p104
      %p341 = pneg %p101
      %p342 = pneg %p125
      %p343 = pneg %p122
      %p344 = pneg %p146
      %p345 = pneg %p143
      %s346 = smul.u32 8, %s23
      %p347 = scmp.lt.s32.totalorder %s22, 1
      %s348 = scalar_select %p347, %s22, 1
      %p349 = scmp.lt.s32.totalorder %s346, 15
      %s350 = scalar_select %p349, %s346, 15
      %s351 = smul.addr %s350, 2
      %s352 = smul.addr %s348, 32
      %s353 = sadd.s32 %s351, %s352
      %s354 = smul.addr %s353, 8
      %s355 = scalar_lea.vmem %s5, %s354
      %p356 = pneg %p174
      %p357 = pneg %p171
      %s358 = smul.u32 8, %s23
      %p359 = scmp.lt.s32.totalorder %s22, 1
      %s360 = scalar_select %p359, %s22, 1
      %p361 = scmp.lt.s32.totalorder %s358, 15
      %s362 = scalar_select %p361, %s358, 15
      %s363 = smul.addr %s362, 2
      %s364 = smul.addr %s360, 32
      %s365 = sadd.s32 %s363, %s364
      %s366 = smul.addr %s365, 8
      %s367 = scalar_lea.vmem %s6, %s366
      %p368 = pneg %p202
      %p369 = pneg %p199
      %p370 = pneg %p230
      %p371 = pneg %p227
      %s372 = smul.u32 8, %s23
      %p373 = scmp.lt.s32.totalorder %s22, 1
      %s374 = scalar_select %p373, %s22, 1
      %p375 = scmp.lt.s32.totalorder %s372, 15
      %s376 = scalar_select %p375, %s372, 15
      %s377 = smul.addr %s376, 2
      %s378 = smul.addr %s374, 32
      %s379 = sadd.s32 %s377, %s378
      %s380 = smul.addr %s379, 8
      %s381 = scalar_lea.vmem %s7, %s380
      %s382 = smul.u32 8, %s23
      %p383 = scmp.lt.s32.totalorder %s22, 1
      %s384 = scalar_select %p383, %s22, 1
      %p385 = scmp.lt.s32.totalorder %s382, 15
      %s386 = scalar_select %p385, %s382, 15
      %s387 = smul.addr %s386, 2
      %s388 = smul.addr %s384, 32
      %s389 = sadd.s32 %s387, %s388
      %s390 = smul.addr %s389, 8
      %s391 = scalar_lea.vmem %s0, %s390
      %s392 = smul.u32 8, %s23
      %s393 = smul.u32 %s22, 2
      %s394 = sadd.s32 %s393, %s23
      %p395 = scmp.lt.s32.totalorder %s394, 3
      %s396 = scalar_select %p395, %s394, 3
      %s397 = smul.addr %s396, 4
      %s398 = smul.addr %s397, 8
      %s399 = scalar_lea.vmem %s1, %s398
      %s400 = smul.u32 %s22, 2
      %s401 = sadd.s32 %s400, %s23
      %s402 = smul.u32 8, %s23
      %p403 = scmp.lt.s32.totalorder %s22, 1
      %s404 = scalar_select %p403, %s22, 1
      %p405 = scmp.lt.s32.totalorder %s402, 15
      %s406 = scalar_select %p405, %s402, 15
      %s407 = smul.addr %s406, 2
      %s408 = smul.addr %s404, 32
      %s409 = sadd.s32 %s407, %s408
      %s410 = smul.addr %s409, 8
      %s411 = scalar_lea.vmem %s5, %s410
      %s412 = smul.u32 8, %s23
      %s413 = smul.u32 8, %s23
      %p414 = scmp.lt.s32.totalorder %s22, 1
      %s415 = scalar_select %p414, %s22, 1
      %p416 = scmp.lt.s32.totalorder %s413, 15
      %s417 = scalar_select %p416, %s413, 15
      %s418 = smul.addr %s417, 2
      %s419 = smul.addr %s415, 32
      %s420 = sadd.s32 %s418, %s419
      %s421 = smul.addr %s420, 8
      %s422 = scalar_lea.vmem %s6, %s421
      %s423 = smul.u32 8, %s23
      %s424 = smul.u32 8, %s23
      %p425 = scmp.lt.s32.totalorder %s22, 1
      %s426 = scalar_select %p425, %s22, 1
      %p427 = scmp.lt.s32.totalorder %s424, 15
      %s428 = scalar_select %p427, %s424, 15
      %s429 = smul.addr %s428, 2
      %s430 = smul.addr %s426, 32
      %s431 = sadd.s32 %s429, %s430
      %s432 = smul.addr %s431, 8
      %s433 = scalar_lea.vmem %s7, %s432
      %s434 = smul.u32 8, %s23
      %vm435 = vcmask 57344
      %436 = vst.msk [vmem:[#allocation2] sm:$0x1] %vm435, 0.0
      %437 = vst.msk [vmem:[#allocation2 + $0x18] sm:$0x1] %vm435, 0.0
      %438 = vst.msk [vmem:[#allocation2 + $0x30] sm:$0x1] %vm435, 0.0
      %439 = vst.msk [vmem:[#allocation2 + $0x48] sm:$0x1] %vm435, 0.0
      %440 = vst.msk [vmem:[#allocation2 + $0x60] sm:$0x1] %vm435, 0.0
      %441 = vst.msk [vmem:[#allocation2 + $0x78] sm:$0x1] %vm435, 0.0
      %442 = vst.msk [vmem:[#allocation2 + $0x90] sm:$0x1] %vm435, 0.0
      %443 = vst.msk [vmem:[#allocation2 + $0xa8] sm:$0x1] %vm435, 0.0
      %444 = vst.msk [vmem:[#allocation2 + $0xc0] sm:$0x1] %vm435, 0.0
      %445 = vst.msk [vmem:[#allocation2 + $0xd8] sm:$0x1] %vm435, 0.0
      %446 = vst.msk [vmem:[#allocation2 + $0x11] sm:$0x1] %vm435, 0.0
      %447 = vst.msk [vmem:[#allocation2 + $0x29] sm:$0x1] %vm435, 0.0
      %448 = vst.msk [vmem:[#allocation2 + $0x41] sm:$0x1] %vm435, 0.0
      %449 = vst.msk [vmem:[#allocation2 + $0x59] sm:$0x1] %vm435, 0.0
      %450 = vst.msk [vmem:[#allocation2 + $0x71] sm:$0x1] %vm435, 0.0
      %451 = vst.msk [vmem:[#allocation2 + $0x89] sm:$0x1] %vm435, 0.0
      %452 = vst.msk [vmem:[#allocation2 + $0xa1] sm:$0x1] %vm435, 0.0
      %453 = vst.msk [vmem:[#allocation2 + $0xb9] sm:$0x1] %vm435, 0.0
      %454 = vst.msk [vmem:[#allocation2 + $0xd1] sm:$0x1] %vm435, 0.0
      %455 = vst.msk [vmem:[#allocation2 + $0xe9] sm:$0x1] %vm435, 0.0
      %v456 = vld [vmem:[%s399] sm:$0xff]
      %v457 = vld [vmem:[%s399 + $0x8] sm:$0xff]
      %vm458 = vcmask 64512
      %459 = vst.msk [vmem:[#allocation2 + $0x1] sm:$0xff] %vm458, %v456
      %460 = vst.msk [vmem:[#allocation2 + $0x9] sm:$0xff] %vm458, %v457
      %s461 = scalar_lea.vmem %s399, 16
      %v462 = vld [vmem:[%s461] sm:$0xff]
      %v463 = vld [vmem:[%s461 + $0x8] sm:$0xff]
      %s464 = scalar_lea.vmem [#allocation2], 216
      %465 = vst.msk [vmem:[%s464 + $0x1] sm:$0xff] %vm458, %v462
      %466 = vst.msk [vmem:[%s464 + $0x9] sm:$0xff] %vm458, %v463
      %v467 = vld [vmem:[%s391] sm:$0xff]
      %v468 = vld [vmem:[%s391 + $0x8] sm:$0xff]
      %v469 = vld [vmem:[%s391 + $0x10] sm:$0xff]
      %v470 = vld [vmem:[%s391 + $0x18] sm:$0xff]
      %v471 = vld [vmem:[%s391 + $0x20] sm:$0xff]
      %v472 = vld [vmem:[%s391 + $0x28] sm:$0xff]
      %v473 = vld [vmem:[%s391 + $0x30] sm:$0xff]
      %v474 = vld [vmem:[%s391 + $0x38] sm:$0xff]
      %v475 = vld [vmem:[%s391 + $0x40] sm:$0xff]
      %v476 = vld [vmem:[%s391 + $0x48] sm:$0xff]
      %v477 = vld [vmem:[%s391 + $0x50] sm:$0xff]
      %v478 = vld [vmem:[%s391 + $0x58] sm:$0xff]
      %v479 = vld [vmem:[%s391 + $0x60] sm:$0xff]
      %v480 = vld [vmem:[%s391 + $0x68] sm:$0xff]
      %v481 = vld [vmem:[%s391 + $0x70] sm:$0xff]
      %v482 = vld [vmem:[%s391 + $0x78] sm:$0xff]
      %s483 = scalar_lea.vmem [#allocation2], 24
      %484 = vst.msk [vmem:[%s483 + $0x1] sm:$0xff] %vm458, %v467
      %485 = vst.msk [vmem:[%s483 + $0x9] sm:$0xff] %vm458, %v468
      %486 = vst.msk [vmem:[%s483 + $0x19] sm:$0xff] %vm458, %v469
      %487 = vst.msk [vmem:[%s483 + $0x21] sm:$0xff] %vm458, %v470
      %488 = vst.msk [vmem:[%s483 + $0x31] sm:$0xff] %vm458, %v471
      %489 = vst.msk [vmem:[%s483 + $0x39] sm:$0xff] %vm458, %v472
      %490 = vst.msk [vmem:[%s483 + $0x49] sm:$0xff] %vm458, %v473
      %491 = vst.msk [vmem:[%s483 + $0x51] sm:$0xff] %vm458, %v474
      %492 = vst.msk [vmem:[%s483 + $0x61] sm:$0xff] %vm458, %v475
      %493 = vst.msk [vmem:[%s483 + $0x69] sm:$0xff] %vm458, %v476
      %494 = vst.msk [vmem:[%s483 + $0x79] sm:$0xff] %vm458, %v477
      %495 = vst.msk [vmem:[%s483 + $0x81] sm:$0xff] %vm458, %v478
      %496 = vst.msk [vmem:[%s483 + $0x91] sm:$0xff] %vm458, %v479
      %497 = vst.msk [vmem:[%s483 + $0x99] sm:$0xff] %vm458, %v480
      %498 = vst.msk [vmem:[%s483 + $0xa9] sm:$0xff] %vm458, %v481
      %499 = vst.msk [vmem:[%s483 + $0xb1] sm:$0xff] %vm458, %v482
      %v500 = vld [vmem:[%s2] sm:$0xff]
      %v501 = vld [vmem:[%s2 + $0x8] sm:$0xff]
      %v502 = vld [vmem:[%s2 + $0x10] sm:$0xff]
      %v503 = vld [vmem:[%s2 + $0x18] sm:$0xff]
      %v504 = vld [vmem:[%s2 + $0x20] sm:$0xff]
      %v505 = vld [vmem:[%s2 + $0x28] sm:$0xff]
      %v506 = vld [vmem:[%s2 + $0x30] sm:$0xff]
      %v507 = vld [vmem:[%s2 + $0x38] sm:$0xff]
      %v508 = vld [vmem:[%s2 + $0x40] sm:$0xff]
      %v509 = vld [vmem:[#allocation2] sm:$0xff]
      %v510 = vld [vmem:[#allocation2 + $0x8] sm:$0xff]
      %v511 = vld [vmem:[#allocation2 + $0x18] sm:$0xff]
      %v512 = vld [vmem:[#allocation2 + $0x20] sm:$0xff]
      %v513 = vld [vmem:[#allocation2 + $0x30] sm:$0xff]
      %v514 = vld [vmem:[#allocation2 + $0x38] sm:$0xff]
      %v515 = vld [vmem:[#allocation2 + $0x48] sm:$0xff]
      %v516 = vld [vmem:[#allocation2 + $0x50] sm:$0xff]
      %v517 = vld [vmem:[#allocation2 + $0x60] sm:$0xff]
      %v518 = vld [vmem:[#allocation2 + $0x68] sm:$0xff]
      %v519 = vld [vmem:[#allocation2 + $0x78] sm:$0xff]
      %v520 = vld [vmem:[#allocation2 + $0x80] sm:$0xff]
      %v521 = vld [vmem:[#allocation2 + $0x90] sm:$0xff]
      %v522 = vld [vmem:[#allocation2 + $0x98] sm:$0xff]
      %v523 = vld [vmem:[#allocation2 + $0xa8] sm:$0xff]
      %v524 = vld [vmem:[#allocation2 + $0xb0] sm:$0xff]
      %v525 = vld [vmem:[#allocation2 + $0x1] sm:$0xff]
      %v526 = vld [vmem:[#allocation2 + $0x9] sm:$0xff]
      %v527 = vld [vmem:[#allocation2 + $0x19] sm:$0xff]
      %v528 = vld [vmem:[#allocation2 + $0x21] sm:$0xff]
      %v529 = vld [vmem:[#allocation2 + $0x31] sm:$0xff]
      %v530 = vld [vmem:[#allocation2 + $0x39] sm:$0xff]
      %v531 = vld [vmem:[#allocation2 + $0x49] sm:$0xff]
      %v532 = vld [vmem:[#allocation2 + $0x51] sm:$0xff]
      %v533 = vld [vmem:[#allocation2 + $0x61] sm:$0xff]
      %v534 = vld [vmem:[#allocation2 + $0x69] sm:$0xff]
      %v535 = vld [vmem:[#allocation2 + $0x79] sm:$0xff]
      %v536 = vld [vmem:[#allocation2 + $0x81] sm:$0xff]
      %v537 = vld [vmem:[#allocation2 + $0x91] sm:$0xff]
      %v538 = vld [vmem:[#allocation2 + $0x99] sm:$0xff]
      %v539 = vld [vmem:[#allocation2 + $0xa9] sm:$0xff]
      %v540 = vld [vmem:[#allocation2 + $0xb1] sm:$0xff]
      %v542 = vsel %vm458, %v525, 0
      %v545 = vsel %vm458, %v526, 0
      %v548 = vsel %vm458, %v527, 0
      %v551 = vsel %vm458, %v528, 0
      %v554 = vsel %vm458, %v529, 0
      %v557 = vsel %vm458, %v530, 0
      %v560 = vsel %vm458, %v531, 0
      %v563 = vsel %vm458, %v532, 0
      %v566 = vsel %vm458, %v533, 0
      %v569 = vsel %vm458, %v534, 0
      %v572 = vsel %vm458, %v535, 0
      %v575 = vsel %vm458, %v536, 0
      %v578 = vsel %vm458, %v537, 0
      %v581 = vsel %vm458, %v538, 0
      %v584 = vsel %vm458, %v539, 0
      %v587 = vsel %vm458, %v540, 0
      %589 = vmatpush.msra.mxu0 0.0
      %590 = vmatpush.msra.mxu0 0.0
      %591 = vmatpush.msra.mxu0 0.0
      %592 = vmatpush.msra.mxu0 0.0
      %593 = vmatpush.msra.mxu0 0.0
      %594 = vmatpush.msra.mxu0 0.0
      %595 = vmatpush.msra.mxu0 0.0
      %596 = vmatpush.msra.mxu0 0.0
      %597 = vmatpush.msra.mxu0 0.0
      %598 = vmatpush.msra.mxu0 0.0
      %599 = vmatpush.msra.mxu0 0.0
      %600 = vmatpush.msra.mxu0 0.0
      %601 = vmatpush.msra.mxu0 0.0
      %602 = vmatpush.msra.mxu0 0.0
      %603 = vmatpush.msra.mxu0 0.0
      %604 = vmatpush.msra.mxu0 %v501
      %605 = vmatmul.f32.gmra.mxu0 %v542
      %v606 = vpop.f32.mrf.mxu0
      %v607 = vadd.f32 0.0, %v606
      %608 = vmatmul.f32.gmra.mxu0 %v545
      %v609 = vpop.f32.mrf.mxu0
      %v610 = vadd.f32 0.0, %v609
      %611 = vmatmul.f32.gmra.mxu0 %v548
      %v612 = vpop.f32.mrf.mxu0
      %v613 = vadd.f32 0.0, %v612
      %614 = vmatmul.f32.gmra.mxu0 %v551
      %v615 = vpop.f32.mrf.mxu0
      %v616 = vadd.f32 0.0, %v615
      %617 = vmatmul.f32.gmra.mxu0 %v554
      %v618 = vpop.f32.mrf.mxu0
      %v619 = vadd.f32 0.0, %v618
      %620 = vmatmul.f32.gmra.mxu0 %v557
      %v621 = vpop.f32.mrf.mxu0
      %v622 = vadd.f32 0.0, %v621
      %623 = vmatmul.f32.gmra.mxu0 %v560
      %v624 = vpop.f32.mrf.mxu0
      %v625 = vadd.f32 0.0, %v624
      %626 = vmatmul.f32.gmra.mxu0 %v563
      %v627 = vpop.f32.mrf.mxu0
      %v628 = vadd.f32 0.0, %v627
      %629 = vmatmul.f32.gmra.mxu0 %v566
      %v630 = vpop.f32.mrf.mxu0
      %v631 = vadd.f32 0.0, %v630
      %632 = vmatmul.f32.gmra.mxu0 %v569
      %v633 = vpop.f32.mrf.mxu0
      %v634 = vadd.f32 0.0, %v633
      %635 = vmatmul.f32.gmra.mxu0 %v572
      %v636 = vpop.f32.mrf.mxu0
      %v637 = vadd.f32 0.0, %v636
      %638 = vmatmul.f32.gmra.mxu0 %v575
      %v639 = vpop.f32.mrf.mxu0
      %v640 = vadd.f32 0.0, %v639
      %641 = vmatmul.f32.gmra.mxu0 %v578
      %v642 = vpop.f32.mrf.mxu0
      %v643 = vadd.f32 0.0, %v642
      %644 = vmatmul.f32.gmra.mxu0 %v581
      %v645 = vpop.f32.mrf.mxu0
      %v646 = vadd.f32 0.0, %v645
      %647 = vmatmul.f32.gmra.mxu0 %v584
      %v648 = vpop.f32.mrf.mxu0
      %v649 = vadd.f32 0.0, %v648
      %650 = vmatmul.f32.gmra.mxu0 %v587
      %v651 = vpop.f32.mrf.mxu0
      %v652 = vadd.f32 0.0, %v651
      %653 = vdwg.mxu0
      %v655 = vsel %vm458, %v509, 0
      %v658 = vsel %vm458, %v510, 0
      %v661 = vsel %vm458, %v511, 0
      %v664 = vsel %vm458, %v512, 0
      %v667 = vsel %vm458, %v513, 0
      %v670 = vsel %vm458, %v514, 0
      %v673 = vsel %vm458, %v515, 0
      %v676 = vsel %vm458, %v516, 0
      %v679 = vsel %vm458, %v517, 0
      %v682 = vsel %vm458, %v518, 0
      %v685 = vsel %vm458, %v519, 0
      %v688 = vsel %vm458, %v520, 0
      %v691 = vsel %vm458, %v521, 0
      %v694 = vsel %vm458, %v522, 0
      %v697 = vsel %vm458, %v523, 0
      %v700 = vsel %vm458, %v524, 0
      %702 = vmatpush.msra.mxu0 0.0
      %703 = vmatpush.msra.mxu0 0.0
      %704 = vmatpush.msra.mxu0 0.0
      %705 = vmatpush.msra.mxu0 0.0
      %706 = vmatpush.msra.mxu0 0.0
      %707 = vmatpush.msra.mxu0 0.0
      %708 = vmatpush.msra.mxu0 0.0
      %709 = vmatpush.msra.mxu0 0.0
      %710 = vmatpush.msra.mxu0 0.0
      %711 = vmatpush.msra.mxu0 0.0
      %712 = vmatpush.msra.mxu0 0.0
      %713 = vmatpush.msra.mxu0 0.0
      %714 = vmatpush.msra.mxu0 0.0
      %715 = vmatpush.msra.mxu0 0.0
      %716 = vmatpush.msra.mxu0 0.0
      %717 = vmatpush.msra.mxu0 %v500
      %718 = vmatmul.f32.gmra.mxu0 %v655
      %v719 = vpop.f32.mrf.mxu0
      %v720 = vadd.f32 %v607, %v719
      %721 = vmatmul.f32.gmra.mxu0 %v658
      %v722 = vpop.f32.mrf.mxu0
      %v723 = vadd.f32 %v610, %v722
      %724 = vmatmul.f32.gmra.mxu0 %v661
      %v725 = vpop.f32.mrf.mxu0
      %v726 = vadd.f32 %v613, %v725
      %727 = vmatmul.f32.gmra.mxu0 %v664
      %v728 = vpop.f32.mrf.mxu0
      %v729 = vadd.f32 %v616, %v728
      %730 = vmatmul.f32.gmra.mxu0 %v667
      %v731 = vpop.f32.mrf.mxu0
      %v732 = vadd.f32 %v619, %v731
      %733 = vmatmul.f32.gmra.mxu0 %v670
      %v734 = vpop.f32.mrf.mxu0
      %v735 = vadd.f32 %v622, %v734
      %736 = vmatmul.f32.gmra.mxu0 %v673
      %v737 = vpop.f32.mrf.mxu0
      %v738 = vadd.f32 %v625, %v737
      %739 = vmatmul.f32.gmra.mxu0 %v676
      %v740 = vpop.f32.mrf.mxu0
      %v741 = vadd.f32 %v628, %v740
      %742 = vmatmul.f32.gmra.mxu0 %v679
      %v743 = vpop.f32.mrf.mxu0
      %v744 = vadd.f32 %v631, %v743
      %745 = vmatmul.f32.gmra.mxu0 %v682
      %v746 = vpop.f32.mrf.mxu0
      %v747 = vadd.f32 %v634, %v746
      %748 = vmatmul.f32.gmra.mxu0 %v685
      %v749 = vpop.f32.mrf.mxu0
      %v750 = vadd.f32 %v637, %v749
      %751 = vmatmul.f32.gmra.mxu0 %v688
      %v752 = vpop.f32.mrf.mxu0
      %v753 = vadd.f32 %v640, %v752
      %754 = vmatmul.f32.gmra.mxu0 %v691
      %v755 = vpop.f32.mrf.mxu0
      %v756 = vadd.f32 %v643, %v755
      %757 = vmatmul.f32.gmra.mxu0 %v694
      %v758 = vpop.f32.mrf.mxu0
      %v759 = vadd.f32 %v646, %v758
      %760 = vmatmul.f32.gmra.mxu0 %v697
      %v761 = vpop.f32.mrf.mxu0
      %v762 = vadd.f32 %v649, %v761
      %763 = vmatmul.f32.gmra.mxu0 %v700
      %v764 = vpop.f32.mrf.mxu0
      %v765 = vadd.f32 %v652, %v764
      %766 = vdwg.mxu0
      %v767 = vld [vmem:[#allocation2 + $0x2] sm:$0xff]
      %v768 = vld [vmem:[#allocation2 + $0xa] sm:$0xff]
      %v769 = vld [vmem:[#allocation2 + $0x1a] sm:$0xff]
      %v770 = vld [vmem:[#allocation2 + $0x22] sm:$0xff]
      %v771 = vld [vmem:[#allocation2 + $0x32] sm:$0xff]
      %v772 = vld [vmem:[#allocation2 + $0x3a] sm:$0xff]
      %v773 = vld [vmem:[#allocation2 + $0x4a] sm:$0xff]
      %v774 = vld [vmem:[#allocation2 + $0x52] sm:$0xff]
      %v775 = vld [vmem:[#allocation2 + $0x62] sm:$0xff]
      %v776 = vld [vmem:[#allocation2 + $0x6a] sm:$0xff]
      %v777 = vld [vmem:[#allocation2 + $0x7a] sm:$0xff]
      %v778 = vld [vmem:[#allocation2 + $0x82] sm:$0xff]
      %v779 = vld [vmem:[#allocation2 + $0x92] sm:$0xff]
      %v780 = vld [vmem:[#allocation2 + $0x9a] sm:$0xff]
      %v781 = vld [vmem:[#allocation2 + $0xaa] sm:$0xff]
      %v782 = vld [vmem:[#allocation2 + $0xb2] sm:$0xff]
      %v784 = vsel %vm458, %v767, 0
      %v787 = vsel %vm458, %v768, 0
      %v790 = vsel %vm458, %v769, 0
      %v793 = vsel %vm458, %v770, 0
      %v796 = vsel %vm458, %v771, 0
      %v799 = vsel %vm458, %v772, 0
      %v802 = vsel %vm458, %v773, 0
      %v805 = vsel %vm458, %v774, 0
      %v808 = vsel %vm458, %v775, 0
      %v811 = vsel %vm458, %v776, 0
      %v814 = vsel %vm458, %v777, 0
      %v817 = vsel %vm458, %v778, 0
      %v820 = vsel %vm458, %v779, 0
      %v823 = vsel %vm458, %v780, 0
      %v826 = vsel %vm458, %v781, 0
      %v829 = vsel %vm458, %v782, 0
      %831 = vmatpush.msra.mxu0 0.0
      %832 = vmatpush.msra.mxu0 0.0
      %833 = vmatpush.msra.mxu0 0.0
      %834 = vmatpush.msra.mxu0 0.0
      %835 = vmatpush.msra.mxu0 0.0
      %836 = vmatpush.msra.mxu0 0.0
      %837 = vmatpush.msra.mxu0 0.0
      %838 = vmatpush.msra.mxu0 0.0
      %839 = vmatpush.msra.mxu0 0.0
      %840 = vmatpush.msra.mxu0 0.0
      %841 = vmatpush.msra.mxu0 0.0
      %842 = vmatpush.msra.mxu0 0.0
      %843 = vmatpush.msra.mxu0 0.0
      %844 = vmatpush.msra.mxu0 0.0
      %845 = vmatpush.msra.mxu0 0.0
      %846 = vmatpush.msra.mxu0 %v502
      %847 = vmatmul.f32.gmra.mxu0 %v784
      %v848 = vpop.f32.mrf.mxu0
      %v849 = vadd.f32 0.0, %v848
      %850 = vmatmul.f32.gmra.mxu0 %v787
      %v851 = vpop.f32.mrf.mxu0
      %v852 = vadd.f32 0.0, %v851
      %853 = vmatmul.f32.gmra.mxu0 %v790
      %v854 = vpop.f32.mrf.mxu0
      %v855 = vadd.f32 0.0, %v854
      %856 = vmatmul.f32.gmra.mxu0 %v793
      %v857 = vpop.f32.mrf.mxu0
      %v858 = vadd.f32 0.0, %v857
      %859 = vmatmul.f32.gmra.mxu0 %v796
      %v860 = vpop.f32.mrf.mxu0
      %v861 = vadd.f32 0.0, %v860
      %862 = vmatmul.f32.gmra.mxu0 %v799
      %v863 = vpop.f32.mrf.mxu0
      %v864 = vadd.f32 0.0, %v863
      %865 = vmatmul.f32.gmra.mxu0 %v802
      %v866 = vpop.f32.mrf.mxu0
      %v867 = vadd.f32 0.0, %v866
      %868 = vmatmul.f32.gmra.mxu0 %v805
      %v869 = vpop.f32.mrf.mxu0
      %v870 = vadd.f32 0.0, %v869
      %871 = vmatmul.f32.gmra.mxu0 %v808
      %v872 = vpop.f32.mrf.mxu0
      %v873 = vadd.f32 0.0, %v872
      %874 = vmatmul.f32.gmra.mxu0 %v811
      %v875 = vpop.f32.mrf.mxu0
      %v876 = vadd.f32 0.0, %v875
      %877 = vmatmul.f32.gmra.mxu0 %v814
      %v878 = vpop.f32.mrf.mxu0
      %v879 = vadd.f32 0.0, %v878
      %880 = vmatmul.f32.gmra.mxu0 %v817
      %v881 = vpop.f32.mrf.mxu0
      %v882 = vadd.f32 0.0, %v881
      %883 = vmatmul.f32.gmra.mxu0 %v820
      %v884 = vpop.f32.mrf.mxu0
      %v885 = vadd.f32 0.0, %v884
      %886 = vmatmul.f32.gmra.mxu0 %v823
      %v887 = vpop.f32.mrf.mxu0
      %v888 = vadd.f32 0.0, %v887
      %889 = vmatmul.f32.gmra.mxu0 %v826
      %v890 = vpop.f32.mrf.mxu0
      %v891 = vadd.f32 0.0, %v890
      %892 = vmatmul.f32.gmra.mxu0 %v829
      %v893 = vpop.f32.mrf.mxu0
      %v894 = vadd.f32 0.0, %v893
      %895 = vdwg.mxu0
      %v896 = vadd.f32 %v720, %v849
      %v897 = vadd.f32 %v723, %v852
      %v898 = vadd.f32 %v726, %v855
      %v899 = vadd.f32 %v729, %v858
      %v900 = vadd.f32 %v732, %v861
      %v901 = vadd.f32 %v735, %v864
      %v902 = vadd.f32 %v738, %v867
      %v903 = vadd.f32 %v741, %v870
      %v904 = vadd.f32 %v744, %v873
      %v905 = vadd.f32 %v747, %v876
      %v906 = vadd.f32 %v750, %v879
      %v907 = vadd.f32 %v753, %v882
      %v908 = vadd.f32 %v756, %v885
      %v909 = vadd.f32 %v759, %v888
      %v910 = vadd.f32 %v762, %v891
      %v911 = vadd.f32 %v765, %v894
      %v912 = vld [vmem:[%s483] sm:$0xff]
      %v913 = vld [vmem:[%s483 + $0x8] sm:$0xff]
      %v914 = vld [vmem:[%s483 + $0x18] sm:$0xff]
      %v915 = vld [vmem:[%s483 + $0x20] sm:$0xff]
      %v916 = vld [vmem:[%s483 + $0x30] sm:$0xff]
      %v917 = vld [vmem:[%s483 + $0x38] sm:$0xff]
      %v918 = vld [vmem:[%s483 + $0x48] sm:$0xff]
      %v919 = vld [vmem:[%s483 + $0x50] sm:$0xff]
      %v920 = vld [vmem:[%s483 + $0x60] sm:$0xff]
      %v921 = vld [vmem:[%s483 + $0x68] sm:$0xff]
      %v922 = vld [vmem:[%s483 + $0x78] sm:$0xff]
      %v923 = vld [vmem:[%s483 + $0x80] sm:$0xff]
      %v924 = vld [vmem:[%s483 + $0x90] sm:$0xff]
      %v925 = vld [vmem:[%s483 + $0x98] sm:$0xff]
      %v926 = vld [vmem:[%s483 + $0xa8] sm:$0xff]
      %v927 = vld [vmem:[%s483 + $0xb0] sm:$0xff]
      %v929 = vsel %vm458, %v912, 0
      %v932 = vsel %vm458, %v913, 0
      %v935 = vsel %vm458, %v914, 0
      %v938 = vsel %vm458, %v915, 0
      %v941 = vsel %vm458, %v916, 0
      %v944 = vsel %vm458, %v917, 0
      %v947 = vsel %vm458, %v918, 0
      %v950 = vsel %vm458, %v919, 0
      %v953 = vsel %vm458, %v920, 0
      %v956 = vsel %vm458, %v921, 0
      %v959 = vsel %vm458, %v922, 0
      %v962 = vsel %vm458, %v923, 0
      %v965 = vsel %vm458, %v924, 0
      %v968 = vsel %vm458, %v925, 0
      %v971 = vsel %vm458, %v926, 0
      %v974 = vsel %vm458, %v927, 0
      %976 = vmatpush.msra.mxu0 0.0
      %977 = vmatpush.msra.mxu0 0.0
      %978 = vmatpush.msra.mxu0 0.0
      %979 = vmatpush.msra.mxu0 0.0
      %980 = vmatpush.msra.mxu0 0.0
      %981 = vmatpush.msra.mxu0 0.0
      %982 = vmatpush.msra.mxu0 0.0
      %983 = vmatpush.msra.mxu0 0.0
      %984 = vmatpush.msra.mxu0 0.0
      %985 = vmatpush.msra.mxu0 0.0
      %986 = vmatpush.msra.mxu0 0.0
      %987 = vmatpush.msra.mxu0 0.0
      %988 = vmatpush.msra.mxu0 0.0
      %989 = vmatpush.msra.mxu0 0.0
      %990 = vmatpush.msra.mxu0 0.0
      %991 = vmatpush.msra.mxu0 %v503
      %992 = vmatmul.f32.gmra.mxu0 %v929
      %v993 = vpop.f32.mrf.mxu0
      %v994 = vadd.f32 0.0, %v993
      %995 = vmatmul.f32.gmra.mxu0 %v932
      %v996 = vpop.f32.mrf.mxu0
      %v997 = vadd.f32 0.0, %v996
      %998 = vmatmul.f32.gmra.mxu0 %v935
      %v999 = vpop.f32.mrf.mxu0
      %v1000 = vadd.f32 0.0, %v999
      %1001 = vmatmul.f32.gmra.mxu0 %v938
      %v1002 = vpop.f32.mrf.mxu0
      %v1003 = vadd.f32 0.0, %v1002
      %1004 = vmatmul.f32.gmra.mxu0 %v941
      %v1005 = vpop.f32.mrf.mxu0
      %v1006 = vadd.f32 0.0, %v1005
      %1007 = vmatmul.f32.gmra.mxu0 %v944
      %v1008 = vpop.f32.mrf.mxu0
      %v1009 = vadd.f32 0.0, %v1008
      %1010 = vmatmul.f32.gmra.mxu0 %v947
      %v1011 = vpop.f32.mrf.mxu0
      %v1012 = vadd.f32 0.0, %v1011
      %1013 = vmatmul.f32.gmra.mxu0 %v950
      %v1014 = vpop.f32.mrf.mxu0
      %v1015 = vadd.f32 0.0, %v1014
      %1016 = vmatmul.f32.gmra.mxu0 %v953
      %v1017 = vpop.f32.mrf.mxu0
      %v1018 = vadd.f32 0.0, %v1017
      %1019 = vmatmul.f32.gmra.mxu0 %v956
      %v1020 = vpop.f32.mrf.mxu0
      %v1021 = vadd.f32 0.0, %v1020
      %1022 = vmatmul.f32.gmra.mxu0 %v959
      %v1023 = vpop.f32.mrf.mxu0
      %v1024 = vadd.f32 0.0, %v1023
      %1025 = vmatmul.f32.gmra.mxu0 %v962
      %v1026 = vpop.f32.mrf.mxu0
      %v1027 = vadd.f32 0.0, %v1026
      %1028 = vmatmul.f32.gmra.mxu0 %v965
      %v1029 = vpop.f32.mrf.mxu0
      %v1030 = vadd.f32 0.0, %v1029
      %1031 = vmatmul.f32.gmra.mxu0 %v968
      %v1032 = vpop.f32.mrf.mxu0
      %v1033 = vadd.f32 0.0, %v1032
      %1034 = vmatmul.f32.gmra.mxu0 %v971
      %v1035 = vpop.f32.mrf.mxu0
      %v1036 = vadd.f32 0.0, %v1035
      %1037 = vmatmul.f32.gmra.mxu0 %v974
      %v1038 = vpop.f32.mrf.mxu0
      %v1039 = vadd.f32 0.0, %v1038
      %1040 = vdwg.mxu0
      %v1041 = vadd.f32 %v896, %v994
      %v1042 = vadd.f32 %v897, %v997
      %v1043 = vadd.f32 %v898, %v1000
      %v1044 = vadd.f32 %v899, %v1003
      %v1045 = vadd.f32 %v900, %v1006
      %v1046 = vadd.f32 %v901, %v1009
      %v1047 = vadd.f32 %v902, %v1012
      %v1048 = vadd.f32 %v903, %v1015
      %v1049 = vadd.f32 %v904, %v1018
      %v1050 = vadd.f32 %v905, %v1021
      %v1051 = vadd.f32 %v906, %v1024
      %v1052 = vadd.f32 %v907, %v1027
      %v1053 = vadd.f32 %v908, %v1030
      %v1054 = vadd.f32 %v909, %v1033
      %v1055 = vadd.f32 %v910, %v1036
      %v1056 = vadd.f32 %v911, %v1039
      %v1057 = vld [vmem:[%s483 + $0x1] sm:$0xff]
      %v1058 = vld [vmem:[%s483 + $0x9] sm:$0xff]
      %v1059 = vld [vmem:[%s483 + $0x19] sm:$0xff]
      %v1060 = vld [vmem:[%s483 + $0x21] sm:$0xff]
      %v1061 = vld [vmem:[%s483 + $0x31] sm:$0xff]
      %v1062 = vld [vmem:[%s483 + $0x39] sm:$0xff]
      %v1063 = vld [vmem:[%s483 + $0x49] sm:$0xff]
      %v1064 = vld [vmem:[%s483 + $0x51] sm:$0xff]
      %v1065 = vld [vmem:[%s483 + $0x61] sm:$0xff]
      %v1066 = vld [vmem:[%s483 + $0x69] sm:$0xff]
      %v1067 = vld [vmem:[%s483 + $0x79] sm:$0xff]
      %v1068 = vld [vmem:[%s483 + $0x81] sm:$0xff]
      %v1069 = vld [vmem:[%s483 + $0x91] sm:$0xff]
      %v1070 = vld [vmem:[%s483 + $0x99] sm:$0xff]
      %v1071 = vld [vmem:[%s483 + $0xa9] sm:$0xff]
      %v1072 = vld [vmem:[%s483 + $0xb1] sm:$0xff]
      %v1074 = vsel %vm458, %v1057, 0
      %v1077 = vsel %vm458, %v1058, 0
      %v1080 = vsel %vm458, %v1059, 0
      %v1083 = vsel %vm458, %v1060, 0
      %v1086 = vsel %vm458, %v1061, 0
      %v1089 = vsel %vm458, %v1062, 0
      %v1092 = vsel %vm458, %v1063, 0
      %v1095 = vsel %vm458, %v1064, 0
      %v1098 = vsel %vm458, %v1065, 0
      %v1101 = vsel %vm458, %v1066, 0
      %v1104 = vsel %vm458, %v1067, 0
      %v1107 = vsel %vm458, %v1068, 0
      %v1110 = vsel %vm458, %v1069, 0
      %v1113 = vsel %vm458, %v1070, 0
      %v1116 = vsel %vm458, %v1071, 0
      %v1119 = vsel %vm458, %v1072, 0
      %1121 = vmatpush.msra.mxu0 0.0
      %1122 = vmatpush.msra.mxu0 0.0
      %1123 = vmatpush.msra.mxu0 0.0
      %1124 = vmatpush.msra.mxu0 0.0
      %1125 = vmatpush.msra.mxu0 0.0
      %1126 = vmatpush.msra.mxu0 0.0
      %1127 = vmatpush.msra.mxu0 0.0
      %1128 = vmatpush.msra.mxu0 0.0
      %1129 = vmatpush.msra.mxu0 0.0
      %1130 = vmatpush.msra.mxu0 0.0
      %1131 = vmatpush.msra.mxu0 0.0
      %1132 = vmatpush.msra.mxu0 0.0
      %1133 = vmatpush.msra.mxu0 0.0
      %1134 = vmatpush.msra.mxu0 0.0
      %1135 = vmatpush.msra.mxu0 0.0
      %1136 = vmatpush.msra.mxu0 %v504
      %1137 = vmatmul.f32.gmra.mxu0 %v1074
      %v1138 = vpop.f32.mrf.mxu0
      %v1139 = vadd.f32 0.0, %v1138
      %1140 = vmatmul.f32.gmra.mxu0 %v1077
      %v1141 = vpop.f32.mrf.mxu0
      %v1142 = vadd.f32 0.0, %v1141
      %1143 = vmatmul.f32.gmra.mxu0 %v1080
      %v1144 = vpop.f32.mrf.mxu0
      %v1145 = vadd.f32 0.0, %v1144
      %1146 = vmatmul.f32.gmra.mxu0 %v1083
      %v1147 = vpop.f32.mrf.mxu0
      %v1148 = vadd.f32 0.0, %v1147
      %1149 = vmatmul.f32.gmra.mxu0 %v1086
      %v1150 = vpop.f32.mrf.mxu0
      %v1151 = vadd.f32 0.0, %v1150
      %1152 = vmatmul.f32.gmra.mxu0 %v1089
      %v1153 = vpop.f32.mrf.mxu0
      %v1154 = vadd.f32 0.0, %v1153
      %1155 = vmatmul.f32.gmra.mxu0 %v1092
      %v1156 = vpop.f32.mrf.mxu0
      %v1157 = vadd.f32 0.0, %v1156
      %1158 = vmatmul.f32.gmra.mxu0 %v1095
      %v1159 = vpop.f32.mrf.mxu0
      %v1160 = vadd.f32 0.0, %v1159
      %1161 = vmatmul.f32.gmra.mxu0 %v1098
      %v1162 = vpop.f32.mrf.mxu0
      %v1163 = vadd.f32 0.0, %v1162
      %1164 = vmatmul.f32.gmra.mxu0 %v1101
      %v1165 = vpop.f32.mrf.mxu0
      %v1166 = vadd.f32 0.0, %v1165
      %1167 = vmatmul.f32.gmra.mxu0 %v1104
      %v1168 = vpop.f32.mrf.mxu0
      %v1169 = vadd.f32 0.0, %v1168
      %1170 = vmatmul.f32.gmra.mxu0 %v1107
      %v1171 = vpop.f32.mrf.mxu0
      %v1172 = vadd.f32 0.0, %v1171
      %1173 = vmatmul.f32.gmra.mxu0 %v1110
      %v1174 = vpop.f32.mrf.mxu0
      %v1175 = vadd.f32 0.0, %v1174
      %1176 = vmatmul.f32.gmra.mxu0 %v1113
      %v1177 = vpop.f32.mrf.mxu0
      %v1178 = vadd.f32 0.0, %v1177
      %1179 = vmatmul.f32.gmra.mxu0 %v1116
      %v1180 = vpop.f32.mrf.mxu0
      %v1181 = vadd.f32 0.0, %v1180
      %1182 = vmatmul.f32.gmra.mxu0 %v1119
      %v1183 = vpop.f32.mrf.mxu0
      %v1184 = vadd.f32 0.0, %v1183
      %1185 = vdwg.mxu0
      %v1186 = vadd.f32 %v1041, %v1139
      %v1187 = vadd.f32 %v1042, %v1142
      %v1188 = vadd.f32 %v1043, %v1145
      %v1189 = vadd.f32 %v1044, %v1148
      %v1190 = vadd.f32 %v1045, %v1151
      %v1191 = vadd.f32 %v1046, %v1154
      %v1192 = vadd.f32 %v1047, %v1157
      %v1193 = vadd.f32 %v1048, %v1160
      %v1194 = vadd.f32 %v1049, %v1163
      %v1195 = vadd.f32 %v1050, %v1166
      %v1196 = vadd.f32 %v1051, %v1169
      %v1197 = vadd.f32 %v1052, %v1172
      %v1198 = vadd.f32 %v1053, %v1175
      %v1199 = vadd.f32 %v1054, %v1178
      %v1200 = vadd.f32 %v1055, %v1181
      %v1201 = vadd.f32 %v1056, %v1184
      %v1202 = vld [vmem:[%s483 + $0x2] sm:$0xff]
      %v1203 = vld [vmem:[%s483 + $0xa] sm:$0xff]
      %v1204 = vld [vmem:[%s483 + $0x1a] sm:$0xff]
      %v1205 = vld [vmem:[%s483 + $0x22] sm:$0xff]
      %v1206 = vld [vmem:[%s483 + $0x32] sm:$0xff]
      %v1207 = vld [vmem:[%s483 + $0x3a] sm:$0xff]
      %v1208 = vld [vmem:[%s483 + $0x4a] sm:$0xff]
      %v1209 = vld [vmem:[%s483 + $0x52] sm:$0xff]
      %v1210 = vld [vmem:[%s483 + $0x62] sm:$0xff]
      %v1211 = vld [vmem:[%s483 + $0x6a] sm:$0xff]
      %v1212 = vld [vmem:[%s483 + $0x7a] sm:$0xff]
      %v1213 = vld [vmem:[%s483 + $0x82] sm:$0xff]
      %v1214 = vld [vmem:[%s483 + $0x92] sm:$0xff]
      %v1215 = vld [vmem:[%s483 + $0x9a] sm:$0xff]
      %v1216 = vld [vmem:[%s483 + $0xaa] sm:$0xff]
      %v1217 = vld [vmem:[%s483 + $0xb2] sm:$0xff]
      %v1219 = vsel %vm458, %v1202, 0
      %v1222 = vsel %vm458, %v1203, 0
      %v1225 = vsel %vm458, %v1204, 0
      %v1228 = vsel %vm458, %v1205, 0
      %v1231 = vsel %vm458, %v1206, 0
      %v1234 = vsel %vm458, %v1207, 0
      %v1237 = vsel %vm458, %v1208, 0
      %v1240 = vsel %vm458, %v1209, 0
      %v1243 = vsel %vm458, %v1210, 0
      %v1246 = vsel %vm458, %v1211, 0
      %v1249 = vsel %vm458, %v1212, 0
      %v1252 = vsel %vm458, %v1213, 0
      %v1255 = vsel %vm458, %v1214, 0
      %v1258 = vsel %vm458, %v1215, 0
      %v1261 = vsel %vm458, %v1216, 0
      %v1264 = vsel %vm458, %v1217, 0
      %1266 = vmatpush.msra.mxu0 0.0
      %1267 = vmatpush.msra.mxu0 0.0
      %1268 = vmatpush.msra.mxu0 0.0
      %1269 = vmatpush.msra.mxu0 0.0
      %1270 = vmatpush.msra.mxu0 0.0
      %1271 = vmatpush.msra.mxu0 0.0
      %1272 = vmatpush.msra.mxu0 0.0
      %1273 = vmatpush.msra.mxu0 0.0
      %1274 = vmatpush.msra.mxu0 0.0
      %1275 = vmatpush.msra.mxu0 0.0
      %1276 = vmatpush.msra.mxu0 0.0
      %1277 = vmatpush.msra.mxu0 0.0
      %1278 = vmatpush.msra.mxu0 0.0
      %1279 = vmatpush.msra.mxu0 0.0
      %1280 = vmatpush.msra.mxu0 0.0
      %1281 = vmatpush.msra.mxu0 %v505
      %1282 = vmatmul.f32.gmra.mxu0 %v1219
      %v1283 = vpop.f32.mrf.mxu0
      %v1284 = vadd.f32 0.0, %v1283
      %1285 = vmatmul.f32.gmra.mxu0 %v1222
      %v1286 = vpop.f32.mrf.mxu0
      %v1287 = vadd.f32 0.0, %v1286
      %1288 = vmatmul.f32.gmra.mxu0 %v1225
      %v1289 = vpop.f32.mrf.mxu0
      %v1290 = vadd.f32 0.0, %v1289
      %1291 = vmatmul.f32.gmra.mxu0 %v1228
      %v1292 = vpop.f32.mrf.mxu0
      %v1293 = vadd.f32 0.0, %v1292
      %1294 = vmatmul.f32.gmra.mxu0 %v1231
      %v1295 = vpop.f32.mrf.mxu0
      %v1296 = vadd.f32 0.0, %v1295
      %1297 = vmatmul.f32.gmra.mxu0 %v1234
      %v1298 = vpop.f32.mrf.mxu0
      %v1299 = vadd.f32 0.0, %v1298
      %1300 = vmatmul.f32.gmra.mxu0 %v1237
      %v1301 = vpop.f32.mrf.mxu0
      %v1302 = vadd.f32 0.0, %v1301
      %1303 = vmatmul.f32.gmra.mxu0 %v1240
      %v1304 = vpop.f32.mrf.mxu0
      %v1305 = vadd.f32 0.0, %v1304
      %1306 = vmatmul.f32.gmra.mxu0 %v1243
      %v1307 = vpop.f32.mrf.mxu0
      %v1308 = vadd.f32 0.0, %v1307
      %1309 = vmatmul.f32.gmra.mxu0 %v1246
      %v1310 = vpop.f32.mrf.mxu0
      %v1311 = vadd.f32 0.0, %v1310
      %1312 = vmatmul.f32.gmra.mxu0 %v1249
      %v1313 = vpop.f32.mrf.mxu0
      %v1314 = vadd.f32 0.0, %v1313
      %1315 = vmatmul.f32.gmra.mxu0 %v1252
      %v1316 = vpop.f32.mrf.mxu0
      %v1317 = vadd.f32 0.0, %v1316
      %1318 = vmatmul.f32.gmra.mxu0 %v1255
      %v1319 = vpop.f32.mrf.mxu0
      %v1320 = vadd.f32 0.0, %v1319
      %1321 = vmatmul.f32.gmra.mxu0 %v1258
      %v1322 = vpop.f32.mrf.mxu0
      %v1323 = vadd.f32 0.0, %v1322
      %1324 = vmatmul.f32.gmra.mxu0 %v1261
      %v1325 = vpop.f32.mrf.mxu0
      %v1326 = vadd.f32 0.0, %v1325
      %1327 = vmatmul.f32.gmra.mxu0 %v1264
      %v1328 = vpop.f32.mrf.mxu0
      %v1329 = vadd.f32 0.0, %v1328
      %1330 = vdwg.mxu0
      %v1331 = vadd.f32 %v1186, %v1284
      %v1332 = vadd.f32 %v1187, %v1287
      %v1333 = vadd.f32 %v1188, %v1290
      %v1334 = vadd.f32 %v1189, %v1293
      %v1335 = vadd.f32 %v1190, %v1296
      %v1336 = vadd.f32 %v1191, %v1299
      %v1337 = vadd.f32 %v1192, %v1302
      %v1338 = vadd.f32 %v1193, %v1305
      %v1339 = vadd.f32 %v1194, %v1308
      %v1340 = vadd.f32 %v1195, %v1311
      %v1341 = vadd.f32 %v1196, %v1314
      %v1342 = vadd.f32 %v1197, %v1317
      %v1343 = vadd.f32 %v1198, %v1320
      %v1344 = vadd.f32 %v1199, %v1323
      %v1345 = vadd.f32 %v1200, %v1326
      %v1346 = vadd.f32 %v1201, %v1329
      %s1347 = scalar_lea.vmem [#allocation2], 48
      %v1348 = vld [vmem:[%s1347] sm:$0xff]
      %v1349 = vld [vmem:[%s1347 + $0x8] sm:$0xff]
      %v1350 = vld [vmem:[%s1347 + $0x18] sm:$0xff]
      %v1351 = vld [vmem:[%s1347 + $0x20] sm:$0xff]
      %v1352 = vld [vmem:[%s1347 + $0x30] sm:$0xff]
      %v1353 = vld [vmem:[%s1347 + $0x38] sm:$0xff]
      %v1354 = vld [vmem:[%s1347 + $0x48] sm:$0xff]
      %v1355 = vld [vmem:[%s1347 + $0x50] sm:$0xff]
      %v1356 = vld [vmem:[%s1347 + $0x60] sm:$0xff]
      %v1357 = vld [vmem:[%s1347 + $0x68] sm:$0xff]
      %v1358 = vld [vmem:[%s1347 + $0x78] sm:$0xff]
      %v1359 = vld [vmem:[%s1347 + $0x80] sm:$0xff]
      %v1360 = vld [vmem:[%s1347 + $0x90] sm:$0xff]
      %v1361 = vld [vmem:[%s1347 + $0x98] sm:$0xff]
      %v1362 = vld [vmem:[%s1347 + $0xa8] sm:$0xff]
      %v1363 = vld [vmem:[%s1347 + $0xb0] sm:$0xff]
      %v1365 = vsel %vm458, %v1348, 0
      %v1368 = vsel %vm458, %v1349, 0
      %v1371 = vsel %vm458, %v1350, 0
      %v1374 = vsel %vm458, %v1351, 0
      %v1377 = vsel %vm458, %v1352, 0
      %v1380 = vsel %vm458, %v1353, 0
      %v1383 = vsel %vm458, %v1354, 0
      %v1386 = vsel %vm458, %v1355, 0
      %v1389 = vsel %vm458, %v1356, 0
      %v1392 = vsel %vm458, %v1357, 0
      %v1395 = vsel %vm458, %v1358, 0
      %v1398 = vsel %vm458, %v1359, 0
      %v1401 = vsel %vm458, %v1360, 0
      %v1404 = vsel %vm458, %v1361, 0
      %v1407 = vsel %vm458, %v1362, 0
      %v1410 = vsel %vm458, %v1363, 0
      %1412 = vmatpush.msra.mxu0 0.0
      %1413 = vmatpush.msra.mxu0 0.0
      %1414 = vmatpush.msra.mxu0 0.0
      %1415 = vmatpush.msra.mxu0 0.0
      %1416 = vmatpush.msra.mxu0 0.0
      %1417 = vmatpush.msra.mxu0 0.0
      %1418 = vmatpush.msra.mxu0 0.0
      %1419 = vmatpush.msra.mxu0 0.0
      %1420 = vmatpush.msra.mxu0 0.0
      %1421 = vmatpush.msra.mxu0 0.0
      %1422 = vmatpush.msra.mxu0 0.0
      %1423 = vmatpush.msra.mxu0 0.0
      %1424 = vmatpush.msra.mxu0 0.0
      %1425 = vmatpush.msra.mxu0 0.0
      %1426 = vmatpush.msra.mxu0 0.0
      %1427 = vmatpush.msra.mxu0 %v506
      %1428 = vmatmul.f32.gmra.mxu0 %v1365
      %v1429 = vpop.f32.mrf.mxu0
      %v1430 = vadd.f32 0.0, %v1429
      %1431 = vmatmul.f32.gmra.mxu0 %v1368
      %v1432 = vpop.f32.mrf.mxu0
      %v1433 = vadd.f32 0.0, %v1432
      %1434 = vmatmul.f32.gmra.mxu0 %v1371
      %v1435 = vpop.f32.mrf.mxu0
      %v1436 = vadd.f32 0.0, %v1435
      %1437 = vmatmul.f32.gmra.mxu0 %v1374
      %v1438 = vpop.f32.mrf.mxu0
      %v1439 = vadd.f32 0.0, %v1438
      %1440 = vmatmul.f32.gmra.mxu0 %v1377
      %v1441 = vpop.f32.mrf.mxu0
      %v1442 = vadd.f32 0.0, %v1441
      %1443 = vmatmul.f32.gmra.mxu0 %v1380
      %v1444 = vpop.f32.mrf.mxu0
      %v1445 = vadd.f32 0.0, %v1444
      %1446 = vmatmul.f32.gmra.mxu0 %v1383
      %v1447 = vpop.f32.mrf.mxu0
      %v1448 = vadd.f32 0.0, %v1447
      %1449 = vmatmul.f32.gmra.mxu0 %v1386
      %v1450 = vpop.f32.mrf.mxu0
      %v1451 = vadd.f32 0.0, %v1450
      %1452 = vmatmul.f32.gmra.mxu0 %v1389
      %v1453 = vpop.f32.mrf.mxu0
      %v1454 = vadd.f32 0.0, %v1453
      %1455 = vmatmul.f32.gmra.mxu0 %v1392
      %v1456 = vpop.f32.mrf.mxu0
      %v1457 = vadd.f32 0.0, %v1456
      %1458 = vmatmul.f32.gmra.mxu0 %v1395
      %v1459 = vpop.f32.mrf.mxu0
      %v1460 = vadd.f32 0.0, %v1459
      %1461 = vmatmul.f32.gmra.mxu0 %v1398
      %v1462 = vpop.f32.mrf.mxu0
      %v1463 = vadd.f32 0.0, %v1462
      %1464 = vmatmul.f32.gmra.mxu0 %v1401
      %v1465 = vpop.f32.mrf.mxu0
      %v1466 = vadd.f32 0.0, %v1465
      %1467 = vmatmul.f32.gmra.mxu0 %v1404
      %v1468 = vpop.f32.mrf.mxu0
      %v1469 = vadd.f32 0.0, %v1468
      %1470 = vmatmul.f32.gmra.mxu0 %v1407
      %v1471 = vpop.f32.mrf.mxu0
      %v1472 = vadd.f32 0.0, %v1471
      %1473 = vmatmul.f32.gmra.mxu0 %v1410
      %v1474 = vpop.f32.mrf.mxu0
      %v1475 = vadd.f32 0.0, %v1474
      %1476 = vdwg.mxu0
      %v1477 = vadd.f32 %v1331, %v1430
      %v1478 = vadd.f32 %v1332, %v1433
      %v1479 = vadd.f32 %v1333, %v1436
      %v1480 = vadd.f32 %v1334, %v1439
      %v1481 = vadd.f32 %v1335, %v1442
      %v1482 = vadd.f32 %v1336, %v1445
      %v1483 = vadd.f32 %v1337, %v1448
      %v1484 = vadd.f32 %v1338, %v1451
      %v1485 = vadd.f32 %v1339, %v1454
      %v1486 = vadd.f32 %v1340, %v1457
      %v1487 = vadd.f32 %v1341, %v1460
      %v1488 = vadd.f32 %v1342, %v1463
      %v1489 = vadd.f32 %v1343, %v1466
      %v1490 = vadd.f32 %v1344, %v1469
      %v1491 = vadd.f32 %v1345, %v1472
      %v1492 = vadd.f32 %v1346, %v1475
      %v1493 = vld [vmem:[%s1347 + $0x1] sm:$0xff]
      %v1494 = vld [vmem:[%s1347 + $0x9] sm:$0xff]
      %v1495 = vld [vmem:[%s1347 + $0x19] sm:$0xff]
      %v1496 = vld [vmem:[%s1347 + $0x21] sm:$0xff]
      %v1497 = vld [vmem:[%s1347 + $0x31] sm:$0xff]
      %v1498 = vld [vmem:[%s1347 + $0x39] sm:$0xff]
      %v1499 = vld [vmem:[%s1347 + $0x49] sm:$0xff]
      %v1500 = vld [vmem:[%s1347 + $0x51] sm:$0xff]
      %v1501 = vld [vmem:[%s1347 + $0x61] sm:$0xff]
      %v1502 = vld [vmem:[%s1347 + $0x69] sm:$0xff]
      %v1503 = vld [vmem:[%s1347 + $0x79] sm:$0xff]
      %v1504 = vld [vmem:[%s1347 + $0x81] sm:$0xff]
      %v1505 = vld [vmem:[%s1347 + $0x91] sm:$0xff]
      %v1506 = vld [vmem:[%s1347 + $0x99] sm:$0xff]
      %v1507 = vld [vmem:[%s1347 + $0xa9] sm:$0xff]
      %v1508 = vld [vmem:[%s1347 + $0xb1] sm:$0xff]
      %v1510 = vsel %vm458, %v1493, 0
      %v1513 = vsel %vm458, %v1494, 0
      %v1516 = vsel %vm458, %v1495, 0
      %v1519 = vsel %vm458, %v1496, 0
      %v1522 = vsel %vm458, %v1497, 0
      %v1525 = vsel %vm458, %v1498, 0
      %v1528 = vsel %vm458, %v1499, 0
      %v1531 = vsel %vm458, %v1500, 0
      %v1534 = vsel %vm458, %v1501, 0
      %v1537 = vsel %vm458, %v1502, 0
      %v1540 = vsel %vm458, %v1503, 0
      %v1543 = vsel %vm458, %v1504, 0
      %v1546 = vsel %vm458, %v1505, 0
      %v1549 = vsel %vm458, %v1506, 0
      %v1552 = vsel %vm458, %v1507, 0
      %v1555 = vsel %vm458, %v1508, 0
      %1557 = vmatpush.msra.mxu0 0.0
      %1558 = vmatpush.msra.mxu0 0.0
      %1559 = vmatpush.msra.mxu0 0.0
      %1560 = vmatpush.msra.mxu0 0.0
      %1561 = vmatpush.msra.mxu0 0.0
      %1562 = vmatpush.msra.mxu0 0.0
      %1563 = vmatpush.msra.mxu0 0.0
      %1564 = vmatpush.msra.mxu0 0.0
      %1565 = vmatpush.msra.mxu0 0.0
      %1566 = vmatpush.msra.mxu0 0.0
      %1567 = vmatpush.msra.mxu0 0.0
      %1568 = vmatpush.msra.mxu0 0.0
      %1569 = vmatpush.msra.mxu0 0.0
      %1570 = vmatpush.msra.mxu0 0.0
      %1571 = vmatpush.msra.mxu0 0.0
      %1572 = vmatpush.msra.mxu0 %v507
      %1573 = vmatmul.f32.gmra.mxu0 %v1510
      %v1574 = vpop.f32.mrf.mxu0
      %v1575 = vadd.f32 0.0, %v1574
      %1576 = vmatmul.f32.gmra.mxu0 %v1513
      %v1577 = vpop.f32.mrf.mxu0
      %v1578 = vadd.f32 0.0, %v1577
      %1579 = vmatmul.f32.gmra.mxu0 %v1516
      %v1580 = vpop.f32.mrf.mxu0
      %v1581 = vadd.f32 0.0, %v1580
      %1582 = vmatmul.f32.gmra.mxu0 %v1519
      %v1583 = vpop.f32.mrf.mxu0
      %v1584 = vadd.f32 0.0, %v1583
      %1585 = vmatmul.f32.gmra.mxu0 %v1522
      %v1586 = vpop.f32.mrf.mxu0
      %v1587 = vadd.f32 0.0, %v1586
      %1588 = vmatmul.f32.gmra.mxu0 %v1525
      %v1589 = vpop.f32.mrf.mxu0
      %v1590 = vadd.f32 0.0, %v1589
      %1591 = vmatmul.f32.gmra.mxu0 %v1528
      %v1592 = vpop.f32.mrf.mxu0
      %v1593 = vadd.f32 0.0, %v1592
      %1594 = vmatmul.f32.gmra.mxu0 %v1531
      %v1595 = vpop.f32.mrf.mxu0
      %v1596 = vadd.f32 0.0, %v1595
      %1597 = vmatmul.f32.gmra.mxu0 %v1534
      %v1598 = vpop.f32.mrf.mxu0
      %v1599 = vadd.f32 0.0, %v1598
      %1600 = vmatmul.f32.gmra.mxu0 %v1537
      %v1601 = vpop.f32.mrf.mxu0
      %v1602 = vadd.f32 0.0, %v1601
      %1603 = vmatmul.f32.gmra.mxu0 %v1540
      %v1604 = vpop.f32.mrf.mxu0
      %v1605 = vadd.f32 0.0, %v1604
      %1606 = vmatmul.f32.gmra.mxu0 %v1543
      %v1607 = vpop.f32.mrf.mxu0
      %v1608 = vadd.f32 0.0, %v1607
      %1609 = vmatmul.f32.gmra.mxu0 %v1546
      %v1610 = vpop.f32.mrf.mxu0
      %v1611 = vadd.f32 0.0, %v1610
      %1612 = vmatmul.f32.gmra.mxu0 %v1549
      %v1613 = vpop.f32.mrf.mxu0
      %v1614 = vadd.f32 0.0, %v1613
      %1615 = vmatmul.f32.gmra.mxu0 %v1552
      %v1616 = vpop.f32.mrf.mxu0
      %v1617 = vadd.f32 0.0, %v1616
      %1618 = vmatmul.f32.gmra.mxu0 %v1555
      %v1619 = vpop.f32.mrf.mxu0
      %v1620 = vadd.f32 0.0, %v1619
      %1621 = vdwg.mxu0
      %v1622 = vadd.f32 %v1477, %v1575
      %v1623 = vadd.f32 %v1478, %v1578
      %v1624 = vadd.f32 %v1479, %v1581
      %v1625 = vadd.f32 %v1480, %v1584
      %v1626 = vadd.f32 %v1481, %v1587
      %v1627 = vadd.f32 %v1482, %v1590
      %v1628 = vadd.f32 %v1483, %v1593
      %v1629 = vadd.f32 %v1484, %v1596
      %v1630 = vadd.f32 %v1485, %v1599
      %v1631 = vadd.f32 %v1486, %v1602
      %v1632 = vadd.f32 %v1487, %v1605
      %v1633 = vadd.f32 %v1488, %v1608
      %v1634 = vadd.f32 %v1489, %v1611
      %v1635 = vadd.f32 %v1490, %v1614
      %v1636 = vadd.f32 %v1491, %v1617
      %v1637 = vadd.f32 %v1492, %v1620
      %v1638 = vld [vmem:[%s1347 + $0x2] sm:$0xff]
      %v1639 = vld [vmem:[%s1347 + $0xa] sm:$0xff]
      %v1640 = vld [vmem:[%s1347 + $0x1a] sm:$0xff]
      %v1641 = vld [vmem:[%s1347 + $0x22] sm:$0xff]
      %v1642 = vld [vmem:[%s1347 + $0x32] sm:$0xff]
      %v1643 = vld [vmem:[%s1347 + $0x3a] sm:$0xff]
      %v1644 = vld [vmem:[%s1347 + $0x4a] sm:$0xff]
      %v1645 = vld [vmem:[%s1347 + $0x52] sm:$0xff]
      %v1646 = vld [vmem:[%s1347 + $0x62] sm:$0xff]
      %v1647 = vld [vmem:[%s1347 + $0x6a] sm:$0xff]
      %v1648 = vld [vmem:[%s1347 + $0x7a] sm:$0xff]
      %v1649 = vld [vmem:[%s1347 + $0x82] sm:$0xff]
      %v1650 = vld [vmem:[%s1347 + $0x92] sm:$0xff]
      %v1651 = vld [vmem:[%s1347 + $0x9a] sm:$0xff]
      %v1652 = vld [vmem:[%s1347 + $0xaa] sm:$0xff]
      %v1653 = vld [vmem:[%s1347 + $0xb2] sm:$0xff]
      %v1655 = vsel %vm458, %v1638, 0
      %v1658 = vsel %vm458, %v1639, 0
      %v1661 = vsel %vm458, %v1640, 0
      %v1664 = vsel %vm458, %v1641, 0
      %v1667 = vsel %vm458, %v1642, 0
      %v1670 = vsel %vm458, %v1643, 0
      %v1673 = vsel %vm458, %v1644, 0
      %v1676 = vsel %vm458, %v1645, 0
      %v1679 = vsel %vm458, %v1646, 0
      %v1682 = vsel %vm458, %v1647, 0
      %v1685 = vsel %vm458, %v1648, 0
      %v1688 = vsel %vm458, %v1649, 0
      %v1691 = vsel %vm458, %v1650, 0
      %v1694 = vsel %vm458, %v1651, 0
      %v1697 = vsel %vm458, %v1652, 0
      %v1700 = vsel %vm458, %v1653, 0
      %1702 = vmatpush.msra.mxu0 0.0
      %1703 = vmatpush.msra.mxu0 0.0
      %1704 = vmatpush.msra.mxu0 0.0
      %1705 = vmatpush.msra.mxu0 0.0
      %1706 = vmatpush.msra.mxu0 0.0
      %1707 = vmatpush.msra.mxu0 0.0
      %1708 = vmatpush.msra.mxu0 0.0
      %1709 = vmatpush.msra.mxu0 0.0
      %1710 = vmatpush.msra.mxu0 0.0
      %1711 = vmatpush.msra.mxu0 0.0
      %1712 = vmatpush.msra.mxu0 0.0
      %1713 = vmatpush.msra.mxu0 0.0
      %1714 = vmatpush.msra.mxu0 0.0
      %1715 = vmatpush.msra.mxu0 0.0
      %1716 = vmatpush.msra.mxu0 0.0
      %1717 = vmatpush.msra.mxu0 %v508
      %1718 = vmatmul.f32.gmra.mxu0 %v1655
      %v1719 = vpop.f32.mrf.mxu0
      %v1720 = vadd.f32 0.0, %v1719
      %1721 = vmatmul.f32.gmra.mxu0 %v1658
      %v1722 = vpop.f32.mrf.mxu0
      %v1723 = vadd.f32 0.0, %v1722
      %1724 = vmatmul.f32.gmra.mxu0 %v1661
      %v1725 = vpop.f32.mrf.mxu0
      %v1726 = vadd.f32 0.0, %v1725
      %1727 = vmatmul.f32.gmra.mxu0 %v1664
      %v1728 = vpop.f32.mrf.mxu0
      %v1729 = vadd.f32 0.0, %v1728
      %1730 = vmatmul.f32.gmra.mxu0 %v1667
      %v1731 = vpop.f32.mrf.mxu0
      %v1732 = vadd.f32 0.0, %v1731
      %1733 = vmatmul.f32.gmra.mxu0 %v1670
      %v1734 = vpop.f32.mrf.mxu0
      %v1735 = vadd.f32 0.0, %v1734
      %1736 = vmatmul.f32.gmra.mxu0 %v1673
      %v1737 = vpop.f32.mrf.mxu0
      %v1738 = vadd.f32 0.0, %v1737
      %1739 = vmatmul.f32.gmra.mxu0 %v1676
      %v1740 = vpop.f32.mrf.mxu0
      %v1741 = vadd.f32 0.0, %v1740
      %1742 = vmatmul.f32.gmra.mxu0 %v1679
      %v1743 = vpop.f32.mrf.mxu0
      %v1744 = vadd.f32 0.0, %v1743
      %1745 = vmatmul.f32.gmra.mxu0 %v1682
      %v1746 = vpop.f32.mrf.mxu0
      %v1747 = vadd.f32 0.0, %v1746
      %1748 = vmatmul.f32.gmra.mxu0 %v1685
      %v1749 = vpop.f32.mrf.mxu0
      %v1750 = vadd.f32 0.0, %v1749
      %1751 = vmatmul.f32.gmra.mxu0 %v1688
      %v1752 = vpop.f32.mrf.mxu0
      %v1753 = vadd.f32 0.0, %v1752
      %1754 = vmatmul.f32.gmra.mxu0 %v1691
      %v1755 = vpop.f32.mrf.mxu0
      %v1756 = vadd.f32 0.0, %v1755
      %1757 = vmatmul.f32.gmra.mxu0 %v1694
      %v1758 = vpop.f32.mrf.mxu0
      %v1759 = vadd.f32 0.0, %v1758
      %1760 = vmatmul.f32.gmra.mxu0 %v1697
      %v1761 = vpop.f32.mrf.mxu0
      %v1762 = vadd.f32 0.0, %v1761
      %1763 = vmatmul.f32.gmra.mxu0 %v1700
      %v1764 = vpop.f32.mrf.mxu0
      %v1765 = vadd.f32 0.0, %v1764
      %1766 = vdwg.mxu0
      %v1767 = vadd.f32 %v1622, %v1720
      %v1768 = vadd.f32 %v1623, %v1723
      %v1769 = vadd.f32 %v1624, %v1726
      %v1770 = vadd.f32 %v1625, %v1729
      %v1771 = vadd.f32 %v1626, %v1732
      %v1772 = vadd.f32 %v1627, %v1735
      %v1773 = vadd.f32 %v1628, %v1738
      %v1774 = vadd.f32 %v1629, %v1741
      %v1775 = vadd.f32 %v1630, %v1744
      %v1776 = vadd.f32 %v1631, %v1747
      %v1777 = vadd.f32 %v1632, %v1750
      %v1778 = vadd.f32 %v1633, %v1753
      %v1779 = vadd.f32 %v1634, %v1756
      %v1780 = vadd.f32 %v1635, %v1759
      %v1781 = vadd.f32 %v1636, %v1762
      %v1782 = vadd.f32 %v1637, %v1765
      %v1783 = vld [vmem:[%s3] sm:$0x1]
      %v1785 = vperm.slane %v1783, 0
      %v1787 = vmul.f32 %v1767, %v1785
      %v1788 = vmul.f32 %v1768, %v1785
      %v1789 = vmul.f32 %v1769, %v1785
      %v1790 = vmul.f32 %v1770, %v1785
      %v1791 = vmul.f32 %v1771, %v1785
      %v1792 = vmul.f32 %v1772, %v1785
      %v1793 = vmul.f32 %v1773, %v1785
      %v1794 = vmul.f32 %v1774, %v1785
      %v1795 = vmul.f32 %v1775, %v1785
      %v1796 = vmul.f32 %v1776, %v1785
      %v1797 = vmul.f32 %v1777, %v1785
      %v1798 = vmul.f32 %v1778, %v1785
      %v1799 = vmul.f32 %v1779, %v1785
      %v1800 = vmul.f32 %v1780, %v1785
      %v1801 = vmul.f32 %v1781, %v1785
      %v1802 = vmul.f32 %v1782, %v1785
      %v1803 = vld [vmem:[%s4] sm:$0x1]
      %v1805 = vperm.slane %v1803, 0
      %v1807 = vadd.f32 %v1787, %v1805
      %v1808 = vadd.f32 %v1788, %v1805
      %v1809 = vadd.f32 %v1789, %v1805
      %v1810 = vadd.f32 %v1790, %v1805
      %v1811 = vadd.f32 %v1791, %v1805
      %v1812 = vadd.f32 %v1792, %v1805
      %v1813 = vadd.f32 %v1793, %v1805
      %v1814 = vadd.f32 %v1794, %v1805
      %v1815 = vadd.f32 %v1795, %v1805
      %v1816 = vadd.f32 %v1796, %v1805
      %v1817 = vadd.f32 %v1797, %v1805
      %v1818 = vadd.f32 %v1798, %v1805
      %v1819 = vadd.f32 %v1799, %v1805
      %v1820 = vadd.f32 %v1800, %v1805
      %v1821 = vadd.f32 %v1801, %v1805
      %v1822 = vadd.f32 %v1802, %v1805
      %v1823 = vld [vmem:[%s411] sm:$0xff]
      %v1824 = vld [vmem:[%s411 + $0x8] sm:$0xff]
      %v1825 = vld [vmem:[%s411 + $0x10] sm:$0xff]
      %v1826 = vld [vmem:[%s411 + $0x18] sm:$0xff]
      %v1827 = vld [vmem:[%s411 + $0x20] sm:$0xff]
      %v1828 = vld [vmem:[%s411 + $0x28] sm:$0xff]
      %v1829 = vld [vmem:[%s411 + $0x30] sm:$0xff]
      %v1830 = vld [vmem:[%s411 + $0x38] sm:$0xff]
      %v1831 = vld [vmem:[%s411 + $0x40] sm:$0xff]
      %v1832 = vld [vmem:[%s411 + $0x48] sm:$0xff]
      %v1833 = vld [vmem:[%s411 + $0x50] sm:$0xff]
      %v1834 = vld [vmem:[%s411 + $0x58] sm:$0xff]
      %v1835 = vld [vmem:[%s411 + $0x60] sm:$0xff]
      %v1836 = vld [vmem:[%s411 + $0x68] sm:$0xff]
      %v1837 = vld [vmem:[%s411 + $0x70] sm:$0xff]
      %v1838 = vld [vmem:[%s411 + $0x78] sm:$0xff]
      %v1839 = vld [vmem:[%s422] sm:$0xff]
      %v1840 = vld [vmem:[%s422 + $0x8] sm:$0xff]
      %v1841 = vld [vmem:[%s422 + $0x10] sm:$0xff]
      %v1842 = vld [vmem:[%s422 + $0x18] sm:$0xff]
      %v1843 = vld [vmem:[%s422 + $0x20] sm:$0xff]
      %v1844 = vld [vmem:[%s422 + $0x28] sm:$0xff]
      %v1845 = vld [vmem:[%s422 + $0x30] sm:$0xff]
      %v1846 = vld [vmem:[%s422 + $0x38] sm:$0xff]
      %v1847 = vld [vmem:[%s422 + $0x40] sm:$0xff]
      %v1848 = vld [vmem:[%s422 + $0x48] sm:$0xff]
      %v1849 = vld [vmem:[%s422 + $0x50] sm:$0xff]
      %v1850 = vld [vmem:[%s422 + $0x58] sm:$0xff]
      %v1851 = vld [vmem:[%s422 + $0x60] sm:$0xff]
      %v1852 = vld [vmem:[%s422 + $0x68] sm:$0xff]
      %v1853 = vld [vmem:[%s422 + $0x70] sm:$0xff]
      %v1854 = vld [vmem:[%s422 + $0x78] sm:$0xff]
      %v1855 = vadd.f32 %v1823, %v1839
      %v1856 = vadd.f32 %v1824, %v1840
      %v1857 = vadd.f32 %v1825, %v1841
      %v1858 = vadd.f32 %v1826, %v1842
      %v1859 = vadd.f32 %v1827, %v1843
      %v1860 = vadd.f32 %v1828, %v1844
      %v1861 = vadd.f32 %v1829, %v1845
      %v1862 = vadd.f32 %v1830, %v1846
      %v1863 = vadd.f32 %v1831, %v1847
      %v1864 = vadd.f32 %v1832, %v1848
      %v1865 = vadd.f32 %v1833, %v1849
      %v1866 = vadd.f32 %v1834, %v1850
      %v1867 = vadd.f32 %v1835, %v1851
      %v1868 = vadd.f32 %v1836, %v1852
      %v1869 = vadd.f32 %v1837, %v1853
      %v1870 = vadd.f32 %v1838, %v1854
      %v1871 = vsub.f32 0.0, %v1855
      %v1872 = vsub.f32 0.0, %v1856
      %v1873 = vsub.f32 0.0, %v1857
      %v1874 = vsub.f32 0.0, %v1858
      %v1875 = vsub.f32 0.0, %v1859
      %v1876 = vsub.f32 0.0, %v1860
      %v1877 = vsub.f32 0.0, %v1861
      %v1878 = vsub.f32 0.0, %v1862
      %v1879 = vsub.f32 0.0, %v1863
      %v1880 = vsub.f32 0.0, %v1864
      %v1881 = vsub.f32 0.0, %v1865
      %v1882 = vsub.f32 0.0, %v1866
      %v1883 = vsub.f32 0.0, %v1867
      %v1884 = vsub.f32 0.0, %v1868
      %v1885 = vsub.f32 0.0, %v1869
      %v1886 = vsub.f32 0.0, %v1870
      %v1887 = vmul.f32 %v1871, 1.442695
      %v1888 = vpow.pop %v1887
      %v1889 = vmul.f32 %v1872, 1.442695
      %v1890 = vpow.pop %v1889
      %v1891 = vmul.f32 %v1873, 1.442695
      %v1892 = vpow.pop %v1891
      %v1893 = vmul.f32 %v1874, 1.442695
      %v1894 = vpow.pop %v1893
      %v1895 = vmul.f32 %v1875, 1.442695
      %v1896 = vpow.pop %v1895
      %v1897 = vmul.f32 %v1876, 1.442695
      %v1898 = vpow.pop %v1897
      %v1899 = vmul.f32 %v1877, 1.442695
      %v1900 = vpow.pop %v1899
      %v1901 = vmul.f32 %v1878, 1.442695
      %v1902 = vpow.pop %v1901
      %v1903 = vmul.f32 %v1879, 1.442695
      %v1904 = vpow.pop %v1903
      %v1905 = vmul.f32 %v1880, 1.442695
      %v1906 = vpow.pop %v1905
      %v1907 = vmul.f32 %v1881, 1.442695
      %v1908 = vpow.pop %v1907
      %v1909 = vmul.f32 %v1882, 1.442695
      %v1910 = vpow.pop %v1909
      %v1911 = vmul.f32 %v1883, 1.442695
      %v1912 = vpow.pop %v1911
      %v1913 = vmul.f32 %v1884, 1.442695
      %v1914 = vpow.pop %v1913
      %v1915 = vmul.f32 %v1885, 1.442695
      %v1916 = vpow.pop %v1915
      %v1917 = vmul.f32 %v1886, 1.442695
      %v1918 = vpow.pop %v1917
      %v1919 = vadd.f32 %v1888, 1.0
      %v1920 = vadd.f32 %v1890, 1.0
      %v1921 = vadd.f32 %v1892, 1.0
      %v1922 = vadd.f32 %v1894, 1.0
      %v1923 = vadd.f32 %v1896, 1.0
      %v1924 = vadd.f32 %v1898, 1.0
      %v1925 = vadd.f32 %v1900, 1.0
      %v1926 = vadd.f32 %v1902, 1.0
      %v1927 = vadd.f32 %v1904, 1.0
      %v1928 = vadd.f32 %v1906, 1.0
      %v1929 = vadd.f32 %v1908, 1.0
      %v1930 = vadd.f32 %v1910, 1.0
      %v1931 = vadd.f32 %v1912, 1.0
      %v1932 = vadd.f32 %v1914, 1.0
      %v1933 = vadd.f32 %v1916, 1.0
      %v1934 = vadd.f32 %v1918, 1.0
      %v1935 = vrcp.pop %v1919
      %v1936 = vmul.f32 %v1919, %v1935
      %v1937 = vsub.f32 1.0, %v1936
      %v1938 = vmul.f32 %v1935, %v1937
      %v1939 = vadd.f32 %v1935, %v1938
      %vm1940 = vweird.f32 %v1919
      %vm1941 = vweird.f32 %v1935
      %vm1942 = vmor %vm1940, %vm1941
      %v1943 = vsel %vm1942, %v1935, %v1939
      %v1944 = vand.u32 2147483647, %v1919
      %vm1945 = vcmp.eq.f32.partialorder %v1944, 8.507059e+37
      %v1946 = vand.u32 %v1919, 2147483648
      %v1947 = vor.u32 1.1754944e-38, %v1946
      %v1948 = vsel %vm1945, %v1947, %v1943
      %v1949 = vmul.f32 1.0, %v1948
      %v1950 = vrcp.pop %v1920
      %v1951 = vmul.f32 %v1920, %v1950
      %v1952 = vsub.f32 1.0, %v1951
      %v1953 = vmul.f32 %v1950, %v1952
      %v1954 = vadd.f32 %v1950, %v1953
      %vm1955 = vweird.f32 %v1920
      %vm1956 = vweird.f32 %v1950
      %vm1957 = vmor %vm1955, %vm1956
      %v1958 = vsel %vm1957, %v1950, %v1954
      %v1959 = vand.u32 2147483647, %v1920
      %vm1960 = vcmp.eq.f32.partialorder %v1959, 8.507059e+37
      %v1961 = vand.u32 %v1920, 2147483648
      %v1962 = vor.u32 1.1754944e-38, %v1961
      %v1963 = vsel %vm1960, %v1962, %v1958
      %v1964 = vmul.f32 1.0, %v1963
      %v1965 = vrcp.pop %v1921
      %v1966 = vmul.f32 %v1921, %v1965
      %v1967 = vsub.f32 1.0, %v1966
      %v1968 = vmul.f32 %v1965, %v1967
      %v1969 = vadd.f32 %v1965, %v1968
      %vm1970 = vweird.f32 %v1921
      %vm1971 = vweird.f32 %v1965
      %vm1972 = vmor %vm1970, %vm1971
      %v1973 = vsel %vm1972, %v1965, %v1969
      %v1974 = vand.u32 2147483647, %v1921
      %vm1975 = vcmp.eq.f32.partialorder %v1974, 8.507059e+37
      %v1976 = vand.u32 %v1921, 2147483648
      %v1977 = vor.u32 1.1754944e-38, %v1976
      %v1978 = vsel %vm1975, %v1977, %v1973
      %v1979 = vmul.f32 1.0, %v1978
      %v1980 = vrcp.pop %v1922
      %v1981 = vmul.f32 %v1922, %v1980
      %v1982 = vsub.f32 1.0, %v1981
      %v1983 = vmul.f32 %v1980, %v1982
      %v1984 = vadd.f32 %v1980, %v1983
      %vm1985 = vweird.f32 %v1922
      %vm1986 = vweird.f32 %v1980
      %vm1987 = vmor %vm1985, %vm1986
      %v1988 = vsel %vm1987, %v1980, %v1984
      %v1989 = vand.u32 2147483647, %v1922
      %vm1990 = vcmp.eq.f32.partialorder %v1989, 8.507059e+37
      %v1991 = vand.u32 %v1922, 2147483648
      %v1992 = vor.u32 1.1754944e-38, %v1991
      %v1993 = vsel %vm1990, %v1992, %v1988
      %v1994 = vmul.f32 1.0, %v1993
      %v1995 = vrcp.pop %v1923
      %v1996 = vmul.f32 %v1923, %v1995
      %v1997 = vsub.f32 1.0, %v1996
      %v1998 = vmul.f32 %v1995, %v1997
      %v1999 = vadd.f32 %v1995, %v1998
      %vm2000 = vweird.f32 %v1923
      %vm2001 = vweird.f32 %v1995
      %vm2002 = vmor %vm2000, %vm2001
      %v2003 = vsel %vm2002, %v1995, %v1999
      %v2004 = vand.u32 2147483647, %v1923
      %vm2005 = vcmp.eq.f32.partialorder %v2004, 8.507059e+37
      %v2006 = vand.u32 %v1923, 2147483648
      %v2007 = vor.u32 1.1754944e-38, %v2006
      %v2008 = vsel %vm2005, %v2007, %v2003
      %v2009 = vmul.f32 1.0, %v2008
      %v2010 = vrcp.pop %v1924
      %v2011 = vmul.f32 %v1924, %v2010
      %v2012 = vsub.f32 1.0, %v2011
      %v2013 = vmul.f32 %v2010, %v2012
      %v2014 = vadd.f32 %v2010, %v2013
      %vm2015 = vweird.f32 %v1924
      %vm2016 = vweird.f32 %v2010
      %vm2017 = vmor %vm2015, %vm2016
      %v2018 = vsel %vm2017, %v2010, %v2014
      %v2019 = vand.u32 2147483647, %v1924
      %vm2020 = vcmp.eq.f32.partialorder %v2019, 8.507059e+37
      %v2021 = vand.u32 %v1924, 2147483648
      %v2022 = vor.u32 1.1754944e-38, %v2021
      %v2023 = vsel %vm2020, %v2022, %v2018
      %v2024 = vmul.f32 1.0, %v2023
      %v2025 = vrcp.pop %v1925
      %v2026 = vmul.f32 %v1925, %v2025
      %v2027 = vsub.f32 1.0, %v2026
      %v2028 = vmul.f32 %v2025, %v2027
      %v2029 = vadd.f32 %v2025, %v2028
      %vm2030 = vweird.f32 %v1925
      %vm2031 = vweird.f32 %v2025
      %vm2032 = vmor %vm2030, %vm2031
      %v2033 = vsel %vm2032, %v2025, %v2029
      %v2034 = vand.u32 2147483647, %v1925
      %vm2035 = vcmp.eq.f32.partialorder %v2034, 8.507059e+37
      %v2036 = vand.u32 %v1925, 2147483648
      %v2037 = vor.u32 1.1754944e-38, %v2036
      %v2038 = vsel %vm2035, %v2037, %v2033
      %v2039 = vmul.f32 1.0, %v2038
      %v2040 = vrcp.pop %v1926
      %v2041 = vmul.f32 %v1926, %v2040
      %v2042 = vsub.f32 1.0, %v2041
      %v2043 = vmul.f32 %v2040, %v2042
      %v2044 = vadd.f32 %v2040, %v2043
      %vm2045 = vweird.f32 %v1926
      %vm2046 = vweird.f32 %v2040
      %vm2047 = vmor %vm2045, %vm2046
      %v2048 = vsel %vm2047, %v2040, %v2044
      %v2049 = vand.u32 2147483647, %v1926
      %vm2050 = vcmp.eq.f32.partialorder %v2049, 8.507059e+37
      %v2051 = vand.u32 %v1926, 2147483648
      %v2052 = vor.u32 1.1754944e-38, %v2051
      %v2053 = vsel %vm2050, %v2052, %v2048
      %v2054 = vmul.f32 1.0, %v2053
      %v2055 = vrcp.pop %v1927
      %v2056 = vmul.f32 %v1927, %v2055
      %v2057 = vsub.f32 1.0, %v2056
      %v2058 = vmul.f32 %v2055, %v2057
      %v2059 = vadd.f32 %v2055, %v2058
      %vm2060 = vweird.f32 %v1927
      %vm2061 = vweird.f32 %v2055
      %vm2062 = vmor %vm2060, %vm2061
      %v2063 = vsel %vm2062, %v2055, %v2059
      %v2064 = vand.u32 2147483647, %v1927
      %vm2065 = vcmp.eq.f32.partialorder %v2064, 8.507059e+37
      %v2066 = vand.u32 %v1927, 2147483648
      %v2067 = vor.u32 1.1754944e-38, %v2066
      %v2068 = vsel %vm2065, %v2067, %v2063
      %v2069 = vmul.f32 1.0, %v2068
      %v2070 = vrcp.pop %v1928
      %v2071 = vmul.f32 %v1928, %v2070
      %v2072 = vsub.f32 1.0, %v2071
      %v2073 = vmul.f32 %v2070, %v2072
      %v2074 = vadd.f32 %v2070, %v2073
      %vm2075 = vweird.f32 %v1928
      %vm2076 = vweird.f32 %v2070
      %vm2077 = vmor %vm2075, %vm2076
      %v2078 = vsel %vm2077, %v2070, %v2074
      %v2079 = vand.u32 2147483647, %v1928
      %vm2080 = vcmp.eq.f32.partialorder %v2079, 8.507059e+37
      %v2081 = vand.u32 %v1928, 2147483648
      %v2082 = vor.u32 1.1754944e-38, %v2081
      %v2083 = vsel %vm2080, %v2082, %v2078
      %v2084 = vmul.f32 1.0, %v2083
      %v2085 = vrcp.pop %v1929
      %v2086 = vmul.f32 %v1929, %v2085
      %v2087 = vsub.f32 1.0, %v2086
      %v2088 = vmul.f32 %v2085, %v2087
      %v2089 = vadd.f32 %v2085, %v2088
      %vm2090 = vweird.f32 %v1929
      %vm2091 = vweird.f32 %v2085
      %vm2092 = vmor %vm2090, %vm2091
      %v2093 = vsel %vm2092, %v2085, %v2089
      %v2094 = vand.u32 2147483647, %v1929
      %vm2095 = vcmp.eq.f32.partialorder %v2094, 8.507059e+37
      %v2096 = vand.u32 %v1929, 2147483648
      %v2097 = vor.u32 1.1754944e-38, %v2096
      %v2098 = vsel %vm2095, %v2097, %v2093
      %v2099 = vmul.f32 1.0, %v2098
      %v2100 = vrcp.pop %v1930
      %v2101 = vmul.f32 %v1930, %v2100
      %v2102 = vsub.f32 1.0, %v2101
      %v2103 = vmul.f32 %v2100, %v2102
      %v2104 = vadd.f32 %v2100, %v2103
      %vm2105 = vweird.f32 %v1930
      %vm2106 = vweird.f32 %v2100
      %vm2107 = vmor %vm2105, %vm2106
      %v2108 = vsel %vm2107, %v2100, %v2104
      %v2109 = vand.u32 2147483647, %v1930
      %vm2110 = vcmp.eq.f32.partialorder %v2109, 8.507059e+37
      %v2111 = vand.u32 %v1930, 2147483648
      %v2112 = vor.u32 1.1754944e-38, %v2111
      %v2113 = vsel %vm2110, %v2112, %v2108
      %v2114 = vmul.f32 1.0, %v2113
      %v2115 = vrcp.pop %v1931
      %v2116 = vmul.f32 %v1931, %v2115
      %v2117 = vsub.f32 1.0, %v2116
      %v2118 = vmul.f32 %v2115, %v2117
      %v2119 = vadd.f32 %v2115, %v2118
      %vm2120 = vweird.f32 %v1931
      %vm2121 = vweird.f32 %v2115
      %vm2122 = vmor %vm2120, %vm2121
      %v2123 = vsel %vm2122, %v2115, %v2119
      %v2124 = vand.u32 2147483647, %v1931
      %vm2125 = vcmp.eq.f32.partialorder %v2124, 8.507059e+37
      %v2126 = vand.u32 %v1931, 2147483648
      %v2127 = vor.u32 1.1754944e-38, %v2126
      %v2128 = vsel %vm2125, %v2127, %v2123
      %v2129 = vmul.f32 1.0, %v2128
      %v2130 = vrcp.pop %v1932
      %v2131 = vmul.f32 %v1932, %v2130
      %v2132 = vsub.f32 1.0, %v2131
      %v2133 = vmul.f32 %v2130, %v2132
      %v2134 = vadd.f32 %v2130, %v2133
      %vm2135 = vweird.f32 %v1932
      %vm2136 = vweird.f32 %v2130
      %vm2137 = vmor %vm2135, %vm2136
      %v2138 = vsel %vm2137, %v2130, %v2134
      %v2139 = vand.u32 2147483647, %v1932
      %vm2140 = vcmp.eq.f32.partialorder %v2139, 8.507059e+37
      %v2141 = vand.u32 %v1932, 2147483648
      %v2142 = vor.u32 1.1754944e-38, %v2141
      %v2143 = vsel %vm2140, %v2142, %v2138
      %v2144 = vmul.f32 1.0, %v2143
      %v2145 = vrcp.pop %v1933
      %v2146 = vmul.f32 %v1933, %v2145
      %v2147 = vsub.f32 1.0, %v2146
      %v2148 = vmul.f32 %v2145, %v2147
      %v2149 = vadd.f32 %v2145, %v2148
      %vm2150 = vweird.f32 %v1933
      %vm2151 = vweird.f32 %v2145
      %vm2152 = vmor %vm2150, %vm2151
      %v2153 = vsel %vm2152, %v2145, %v2149
      %v2154 = vand.u32 2147483647, %v1933
      %vm2155 = vcmp.eq.f32.partialorder %v2154, 8.507059e+37
      %v2156 = vand.u32 %v1933, 2147483648
      %v2157 = vor.u32 1.1754944e-38, %v2156
      %v2158 = vsel %vm2155, %v2157, %v2153
      %v2159 = vmul.f32 1.0, %v2158
      %v2160 = vrcp.pop %v1934
      %v2161 = vmul.f32 %v1934, %v2160
      %v2162 = vsub.f32 1.0, %v2161
      %v2163 = vmul.f32 %v2160, %v2162
      %v2164 = vadd.f32 %v2160, %v2163
      %vm2165 = vweird.f32 %v1934
      %vm2166 = vweird.f32 %v2160
      %vm2167 = vmor %vm2165, %vm2166
      %v2168 = vsel %vm2167, %v2160, %v2164
      %v2169 = vand.u32 2147483647, %v1934
      %vm2170 = vcmp.eq.f32.partialorder %v2169, 8.507059e+37
      %v2171 = vand.u32 %v1934, 2147483648
      %v2172 = vor.u32 1.1754944e-38, %v2171
      %v2173 = vsel %vm2170, %v2172, %v2168
      %v2174 = vmul.f32 1.0, %v2173
      %v2175 = vmul.f32 %v1807, %v1949
      %v2176 = vmul.f32 %v1808, %v1964
      %v2177 = vmul.f32 %v1809, %v1979
      %v2178 = vmul.f32 %v1810, %v1994
      %v2179 = vmul.f32 %v1811, %v2009
      %v2180 = vmul.f32 %v1812, %v2024
      %v2181 = vmul.f32 %v1813, %v2039
      %v2182 = vmul.f32 %v1814, %v2054
      %v2183 = vmul.f32 %v1815, %v2069
      %v2184 = vmul.f32 %v1816, %v2084
      %v2185 = vmul.f32 %v1817, %v2099
      %v2186 = vmul.f32 %v1818, %v2114
      %v2187 = vmul.f32 %v1819, %v2129
      %v2188 = vmul.f32 %v1820, %v2144
      %v2189 = vmul.f32 %v1821, %v2159
      %v2190 = vmul.f32 %v1822, %v2174
      %2191 = vst.msk [vmem:[%s433] sm:$0xff] %vm458, %v2175
      %2192 = vst.msk [vmem:[%s433 + $0x8] sm:$0xff] %vm458, %v2176
      %2193 = vst.msk [vmem:[%s433 + $0x10] sm:$0xff] %vm458, %v2177
      %2194 = vst.msk [vmem:[%s433 + $0x18] sm:$0xff] %vm458, %v2178
      %2195 = vst.msk [vmem:[%s433 + $0x20] sm:$0xff] %vm458, %v2179
      %2196 = vst.msk [vmem:[%s433 + $0x28] sm:$0xff] %vm458, %v2180
      %2197 = vst.msk [vmem:[%s433 + $0x30] sm:$0xff] %vm458, %v2181
      %2198 = vst.msk [vmem:[%s433 + $0x38] sm:$0xff] %vm458, %v2182
      %2199 = vst.msk [vmem:[%s433 + $0x40] sm:$0xff] %vm458, %v2183
      %2200 = vst.msk [vmem:[%s433 + $0x48] sm:$0xff] %vm458, %v2184
      %2201 = vst.msk [vmem:[%s433 + $0x50] sm:$0xff] %vm458, %v2185
      %2202 = vst.msk [vmem:[%s433 + $0x58] sm:$0xff] %vm458, %v2186
      %2203 = vst.msk [vmem:[%s433 + $0x60] sm:$0xff] %vm458, %v2187
      %2204 = vst.msk [vmem:[%s433 + $0x68] sm:$0xff] %vm458, %v2188
      %2205 = vst.msk [vmem:[%s433 + $0x70] sm:$0xff] %vm458, %v2189
      %2206 = vst.msk [vmem:[%s433 + $0x78] sm:$0xff] %vm458, %v2190
      %s2207 = smul.u32 8, %s23
      %p2208 = scmp.lt.s32.totalorder %s22, 1
      %s2209 = scalar_select %p2208, %s22, 1
      %p2210 = scmp.lt.s32.totalorder %s2207, 15
      %s2211 = scalar_select %p2210, %s2207, 15
      %s2212 = smul.addr %s2211, 2
      %s2213 = smul.addr %s2209, 32
      %s2214 = sadd.s32 %s2212, %s2213
      %s2215 = smul.addr %s2214, 8
      %s2216 = scalar_lea.vmem %s7, %s2215
      // Predicated region
      $region49: #{_lambda_.8} parent=47 // pred_check
        %p2217 = pneg %p227
      $region50: #{_lambda_.8} parent=47 // pred_check_branch
        %2219 = sbr.rel (%p2217) target = $region52
      $region51: #{_lambda_.8} parent=47 // pred_region
        %s2220 = smul.u32 8, %s23
      $region52: #{_lambda_.8} parent=47 // pred_fallthru
        _
    $region48: #{_lambda_.8} parent=5 // pred_fallthru
      _
    %p2221 = scmp.le.s32.totalorder 2, %s13
    // Predicated region
    $region53: #{_lambda_.8} parent=5 // pred_check
      %p2222 = pneg %p2221
    $region54: #{_lambda_.8} parent=5 // pred_check_branch
      %2224 = sbr.rel (%p2222) target = $region56
    $region55: #{_lambda_.8} parent=5 // pred_region
      %s2225 = ssub.s32 %s13, 2
      // Predicated region
      $region57: #{_lambda_.8} parent=55 // pred_check
        %p2226 = pneg %p233
      $region58: #{_lambda_.8} parent=55 // pred_check_branch
        %2228 = sbr.rel (%p2226) target = $region60
      $region59: #{_lambda_.8} parent=55 // pred_region
        %s2229 = smul.u32 8, %s25
        %p2230 = scmp.lt.s32.totalorder %s24, 1
        %s2231 = scalar_select %p2230, %s24, 1
        %p2232 = scmp.lt.s32.totalorder %s2229, 15
        %s2233 = scalar_select %p2232, %s2229, 15
        %s2234 = smul.addr %s2233, 2
        %s2235 = smul.addr %s2231, 32
        %s2236 = sadd.s32 %s2234, %s2235
        %s2237 = smul.addr %s2236, 8
        %s2238 = scalar_lea.vmem %s7, %s2237
      $region60: #{_lambda_.8} parent=55 // pred_fallthru
        _
    $region56: #{_lambda_.8} parent=5 // pred_fallthru
      _
  $region6: #{_lambda_.8} parent=0 // loop_footer
    %s17 = sadd.s32 1, %s13
  $region7: #{_lambda_.8} parent=0 // loop_footer_branch
    %12 = sbr.rel target = $region3
  $region8: #{_lambda_.8} parent=0 // loop_exit
    _

</llo_original>
